<compile_context>
chip_gen: v5e
topology: v5e:2x2
jax: 0.10.0
libtpu: 0.0.40
codegen_flags: <defaults>
</compile_context>

<pallas_src>
import numpy as np
import jax
import jax.numpy as jnp
from jax.experimental import pallas as pl
from jax.experimental.pallas import tpu as pltpu

TB = 32            # batch tile (images per grid step)
K1 = 5 * 28        # conv1 contraction: 5 kh taps x 28 input columns = 140
W1 = 32 * 16       # conv1 out lanes: 32 width blocks x 16 (10 ch + pad) = 512
P1 = W1 // 2       # pooled conv1 lanes = conv2 contraction per kh tap = 256
W2 = 8 * 32        # conv2 out lanes: 8 width blocks x 32 (20 ch + pad) = 256
P2 = W2 // 2       # pooled conv2 lanes = 128
NL = 128           # fc lane width (50 / 10 real, zero padded)


# ------------------------------ fused kernel --------------------------------

def fused_net_kernel(x_ref, t1_ref, b1_ref, t2_ref, b2_ref,
                     f1_ref, bf1_ref, f2_ref, bf2_ref, o_ref):
    f32, bf16 = jnp.float32, jnp.bfloat16

    # ---- conv1 (1->10, k=5): ONE Toeplitz matmul, K fused over kh taps ------
    x2 = x_ref[...].reshape(24 * TB, K1)                          # bf16, rows = oh*TB + b
    y1 = jnp.dot(x2, t1_ref[...], preferred_element_type=f32)     # [24*TB, 512]

    # ---- 2x2 max-pool, then bias (commutes with max) + relu -----------------
    yh = jnp.max(y1.reshape(12, 2, TB, W1), axis=1)               # height pool  [12, TB, 512]
    p1 = jnp.maximum(yh[:, :, :P1], yh[:, :, P1:])                # width pool   [12, TB, 256]
    a1 = jnp.maximum(p1 + b1_ref[...], 0.0).astype(bf16)          # [12, TB, 256]

    # ---- conv2 (10->20, k=5): 5 width-Toeplitz matmuls (one per kh tap) -----
    # LHS per tap is a zero-copy view of a1; accumulate in f32.
    # TODO(synk): Dropout2d is identity here (eval/inference semantics).
    y2 = None
    for kh in range(5):
        lhs = a1[kh:kh + 8].reshape(8 * TB, P1)                   # rows = oh*TB + b
        t = jnp.dot(lhs, t2_ref[kh], preferred_element_type=f32)  # [8*TB, 256]
        y2 = t if y2 is None else y2 + t

    # ---- 2x2 max-pool, then bias + relu --------------------------------------
    y2h = jnp.max(y2.reshape(4, 2, TB, W2), axis=1)               # [4, TB, 256]
    p2 = jnp.maximum(y2h[:, :, :P2], y2h[:, :, P2:])              # [4, TB, 128]
    a2 = jnp.maximum(p2 + b2_ref[...], 0.0).astype(bf16)          # [4, TB, 128]

    # ---- flatten (PyTorch (c,h,w) order folded into F1p) + fc1 + relu -------
    flat = jnp.concatenate([a2[h] for h in range(4)], axis=-1)    # [TB, 512]
    h1 = jnp.dot(flat, f1_ref[...], preferred_element_type=f32) + bf1_ref[...]
    h1 = jnp.maximum(h1, 0.0).astype(bf16)                        # [TB, 128]
    # TODO(synk): F.dropout is identity here (eval/inference semantics).

    # ---- fc2 + log_softmax over the 10 real classes (f32 math) --------------
    z = jnp.dot(h1, f2_ref[...], preferred_element_type=f32) + bf2_ref[...]
    col = jax.lax.broadcasted_iota(jnp.int32, z.shape, 1)
    z = jnp.where(col < 10, z, -1e30)                             # mask pad lanes
    zs = z - jnp.max(z, axis=-1, keepdims=True)
    lse = jnp.log(jnp.sum(jnp.exp(zs), axis=-1, keepdims=True))
    o_ref[...] = zs - lse                                         # [TB, 128]


# --------------------------- one-time weight prep ----------------------------

def prepare_params(conv1_w, conv1_b, conv2_w, conv2_b, fc1_w, fc1_b, fc2_w, fc2_b):
    """One-time host-side weight re-layout: lane-dense Toeplitz / FC slabs (bf16)."""
    w1 = np.asarray(conv1_w, np.float32).reshape(10, 5, 5)        # [co, kh, kw]
    w2 = np.asarray(conv2_w, np.float32)                          # [co, ci, kh, kw]
    f1 = np.asarray(fc1_w, np.float32)                            # [50, 320]
    f2 = np.asarray(fc2_w, np.float32)                            # [10, 50]
    b1 = np.asarray(conv1_b, np.float32)
    b2 = np.asarray(conv2_b, np.float32)

    # width -> lane block maps (even widths in lower half, odd in upper half,
    # so the 2x2 width pool is a single 128-aligned max of two lane halves)
    blk1 = lambda ow: (ow % 2) * 16 + ow // 2     # 24 widths -> 32 blocks of 16 lanes
    blk2 = lambda ow: (ow % 2) * 4 + ow // 2      # 8 widths  -> 8 blocks of 32 lanes

    # conv1 Toeplitz (K fused over kh): T1[kh*28 + w_in, blk1(ow)*16 + co]
    T1 = np.zeros((K1, W1), np.float32)
    for kh in range(5):
        for kw in range(5):
            for ow in range(24):
                T1[kh * 28 + ow + kw, blk1(ow) * 16: blk1(ow) * 16 + 10] = w1[:, kh, kw]
    # conv1 bias, applied AFTER pooling: pooled width wi -> lanes [16*wi : 16*wi+10]
    b1r = np.zeros((1, P1), np.float32)
    for wi in range(12):
        b1r[0, 16 * wi: 16 * wi + 10] = b1

    # conv2 width-Toeplitz per kh tap: T2[kh, 16*wi + ci, blk2(ow)*32 + co]
    T2 = np.zeros((5, P1, W2), np.float32)
    for kh in range(5):
        for kw in range(5):
            for ow in range(8):
                wi = ow + kw
                T2[kh, 16 * wi: 16 * wi + 10,
                   blk2(ow) * 32: blk2(ow) * 32 + 20] = w2[:, :, kh, kw].T
    b2r = np.zeros((1, P2), np.float32)
    for w in range(4):
        b2r[0, 32 * w: 32 * w + 20] = b2

    # fc1: flat lane = 128*h + 32*w + c  <->  PyTorch flatten index c*16 + h*4 + w
    F1p = np.zeros((4 * P2, NL), np.float32)
    for h in range(4):
        for w in range(4):
            for c in range(20):
                F1p[128 * h + 32 * w + c, :50] = f1[:, c * 16 + h * 4 + w]
    bf1 = np.zeros((1, NL), np.float32)
    bf1[0, :50] = np.asarray(fc1_b, np.float32)

    F2p = np.zeros((NL, NL), np.float32)
    F2p[:50, :10] = f2.T
    bf2 = np.zeros((1, NL), np.float32)
    bf2[0, :10] = np.asarray(fc2_b, np.float32)

    bf = jnp.bfloat16
    return (jnp.asarray(T1, bf), jnp.asarray(b1r), jnp.asarray(T2, bf),
            jnp.asarray(b2r), jnp.asarray(F1p, bf), jnp.asarray(bf1),
            jnp.asarray(F2p, bf), jnp.asarray(bf2))


# --------------------------------- wrapper -----------------------------------

def net_forward(x_nchw, prep):
    """Forward pass matching Net.forward (eval-mode dropout).  x: [B,1,28,28]."""
    T1, b1r, T2, b2r, F1p, bf1, F2p, bf2 = prep
    B = x_nchw.shape[0]
    n_tiles = (B + TB - 1) // TB
    B_pad = n_tiles * TB

    x = x_nchw.reshape(B, 28, 28).astype(jnp.float32)
    x = jnp.pad(x, ((0, B_pad - B), (0, 0), (0, 0)))
    # im2col over the 5 height taps only: x_col[oh, b, kh*28 + w] = x[b, oh+kh, w]
    x_col = jnp.concatenate([x[:, kh:kh + 24, :] for kh in range(5)], axis=-1)
    x_col = jnp.transpose(x_col, (1, 0, 2)).astype(jnp.bfloat16)   # [24, B_pad, 140]

    out = pl.pallas_call(
        fused_net_kernel,
        out_shape=jax.ShapeDtypeStruct((B_pad, NL), jnp.float32),
        grid_spec=pltpu.PrefetchScalarGridSpec(
            num_scalar_prefetch=0,
            grid=(n_tiles,),
            in_specs=[
                pl.BlockSpec((24, TB, K1), lambda i: (0, i, 0)),    # input tile
                pl.BlockSpec((K1, W1), lambda i: (0, 0)),           # conv1 Toeplitz
                pl.BlockSpec((1, P1), lambda i: (0, 0)),            # conv1 bias (post-pool)
                pl.BlockSpec((5, P1, W2), lambda i: (0, 0, 0)),     # conv2 Toeplitz (per kh)
                pl.BlockSpec((1, P2), lambda i: (0, 0)),            # conv2 bias (post-pool)
                pl.BlockSpec((4 * P2, NL), lambda i: (0, 0)),       # fc1 weights
                pl.BlockSpec((1, NL), lambda i: (0, 0)),            # fc1 bias
                pl.BlockSpec((NL, NL), lambda i: (0, 0)),           # fc2 weights
                pl.BlockSpec((1, NL), lambda i: (0, 0)),            # fc2 bias
            ],
            out_specs=pl.BlockSpec((TB, NL), lambda i: (i, 0)),
        ),
        compiler_params=pltpu.CompilerParams(
            dimension_semantics=("parallel",),
            vmem_limit_bytes=32 * 1024 * 1024,
        ),
    )(x_col, T1, b1r, T2, b2r, F1p, bf1, F2p, bf2)

    return out[:B, :10]


# ---------------------------- pure-JAX reference -----------------------------

def reference_forward(x, params):
    c1w, c1b, c2w, c2b, f1w, f1b, f2w, f2b = params
    hp = jax.lax.Precision.HIGHEST
    B = x.shape[0]
    y = jax.lax.conv_general_dilated(
        x, c1w, (1, 1), "VALID",
        dimension_numbers=("NCHW", "OIHW", "NCHW"), precision=hp)
    y = y + c1b[None, :, None, None]
    y = y.reshape(B, 10, 12, 2, 12, 2).max(axis=(3, 5))
    y = jnp.maximum(y, 0.0)
    y = jax.lax.conv_general_dilated(
        y, c2w, (1, 1), "VALID",
        dimension_numbers=("NCHW", "OIHW", "NCHW"), precision=hp)
    y = y + c2b[None, :, None, None]
    y = y.reshape(B, 20, 4, 2, 4, 2).max(axis=(3, 5))
    y = jnp.maximum(y, 0.0)
    flat = y.reshape(B, 320)
    h = jnp.maximum(jnp.dot(flat, f1w.T, precision=hp) + f1b, 0.0)
    z = jnp.dot(h, f2w.T, precision=hp) + f2b
    return jax.nn.log_softmax(z, axis=-1)


# ----------------------------------- main -------------------------------------

if __name__ == "__main__":
    key = jax.random.PRNGKey(0)
    ks = jax.random.split(key, 10)

    # Deterministic synthetic parameters (shapes per Net.__init__)
    conv1_w = 0.1 * jax.random.normal(ks[0], (10, 1, 5, 5), jnp.float32)
    conv1_b = 0.1 * jax.random.normal(ks[1], (10,), jnp.float32)
    conv2_w = 0.1 * jax.random.normal(ks[2], (20, 10, 5, 5), jnp.float32)
    conv2_b = 0.1 * jax.random.normal(ks[3], (20,), jnp.float32)
    fc1_w = 0.05 * jax.random.normal(ks[4], (50, 320), jnp.float32)
    fc1_b = 0.05 * jax.random.normal(ks[5], (50,), jnp.float32)
    fc2_w = 0.05 * jax.random.normal(ks[6], (10, 50), jnp.float32)
    fc2_b = 0.05 * jax.random.normal(ks[7], (10,), jnp.float32)
    params = (conv1_w, conv1_b, conv2_w, conv2_b, fc1_w, fc1_b, fc2_w, fc2_b)

    prep = prepare_params(*params)                   # one-time weight re-layout
    fwd = jax.jit(net_forward)

    # small batch (pads into a single 32-image tile)
    x = jax.random.normal(ks[8], (2, 1, 28, 28), jnp.float32)
    out = jax.block_until_ready(fwd(x, prep))
    assert out.shape == (2, 10) and out.dtype == jnp.float32
    assert jnp.allclose(jnp.sum(jnp.exp(out), axis=-1), 1.0, atol=1e-4)
    ref = jax.block_until_ready(reference_forward(x, params))
    assert jnp.allclose(out, ref, atol=5e-2, rtol=5e-2)

    # multi-tile batch (2 grid steps -> exercises batch tiling / both v7x cores)
    x2 = jax.random.normal(ks[9], (40, 1, 28, 28), jnp.float32)
    out2 = jax.block_until_ready(fwd(x2, prep))
    ref2 = jax.block_until_ready(reference_forward(x2, params))
    assert out2.shape == (40, 10)
    assert jnp.allclose(out2, ref2, atol=5e-2, rtol=5e-2)

    print("KERNEL_OK")
</pallas_src>

<mosaic_0001>
module attributes {stable_mosaic.version = 11 : i64} {
  func.func @fused_net_kernel(%arg0: i32, %arg1: memref<24x32x140xbf16, #tpu.memory_space<vmem>>, %arg2: memref<140x512xbf16, #tpu.memory_space<vmem>>, %arg3: memref<1x256xf32, #tpu.memory_space<vmem>>, %arg4: memref<5x256x256xbf16, #tpu.memory_space<vmem>>, %arg5: memref<1x128xf32, #tpu.memory_space<vmem>>, %arg6: memref<512x128xbf16, #tpu.memory_space<vmem>>, %arg7: memref<1x128xf32, #tpu.memory_space<vmem>>, %arg8: memref<128x128xbf16, #tpu.memory_space<vmem>>, %arg9: memref<1x128xf32, #tpu.memory_space<vmem>>, %arg10: memref<32x128xf32, #tpu.memory_space<vmem>>) attributes {dimension_semantics = [#tpu.dimension_semantics<parallel>], iteration_bounds = array<i64: 1>, scalar_prefetch = 0 : i64, scratch_operands = 0 : i64, tpu.core_type = #tpu.core_type<tc>, window_params = [{transform_indices = @transform_0, window_bounds = array<i64: 24, 32, 140>}, {pipeline_mode = #tpu.pipeline_mode<synchronous>, transform_indices = @transform_1, window_bounds = array<i64: 140, 512>}, {pipeline_mode = #tpu.pipeline_mode<synchronous>, transform_indices = @transform_2, window_bounds = array<i64: 1, 256>}, {pipeline_mode = #tpu.pipeline_mode<synchronous>, transform_indices = @transform_3, window_bounds = array<i64: 5, 256, 256>}, {pipeline_mode = #tpu.pipeline_mode<synchronous>, transform_indices = @transform_4, window_bounds = array<i64: 1, 128>}, {pipeline_mode = #tpu.pipeline_mode<synchronous>, transform_indices = @transform_5, window_bounds = array<i64: 512, 128>}, {pipeline_mode = #tpu.pipeline_mode<synchronous>, transform_indices = @transform_6, window_bounds = array<i64: 1, 128>}, {pipeline_mode = #tpu.pipeline_mode<synchronous>, transform_indices = @transform_7, window_bounds = array<i64: 128, 128>}, {pipeline_mode = #tpu.pipeline_mode<synchronous>, transform_indices = @transform_8, window_bounds = array<i64: 1, 128>}, {transform_indices = @transform_9, window_bounds = array<i64: 32, 128>}]} {
    %c0 = arith.constant 0 : index
    %c0_0 = arith.constant 0 : index
    %c0_1 = arith.constant 0 : index
    %0 = vector.load %arg1[%c0, %c0_0, %c0_1] : memref<24x32x140xbf16, #tpu.memory_space<vmem>>, vector<24x32x140xbf16>
    %1 = vector.shape_cast %0 : vector<24x32x140xbf16> to vector<768x140xbf16>
    %c0_2 = arith.constant 0 : index
    %c0_3 = arith.constant 0 : index
    %2 = vector.load %arg2[%c0_2, %c0_3] : memref<140x512xbf16, #tpu.memory_space<vmem>>, vector<140x512xbf16>
    %cst = arith.constant dense<0.000000e+00> : vector<768x512xf32>
    %3 = tpu.matmul %1, %2, %cst {dimension_numbers = #tpu.dot_dimension_numbers<[1], [0], [0], [1], [0, 0, 1, 1], [], []>} : vector<768x140xbf16>, vector<140x512xbf16>, vector<768x512xf32> -> vector<768x512xf32>
    %4 = vector.shape_cast %3 : vector<768x512xf32> to vector<12x2x32x512xf32>
    %cst_4 = arith.constant dense<0xFF800000> : vector<12x32x512xf32>
    %5 = vector.multi_reduction <maximumf>, %4, %cst_4 [1] : vector<12x2x32x512xf32> to vector<12x32x512xf32>
    %6 = vector.extract_strided_slice %5 {offsets = [0, 0, 0], sizes = [12, 32, 256], strides = [1, 1, 1]} : vector<12x32x512xf32> to vector<12x32x256xf32>
    %7 = vector.extract_strided_slice %5 {offsets = [0, 0, 256], sizes = [12, 32, 256], strides = [1, 1, 1]} : vector<12x32x512xf32> to vector<12x32x256xf32>
    %8 = arith.maximumf %6, %7 : vector<12x32x256xf32>
    %c0_5 = arith.constant 0 : index
    %c0_6 = arith.constant 0 : index
    %9 = vector.load %arg3[%c0_5, %c0_6] : memref<1x256xf32, #tpu.memory_space<vmem>>, vector<1x256xf32>
    %10 = vector.shape_cast %9 : vector<1x256xf32> to vector<1x1x256xf32>
    %11 = vector.broadcast %10 : vector<1x1x256xf32> to vector<12x32x256xf32>
    %12 = arith.addf %8, %11 : vector<12x32x256xf32>
    %cst_7 = arith.constant 0.000000e+00 : f32
    %13 = vector.broadcast %cst_7 : f32 to vector<12x32x256xf32>
    %14 = arith.maximumf %12, %13 : vector<12x32x256xf32>
    %15 = arith.truncf %14 : vector<12x32x256xf32> to vector<12x32x256xbf16>
    %16 = vector.extract_strided_slice %15 {offsets = [0, 0, 0], sizes = [8, 32, 256], strides = [1, 1, 1]} : vector<12x32x256xbf16> to vector<8x32x256xbf16>
    %17 = vector.shape_cast %16 : vector<8x32x256xbf16> to vector<256x256xbf16>
    %c0_8 = arith.constant 0 : index
    %c0_9 = arith.constant 0 : index
    %c0_10 = arith.constant 0 : index
    %18 = vector.load %arg4[%c0_8, %c0_9, %c0_10] : memref<5x256x256xbf16, #tpu.memory_space<vmem>>, vector<1x256x256xbf16>
    %19 = vector.shape_cast %18 : vector<1x256x256xbf16> to vector<256x256xbf16>
    %cst_11 = arith.constant dense<0.000000e+00> : vector<256x256xf32>
    %20 = tpu.matmul %17, %19, %cst_11 {dimension_numbers = #tpu.dot_dimension_numbers<[1], [0], [0], [1], [0, 0, 1, 1], [], []>} : vector<256x256xbf16>, vector<256x256xbf16>, vector<256x256xf32> -> vector<256x256xf32>
    %21 = vector.extract_strided_slice %15 {offsets = [1, 0, 0], sizes = [8, 32, 256], strides = [1, 1, 1]} : vector<12x32x256xbf16> to vector<8x32x256xbf16>
    %22 = vector.shape_cast %21 : vector<8x32x256xbf16> to vector<256x256xbf16>
    %c1 = arith.constant 1 : index
    %c0_12 = arith.constant 0 : index
    %c0_13 = arith.constant 0 : index
    %23 = vector.load %arg4[%c1, %c0_12, %c0_13] : memref<5x256x256xbf16, #tpu.memory_space<vmem>>, vector<1x256x256xbf16>
    %24 = vector.shape_cast %23 : vector<1x256x256xbf16> to vector<256x256xbf16>
    %cst_14 = arith.constant dense<0.000000e+00> : vector<256x256xf32>
    %25 = tpu.matmul %22, %24, %cst_14 {dimension_numbers = #tpu.dot_dimension_numbers<[1], [0], [0], [1], [0, 0, 1, 1], [], []>} : vector<256x256xbf16>, vector<256x256xbf16>, vector<256x256xf32> -> vector<256x256xf32>
    %26 = arith.addf %20, %25 : vector<256x256xf32>
    %27 = vector.extract_strided_slice %15 {offsets = [2, 0, 0], sizes = [8, 32, 256], strides = [1, 1, 1]} : vector<12x32x256xbf16> to vector<8x32x256xbf16>
    %28 = vector.shape_cast %27 : vector<8x32x256xbf16> to vector<256x256xbf16>
    %c2 = arith.constant 2 : index
    %c0_15 = arith.constant 0 : index
    %c0_16 = arith.constant 0 : index
    %29 = vector.load %arg4[%c2, %c0_15, %c0_16] : memref<5x256x256xbf16, #tpu.memory_space<vmem>>, vector<1x256x256xbf16>
    %30 = vector.shape_cast %29 : vector<1x256x256xbf16> to vector<256x256xbf16>
    %cst_17 = arith.constant dense<0.000000e+00> : vector<256x256xf32>
    %31 = tpu.matmul %28, %30, %cst_17 {dimension_numbers = #tpu.dot_dimension_numbers<[1], [0], [0], [1], [0, 0, 1, 1], [], []>} : vector<256x256xbf16>, vector<256x256xbf16>, vector<256x256xf32> -> vector<256x256xf32>
    %32 = arith.addf %26, %31 : vector<256x256xf32>
    %33 = vector.extract_strided_slice %15 {offsets = [3, 0, 0], sizes = [8, 32, 256], strides = [1, 1, 1]} : vector<12x32x256xbf16> to vector<8x32x256xbf16>
    %34 = vector.shape_cast %33 : vector<8x32x256xbf16> to vector<256x256xbf16>
    %c3 = arith.constant 3 : index
    %c0_18 = arith.constant 0 : index
    %c0_19 = arith.constant 0 : index
    %35 = vector.load %arg4[%c3, %c0_18, %c0_19] : memref<5x256x256xbf16, #tpu.memory_space<vmem>>, vector<1x256x256xbf16>
    %36 = vector.shape_cast %35 : vector<1x256x256xbf16> to vector<256x256xbf16>
    %cst_20 = arith.constant dense<0.000000e+00> : vector<256x256xf32>
    %37 = tpu.matmul %34, %36, %cst_20 {dimension_numbers = #tpu.dot_dimension_numbers<[1], [0], [0], [1], [0, 0, 1, 1], [], []>} : vector<256x256xbf16>, vector<256x256xbf16>, vector<256x256xf32> -> vector<256x256xf32>
    %38 = arith.addf %32, %37 : vector<256x256xf32>
    %39 = vector.extract_strided_slice %15 {offsets = [4, 0, 0], sizes = [8, 32, 256], strides = [1, 1, 1]} : vector<12x32x256xbf16> to vector<8x32x256xbf16>
    %40 = vector.shape_cast %39 : vector<8x32x256xbf16> to vector<256x256xbf16>
    %c4 = arith.constant 4 : index
    %c0_21 = arith.constant 0 : index
    %c0_22 = arith.constant 0 : index
    %41 = vector.load %arg4[%c4, %c0_21, %c0_22] : memref<5x256x256xbf16, #tpu.memory_space<vmem>>, vector<1x256x256xbf16>
    %42 = vector.shape_cast %41 : vector<1x256x256xbf16> to vector<256x256xbf16>
    %cst_23 = arith.constant dense<0.000000e+00> : vector<256x256xf32>
    %43 = tpu.matmul %40, %42, %cst_23 {dimension_numbers = #tpu.dot_dimension_numbers<[1], [0], [0], [1], [0, 0, 1, 1], [], []>} : vector<256x256xbf16>, vector<256x256xbf16>, vector<256x256xf32> -> vector<256x256xf32>
    %44 = arith.addf %38, %43 : vector<256x256xf32>
    %45 = vector.shape_cast %44 : vector<256x256xf32> to vector<4x2x32x256xf32>
    %cst_24 = arith.constant dense<0xFF800000> : vector<4x32x256xf32>
    %46 = vector.multi_reduction <maximumf>, %45, %cst_24 [1] : vector<4x2x32x256xf32> to vector<4x32x256xf32>
    %47 = vector.extract_strided_slice %46 {offsets = [0, 0, 0], sizes = [4, 32, 128], strides = [1, 1, 1]} : vector<4x32x256xf32> to vector<4x32x128xf32>
    %48 = vector.extract_strided_slice %46 {offsets = [0, 0, 128], sizes = [4, 32, 128], strides = [1, 1, 1]} : vector<4x32x256xf32> to vector<4x32x128xf32>
    %49 = arith.maximumf %47, %48 : vector<4x32x128xf32>
    %c0_25 = arith.constant 0 : index
    %c0_26 = arith.constant 0 : index
    %50 = vector.load %arg5[%c0_25, %c0_26] : memref<1x128xf32, #tpu.memory_space<vmem>>, vector<1x128xf32>
    %51 = vector.shape_cast %50 : vector<1x128xf32> to vector<1x1x128xf32>
    %52 = vector.broadcast %51 : vector<1x1x128xf32> to vector<4x32x128xf32>
    %53 = arith.addf %49, %52 : vector<4x32x128xf32>
    %cst_27 = arith.constant 0.000000e+00 : f32
    %54 = vector.broadcast %cst_27 : f32 to vector<4x32x128xf32>
    %55 = arith.maximumf %53, %54 : vector<4x32x128xf32>
    %56 = arith.truncf %55 : vector<4x32x128xf32> to vector<4x32x128xbf16>
    %57 = vector.extract_strided_slice %56 {offsets = [0, 0, 0], sizes = [1, 32, 128], strides = [1, 1, 1]} : vector<4x32x128xbf16> to vector<1x32x128xbf16>
    %58 = vector.shape_cast %57 : vector<1x32x128xbf16> to vector<32x128xbf16>
    %59 = vector.extract_strided_slice %56 {offsets = [1, 0, 0], sizes = [1, 32, 128], strides = [1, 1, 1]} : vector<4x32x128xbf16> to vector<1x32x128xbf16>
    %60 = vector.shape_cast %59 : vector<1x32x128xbf16> to vector<32x128xbf16>
    %61 = vector.extract_strided_slice %56 {offsets = [2, 0, 0], sizes = [1, 32, 128], strides = [1, 1, 1]} : vector<4x32x128xbf16> to vector<1x32x128xbf16>
    %62 = vector.shape_cast %61 : vector<1x32x128xbf16> to vector<32x128xbf16>
    %63 = vector.extract_strided_slice %56 {offsets = [3, 0, 0], sizes = [1, 32, 128], strides = [1, 1, 1]} : vector<4x32x128xbf16> to vector<1x32x128xbf16>
    %64 = vector.shape_cast %63 : vector<1x32x128xbf16> to vector<32x128xbf16>
    %65 = tpu.concatenate %58, %60, %62, %64 in 1 : vector<32x128xbf16>, vector<32x128xbf16>, vector<32x128xbf16>, vector<32x128xbf16> -> vector<32x512xbf16>
    %c0_28 = arith.constant 0 : index
    %c0_29 = arith.constant 0 : index
    %66 = vector.load %arg6[%c0_28, %c0_29] : memref<512x128xbf16, #tpu.memory_space<vmem>>, vector<512x128xbf16>
    %cst_30 = arith.constant dense<0.000000e+00> : vector<32x128xf32>
    %67 = tpu.matmul %65, %66, %cst_30 {dimension_numbers = #tpu.dot_dimension_numbers<[1], [0], [0], [1], [0, 0, 1, 1], [], []>} : vector<32x512xbf16>, vector<512x128xbf16>, vector<32x128xf32> -> vector<32x128xf32>
    %c0_31 = arith.constant 0 : index
    %c0_32 = arith.constant 0 : index
    %68 = vector.load %arg7[%c0_31, %c0_32] : memref<1x128xf32, #tpu.memory_space<vmem>>, vector<1x128xf32>
    %69 = vector.broadcast %68 : vector<1x128xf32> to vector<32x128xf32>
    %70 = arith.addf %67, %69 : vector<32x128xf32>
    %cst_33 = arith.constant 0.000000e+00 : f32
    %71 = vector.broadcast %cst_33 : f32 to vector<32x128xf32>
    %72 = arith.maximumf %70, %71 : vector<32x128xf32>
    %73 = arith.truncf %72 : vector<32x128xf32> to vector<32x128xbf16>
    %c0_34 = arith.constant 0 : index
    %c0_35 = arith.constant 0 : index
    %74 = vector.load %arg8[%c0_34, %c0_35] : memref<128x128xbf16, #tpu.memory_space<vmem>>, vector<128x128xbf16>
    %cst_36 = arith.constant dense<0.000000e+00> : vector<32x128xf32>
    %75 = tpu.matmul %73, %74, %cst_36 {dimension_numbers = #tpu.dot_dimension_numbers<[1], [0], [0], [1], [0, 0, 1, 1], [], []>} : vector<32x128xbf16>, vector<128x128xbf16>, vector<32x128xf32> -> vector<32x128xf32>
    %c0_37 = arith.constant 0 : index
    %c0_38 = arith.constant 0 : index
    %76 = vector.load %arg9[%c0_37, %c0_38] : memref<1x128xf32, #tpu.memory_space<vmem>>, vector<1x128xf32>
    %77 = vector.broadcast %76 : vector<1x128xf32> to vector<32x128xf32>
    %78 = arith.addf %75, %77 : vector<32x128xf32>
    %79 = tpu.iota {dimensions = array<i32: 1>} : vector<32x128xi32>
    %c10_i32 = arith.constant 10 : i32
    %80 = vector.broadcast %c10_i32 : i32 to vector<32x128xi32>
    %81 = arith.cmpi slt, %79, %80 : vector<32x128xi32>
    %cst_39 = arith.constant -1.000000e+30 : f32
    %82 = vector.broadcast %cst_39 : f32 to vector<32x128xf32>
    %83 = arith.select %81, %78, %82 : vector<32x128xi1>, vector<32x128xf32>
    %cst_40 = arith.constant dense<0xFF800000> : vector<32xf32>
    %84 = vector.multi_reduction <maximumf>, %83, %cst_40 [1] : vector<32x128xf32> to vector<32xf32>
    %85 = vector.shape_cast %84 : vector<32xf32> to vector<32x1xf32>
    %86 = vector.broadcast %85 : vector<32x1xf32> to vector<32x128xf32>
    %87 = arith.subf %83, %86 : vector<32x128xf32>
    %88 = math.exp %87 : vector<32x128xf32>
    %cst_41 = arith.constant dense<0.000000e+00> : vector<32xf32>
    %89 = vector.multi_reduction <add>, %88, %cst_41 [1] : vector<32x128xf32> to vector<32xf32>
    %90 = vector.shape_cast %89 : vector<32xf32> to vector<32x1xf32>
    %91 = math.log %90 : vector<32x1xf32>
    %92 = vector.broadcast %91 : vector<32x1xf32> to vector<32x128xf32>
    %93 = arith.subf %87, %92 : vector<32x128xf32>
    %c0_42 = arith.constant 0 : index
    %c0_43 = arith.constant 0 : index
    %94 = vector.load %arg10[%c0_42, %c0_43] : memref<32x128xf32, #tpu.memory_space<vmem>>, vector<32x128xf32>
    tpu.vector_store %arg10[%c0_42, %c0_43], %93 {strides = array<i32>} : memref<32x128xf32, #tpu.memory_space<vmem>>, vector<32x128xf32>,
    return
  }
  func.func @transform_0(%arg0: i32) -> (i32, i32, i32) {
    %c0_i32 = arith.constant 0 : i32
    %c0_i32_0 = arith.constant 0 : i32
    %c0_i32_1 = arith.constant 0 : i32
    return %c0_i32, %arg0, %c0_i32_0 : i32, i32, i32
  }
  func.func @transform_1(%arg0: i32) -> (i32, i32) {
    %c0_i32 = arith.constant 0 : i32
    %c0_i32_0 = arith.constant 0 : i32
    %c0_i32_1 = arith.constant 0 : i32
    return %c0_i32, %c0_i32_0 : i32, i32
  }
  func.func @transform_2(%arg0: i32) -> (i32, i32) {
    %c0_i32 = arith.constant 0 : i32
    %c0_i32_0 = arith.constant 0 : i32
    %c0_i32_1 = arith.constant 0 : i32
    return %c0_i32, %c0_i32_0 : i32, i32
  }
  func.func @transform_3(%arg0: i32) -> (i32, i32, i32) {
    %c0_i32 = arith.constant 0 : i32
    %c0_i32_0 = arith.constant 0 : i32
    %c0_i32_1 = arith.constant 0 : i32
    %c0_i32_2 = arith.constant 0 : i32
    return %c0_i32, %c0_i32_0, %c0_i32_1 : i32, i32, i32
  }
  func.func @transform_4(%arg0: i32) -> (i32, i32) {
    %c0_i32 = arith.constant 0 : i32
    %c0_i32_0 = arith.constant 0 : i32
    %c0_i32_1 = arith.constant 0 : i32
    return %c0_i32, %c0_i32_0 : i32, i32
  }
  func.func @transform_5(%arg0: i32) -> (i32, i32) {
    %c0_i32 = arith.constant 0 : i32
    %c0_i32_0 = arith.constant 0 : i32
    %c0_i32_1 = arith.constant 0 : i32
    return %c0_i32, %c0_i32_0 : i32, i32
  }
  func.func @transform_6(%arg0: i32) -> (i32, i32) {
    %c0_i32 = arith.constant 0 : i32
    %c0_i32_0 = arith.constant 0 : i32
    %c0_i32_1 = arith.constant 0 : i32
    return %c0_i32, %c0_i32_0 : i32, i32
  }
  func.func @transform_7(%arg0: i32) -> (i32, i32) {
    %c0_i32 = arith.constant 0 : i32
    %c0_i32_0 = arith.constant 0 : i32
    %c0_i32_1 = arith.constant 0 : i32
    return %c0_i32, %c0_i32_0 : i32, i32
  }
  func.func @transform_8(%arg0: i32) -> (i32, i32) {
    %c0_i32 = arith.constant 0 : i32
    %c0_i32_0 = arith.constant 0 : i32
    %c0_i32_1 = arith.constant 0 : i32
    return %c0_i32, %c0_i32_0 : i32, i32
  }
  func.func @transform_9(%arg0: i32) -> (i32, i32) {
    %c0_i32 = arith.constant 0 : i32
    %c0_i32_0 = arith.constant 0 : i32
    return %arg0, %c0_i32 : i32, i32
  }
}

</mosaic_0001>

<llo_original>
// kernel: net_forward.1
$region0: #{net_forward.1}
  #allocation0 [shape = 'u32[]', space=smem, size = 0x4, offset = 0x4, fixed_abs, tag = 'smem constant byte address 0x4 - core index']
  #allocation1 [shape = 'u32[72,128]{1,0:T(1,128)}', space=vmem, size = 0x9000, scoped, tag = 'internal scratch']
  %s0 = inlined_call_operand.vmem [shape: bf16[24,32,140], index: 0, kind: input, shape index: {}]
  %s1 = inlined_call_operand.vmem [shape: bf16[140,512], index: 1, kind: input, shape index: {}]
  %s2 = inlined_call_operand.vmem [shape: f32[1,256], index: 2, kind: input, shape index: {}]
  %s3 = inlined_call_operand.vmem [shape: bf16[5,256,256], index: 3, kind: input, shape index: {}]
  %s4 = inlined_call_operand.vmem [shape: f32[1,128], index: 4, kind: input, shape index: {}]
  %s5 = inlined_call_operand.vmem [shape: bf16[512,128], index: 5, kind: input, shape index: {}]
  %s6 = inlined_call_operand.vmem [shape: f32[1,128], index: 6, kind: input, shape index: {}]
  %s7 = inlined_call_operand.vmem [shape: bf16[128,128], index: 7, kind: input, shape index: {}]
  %s8 = inlined_call_operand.vmem [shape: f32[1,128], index: 8, kind: input, shape index: {}]
  %s9 = inlined_call_operand.vmem [shape: f32[32,128], index: 9, kind: output, shape index: {}]
  %s10 = sld [smem:[#allocation0]]
  $region46: #{net_forward.1} parent=0
    _
  %s12 = ssub.s32 1, %s10
  %s13 = scalar_select 0, %s12, %s10
  // Predicated region
  $region2: #{net_forward.1} parent=0 // pred_check
    _
  $region3: #{net_forward.1} parent=0 // pred_check_branch
    %15 = sbr.rel (0) target = $region5
  $region4: #{net_forward.1} parent=0 // pred_region
    _
  $region5: #{net_forward.1} parent=0 // pred_fallthru
    _
  // Predicated region
  $region6: #{net_forward.1} parent=0 // pred_check
    _
  $region7: #{net_forward.1} parent=0 // pred_check_branch
    %17 = sbr.rel (0) target = $region9
  $region8: #{net_forward.1} parent=0 // pred_region
    _
  $region9: #{net_forward.1} parent=0 // pred_fallthru
    _
  // Predicated region
  $region10: #{net_forward.1} parent=0 // pred_check
    _
  $region11: #{net_forward.1} parent=0 // pred_check_branch
    %19 = sbr.rel (0) target = $region13
  $region12: #{net_forward.1} parent=0 // pred_region
    _
  $region13: #{net_forward.1} parent=0 // pred_fallthru
    _
  // Predicated region
  $region14: #{net_forward.1} parent=0 // pred_check
    _
  $region15: #{net_forward.1} parent=0 // pred_check_branch
    %21 = sbr.rel (0) target = $region17
  $region16: #{net_forward.1} parent=0 // pred_region
    _
  $region17: #{net_forward.1} parent=0 // pred_fallthru
    _
  // Predicated region
  $region18: #{net_forward.1} parent=0 // pred_check
    _
  $region19: #{net_forward.1} parent=0 // pred_check_branch
    %23 = sbr.rel (0) target = $region21
  $region20: #{net_forward.1} parent=0 // pred_region
    _
  $region21: #{net_forward.1} parent=0 // pred_fallthru
    _
  // Predicated region
  $region22: #{net_forward.1} parent=0 // pred_check
    _
  $region23: #{net_forward.1} parent=0 // pred_check_branch
    %25 = sbr.rel (0) target = $region25
  $region24: #{net_forward.1} parent=0 // pred_region
    _
  $region25: #{net_forward.1} parent=0 // pred_fallthru
    _
  // Predicated region
  $region26: #{net_forward.1} parent=0 // pred_check
    _
  $region27: #{net_forward.1} parent=0 // pred_check_branch
    %27 = sbr.rel (0) target = $region29
  $region28: #{net_forward.1} parent=0 // pred_region
    _
  $region29: #{net_forward.1} parent=0 // pred_fallthru
    _
  // Predicated region
  $region30: #{net_forward.1} parent=0 // pred_check
    _
  $region31: #{net_forward.1} parent=0 // pred_check_branch
    %29 = sbr.rel (0) target = $region33
  $region32: #{net_forward.1} parent=0 // pred_region
    _
  $region33: #{net_forward.1} parent=0 // pred_fallthru
    _
  // Predicated region
  $region34: #{net_forward.1} parent=0 // pred_check
    _
  $region35: #{net_forward.1} parent=0 // pred_check_branch
    %31 = sbr.rel (0) target = $region37
  $region36: #{net_forward.1} parent=0 // pred_region
    _
  $region37: #{net_forward.1} parent=0 // pred_fallthru
    _
  %v33 = vld [vmem:[%s0] sm:$0xff]
  %v34 = vld [vmem:[%s0 + $0x8] sm:$0xff]
  %v35 = vld [vmem:[%s0 + $0x10] sm:$0xff]
  %v36 = vld [vmem:[%s0 + $0x18] sm:$0xff]
  %v37 = vld [vmem:[%s0 + $0x20] sm:$0xff]
  %v38 = vld [vmem:[%s0 + $0x28] sm:$0xff]
  %v39 = vld [vmem:[%s0 + $0x30] sm:$0xff]
  %v40 = vld [vmem:[%s0 + $0x38] sm:$0xff]
  %v41 = vld [vmem:[%s0 + $0x40] sm:$0xff]
  %v42 = vld [vmem:[%s0 + $0x48] sm:$0xff]
  %v43 = vld [vmem:[%s0 + $0x50] sm:$0xff]
  %v44 = vld [vmem:[%s0 + $0x58] sm:$0xff]
  %v45 = vld [vmem:[%s0 + $0x60] sm:$0xff]
  %v46 = vld [vmem:[%s0 + $0x68] sm:$0xff]
  %v47 = vld [vmem:[%s0 + $0x70] sm:$0xff]
  %v48 = vld [vmem:[%s0 + $0x78] sm:$0xff]
  %v49 = vld [vmem:[%s0 + $0x80] sm:$0xff]
  %v50 = vld [vmem:[%s0 + $0x88] sm:$0xff]
  %v51 = vld [vmem:[%s0 + $0x90] sm:$0xff]
  %v52 = vld [vmem:[%s0 + $0x98] sm:$0xff]
  %v53 = vld [vmem:[%s0 + $0xa0] sm:$0xff]
  %v54 = vld [vmem:[%s0 + $0xa8] sm:$0xff]
  %v55 = vld [vmem:[%s0 + $0xb0] sm:$0xff]
  %v56 = vld [vmem:[%s0 + $0xb8] sm:$0xff]
  %v57 = vld [vmem:[%s0 + $0xc0] sm:$0xff]
  %v58 = vld [vmem:[%s0 + $0xc8] sm:$0xff]
  %v59 = vld [vmem:[%s0 + $0xd0] sm:$0xff]
  %v60 = vld [vmem:[%s0 + $0xd8] sm:$0xff]
  %v61 = vld [vmem:[%s0 + $0xe0] sm:$0xff]
  %v62 = vld [vmem:[%s0 + $0xe8] sm:$0xff]
  %v63 = vld [vmem:[%s0 + $0xf0] sm:$0xff]
  %v64 = vld [vmem:[%s0 + $0xf8] sm:$0xff]
  %v65 = vld [vmem:[%s0 + $0x100] sm:$0xff]
  %v66 = vld [vmem:[%s0 + $0x108] sm:$0xff]
  %v67 = vld [vmem:[%s0 + $0x110] sm:$0xff]
  %v68 = vld [vmem:[%s0 + $0x118] sm:$0xff]
  %v69 = vld [vmem:[%s0 + $0x120] sm:$0xff]
  %v70 = vld [vmem:[%s0 + $0x128] sm:$0xff]
  %v71 = vld [vmem:[%s0 + $0x130] sm:$0xff]
  %v72 = vld [vmem:[%s0 + $0x138] sm:$0xff]
  %v73 = vld [vmem:[%s0 + $0x140] sm:$0xff]
  %v74 = vld [vmem:[%s0 + $0x148] sm:$0xff]
  %v75 = vld [vmem:[%s0 + $0x150] sm:$0xff]
  %v76 = vld [vmem:[%s0 + $0x158] sm:$0xff]
  %v77 = vld [vmem:[%s0 + $0x160] sm:$0xff]
  %v78 = vld [vmem:[%s0 + $0x168] sm:$0xff]
  %v79 = vld [vmem:[%s0 + $0x170] sm:$0xff]
  %v80 = vld [vmem:[%s0 + $0x178] sm:$0xff]
  %v81 = vld [vmem:[%s0 + $0x180] sm:$0xff]
  %v82 = vld [vmem:[%s0 + $0x188] sm:$0xff]
  %v83 = vld [vmem:[%s0 + $0x190] sm:$0xff]
  %v84 = vld [vmem:[%s0 + $0x198] sm:$0xff]
  %v85 = vld [vmem:[%s0 + $0x1a0] sm:$0xff]
  %v86 = vld [vmem:[%s0 + $0x1a8] sm:$0xff]
  %v87 = vld [vmem:[%s0 + $0x1b0] sm:$0xff]
  %v88 = vld [vmem:[%s0 + $0x1b8] sm:$0xff]
  %v89 = vld [vmem:[%s0 + $0x1c0] sm:$0xff]
  %v90 = vld [vmem:[%s0 + $0x1c8] sm:$0xff]
  %v91 = vld [vmem:[%s0 + $0x1d0] sm:$0xff]
  %v92 = vld [vmem:[%s0 + $0x1d8] sm:$0xff]
  %v93 = vld [vmem:[%s0 + $0x1e0] sm:$0xff]
  %v94 = vld [vmem:[%s0 + $0x1e8] sm:$0xff]
  %v95 = vld [vmem:[%s0 + $0x1f0] sm:$0xff]
  %v96 = vld [vmem:[%s0 + $0x1f8] sm:$0xff]
  %v97 = vld [vmem:[%s0 + $0x200] sm:$0xff]
  %v98 = vld [vmem:[%s0 + $0x208] sm:$0xff]
  %v99 = vld [vmem:[%s0 + $0x210] sm:$0xff]
  %v100 = vld [vmem:[%s0 + $0x218] sm:$0xff]
  %v101 = vld [vmem:[%s0 + $0x220] sm:$0xff]
  %v102 = vld [vmem:[%s0 + $0x228] sm:$0xff]
  %v103 = vld [vmem:[%s0 + $0x230] sm:$0xff]
  %v104 = vld [vmem:[%s0 + $0x238] sm:$0xff]
  %v105 = vld [vmem:[%s0 + $0x240] sm:$0xff]
  %v106 = vld [vmem:[%s0 + $0x248] sm:$0xff]
  %v107 = vld [vmem:[%s0 + $0x250] sm:$0xff]
  %v108 = vld [vmem:[%s0 + $0x258] sm:$0xff]
  %v109 = vld [vmem:[%s0 + $0x260] sm:$0xff]
  %v110 = vld [vmem:[%s0 + $0x268] sm:$0xff]
  %v111 = vld [vmem:[%s0 + $0x270] sm:$0xff]
  %v112 = vld [vmem:[%s0 + $0x278] sm:$0xff]
  %v113 = vld [vmem:[%s0 + $0x280] sm:$0xff]
  %v114 = vld [vmem:[%s0 + $0x288] sm:$0xff]
  %v115 = vld [vmem:[%s0 + $0x290] sm:$0xff]
  %v116 = vld [vmem:[%s0 + $0x298] sm:$0xff]
  %v117 = vld [vmem:[%s0 + $0x2a0] sm:$0xff]
  %v118 = vld [vmem:[%s0 + $0x2a8] sm:$0xff]
  %v119 = vld [vmem:[%s0 + $0x2b0] sm:$0xff]
  %v120 = vld [vmem:[%s0 + $0x2b8] sm:$0xff]
  %v121 = vld [vmem:[%s0 + $0x2c0] sm:$0xff]
  %v122 = vld [vmem:[%s0 + $0x2c8] sm:$0xff]
  %v123 = vld [vmem:[%s0 + $0x2d0] sm:$0xff]
  %v124 = vld [vmem:[%s0 + $0x2d8] sm:$0xff]
  %v125 = vld [vmem:[%s0 + $0x2e0] sm:$0xff]
  %v126 = vld [vmem:[%s0 + $0x2e8] sm:$0xff]
  %v127 = vld [vmem:[%s0 + $0x2f0] sm:$0xff]
  %v128 = vld [vmem:[%s0 + $0x2f8] sm:$0xff]
  %v129 = vld [vmem:[%s1] sm:$0xff]
  %v130 = vld [vmem:[%s1 + $0x8] sm:$0xff]
  %v131 = vld [vmem:[%s1 + $0x10] sm:$0xff]
  %v132 = vld [vmem:[%s1 + $0x18] sm:$0xff]
  %v133 = vld [vmem:[%s1 + $0x20] sm:$0xff]
  %v134 = vld [vmem:[%s1 + $0x28] sm:$0xff]
  %v135 = vld [vmem:[%s1 + $0x30] sm:$0xff]
  %v136 = vld [vmem:[%s1 + $0x38] sm:$0xff]
  %v137 = vld [vmem:[%s1 + $0x40] sm:$0xff]
  %v138 = vld [vmem:[%s1 + $0x48] sm:$0xff]
  %v139 = vld [vmem:[%s1 + $0x50] sm:$0xff]
  %v140 = vld [vmem:[%s1 + $0x58] sm:$0xff]
  %v141 = vld [vmem:[%s1 + $0x60] sm:$0xff]
  %v142 = vld [vmem:[%s1 + $0x68] sm:$0xff]
  %v143 = vld [vmem:[%s1 + $0x70] sm:$0xff]
  %v144 = vld [vmem:[%s1 + $0x78] sm:$0xff]
  %v145 = vld [vmem:[%s1 + $0x80] sm:$0xff]
  %v146 = vld [vmem:[%s1 + $0x88] sm:$0xff]
  %v147 = vld [vmem:[%s1 + $0x90] sm:$0xff]
  %v148 = vld [vmem:[%s1 + $0x98] sm:$0xff]
  %v149 = vld [vmem:[%s1 + $0xa0] sm:$0xff]
  %v150 = vld [vmem:[%s1 + $0xa8] sm:$0xff]
  %v151 = vld [vmem:[%s1 + $0xb0] sm:$0xff]
  %v152 = vld [vmem:[%s1 + $0xb8] sm:$0xff]
  %v153 = vld [vmem:[%s1 + $0xc0] sm:$0xff]
  %v154 = vld [vmem:[%s1 + $0xc8] sm:$0xff]
  %v155 = vld [vmem:[%s1 + $0xd0] sm:$0xff]
  %v156 = vld [vmem:[%s1 + $0xd8] sm:$0xff]
  %v157 = vld [vmem:[%s1 + $0xe0] sm:$0xff]
  %v158 = vld [vmem:[%s1 + $0xe8] sm:$0xff]
  %v159 = vld [vmem:[%s1 + $0xf0] sm:$0xff]
  %v160 = vld [vmem:[%s1 + $0xf8] sm:$0xff]
  %v161 = vld [vmem:[%s1 + $0x100] sm:$0xff]
  %v162 = vld [vmem:[%s1 + $0x108] sm:$0xff]
  %v163 = vld [vmem:[%s1 + $0x110] sm:$0x33]
  %v164 = vld [vmem:[%s1 + $0x118] sm:$0x33]
  %v261 = vunpack.c.l.b16 %v33
  %v262 = vunpack.c.h.b16 %v33
  %v263 = vunpack.c.l.b16 %v34
  %v264 = vunpack.c.h.b16 %v34
  %v265 = vunpack.c.l.b16 %v35
  %v266 = vunpack.c.h.b16 %v35
  %v267 = vunpack.c.l.b16 %v36
  %v268 = vunpack.c.h.b16 %v36
  %v269 = vunpack.c.l.b16 %v37
  %v270 = vunpack.c.h.b16 %v37
  %v271 = vunpack.c.l.b16 %v38
  %v272 = vunpack.c.h.b16 %v38
  %v273 = vunpack.c.l.b16 %v39
  %v274 = vunpack.c.h.b16 %v39
  %v275 = vunpack.c.l.b16 %v40
  %v276 = vunpack.c.h.b16 %v40
  %v277 = vunpack.c.l.b16 %v41
  %v278 = vunpack.c.h.b16 %v41
  %v279 = vunpack.c.l.b16 %v42
  %v280 = vunpack.c.h.b16 %v42
  %v281 = vunpack.c.l.b16 %v43
  %v282 = vunpack.c.h.b16 %v43
  %v283 = vunpack.c.l.b16 %v44
  %v284 = vunpack.c.h.b16 %v44
  %v285 = vunpack.c.l.b16 %v45
  %v286 = vunpack.c.h.b16 %v45
  %v287 = vunpack.c.l.b16 %v46
  %v288 = vunpack.c.h.b16 %v46
  %v289 = vunpack.c.l.b16 %v47
  %v290 = vunpack.c.h.b16 %v47
  %v291 = vunpack.c.l.b16 %v48
  %v292 = vunpack.c.h.b16 %v48
  %v293 = vunpack.c.l.b16 %v49
  %v294 = vunpack.c.h.b16 %v49
  %v295 = vunpack.c.l.b16 %v50
  %v296 = vunpack.c.h.b16 %v50
  %v297 = vunpack.c.l.b16 %v51
  %v298 = vunpack.c.h.b16 %v51
  %v299 = vunpack.c.l.b16 %v52
  %v300 = vunpack.c.h.b16 %v52
  %v301 = vunpack.c.l.b16 %v53
  %v302 = vunpack.c.h.b16 %v53
  %v303 = vunpack.c.l.b16 %v54
  %v304 = vunpack.c.h.b16 %v54
  %v305 = vunpack.c.l.b16 %v55
  %v306 = vunpack.c.h.b16 %v55
  %v307 = vunpack.c.l.b16 %v56
  %v308 = vunpack.c.h.b16 %v56
  %v309 = vunpack.c.l.b16 %v57
  %v310 = vunpack.c.h.b16 %v57
  %v311 = vunpack.c.l.b16 %v58
  %v312 = vunpack.c.h.b16 %v58
  %v313 = vunpack.c.l.b16 %v59
  %v314 = vunpack.c.h.b16 %v59
  %v315 = vunpack.c.l.b16 %v60
  %v316 = vunpack.c.h.b16 %v60
  %v317 = vunpack.c.l.b16 %v61
  %v318 = vunpack.c.h.b16 %v61
  %v319 = vunpack.c.l.b16 %v62
  %v320 = vunpack.c.h.b16 %v62
  %v321 = vunpack.c.l.b16 %v63
  %v322 = vunpack.c.h.b16 %v63
  %v323 = vunpack.c.l.b16 %v64
  %v324 = vunpack.c.h.b16 %v64
  %v325 = vunpack.c.l.b16 %v65
  %v326 = vunpack.c.h.b16 %v65
  %v327 = vunpack.c.l.b16 %v66
  %v328 = vunpack.c.h.b16 %v66
  %v329 = vunpack.c.l.b16 %v67
  %v330 = vunpack.c.h.b16 %v67
  %v331 = vunpack.c.l.b16 %v68
  %v332 = vunpack.c.h.b16 %v68
  %v333 = vunpack.c.l.b16 %v69
  %v334 = vunpack.c.h.b16 %v69
  %v335 = vunpack.c.l.b16 %v70
  %v336 = vunpack.c.h.b16 %v70
  %v337 = vunpack.c.l.b16 %v71
  %v338 = vunpack.c.h.b16 %v71
  %v339 = vunpack.c.l.b16 %v72
  %v340 = vunpack.c.h.b16 %v72
  %v341 = vunpack.c.l.b16 %v73
  %v342 = vunpack.c.h.b16 %v73
  %v343 = vunpack.c.l.b16 %v74
  %v344 = vunpack.c.h.b16 %v74
  %v345 = vunpack.c.l.b16 %v75
  %v346 = vunpack.c.h.b16 %v75
  %v347 = vunpack.c.l.b16 %v76
  %v348 = vunpack.c.h.b16 %v76
  %v349 = vunpack.c.l.b16 %v77
  %v350 = vunpack.c.h.b16 %v77
  %v351 = vunpack.c.l.b16 %v78
  %v352 = vunpack.c.h.b16 %v78
  %v353 = vunpack.c.l.b16 %v79
  %v354 = vunpack.c.h.b16 %v79
  %v355 = vunpack.c.l.b16 %v80
  %v356 = vunpack.c.h.b16 %v80
  %v357 = vunpack.c.l.b16 %v81
  %v358 = vunpack.c.h.b16 %v81
  %v359 = vunpack.c.l.b16 %v82
  %v360 = vunpack.c.h.b16 %v82
  %v361 = vunpack.c.l.b16 %v83
  %v362 = vunpack.c.h.b16 %v83
  %v363 = vunpack.c.l.b16 %v84
  %v364 = vunpack.c.h.b16 %v84
  %v365 = vunpack.c.l.b16 %v85
  %v366 = vunpack.c.h.b16 %v85
  %v367 = vunpack.c.l.b16 %v86
  %v368 = vunpack.c.h.b16 %v86
  %v369 = vunpack.c.l.b16 %v87
  %v370 = vunpack.c.h.b16 %v87
  %v371 = vunpack.c.l.b16 %v88
  %v372 = vunpack.c.h.b16 %v88
  %v373 = vunpack.c.l.b16 %v89
  %v374 = vunpack.c.h.b16 %v89
  %v375 = vunpack.c.l.b16 %v90
  %v376 = vunpack.c.h.b16 %v90
  %v377 = vunpack.c.l.b16 %v91
  %v378 = vunpack.c.h.b16 %v91
  %v379 = vunpack.c.l.b16 %v92
  %v380 = vunpack.c.h.b16 %v92
  %v381 = vunpack.c.l.b16 %v93
  %v382 = vunpack.c.h.b16 %v93
  %v383 = vunpack.c.l.b16 %v94
  %v384 = vunpack.c.h.b16 %v94
  %v385 = vunpack.c.l.b16 %v95
  %v386 = vunpack.c.h.b16 %v95
  %v387 = vunpack.c.l.b16 %v96
  %v388 = vunpack.c.h.b16 %v96
  %v389 = vunpack.c.l.b16 %v97
  %v390 = vunpack.c.h.b16 %v97
  %v391 = vunpack.c.l.b16 %v98
  %v392 = vunpack.c.h.b16 %v98
  %v393 = vunpack.c.l.b16 %v99
  %v394 = vunpack.c.h.b16 %v99
  %v395 = vunpack.c.l.b16 %v100
  %v396 = vunpack.c.h.b16 %v100
  %v397 = vunpack.c.l.b16 %v101
  %v398 = vunpack.c.h.b16 %v101
  %v399 = vunpack.c.l.b16 %v102
  %v400 = vunpack.c.h.b16 %v102
  %v401 = vunpack.c.l.b16 %v103
  %v402 = vunpack.c.h.b16 %v103
  %v403 = vunpack.c.l.b16 %v104
  %v404 = vunpack.c.h.b16 %v104
  %v405 = vunpack.c.l.b16 %v105
  %v406 = vunpack.c.h.b16 %v105
  %v407 = vunpack.c.l.b16 %v106
  %v408 = vunpack.c.h.b16 %v106
  %v409 = vunpack.c.l.b16 %v107
  %v410 = vunpack.c.h.b16 %v107
  %v411 = vunpack.c.l.b16 %v108
  %v412 = vunpack.c.h.b16 %v108
  %v413 = vunpack.c.l.b16 %v109
  %v414 = vunpack.c.h.b16 %v109
  %v415 = vunpack.c.l.b16 %v110
  %v416 = vunpack.c.h.b16 %v110
  %v417 = vunpack.c.l.b16 %v111
  %v418 = vunpack.c.h.b16 %v111
  %v419 = vunpack.c.l.b16 %v112
  %v420 = vunpack.c.h.b16 %v112
  %v421 = vunpack.c.l.b16 %v113
  %v422 = vunpack.c.h.b16 %v113
  %v423 = vunpack.c.l.b16 %v114
  %v424 = vunpack.c.h.b16 %v114
  %v425 = vunpack.c.l.b16 %v115
  %v426 = vunpack.c.h.b16 %v115
  %v427 = vunpack.c.l.b16 %v116
  %v428 = vunpack.c.h.b16 %v116
  %v429 = vunpack.c.l.b16 %v117
  %v430 = vunpack.c.h.b16 %v117
  %v431 = vunpack.c.l.b16 %v118
  %v432 = vunpack.c.h.b16 %v118
  %v433 = vunpack.c.l.b16 %v119
  %v434 = vunpack.c.h.b16 %v119
  %v435 = vunpack.c.l.b16 %v120
  %v436 = vunpack.c.h.b16 %v120
  %v437 = vunpack.c.l.b16 %v121
  %v438 = vunpack.c.h.b16 %v121
  %v439 = vunpack.c.l.b16 %v122
  %v440 = vunpack.c.h.b16 %v122
  %v441 = vunpack.c.l.b16 %v123
  %v442 = vunpack.c.h.b16 %v123
  %v443 = vunpack.c.l.b16 %v124
  %v444 = vunpack.c.h.b16 %v124
  %v445 = vunpack.c.l.b16 %v125
  %v446 = vunpack.c.h.b16 %v125
  %v447 = vunpack.c.l.b16 %v126
  %v448 = vunpack.c.h.b16 %v126
  %v449 = vunpack.c.l.b16 %v127
  %v450 = vunpack.c.h.b16 %v127
  %v451 = vunpack.c.l.b16 %v128
  %v452 = vunpack.c.h.b16 %v128
  %v453 = vpack.c.b16 %v263, %v261
  %v454 = vpack.c.b16 %v264, %v262
  %v455 = vpack.c.b16 %v267, %v265
  %v456 = vpack.c.b16 %v268, %v266
  %v457 = vpack.c.b16 %v271, %v269
  %v458 = vpack.c.b16 %v272, %v270
  %v459 = vpack.c.b16 %v275, %v273
  %v460 = vpack.c.b16 %v276, %v274
  %v461 = vpack.c.b16 %v279, %v277
  %v462 = vpack.c.b16 %v280, %v278
  %v463 = vpack.c.b16 %v283, %v281
  %v464 = vpack.c.b16 %v284, %v282
  %v465 = vpack.c.b16 %v287, %v285
  %v466 = vpack.c.b16 %v288, %v286
  %v467 = vpack.c.b16 %v291, %v289
  %v468 = vpack.c.b16 %v292, %v290
  %v469 = vpack.c.b16 %v295, %v293
  %v470 = vpack.c.b16 %v296, %v294
  %v471 = vpack.c.b16 %v299, %v297
  %v472 = vpack.c.b16 %v300, %v298
  %v473 = vpack.c.b16 %v303, %v301
  %v474 = vpack.c.b16 %v304, %v302
  %v475 = vpack.c.b16 %v307, %v305
  %v476 = vpack.c.b16 %v308, %v306
  %v477 = vpack.c.b16 %v311, %v309
  %v478 = vpack.c.b16 %v312, %v310
  %v479 = vpack.c.b16 %v315, %v313
  %v480 = vpack.c.b16 %v316, %v314
  %v481 = vpack.c.b16 %v319, %v317
  %v482 = vpack.c.b16 %v320, %v318
  %v483 = vpack.c.b16 %v323, %v321
  %v484 = vpack.c.b16 %v324, %v322
  %v485 = vpack.c.b16 %v327, %v325
  %v486 = vpack.c.b16 %v328, %v326
  %v487 = vpack.c.b16 %v331, %v329
  %v488 = vpack.c.b16 %v332, %v330
  %v489 = vpack.c.b16 %v335, %v333
  %v490 = vpack.c.b16 %v336, %v334
  %v491 = vpack.c.b16 %v339, %v337
  %v492 = vpack.c.b16 %v340, %v338
  %v493 = vpack.c.b16 %v343, %v341
  %v494 = vpack.c.b16 %v344, %v342
  %v495 = vpack.c.b16 %v347, %v345
  %v496 = vpack.c.b16 %v348, %v346
  %v497 = vpack.c.b16 %v351, %v349
  %v498 = vpack.c.b16 %v352, %v350
  %v499 = vpack.c.b16 %v355, %v353
  %v500 = vpack.c.b16 %v356, %v354
  %v501 = vpack.c.b16 %v359, %v357
  %v502 = vpack.c.b16 %v360, %v358
  %v503 = vpack.c.b16 %v363, %v361
  %v504 = vpack.c.b16 %v364, %v362
  %v505 = vpack.c.b16 %v367, %v365
  %v506 = vpack.c.b16 %v368, %v366
  %v507 = vpack.c.b16 %v371, %v369
  %v508 = vpack.c.b16 %v372, %v370
  %v509 = vpack.c.b16 %v375, %v373
  %v510 = vpack.c.b16 %v376, %v374
  %v511 = vpack.c.b16 %v379, %v377
  %v512 = vpack.c.b16 %v380, %v378
  %v513 = vpack.c.b16 %v383, %v381
  %v514 = vpack.c.b16 %v384, %v382
  %v515 = vpack.c.b16 %v387, %v385
  %v516 = vpack.c.b16 %v388, %v386
  %v517 = vpack.c.b16 %v391, %v389
  %v518 = vpack.c.b16 %v392, %v390
  %v519 = vpack.c.b16 %v395, %v393
  %v520 = vpack.c.b16 %v396, %v394
  %v521 = vpack.c.b16 %v399, %v397
  %v522 = vpack.c.b16 %v400, %v398
  %v523 = vpack.c.b16 %v403, %v401
  %v524 = vpack.c.b16 %v404, %v402
  %v525 = vpack.c.b16 %v407, %v405
  %v526 = vpack.c.b16 %v408, %v406
  %v527 = vpack.c.b16 %v411, %v409
  %v528 = vpack.c.b16 %v412, %v410
  %v529 = vpack.c.b16 %v415, %v413
  %v530 = vpack.c.b16 %v416, %v414
  %v531 = vpack.c.b16 %v419, %v417
  %v532 = vpack.c.b16 %v420, %v418
  %v533 = vpack.c.b16 %v423, %v421
  %v534 = vpack.c.b16 %v424, %v422
  %v535 = vpack.c.b16 %v427, %v425
  %v536 = vpack.c.b16 %v428, %v426
  %v537 = vpack.c.b16 %v431, %v429
  %v538 = vpack.c.b16 %v432, %v430
  %v539 = vpack.c.b16 %v435, %v433
  %v540 = vpack.c.b16 %v436, %v434
  %v541 = vpack.c.b16 %v439, %v437
  %v542 = vpack.c.b16 %v440, %v438
  %v543 = vpack.c.b16 %v443, %v441
  %v544 = vpack.c.b16 %v444, %v442
  %v545 = vpack.c.b16 %v447, %v445
  %v546 = vpack.c.b16 %v448, %v446
  %v547 = vpack.c.b16 %v451, %v449
  %v548 = vpack.c.b16 %v452, %v450
  %v633 = vunpack.c.l.b16 %v129
  %v634 = vunpack.c.h.b16 %v129
  %v635 = vunpack.c.l.b16 %v130
  %v636 = vunpack.c.h.b16 %v130
  %v637 = vunpack.c.l.b16 %v131
  %v638 = vunpack.c.h.b16 %v131
  %v639 = vunpack.c.l.b16 %v132
  %v640 = vunpack.c.h.b16 %v132
  %v641 = vunpack.c.l.b16 %v133
  %v642 = vunpack.c.h.b16 %v133
  %v643 = vunpack.c.l.b16 %v134
  %v644 = vunpack.c.h.b16 %v134
  %v645 = vunpack.c.l.b16 %v135
  %v646 = vunpack.c.h.b16 %v135
  %v647 = vunpack.c.l.b16 %v136
  %v648 = vunpack.c.h.b16 %v136
  %v649 = vunpack.c.l.b16 %v137
  %v650 = vunpack.c.h.b16 %v137
  %v651 = vunpack.c.l.b16 %v138
  %v652 = vunpack.c.h.b16 %v138
  %v653 = vunpack.c.l.b16 %v139
  %v654 = vunpack.c.h.b16 %v139
  %v655 = vunpack.c.l.b16 %v140
  %v656 = vunpack.c.h.b16 %v140
  %v657 = vunpack.c.l.b16 %v141
  %v658 = vunpack.c.h.b16 %v141
  %v659 = vunpack.c.l.b16 %v142
  %v660 = vunpack.c.h.b16 %v142
  %v661 = vunpack.c.l.b16 %v143
  %v662 = vunpack.c.h.b16 %v143
  %v663 = vunpack.c.l.b16 %v144
  %v664 = vunpack.c.h.b16 %v144
  %v665 = vunpack.c.l.b16 %v145
  %v666 = vunpack.c.h.b16 %v145
  %v667 = vunpack.c.l.b16 %v146
  %v668 = vunpack.c.h.b16 %v146
  %v669 = vunpack.c.l.b16 %v147
  %v670 = vunpack.c.h.b16 %v147
  %v671 = vunpack.c.l.b16 %v148
  %v672 = vunpack.c.h.b16 %v148
  %v673 = vunpack.c.l.b16 %v149
  %v674 = vunpack.c.h.b16 %v149
  %v675 = vunpack.c.l.b16 %v150
  %v676 = vunpack.c.h.b16 %v150
  %v677 = vunpack.c.l.b16 %v151
  %v678 = vunpack.c.h.b16 %v151
  %v679 = vunpack.c.l.b16 %v152
  %v680 = vunpack.c.h.b16 %v152
  %v681 = vunpack.c.l.b16 %v153
  %v682 = vunpack.c.h.b16 %v153
  %v683 = vunpack.c.l.b16 %v154
  %v684 = vunpack.c.h.b16 %v154
  %v685 = vunpack.c.l.b16 %v155
  %v686 = vunpack.c.h.b16 %v155
  %v687 = vunpack.c.l.b16 %v156
  %v688 = vunpack.c.h.b16 %v156
  %v689 = vunpack.c.l.b16 %v157
  %v690 = vunpack.c.h.b16 %v157
  %v691 = vunpack.c.l.b16 %v158
  %v692 = vunpack.c.h.b16 %v158
  %v693 = vunpack.c.l.b16 %v159
  %v694 = vunpack.c.h.b16 %v159
  %v695 = vunpack.c.l.b16 %v160
  %v696 = vunpack.c.h.b16 %v160
  %v697 = vunpack.c.l.b16 %v161
  %v698 = vunpack.c.h.b16 %v161
  %v699 = vunpack.c.l.b16 %v162
  %v700 = vunpack.c.h.b16 %v162
  %v701 = vunpack.c.l.b16 %v163
  %v702 = vunpack.c.h.b16 %v163
  %v703 = vunpack.c.l.b16 %v164
  %v704 = vunpack.c.h.b16 %v164
  %v705 = vpack.c.b16 %v637, %v633
  %v706 = vpack.c.b16 %v638, %v634
  %v707 = vpack.c.b16 %v639, %v635
  %v708 = vpack.c.b16 %v640, %v636
  %v709 = vpack.c.b16 %v645, %v641
  %v710 = vpack.c.b16 %v646, %v642
  %v711 = vpack.c.b16 %v647, %v643
  %v712 = vpack.c.b16 %v648, %v644
  %v713 = vpack.c.b16 %v653, %v649
  %v714 = vpack.c.b16 %v654, %v650
  %v715 = vpack.c.b16 %v655, %v651
  %v716 = vpack.c.b16 %v656, %v652
  %v717 = vpack.c.b16 %v661, %v657
  %v718 = vpack.c.b16 %v662, %v658
  %v719 = vpack.c.b16 %v663, %v659
  %v720 = vpack.c.b16 %v664, %v660
  %v721 = vpack.c.b16 %v669, %v665
  %v722 = vpack.c.b16 %v670, %v666
  %v723 = vpack.c.b16 %v671, %v667
  %v724 = vpack.c.b16 %v672, %v668
  %v725 = vpack.c.b16 %v677, %v673
  %v726 = vpack.c.b16 %v678, %v674
  %v727 = vpack.c.b16 %v679, %v675
  %v728 = vpack.c.b16 %v680, %v676
  %v729 = vpack.c.b16 %v685, %v681
  %v730 = vpack.c.b16 %v686, %v682
  %v731 = vpack.c.b16 %v687, %v683
  %v732 = vpack.c.b16 %v688, %v684
  %v733 = vpack.c.b16 %v693, %v689
  %v734 = vpack.c.b16 %v694, %v690
  %v735 = vpack.c.b16 %v695, %v691
  %v736 = vpack.c.b16 %v696, %v692
  %v737 = vpack.c.b16 %v701, %v697
  %v738 = vpack.c.b16 %v702, %v698
  %v739 = vpack.c.b16 %v703, %v699
  %v740 = vpack.c.b16 %v704, %v700
  %vm773 = vcmask 97280
  %v775 = vsel %vm773, %v454, 0
  %v778 = vsel %vm773, %v456, 0
  %v781 = vsel %vm773, %v458, 0
  %v784 = vsel %vm773, %v460, 0
  %v787 = vsel %vm773, %v462, 0
  %v790 = vsel %vm773, %v464, 0
  %v793 = vsel %vm773, %v466, 0
  %v796 = vsel %vm773, %v468, 0
  %v799 = vsel %vm773, %v470, 0
  %v802 = vsel %vm773, %v472, 0
  %v805 = vsel %vm773, %v474, 0
  %v808 = vsel %vm773, %v476, 0
  %v811 = vsel %vm773, %v478, 0
  %v814 = vsel %vm773, %v480, 0
  %v817 = vsel %vm773, %v482, 0
  %v820 = vsel %vm773, %v484, 0
  %v823 = vsel %vm773, %v486, 0
  %v826 = vsel %vm773, %v488, 0
  %v829 = vsel %vm773, %v490, 0
  %v832 = vsel %vm773, %v492, 0
  %v835 = vsel %vm773, %v494, 0
  %v838 = vsel %vm773, %v496, 0
  %v841 = vsel %vm773, %v498, 0
  %v844 = vsel %vm773, %v500, 0
  %v847 = vsel %vm773, %v502, 0
  %v850 = vsel %vm773, %v504, 0
  %v853 = vsel %vm773, %v506, 0
  %v856 = vsel %vm773, %v508, 0
  %v859 = vsel %vm773, %v510, 0
  %v862 = vsel %vm773, %v512, 0
  %v865 = vsel %vm773, %v514, 0
  %v868 = vsel %vm773, %v516, 0
  %v871 = vsel %vm773, %v518, 0
  %v874 = vsel %vm773, %v520, 0
  %v877 = vsel %vm773, %v522, 0
  %v880 = vsel %vm773, %v524, 0
  %v883 = vsel %vm773, %v526, 0
  %v886 = vsel %vm773, %v528, 0
  %v889 = vsel %vm773, %v530, 0
  %v892 = vsel %vm773, %v532, 0
  %v895 = vsel %vm773, %v534, 0
  %v898 = vsel %vm773, %v536, 0
  %v901 = vsel %vm773, %v538, 0
  %v904 = vsel %vm773, %v540, 0
  %v907 = vsel %vm773, %v542, 0
  %v910 = vsel %vm773, %v544, 0
  %v913 = vsel %vm773, %v546, 0
  %v916 = vsel %vm773, %v548, 0
  %vm918 = vcmask 1045504
  %v920 = vsel %vm918, %v737, 0
  %v923 = vsel %vm918, %v738, 0
  %v926 = vsel %vm918, %v739, 0
  %v929 = vsel %vm918, %v740, 0
  %931 = vmatpush.bf16.msra.mxu0 %v733
  %932 = vmatpush.bf16.msra.mxu0 %v729
  %933 = vmatpush.bf16.msra.mxu0 %v725
  %934 = vmatpush.bf16.msra.mxu0 %v721
  %935 = vmatpush.bf16.msra.mxu0 %v717
  %936 = vmatpush.bf16.msra.mxu0 %v713
  %937 = vmatpush.bf16.msra.mxu0 %v709
  %938 = vmatpush.bf16.msra.mxu0 %v705
  %939 = vmatmul.bf16.gmra.mxu0 %v453
  %v940 = vpop.f32.mrf.mxu0
  %v941 = vadd.f32 0.0, %v940
  %v942 = vpop.f32.mrf.mxu0
  %v943 = vadd.f32 0.0, %v942
  %944 = vmatmul.bf16.gmra.mxu0 %v455
  %v945 = vpop.f32.mrf.mxu0
  %v946 = vadd.f32 0.0, %v945
  %v947 = vpop.f32.mrf.mxu0
  %v948 = vadd.f32 0.0, %v947
  %949 = vmatmul.bf16.gmra.mxu0 %v457
  %v950 = vpop.f32.mrf.mxu0
  %v951 = vadd.f32 0.0, %v950
  %v952 = vpop.f32.mrf.mxu0
  %v953 = vadd.f32 0.0, %v952
  %954 = vmatmul.bf16.gmra.mxu0 %v459
  %v955 = vpop.f32.mrf.mxu0
  %v956 = vadd.f32 0.0, %v955
  %v957 = vpop.f32.mrf.mxu0
  %v958 = vadd.f32 0.0, %v957
  %959 = vmatmul.bf16.gmra.mxu0 %v461
  %v960 = vpop.f32.mrf.mxu0
  %v961 = vadd.f32 0.0, %v960
  %v962 = vpop.f32.mrf.mxu0
  %v963 = vadd.f32 0.0, %v962
  %964 = vmatmul.bf16.gmra.mxu0 %v463
  %v965 = vpop.f32.mrf.mxu0
  %v966 = vadd.f32 0.0, %v965
  %v967 = vpop.f32.mrf.mxu0
  %v968 = vadd.f32 0.0, %v967
  %969 = vmatmul.bf16.gmra.mxu0 %v465
  %v970 = vpop.f32.mrf.mxu0
  %v971 = vadd.f32 0.0, %v970
  %v972 = vpop.f32.mrf.mxu0
  %v973 = vadd.f32 0.0, %v972
  %974 = vmatmul.bf16.gmra.mxu0 %v467
  %v975 = vpop.f32.mrf.mxu0
  %v976 = vadd.f32 0.0, %v975
  %v977 = vpop.f32.mrf.mxu0
  %v978 = vadd.f32 0.0, %v977
  %979 = vmatmul.bf16.gmra.mxu0 %v469
  %v980 = vpop.f32.mrf.mxu0
  %v981 = vadd.f32 0.0, %v980
  %v982 = vpop.f32.mrf.mxu0
  %v983 = vadd.f32 0.0, %v982
  %984 = vmatmul.bf16.gmra.mxu0 %v471
  %v985 = vpop.f32.mrf.mxu0
  %v986 = vadd.f32 0.0, %v985
  %v987 = vpop.f32.mrf.mxu0
  %v988 = vadd.f32 0.0, %v987
  %989 = vmatmul.bf16.gmra.mxu0 %v473
  %v990 = vpop.f32.mrf.mxu0
  %v991 = vadd.f32 0.0, %v990
  %v992 = vpop.f32.mrf.mxu0
  %v993 = vadd.f32 0.0, %v992
  %994 = vmatmul.bf16.gmra.mxu0 %v475
  %v995 = vpop.f32.mrf.mxu0
  %v996 = vadd.f32 0.0, %v995
  %v997 = vpop.f32.mrf.mxu0
  %v998 = vadd.f32 0.0, %v997
  %999 = vmatmul.bf16.gmra.mxu0 %v477
  %v1000 = vpop.f32.mrf.mxu0
  %v1001 = vadd.f32 0.0, %v1000
  %v1002 = vpop.f32.mrf.mxu0
  %v1003 = vadd.f32 0.0, %v1002
  %1004 = vmatmul.bf16.gmra.mxu0 %v479
  %v1005 = vpop.f32.mrf.mxu0
  %v1006 = vadd.f32 0.0, %v1005
  %v1007 = vpop.f32.mrf.mxu0
  %v1008 = vadd.f32 0.0, %v1007
  %1009 = vmatmul.bf16.gmra.mxu0 %v481
  %v1010 = vpop.f32.mrf.mxu0
  %v1011 = vadd.f32 0.0, %v1010
  %v1012 = vpop.f32.mrf.mxu0
  %v1013 = vadd.f32 0.0, %v1012
  %1014 = vmatmul.bf16.gmra.mxu0 %v483
  %v1015 = vpop.f32.mrf.mxu0
  %v1016 = vadd.f32 0.0, %v1015
  %v1017 = vpop.f32.mrf.mxu0
  %v1018 = vadd.f32 0.0, %v1017
  %1019 = vmatmul.bf16.gmra.mxu0 %v485
  %v1020 = vpop.f32.mrf.mxu0
  %v1021 = vadd.f32 0.0, %v1020
  %v1022 = vpop.f32.mrf.mxu0
  %v1023 = vadd.f32 0.0, %v1022
  %1024 = vmatmul.bf16.gmra.mxu0 %v487
  %v1025 = vpop.f32.mrf.mxu0
  %v1026 = vadd.f32 0.0, %v1025
  %v1027 = vpop.f32.mrf.mxu0
  %v1028 = vadd.f32 0.0, %v1027
  %1029 = vmatmul.bf16.gmra.mxu0 %v489
  %v1030 = vpop.f32.mrf.mxu0
  %v1031 = vadd.f32 0.0, %v1030
  %v1032 = vpop.f32.mrf.mxu0
  %v1033 = vadd.f32 0.0, %v1032
  %1034 = vmatmul.bf16.gmra.mxu0 %v491
  %v1035 = vpop.f32.mrf.mxu0
  %v1036 = vadd.f32 0.0, %v1035
  %v1037 = vpop.f32.mrf.mxu0
  %v1038 = vadd.f32 0.0, %v1037
  %1039 = vmatmul.bf16.gmra.mxu0 %v493
  %v1040 = vpop.f32.mrf.mxu0
  %v1041 = vadd.f32 0.0, %v1040
  %v1042 = vpop.f32.mrf.mxu0
  %v1043 = vadd.f32 0.0, %v1042
  %1044 = vmatmul.bf16.gmra.mxu0 %v495
  %v1045 = vpop.f32.mrf.mxu0
  %v1046 = vadd.f32 0.0, %v1045
  %v1047 = vpop.f32.mrf.mxu0
  %v1048 = vadd.f32 0.0, %v1047
  %1049 = vmatmul.bf16.gmra.mxu0 %v497
  %v1050 = vpop.f32.mrf.mxu0
  %v1051 = vadd.f32 0.0, %v1050
  %v1052 = vpop.f32.mrf.mxu0
  %v1053 = vadd.f32 0.0, %v1052
  %1054 = vmatmul.bf16.gmra.mxu0 %v499
  %v1055 = vpop.f32.mrf.mxu0
  %v1056 = vadd.f32 0.0, %v1055
  %v1057 = vpop.f32.mrf.mxu0
  %v1058 = vadd.f32 0.0, %v1057
  %1059 = vmatmul.bf16.gmra.mxu0 %v501
  %v1060 = vpop.f32.mrf.mxu0
  %v1061 = vadd.f32 0.0, %v1060
  %v1062 = vpop.f32.mrf.mxu0
  %v1063 = vadd.f32 0.0, %v1062
  %1064 = vmatmul.bf16.gmra.mxu0 %v503
  %v1065 = vpop.f32.mrf.mxu0
  %v1066 = vadd.f32 0.0, %v1065
  %v1067 = vpop.f32.mrf.mxu0
  %v1068 = vadd.f32 0.0, %v1067
  %1069 = vmatmul.bf16.gmra.mxu0 %v505
  %v1070 = vpop.f32.mrf.mxu0
  %v1071 = vadd.f32 0.0, %v1070
  %v1072 = vpop.f32.mrf.mxu0
  %v1073 = vadd.f32 0.0, %v1072
  %1074 = vmatmul.bf16.gmra.mxu0 %v507
  %v1075 = vpop.f32.mrf.mxu0
  %v1076 = vadd.f32 0.0, %v1075
  %v1077 = vpop.f32.mrf.mxu0
  %v1078 = vadd.f32 0.0, %v1077
  %1079 = vmatmul.bf16.gmra.mxu0 %v509
  %v1080 = vpop.f32.mrf.mxu0
  %v1081 = vadd.f32 0.0, %v1080
  %v1082 = vpop.f32.mrf.mxu0
  %v1083 = vadd.f32 0.0, %v1082
  %1084 = vmatmul.bf16.gmra.mxu0 %v511
  %v1085 = vpop.f32.mrf.mxu0
  %v1086 = vadd.f32 0.0, %v1085
  %v1087 = vpop.f32.mrf.mxu0
  %v1088 = vadd.f32 0.0, %v1087
  %1089 = vmatmul.bf16.gmra.mxu0 %v513
  %v1090 = vpop.f32.mrf.mxu0
  %v1091 = vadd.f32 0.0, %v1090
  %v1092 = vpop.f32.mrf.mxu0
  %v1093 = vadd.f32 0.0, %v1092
  %1094 = vmatmul.bf16.gmra.mxu0 %v515
  %v1095 = vpop.f32.mrf.mxu0
  %v1096 = vadd.f32 0.0, %v1095
  %v1097 = vpop.f32.mrf.mxu0
  %v1098 = vadd.f32 0.0, %v1097
  %1099 = vmatmul.bf16.gmra.mxu0 %v517
  %v1100 = vpop.f32.mrf.mxu0
  %v1101 = vadd.f32 0.0, %v1100
  %v1102 = vpop.f32.mrf.mxu0
  %v1103 = vadd.f32 0.0, %v1102
  %1104 = vmatmul.bf16.gmra.mxu0 %v519
  %v1105 = vpop.f32.mrf.mxu0
  %v1106 = vadd.f32 0.0, %v1105
  %v1107 = vpop.f32.mrf.mxu0
  %v1108 = vadd.f32 0.0, %v1107
  %1109 = vmatmul.bf16.gmra.mxu0 %v521
  %v1110 = vpop.f32.mrf.mxu0
  %v1111 = vadd.f32 0.0, %v1110
  %v1112 = vpop.f32.mrf.mxu0
  %v1113 = vadd.f32 0.0, %v1112
  %1114 = vmatmul.bf16.gmra.mxu0 %v523
  %v1115 = vpop.f32.mrf.mxu0
  %v1116 = vadd.f32 0.0, %v1115
  %v1117 = vpop.f32.mrf.mxu0
  %v1118 = vadd.f32 0.0, %v1117
  %1119 = vmatmul.bf16.gmra.mxu0 %v525
  %v1120 = vpop.f32.mrf.mxu0
  %v1121 = vadd.f32 0.0, %v1120
  %v1122 = vpop.f32.mrf.mxu0
  %v1123 = vadd.f32 0.0, %v1122
  %1124 = vmatmul.bf16.gmra.mxu0 %v527
  %v1125 = vpop.f32.mrf.mxu0
  %v1126 = vadd.f32 0.0, %v1125
  %v1127 = vpop.f32.mrf.mxu0
  %v1128 = vadd.f32 0.0, %v1127
  %1129 = vmatmul.bf16.gmra.mxu0 %v529
  %v1130 = vpop.f32.mrf.mxu0
  %v1131 = vadd.f32 0.0, %v1130
  %v1132 = vpop.f32.mrf.mxu0
  %v1133 = vadd.f32 0.0, %v1132
  %1134 = vmatmul.bf16.gmra.mxu0 %v531
  %v1135 = vpop.f32.mrf.mxu0
  %v1136 = vadd.f32 0.0, %v1135
  %v1137 = vpop.f32.mrf.mxu0
  %v1138 = vadd.f32 0.0, %v1137
  %1139 = vmatmul.bf16.gmra.mxu0 %v533
  %v1140 = vpop.f32.mrf.mxu0
  %v1141 = vadd.f32 0.0, %v1140
  %v1142 = vpop.f32.mrf.mxu0
  %v1143 = vadd.f32 0.0, %v1142
  %1144 = vmatmul.bf16.gmra.mxu0 %v535
  %v1145 = vpop.f32.mrf.mxu0
  %v1146 = vadd.f32 0.0, %v1145
  %v1147 = vpop.f32.mrf.mxu0
  %v1148 = vadd.f32 0.0, %v1147
  %1149 = vmatmul.bf16.gmra.mxu0 %v537
  %v1150 = vpop.f32.mrf.mxu0
  %v1151 = vadd.f32 0.0, %v1150
  %v1152 = vpop.f32.mrf.mxu0
  %v1153 = vadd.f32 0.0, %v1152
  %1154 = vmatmul.bf16.gmra.mxu0 %v539
  %v1155 = vpop.f32.mrf.mxu0
  %v1156 = vadd.f32 0.0, %v1155
  %v1157 = vpop.f32.mrf.mxu0
  %v1158 = vadd.f32 0.0, %v1157
  %1159 = vmatmul.bf16.gmra.mxu0 %v541
  %v1160 = vpop.f32.mrf.mxu0
  %v1161 = vadd.f32 0.0, %v1160
  %v1162 = vpop.f32.mrf.mxu0
  %v1163 = vadd.f32 0.0, %v1162
  %1164 = vmatmul.bf16.gmra.mxu0 %v543
  %v1165 = vpop.f32.mrf.mxu0
  %v1166 = vadd.f32 0.0, %v1165
  %v1167 = vpop.f32.mrf.mxu0
  %v1168 = vadd.f32 0.0, %v1167
  %1169 = vmatmul.bf16.gmra.mxu0 %v545
  %v1170 = vpop.f32.mrf.mxu0
  %v1171 = vadd.f32 0.0, %v1170
  %v1172 = vpop.f32.mrf.mxu0
  %v1173 = vadd.f32 0.0, %v1172
  %1174 = vmatmul.bf16.gmra.mxu0 %v547
  %v1175 = vpop.f32.mrf.mxu0
  %v1176 = vadd.f32 0.0, %v1175
  %v1177 = vpop.f32.mrf.mxu0
  %v1178 = vadd.f32 0.0, %v1177
  %1179 = vdwg.mxu0
  %1180 = vmatpush.bf16.msra.mxu0 0
  %1181 = vmatpush.bf16.msra.mxu0 0
  %1182 = vmatpush.bf16.msra.mxu0 0
  %1183 = vmatpush.bf16.msra.mxu0 0
  %1184 = vmatpush.bf16.msra.mxu0 0
  %1185 = vmatpush.bf16.msra.mxu0 0
  %1186 = vmatpush.bf16.msra.mxu0 0
  %1187 = vmatpush.bf16.msra.mxu0 %v920
  %1188 = vmatmul.bf16.gmra.mxu0 %v775
  %v1189 = vpop.f32.mrf.mxu0
  %v1190 = vadd.f32 %v941, %v1189
  %v1191 = vpop.f32.mrf.mxu0
  %v1192 = vadd.f32 %v943, %v1191
  %1193 = vmatmul.bf16.gmra.mxu0 %v778
  %v1194 = vpop.f32.mrf.mxu0
  %v1195 = vadd.f32 %v946, %v1194
  %v1196 = vpop.f32.mrf.mxu0
  %v1197 = vadd.f32 %v948, %v1196
  %1198 = vmatmul.bf16.gmra.mxu0 %v781
  %v1199 = vpop.f32.mrf.mxu0
  %v1200 = vadd.f32 %v951, %v1199
  %v1201 = vpop.f32.mrf.mxu0
  %v1202 = vadd.f32 %v953, %v1201
  %1203 = vmatmul.bf16.gmra.mxu0 %v784
  %v1204 = vpop.f32.mrf.mxu0
  %v1205 = vadd.f32 %v956, %v1204
  %v1206 = vpop.f32.mrf.mxu0
  %v1207 = vadd.f32 %v958, %v1206
  %1208 = vmatmul.bf16.gmra.mxu0 %v787
  %v1209 = vpop.f32.mrf.mxu0
  %v1210 = vadd.f32 %v961, %v1209
  %v1211 = vpop.f32.mrf.mxu0
  %v1212 = vadd.f32 %v963, %v1211
  %1213 = vmatmul.bf16.gmra.mxu0 %v790
  %v1214 = vpop.f32.mrf.mxu0
  %v1215 = vadd.f32 %v966, %v1214
  %v1216 = vpop.f32.mrf.mxu0
  %v1217 = vadd.f32 %v968, %v1216
  %1218 = vmatmul.bf16.gmra.mxu0 %v793
  %v1219 = vpop.f32.mrf.mxu0
  %v1220 = vadd.f32 %v971, %v1219
  %v1221 = vpop.f32.mrf.mxu0
  %v1222 = vadd.f32 %v973, %v1221
  %1223 = vmatmul.bf16.gmra.mxu0 %v796
  %v1224 = vpop.f32.mrf.mxu0
  %v1225 = vadd.f32 %v976, %v1224
  %v1226 = vpop.f32.mrf.mxu0
  %v1227 = vadd.f32 %v978, %v1226
  %1228 = vmatmul.bf16.gmra.mxu0 %v799
  %v1229 = vpop.f32.mrf.mxu0
  %v1230 = vadd.f32 %v981, %v1229
  %v1231 = vpop.f32.mrf.mxu0
  %v1232 = vadd.f32 %v983, %v1231
  %1233 = vmatmul.bf16.gmra.mxu0 %v802
  %v1234 = vpop.f32.mrf.mxu0
  %v1235 = vadd.f32 %v986, %v1234
  %v1236 = vpop.f32.mrf.mxu0
  %v1237 = vadd.f32 %v988, %v1236
  %1238 = vmatmul.bf16.gmra.mxu0 %v805
  %v1239 = vpop.f32.mrf.mxu0
  %v1240 = vadd.f32 %v991, %v1239
  %v1241 = vpop.f32.mrf.mxu0
  %v1242 = vadd.f32 %v993, %v1241
  %1243 = vmatmul.bf16.gmra.mxu0 %v808
  %v1244 = vpop.f32.mrf.mxu0
  %v1245 = vadd.f32 %v996, %v1244
  %v1246 = vpop.f32.mrf.mxu0
  %v1247 = vadd.f32 %v998, %v1246
  %1248 = vmatmul.bf16.gmra.mxu0 %v811
  %v1249 = vpop.f32.mrf.mxu0
  %v1250 = vadd.f32 %v1001, %v1249
  %v1251 = vpop.f32.mrf.mxu0
  %v1252 = vadd.f32 %v1003, %v1251
  %1253 = vmatmul.bf16.gmra.mxu0 %v814
  %v1254 = vpop.f32.mrf.mxu0
  %v1255 = vadd.f32 %v1006, %v1254
  %v1256 = vpop.f32.mrf.mxu0
  %v1257 = vadd.f32 %v1008, %v1256
  %1258 = vmatmul.bf16.gmra.mxu0 %v817
  %v1259 = vpop.f32.mrf.mxu0
  %v1260 = vadd.f32 %v1011, %v1259
  %v1261 = vpop.f32.mrf.mxu0
  %v1262 = vadd.f32 %v1013, %v1261
  %1263 = vmatmul.bf16.gmra.mxu0 %v820
  %v1264 = vpop.f32.mrf.mxu0
  %v1265 = vadd.f32 %v1016, %v1264
  %v1266 = vpop.f32.mrf.mxu0
  %v1267 = vadd.f32 %v1018, %v1266
  %1268 = vmatmul.bf16.gmra.mxu0 %v823
  %v1269 = vpop.f32.mrf.mxu0
  %v1270 = vadd.f32 %v1021, %v1269
  %v1271 = vpop.f32.mrf.mxu0
  %v1272 = vadd.f32 %v1023, %v1271
  %1273 = vmatmul.bf16.gmra.mxu0 %v826
  %v1274 = vpop.f32.mrf.mxu0
  %v1275 = vadd.f32 %v1026, %v1274
  %v1276 = vpop.f32.mrf.mxu0
  %v1277 = vadd.f32 %v1028, %v1276
  %1278 = vmatmul.bf16.gmra.mxu0 %v829
  %v1279 = vpop.f32.mrf.mxu0
  %v1280 = vadd.f32 %v1031, %v1279
  %v1281 = vpop.f32.mrf.mxu0
  %v1282 = vadd.f32 %v1033, %v1281
  %1283 = vmatmul.bf16.gmra.mxu0 %v832
  %v1284 = vpop.f32.mrf.mxu0
  %v1285 = vadd.f32 %v1036, %v1284
  %v1286 = vpop.f32.mrf.mxu0
  %v1287 = vadd.f32 %v1038, %v1286
  %1288 = vmatmul.bf16.gmra.mxu0 %v835
  %v1289 = vpop.f32.mrf.mxu0
  %v1290 = vadd.f32 %v1041, %v1289
  %v1291 = vpop.f32.mrf.mxu0
  %v1292 = vadd.f32 %v1043, %v1291
  %1293 = vmatmul.bf16.gmra.mxu0 %v838
  %v1294 = vpop.f32.mrf.mxu0
  %v1295 = vadd.f32 %v1046, %v1294
  %v1296 = vpop.f32.mrf.mxu0
  %v1297 = vadd.f32 %v1048, %v1296
  %1298 = vmatmul.bf16.gmra.mxu0 %v841
  %v1299 = vpop.f32.mrf.mxu0
  %v1300 = vadd.f32 %v1051, %v1299
  %v1301 = vpop.f32.mrf.mxu0
  %v1302 = vadd.f32 %v1053, %v1301
  %1303 = vmatmul.bf16.gmra.mxu0 %v844
  %v1304 = vpop.f32.mrf.mxu0
  %v1305 = vadd.f32 %v1056, %v1304
  %v1306 = vpop.f32.mrf.mxu0
  %v1307 = vadd.f32 %v1058, %v1306
  %1308 = vmatmul.bf16.gmra.mxu0 %v847
  %v1309 = vpop.f32.mrf.mxu0
  %v1310 = vadd.f32 %v1061, %v1309
  %v1311 = vpop.f32.mrf.mxu0
  %v1312 = vadd.f32 %v1063, %v1311
  %1313 = vmatmul.bf16.gmra.mxu0 %v850
  %v1314 = vpop.f32.mrf.mxu0
  %v1315 = vadd.f32 %v1066, %v1314
  %v1316 = vpop.f32.mrf.mxu0
  %v1317 = vadd.f32 %v1068, %v1316
  %1318 = vmatmul.bf16.gmra.mxu0 %v853
  %v1319 = vpop.f32.mrf.mxu0
  %v1320 = vadd.f32 %v1071, %v1319
  %v1321 = vpop.f32.mrf.mxu0
  %v1322 = vadd.f32 %v1073, %v1321
  %1323 = vmatmul.bf16.gmra.mxu0 %v856
  %v1324 = vpop.f32.mrf.mxu0
  %v1325 = vadd.f32 %v1076, %v1324
  %v1326 = vpop.f32.mrf.mxu0
  %v1327 = vadd.f32 %v1078, %v1326
  %1328 = vmatmul.bf16.gmra.mxu0 %v859
  %v1329 = vpop.f32.mrf.mxu0
  %v1330 = vadd.f32 %v1081, %v1329
  %v1331 = vpop.f32.mrf.mxu0
  %v1332 = vadd.f32 %v1083, %v1331
  %1333 = vmatmul.bf16.gmra.mxu0 %v862
  %v1334 = vpop.f32.mrf.mxu0
  %v1335 = vadd.f32 %v1086, %v1334
  %v1336 = vpop.f32.mrf.mxu0
  %v1337 = vadd.f32 %v1088, %v1336
  %1338 = vmatmul.bf16.gmra.mxu0 %v865
  %v1339 = vpop.f32.mrf.mxu0
  %v1340 = vadd.f32 %v1091, %v1339
  %v1341 = vpop.f32.mrf.mxu0
  %v1342 = vadd.f32 %v1093, %v1341
  %1343 = vmatmul.bf16.gmra.mxu0 %v868
  %v1344 = vpop.f32.mrf.mxu0
  %v1345 = vadd.f32 %v1096, %v1344
  %v1346 = vpop.f32.mrf.mxu0
  %v1347 = vadd.f32 %v1098, %v1346
  %1348 = vmatmul.bf16.gmra.mxu0 %v871
  %v1349 = vpop.f32.mrf.mxu0
  %v1350 = vadd.f32 %v1101, %v1349
  %v1351 = vpop.f32.mrf.mxu0
  %v1352 = vadd.f32 %v1103, %v1351
  %1353 = vmatmul.bf16.gmra.mxu0 %v874
  %v1354 = vpop.f32.mrf.mxu0
  %v1355 = vadd.f32 %v1106, %v1354
  %v1356 = vpop.f32.mrf.mxu0
  %v1357 = vadd.f32 %v1108, %v1356
  %1358 = vmatmul.bf16.gmra.mxu0 %v877
  %v1359 = vpop.f32.mrf.mxu0
  %v1360 = vadd.f32 %v1111, %v1359
  %v1361 = vpop.f32.mrf.mxu0
  %v1362 = vadd.f32 %v1113, %v1361
  %1363 = vmatmul.bf16.gmra.mxu0 %v880
  %v1364 = vpop.f32.mrf.mxu0
  %v1365 = vadd.f32 %v1116, %v1364
  %v1366 = vpop.f32.mrf.mxu0
  %v1367 = vadd.f32 %v1118, %v1366
  %1368 = vmatmul.bf16.gmra.mxu0 %v883
  %v1369 = vpop.f32.mrf.mxu0
  %v1370 = vadd.f32 %v1121, %v1369
  %v1371 = vpop.f32.mrf.mxu0
  %v1372 = vadd.f32 %v1123, %v1371
  %1373 = vmatmul.bf16.gmra.mxu0 %v886
  %v1374 = vpop.f32.mrf.mxu0
  %v1375 = vadd.f32 %v1126, %v1374
  %v1376 = vpop.f32.mrf.mxu0
  %v1377 = vadd.f32 %v1128, %v1376
  %1378 = vmatmul.bf16.gmra.mxu0 %v889
  %v1379 = vpop.f32.mrf.mxu0
  %v1380 = vadd.f32 %v1131, %v1379
  %v1381 = vpop.f32.mrf.mxu0
  %v1382 = vadd.f32 %v1133, %v1381
  %1383 = vmatmul.bf16.gmra.mxu0 %v892
  %v1384 = vpop.f32.mrf.mxu0
  %v1385 = vadd.f32 %v1136, %v1384
  %v1386 = vpop.f32.mrf.mxu0
  %v1387 = vadd.f32 %v1138, %v1386
  %1388 = vmatmul.bf16.gmra.mxu0 %v895
  %v1389 = vpop.f32.mrf.mxu0
  %v1390 = vadd.f32 %v1141, %v1389
  %v1391 = vpop.f32.mrf.mxu0
  %v1392 = vadd.f32 %v1143, %v1391
  %1393 = vmatmul.bf16.gmra.mxu0 %v898
  %v1394 = vpop.f32.mrf.mxu0
  %v1395 = vadd.f32 %v1146, %v1394
  %v1396 = vpop.f32.mrf.mxu0
  %v1397 = vadd.f32 %v1148, %v1396
  %1398 = vmatmul.bf16.gmra.mxu0 %v901
  %v1399 = vpop.f32.mrf.mxu0
  %v1400 = vadd.f32 %v1151, %v1399
  %v1401 = vpop.f32.mrf.mxu0
  %v1402 = vadd.f32 %v1153, %v1401
  %1403 = vmatmul.bf16.gmra.mxu0 %v904
  %v1404 = vpop.f32.mrf.mxu0
  %v1405 = vadd.f32 %v1156, %v1404
  %v1406 = vpop.f32.mrf.mxu0
  %v1407 = vadd.f32 %v1158, %v1406
  %1408 = vmatmul.bf16.gmra.mxu0 %v907
  %v1409 = vpop.f32.mrf.mxu0
  %v1410 = vadd.f32 %v1161, %v1409
  %v1411 = vpop.f32.mrf.mxu0
  %v1412 = vadd.f32 %v1163, %v1411
  %1413 = vmatmul.bf16.gmra.mxu0 %v910
  %v1414 = vpop.f32.mrf.mxu0
  %v1415 = vadd.f32 %v1166, %v1414
  %v1416 = vpop.f32.mrf.mxu0
  %v1417 = vadd.f32 %v1168, %v1416
  %1418 = vmatmul.bf16.gmra.mxu0 %v913
  %v1419 = vpop.f32.mrf.mxu0
  %v1420 = vadd.f32 %v1171, %v1419
  %v1421 = vpop.f32.mrf.mxu0
  %v1422 = vadd.f32 %v1173, %v1421
  %1423 = vmatmul.bf16.gmra.mxu0 %v916
  %v1424 = vpop.f32.mrf.mxu0
  %v1425 = vadd.f32 %v1176, %v1424
  %v1426 = vpop.f32.mrf.mxu0
  %v1427 = vadd.f32 %v1178, %v1426
  %1428 = vdwg.mxu0
  %1429 = vmatpush.bf16.msra.mxu0 %v734
  %1430 = vmatpush.bf16.msra.mxu0 %v730
  %1431 = vmatpush.bf16.msra.mxu0 %v726
  %1432 = vmatpush.bf16.msra.mxu0 %v722
  %1433 = vmatpush.bf16.msra.mxu0 %v718
  %1434 = vmatpush.bf16.msra.mxu0 %v714
  %1435 = vmatpush.bf16.msra.mxu0 %v710
  %1436 = vmatpush.bf16.msra.mxu0 %v706
  %1437 = vmatmul.bf16.gmra.mxu0 %v453
  %v1438 = vpop.f32.mrf.mxu0
  %v1439 = vadd.f32 0.0, %v1438
  %v1440 = vpop.f32.mrf.mxu0
  %v1441 = vadd.f32 0.0, %v1440
  %1442 = vmatmul.bf16.gmra.mxu0 %v455
  %v1443 = vpop.f32.mrf.mxu0
  %v1444 = vadd.f32 0.0, %v1443
  %v1445 = vpop.f32.mrf.mxu0
  %v1446 = vadd.f32 0.0, %v1445
  %1447 = vmatmul.bf16.gmra.mxu0 %v457
  %v1448 = vpop.f32.mrf.mxu0
  %v1449 = vadd.f32 0.0, %v1448
  %v1450 = vpop.f32.mrf.mxu0
  %v1451 = vadd.f32 0.0, %v1450
  %1452 = vmatmul.bf16.gmra.mxu0 %v459
  %v1453 = vpop.f32.mrf.mxu0
  %v1454 = vadd.f32 0.0, %v1453
  %v1455 = vpop.f32.mrf.mxu0
  %v1456 = vadd.f32 0.0, %v1455
  %1457 = vmatmul.bf16.gmra.mxu0 %v461
  %v1458 = vpop.f32.mrf.mxu0
  %v1459 = vadd.f32 0.0, %v1458
  %v1460 = vpop.f32.mrf.mxu0
  %v1461 = vadd.f32 0.0, %v1460
  %1462 = vmatmul.bf16.gmra.mxu0 %v463
  %v1463 = vpop.f32.mrf.mxu0
  %v1464 = vadd.f32 0.0, %v1463
  %v1465 = vpop.f32.mrf.mxu0
  %v1466 = vadd.f32 0.0, %v1465
  %1467 = vmatmul.bf16.gmra.mxu0 %v465
  %v1468 = vpop.f32.mrf.mxu0
  %v1469 = vadd.f32 0.0, %v1468
  %v1470 = vpop.f32.mrf.mxu0
  %v1471 = vadd.f32 0.0, %v1470
  %1472 = vmatmul.bf16.gmra.mxu0 %v467
  %v1473 = vpop.f32.mrf.mxu0
  %v1474 = vadd.f32 0.0, %v1473
  %v1475 = vpop.f32.mrf.mxu0
  %v1476 = vadd.f32 0.0, %v1475
  %1477 = vmatmul.bf16.gmra.mxu0 %v469
  %v1478 = vpop.f32.mrf.mxu0
  %v1479 = vadd.f32 0.0, %v1478
  %v1480 = vpop.f32.mrf.mxu0
  %v1481 = vadd.f32 0.0, %v1480
  %1482 = vmatmul.bf16.gmra.mxu0 %v471
  %v1483 = vpop.f32.mrf.mxu0
  %v1484 = vadd.f32 0.0, %v1483
  %v1485 = vpop.f32.mrf.mxu0
  %v1486 = vadd.f32 0.0, %v1485
  %1487 = vmatmul.bf16.gmra.mxu0 %v473
  %v1488 = vpop.f32.mrf.mxu0
  %v1489 = vadd.f32 0.0, %v1488
  %v1490 = vpop.f32.mrf.mxu0
  %v1491 = vadd.f32 0.0, %v1490
  %1492 = vmatmul.bf16.gmra.mxu0 %v475
  %v1493 = vpop.f32.mrf.mxu0
  %v1494 = vadd.f32 0.0, %v1493
  %v1495 = vpop.f32.mrf.mxu0
  %v1496 = vadd.f32 0.0, %v1495
  %1497 = vmatmul.bf16.gmra.mxu0 %v477
  %v1498 = vpop.f32.mrf.mxu0
  %v1499 = vadd.f32 0.0, %v1498
  %v1500 = vpop.f32.mrf.mxu0
  %v1501 = vadd.f32 0.0, %v1500
  %1502 = vmatmul.bf16.gmra.mxu0 %v479
  %v1503 = vpop.f32.mrf.mxu0
  %v1504 = vadd.f32 0.0, %v1503
  %v1505 = vpop.f32.mrf.mxu0
  %v1506 = vadd.f32 0.0, %v1505
  %1507 = vmatmul.bf16.gmra.mxu0 %v481
  %v1508 = vpop.f32.mrf.mxu0
  %v1509 = vadd.f32 0.0, %v1508
  %v1510 = vpop.f32.mrf.mxu0
  %v1511 = vadd.f32 0.0, %v1510
  %1512 = vmatmul.bf16.gmra.mxu0 %v483
  %v1513 = vpop.f32.mrf.mxu0
  %v1514 = vadd.f32 0.0, %v1513
  %v1515 = vpop.f32.mrf.mxu0
  %v1516 = vadd.f32 0.0, %v1515
  %1517 = vmatmul.bf16.gmra.mxu0 %v485
  %v1518 = vpop.f32.mrf.mxu0
  %v1519 = vadd.f32 0.0, %v1518
  %v1520 = vpop.f32.mrf.mxu0
  %v1521 = vadd.f32 0.0, %v1520
  %1522 = vmatmul.bf16.gmra.mxu0 %v487
  %v1523 = vpop.f32.mrf.mxu0
  %v1524 = vadd.f32 0.0, %v1523
  %v1525 = vpop.f32.mrf.mxu0
  %v1526 = vadd.f32 0.0, %v1525
  %1527 = vmatmul.bf16.gmra.mxu0 %v489
  %v1528 = vpop.f32.mrf.mxu0
  %v1529 = vadd.f32 0.0, %v1528
  %v1530 = vpop.f32.mrf.mxu0
  %v1531 = vadd.f32 0.0, %v1530
  %1532 = vmatmul.bf16.gmra.mxu0 %v491
  %v1533 = vpop.f32.mrf.mxu0
  %v1534 = vadd.f32 0.0, %v1533
  %v1535 = vpop.f32.mrf.mxu0
  %v1536 = vadd.f32 0.0, %v1535
  %1537 = vmatmul.bf16.gmra.mxu0 %v493
  %v1538 = vpop.f32.mrf.mxu0
  %v1539 = vadd.f32 0.0, %v1538
  %v1540 = vpop.f32.mrf.mxu0
  %v1541 = vadd.f32 0.0, %v1540
  %1542 = vmatmul.bf16.gmra.mxu0 %v495
  %v1543 = vpop.f32.mrf.mxu0
  %v1544 = vadd.f32 0.0, %v1543
  %v1545 = vpop.f32.mrf.mxu0
  %v1546 = vadd.f32 0.0, %v1545
  %1547 = vmatmul.bf16.gmra.mxu0 %v497
  %v1548 = vpop.f32.mrf.mxu0
  %v1549 = vadd.f32 0.0, %v1548
  %v1550 = vpop.f32.mrf.mxu0
  %v1551 = vadd.f32 0.0, %v1550
  %1552 = vmatmul.bf16.gmra.mxu0 %v499
  %v1553 = vpop.f32.mrf.mxu0
  %v1554 = vadd.f32 0.0, %v1553
  %v1555 = vpop.f32.mrf.mxu0
  %v1556 = vadd.f32 0.0, %v1555
  %1557 = vmatmul.bf16.gmra.mxu0 %v501
  %v1558 = vpop.f32.mrf.mxu0
  %v1559 = vadd.f32 0.0, %v1558
  %v1560 = vpop.f32.mrf.mxu0
  %v1561 = vadd.f32 0.0, %v1560
  %1562 = vmatmul.bf16.gmra.mxu0 %v503
  %v1563 = vpop.f32.mrf.mxu0
  %v1564 = vadd.f32 0.0, %v1563
  %v1565 = vpop.f32.mrf.mxu0
  %v1566 = vadd.f32 0.0, %v1565
  %1567 = vmatmul.bf16.gmra.mxu0 %v505
  %v1568 = vpop.f32.mrf.mxu0
  %v1569 = vadd.f32 0.0, %v1568
  %v1570 = vpop.f32.mrf.mxu0
  %v1571 = vadd.f32 0.0, %v1570
  %1572 = vmatmul.bf16.gmra.mxu0 %v507
  %v1573 = vpop.f32.mrf.mxu0
  %v1574 = vadd.f32 0.0, %v1573
  %v1575 = vpop.f32.mrf.mxu0
  %v1576 = vadd.f32 0.0, %v1575
  %1577 = vmatmul.bf16.gmra.mxu0 %v509
  %v1578 = vpop.f32.mrf.mxu0
  %v1579 = vadd.f32 0.0, %v1578
  %v1580 = vpop.f32.mrf.mxu0
  %v1581 = vadd.f32 0.0, %v1580
  %1582 = vmatmul.bf16.gmra.mxu0 %v511
  %v1583 = vpop.f32.mrf.mxu0
  %v1584 = vadd.f32 0.0, %v1583
  %v1585 = vpop.f32.mrf.mxu0
  %v1586 = vadd.f32 0.0, %v1585
  %1587 = vmatmul.bf16.gmra.mxu0 %v513
  %v1588 = vpop.f32.mrf.mxu0
  %v1589 = vadd.f32 0.0, %v1588
  %v1590 = vpop.f32.mrf.mxu0
  %v1591 = vadd.f32 0.0, %v1590
  %1592 = vmatmul.bf16.gmra.mxu0 %v515
  %v1593 = vpop.f32.mrf.mxu0
  %v1594 = vadd.f32 0.0, %v1593
  %v1595 = vpop.f32.mrf.mxu0
  %v1596 = vadd.f32 0.0, %v1595
  %1597 = vmatmul.bf16.gmra.mxu0 %v517
  %v1598 = vpop.f32.mrf.mxu0
  %v1599 = vadd.f32 0.0, %v1598
  %v1600 = vpop.f32.mrf.mxu0
  %v1601 = vadd.f32 0.0, %v1600
  %1602 = vmatmul.bf16.gmra.mxu0 %v519
  %v1603 = vpop.f32.mrf.mxu0
  %v1604 = vadd.f32 0.0, %v1603
  %v1605 = vpop.f32.mrf.mxu0
  %v1606 = vadd.f32 0.0, %v1605
  %1607 = vmatmul.bf16.gmra.mxu0 %v521
  %v1608 = vpop.f32.mrf.mxu0
  %v1609 = vadd.f32 0.0, %v1608
  %v1610 = vpop.f32.mrf.mxu0
  %v1611 = vadd.f32 0.0, %v1610
  %1612 = vmatmul.bf16.gmra.mxu0 %v523
  %v1613 = vpop.f32.mrf.mxu0
  %v1614 = vadd.f32 0.0, %v1613
  %v1615 = vpop.f32.mrf.mxu0
  %v1616 = vadd.f32 0.0, %v1615
  %1617 = vmatmul.bf16.gmra.mxu0 %v525
  %v1618 = vpop.f32.mrf.mxu0
  %v1619 = vadd.f32 0.0, %v1618
  %v1620 = vpop.f32.mrf.mxu0
  %v1621 = vadd.f32 0.0, %v1620
  %1622 = vmatmul.bf16.gmra.mxu0 %v527
  %v1623 = vpop.f32.mrf.mxu0
  %v1624 = vadd.f32 0.0, %v1623
  %v1625 = vpop.f32.mrf.mxu0
  %v1626 = vadd.f32 0.0, %v1625
  %1627 = vmatmul.bf16.gmra.mxu0 %v529
  %v1628 = vpop.f32.mrf.mxu0
  %v1629 = vadd.f32 0.0, %v1628
  %v1630 = vpop.f32.mrf.mxu0
  %v1631 = vadd.f32 0.0, %v1630
  %1632 = vmatmul.bf16.gmra.mxu0 %v531
  %v1633 = vpop.f32.mrf.mxu0
  %v1634 = vadd.f32 0.0, %v1633
  %v1635 = vpop.f32.mrf.mxu0
  %v1636 = vadd.f32 0.0, %v1635
  %1637 = vmatmul.bf16.gmra.mxu0 %v533
  %v1638 = vpop.f32.mrf.mxu0
  %v1639 = vadd.f32 0.0, %v1638
  %v1640 = vpop.f32.mrf.mxu0
  %v1641 = vadd.f32 0.0, %v1640
  %1642 = vmatmul.bf16.gmra.mxu0 %v535
  %v1643 = vpop.f32.mrf.mxu0
  %v1644 = vadd.f32 0.0, %v1643
  %v1645 = vpop.f32.mrf.mxu0
  %v1646 = vadd.f32 0.0, %v1645
  %1647 = vmatmul.bf16.gmra.mxu0 %v537
  %v1648 = vpop.f32.mrf.mxu0
  %v1649 = vadd.f32 0.0, %v1648
  %v1650 = vpop.f32.mrf.mxu0
  %v1651 = vadd.f32 0.0, %v1650
  %1652 = vmatmul.bf16.gmra.mxu0 %v539
  %v1653 = vpop.f32.mrf.mxu0
  %v1654 = vadd.f32 0.0, %v1653
  %v1655 = vpop.f32.mrf.mxu0
  %v1656 = vadd.f32 0.0, %v1655
  %1657 = vmatmul.bf16.gmra.mxu0 %v541
  %v1658 = vpop.f32.mrf.mxu0
  %v1659 = vadd.f32 0.0, %v1658
  %v1660 = vpop.f32.mrf.mxu0
  %v1661 = vadd.f32 0.0, %v1660
  %1662 = vmatmul.bf16.gmra.mxu0 %v543
  %v1663 = vpop.f32.mrf.mxu0
  %v1664 = vadd.f32 0.0, %v1663
  %v1665 = vpop.f32.mrf.mxu0
  %v1666 = vadd.f32 0.0, %v1665
  %1667 = vmatmul.bf16.gmra.mxu0 %v545
  %v1668 = vpop.f32.mrf.mxu0
  %v1669 = vadd.f32 0.0, %v1668
  %v1670 = vpop.f32.mrf.mxu0
  %v1671 = vadd.f32 0.0, %v1670
  %1672 = vmatmul.bf16.gmra.mxu0 %v547
  %v1673 = vpop.f32.mrf.mxu0
  %v1674 = vadd.f32 0.0, %v1673
  %v1675 = vpop.f32.mrf.mxu0
  %v1676 = vadd.f32 0.0, %v1675
  %1677 = vdwg.mxu0
  %1678 = vmatpush.bf16.msra.mxu0 0
  %1679 = vmatpush.bf16.msra.mxu0 0
  %1680 = vmatpush.bf16.msra.mxu0 0
  %1681 = vmatpush.bf16.msra.mxu0 0
  %1682 = vmatpush.bf16.msra.mxu0 0
  %1683 = vmatpush.bf16.msra.mxu0 0
  %1684 = vmatpush.bf16.msra.mxu0 0
  %1685 = vmatpush.bf16.msra.mxu0 %v923
  %1686 = vmatmul.bf16.gmra.mxu0 %v775
  %v1687 = vpop.f32.mrf.mxu0
  %v1688 = vadd.f32 %v1439, %v1687
  %v1689 = vpop.f32.mrf.mxu0
  %v1690 = vadd.f32 %v1441, %v1689
  %1691 = vmatmul.bf16.gmra.mxu0 %v778
  %v1692 = vpop.f32.mrf.mxu0
  %v1693 = vadd.f32 %v1444, %v1692
  %v1694 = vpop.f32.mrf.mxu0
  %v1695 = vadd.f32 %v1446, %v1694
  %1696 = vmatmul.bf16.gmra.mxu0 %v781
  %v1697 = vpop.f32.mrf.mxu0
  %v1698 = vadd.f32 %v1449, %v1697
  %v1699 = vpop.f32.mrf.mxu0
  %v1700 = vadd.f32 %v1451, %v1699
  %1701 = vmatmul.bf16.gmra.mxu0 %v784
  %v1702 = vpop.f32.mrf.mxu0
  %v1703 = vadd.f32 %v1454, %v1702
  %v1704 = vpop.f32.mrf.mxu0
  %v1705 = vadd.f32 %v1456, %v1704
  %1706 = vmatmul.bf16.gmra.mxu0 %v787
  %v1707 = vpop.f32.mrf.mxu0
  %v1708 = vadd.f32 %v1459, %v1707
  %v1709 = vpop.f32.mrf.mxu0
  %v1710 = vadd.f32 %v1461, %v1709
  %1711 = vmatmul.bf16.gmra.mxu0 %v790
  %v1712 = vpop.f32.mrf.mxu0
  %v1713 = vadd.f32 %v1464, %v1712
  %v1714 = vpop.f32.mrf.mxu0
  %v1715 = vadd.f32 %v1466, %v1714
  %1716 = vmatmul.bf16.gmra.mxu0 %v793
  %v1717 = vpop.f32.mrf.mxu0
  %v1718 = vadd.f32 %v1469, %v1717
  %v1719 = vpop.f32.mrf.mxu0
  %v1720 = vadd.f32 %v1471, %v1719
  %1721 = vmatmul.bf16.gmra.mxu0 %v796
  %v1722 = vpop.f32.mrf.mxu0
  %v1723 = vadd.f32 %v1474, %v1722
  %v1724 = vpop.f32.mrf.mxu0
  %v1725 = vadd.f32 %v1476, %v1724
  %1726 = vmatmul.bf16.gmra.mxu0 %v799
  %v1727 = vpop.f32.mrf.mxu0
  %v1728 = vadd.f32 %v1479, %v1727
  %v1729 = vpop.f32.mrf.mxu0
  %v1730 = vadd.f32 %v1481, %v1729
  %1731 = vmatmul.bf16.gmra.mxu0 %v802
  %v1732 = vpop.f32.mrf.mxu0
  %v1733 = vadd.f32 %v1484, %v1732
  %v1734 = vpop.f32.mrf.mxu0
  %v1735 = vadd.f32 %v1486, %v1734
  %1736 = vmatmul.bf16.gmra.mxu0 %v805
  %v1737 = vpop.f32.mrf.mxu0
  %v1738 = vadd.f32 %v1489, %v1737
  %v1739 = vpop.f32.mrf.mxu0
  %v1740 = vadd.f32 %v1491, %v1739
  %1741 = vmatmul.bf16.gmra.mxu0 %v808
  %v1742 = vpop.f32.mrf.mxu0
  %v1743 = vadd.f32 %v1494, %v1742
  %v1744 = vpop.f32.mrf.mxu0
  %v1745 = vadd.f32 %v1496, %v1744
  %1746 = vmatmul.bf16.gmra.mxu0 %v811
  %v1747 = vpop.f32.mrf.mxu0
  %v1748 = vadd.f32 %v1499, %v1747
  %v1749 = vpop.f32.mrf.mxu0
  %v1750 = vadd.f32 %v1501, %v1749
  %1751 = vmatmul.bf16.gmra.mxu0 %v814
  %v1752 = vpop.f32.mrf.mxu0
  %v1753 = vadd.f32 %v1504, %v1752
  %v1754 = vpop.f32.mrf.mxu0
  %v1755 = vadd.f32 %v1506, %v1754
  %1756 = vmatmul.bf16.gmra.mxu0 %v817
  %v1757 = vpop.f32.mrf.mxu0
  %v1758 = vadd.f32 %v1509, %v1757
  %v1759 = vpop.f32.mrf.mxu0
  %v1760 = vadd.f32 %v1511, %v1759
  %1761 = vmatmul.bf16.gmra.mxu0 %v820
  %v1762 = vpop.f32.mrf.mxu0
  %v1763 = vadd.f32 %v1514, %v1762
  %v1764 = vpop.f32.mrf.mxu0
  %v1765 = vadd.f32 %v1516, %v1764
  %1766 = vmatmul.bf16.gmra.mxu0 %v823
  %v1767 = vpop.f32.mrf.mxu0
  %v1768 = vadd.f32 %v1519, %v1767
  %v1769 = vpop.f32.mrf.mxu0
  %v1770 = vadd.f32 %v1521, %v1769
  %1771 = vmatmul.bf16.gmra.mxu0 %v826
  %v1772 = vpop.f32.mrf.mxu0
  %v1773 = vadd.f32 %v1524, %v1772
  %v1774 = vpop.f32.mrf.mxu0
  %v1775 = vadd.f32 %v1526, %v1774
  %1776 = vmatmul.bf16.gmra.mxu0 %v829
  %v1777 = vpop.f32.mrf.mxu0
  %v1778 = vadd.f32 %v1529, %v1777
  %v1779 = vpop.f32.mrf.mxu0
  %v1780 = vadd.f32 %v1531, %v1779
  %1781 = vmatmul.bf16.gmra.mxu0 %v832
  %v1782 = vpop.f32.mrf.mxu0
  %v1783 = vadd.f32 %v1534, %v1782
  %v1784 = vpop.f32.mrf.mxu0
  %v1785 = vadd.f32 %v1536, %v1784
  %1786 = vmatmul.bf16.gmra.mxu0 %v835
  %v1787 = vpop.f32.mrf.mxu0
  %v1788 = vadd.f32 %v1539, %v1787
  %v1789 = vpop.f32.mrf.mxu0
  %v1790 = vadd.f32 %v1541, %v1789
  %1791 = vmatmul.bf16.gmra.mxu0 %v838
  %v1792 = vpop.f32.mrf.mxu0
  %v1793 = vadd.f32 %v1544, %v1792
  %v1794 = vpop.f32.mrf.mxu0
  %v1795 = vadd.f32 %v1546, %v1794
  %1796 = vmatmul.bf16.gmra.mxu0 %v841
  %v1797 = vpop.f32.mrf.mxu0
  %v1798 = vadd.f32 %v1549, %v1797
  %v1799 = vpop.f32.mrf.mxu0
  %v1800 = vadd.f32 %v1551, %v1799
  %1801 = vmatmul.bf16.gmra.mxu0 %v844
  %v1802 = vpop.f32.mrf.mxu0
  %v1803 = vadd.f32 %v1554, %v1802
  %v1804 = vpop.f32.mrf.mxu0
  %v1805 = vadd.f32 %v1556, %v1804
  %1806 = vmatmul.bf16.gmra.mxu0 %v847
  %v1807 = vpop.f32.mrf.mxu0
  %v1808 = vadd.f32 %v1559, %v1807
  %v1809 = vpop.f32.mrf.mxu0
  %v1810 = vadd.f32 %v1561, %v1809
  %1811 = vmatmul.bf16.gmra.mxu0 %v850
  %v1812 = vpop.f32.mrf.mxu0
  %v1813 = vadd.f32 %v1564, %v1812
  %v1814 = vpop.f32.mrf.mxu0
  %v1815 = vadd.f32 %v1566, %v1814
  %1816 = vmatmul.bf16.gmra.mxu0 %v853
  %v1817 = vpop.f32.mrf.mxu0
  %v1818 = vadd.f32 %v1569, %v1817
  %v1819 = vpop.f32.mrf.mxu0
  %v1820 = vadd.f32 %v1571, %v1819
  %1821 = vmatmul.bf16.gmra.mxu0 %v856
  %v1822 = vpop.f32.mrf.mxu0
  %v1823 = vadd.f32 %v1574, %v1822
  %v1824 = vpop.f32.mrf.mxu0
  %v1825 = vadd.f32 %v1576, %v1824
  %1826 = vmatmul.bf16.gmra.mxu0 %v859
  %v1827 = vpop.f32.mrf.mxu0
  %v1828 = vadd.f32 %v1579, %v1827
  %v1829 = vpop.f32.mrf.mxu0
  %v1830 = vadd.f32 %v1581, %v1829
  %1831 = vmatmul.bf16.gmra.mxu0 %v862
  %v1832 = vpop.f32.mrf.mxu0
  %v1833 = vadd.f32 %v1584, %v1832
  %v1834 = vpop.f32.mrf.mxu0
  %v1835 = vadd.f32 %v1586, %v1834
  %1836 = vmatmul.bf16.gmra.mxu0 %v865
  %v1837 = vpop.f32.mrf.mxu0
  %v1838 = vadd.f32 %v1589, %v1837
  %v1839 = vpop.f32.mrf.mxu0
  %v1840 = vadd.f32 %v1591, %v1839
  %1841 = vmatmul.bf16.gmra.mxu0 %v868
  %v1842 = vpop.f32.mrf.mxu0
  %v1843 = vadd.f32 %v1594, %v1842
  %v1844 = vpop.f32.mrf.mxu0
  %v1845 = vadd.f32 %v1596, %v1844
  %1846 = vmatmul.bf16.gmra.mxu0 %v871
  %v1847 = vpop.f32.mrf.mxu0
  %v1848 = vadd.f32 %v1599, %v1847
  %v1849 = vpop.f32.mrf.mxu0
  %v1850 = vadd.f32 %v1601, %v1849
  %1851 = vmatmul.bf16.gmra.mxu0 %v874
  %v1852 = vpop.f32.mrf.mxu0
  %v1853 = vadd.f32 %v1604, %v1852
  %v1854 = vpop.f32.mrf.mxu0
  %v1855 = vadd.f32 %v1606, %v1854
  %1856 = vmatmul.bf16.gmra.mxu0 %v877
  %v1857 = vpop.f32.mrf.mxu0
  %v1858 = vadd.f32 %v1609, %v1857
  %v1859 = vpop.f32.mrf.mxu0
  %v1860 = vadd.f32 %v1611, %v1859
  %1861 = vmatmul.bf16.gmra.mxu0 %v880
  %v1862 = vpop.f32.mrf.mxu0
  %v1863 = vadd.f32 %v1614, %v1862
  %v1864 = vpop.f32.mrf.mxu0
  %v1865 = vadd.f32 %v1616, %v1864
  %1866 = vmatmul.bf16.gmra.mxu0 %v883
  %v1867 = vpop.f32.mrf.mxu0
  %v1868 = vadd.f32 %v1619, %v1867
  %v1869 = vpop.f32.mrf.mxu0
  %v1870 = vadd.f32 %v1621, %v1869
  %1871 = vmatmul.bf16.gmra.mxu0 %v886
  %v1872 = vpop.f32.mrf.mxu0
  %v1873 = vadd.f32 %v1624, %v1872
  %v1874 = vpop.f32.mrf.mxu0
  %v1875 = vadd.f32 %v1626, %v1874
  %1876 = vmatmul.bf16.gmra.mxu0 %v889
  %v1877 = vpop.f32.mrf.mxu0
  %v1878 = vadd.f32 %v1629, %v1877
  %v1879 = vpop.f32.mrf.mxu0
  %v1880 = vadd.f32 %v1631, %v1879
  %1881 = vmatmul.bf16.gmra.mxu0 %v892
  %v1882 = vpop.f32.mrf.mxu0
  %v1883 = vadd.f32 %v1634, %v1882
  %v1884 = vpop.f32.mrf.mxu0
  %v1885 = vadd.f32 %v1636, %v1884
  %1886 = vmatmul.bf16.gmra.mxu0 %v895
  %v1887 = vpop.f32.mrf.mxu0
  %v1888 = vadd.f32 %v1639, %v1887
  %v1889 = vpop.f32.mrf.mxu0
  %v1890 = vadd.f32 %v1641, %v1889
  %1891 = vmatmul.bf16.gmra.mxu0 %v898
  %v1892 = vpop.f32.mrf.mxu0
  %v1893 = vadd.f32 %v1644, %v1892
  %v1894 = vpop.f32.mrf.mxu0
  %v1895 = vadd.f32 %v1646, %v1894
  %1896 = vmatmul.bf16.gmra.mxu0 %v901
  %v1897 = vpop.f32.mrf.mxu0
  %v1898 = vadd.f32 %v1649, %v1897
  %v1899 = vpop.f32.mrf.mxu0
  %v1900 = vadd.f32 %v1651, %v1899
  %1901 = vmatmul.bf16.gmra.mxu0 %v904
  %v1902 = vpop.f32.mrf.mxu0
  %v1903 = vadd.f32 %v1654, %v1902
  %v1904 = vpop.f32.mrf.mxu0
  %v1905 = vadd.f32 %v1656, %v1904
  %1906 = vmatmul.bf16.gmra.mxu0 %v907
  %v1907 = vpop.f32.mrf.mxu0
  %v1908 = vadd.f32 %v1659, %v1907
  %v1909 = vpop.f32.mrf.mxu0
  %v1910 = vadd.f32 %v1661, %v1909
  %1911 = vmatmul.bf16.gmra.mxu0 %v910
  %v1912 = vpop.f32.mrf.mxu0
  %v1913 = vadd.f32 %v1664, %v1912
  %v1914 = vpop.f32.mrf.mxu0
  %v1915 = vadd.f32 %v1666, %v1914
  %1916 = vmatmul.bf16.gmra.mxu0 %v913
  %v1917 = vpop.f32.mrf.mxu0
  %v1918 = vadd.f32 %v1669, %v1917
  %v1919 = vpop.f32.mrf.mxu0
  %v1920 = vadd.f32 %v1671, %v1919
  %1921 = vmatmul.bf16.gmra.mxu0 %v916
  %v1922 = vpop.f32.mrf.mxu0
  %v1923 = vadd.f32 %v1674, %v1922
  %v1924 = vpop.f32.mrf.mxu0
  %v1925 = vadd.f32 %v1676, %v1924
  %1926 = vdwg.mxu0
  %1927 = vmatpush.bf16.msra.mxu0 %v735
  %1928 = vmatpush.bf16.msra.mxu0 %v731
  %1929 = vmatpush.bf16.msra.mxu0 %v727
  %1930 = vmatpush.bf16.msra.mxu0 %v723
  %1931 = vmatpush.bf16.msra.mxu0 %v719
  %1932 = vmatpush.bf16.msra.mxu0 %v715
  %1933 = vmatpush.bf16.msra.mxu0 %v711
  %1934 = vmatpush.bf16.msra.mxu0 %v707
  %1935 = vmatmul.bf16.gmra.mxu0 %v453
  %v1936 = vpop.f32.mrf.mxu0
  %v1937 = vadd.f32 0.0, %v1936
  %v1938 = vpop.f32.mrf.mxu0
  %v1939 = vadd.f32 0.0, %v1938
  %1940 = vmatmul.bf16.gmra.mxu0 %v455
  %v1941 = vpop.f32.mrf.mxu0
  %v1942 = vadd.f32 0.0, %v1941
  %v1943 = vpop.f32.mrf.mxu0
  %v1944 = vadd.f32 0.0, %v1943
  %1945 = vmatmul.bf16.gmra.mxu0 %v457
  %v1946 = vpop.f32.mrf.mxu0
  %v1947 = vadd.f32 0.0, %v1946
  %v1948 = vpop.f32.mrf.mxu0
  %v1949 = vadd.f32 0.0, %v1948
  %1950 = vmatmul.bf16.gmra.mxu0 %v459
  %v1951 = vpop.f32.mrf.mxu0
  %v1952 = vadd.f32 0.0, %v1951
  %v1953 = vpop.f32.mrf.mxu0
  %v1954 = vadd.f32 0.0, %v1953
  %1955 = vmatmul.bf16.gmra.mxu0 %v461
  %v1956 = vpop.f32.mrf.mxu0
  %v1957 = vadd.f32 0.0, %v1956
  %v1958 = vpop.f32.mrf.mxu0
  %v1959 = vadd.f32 0.0, %v1958
  %1960 = vmatmul.bf16.gmra.mxu0 %v463
  %v1961 = vpop.f32.mrf.mxu0
  %v1962 = vadd.f32 0.0, %v1961
  %v1963 = vpop.f32.mrf.mxu0
  %v1964 = vadd.f32 0.0, %v1963
  %1965 = vmatmul.bf16.gmra.mxu0 %v465
  %v1966 = vpop.f32.mrf.mxu0
  %v1967 = vadd.f32 0.0, %v1966
  %v1968 = vpop.f32.mrf.mxu0
  %v1969 = vadd.f32 0.0, %v1968
  %1970 = vmatmul.bf16.gmra.mxu0 %v467
  %v1971 = vpop.f32.mrf.mxu0
  %v1972 = vadd.f32 0.0, %v1971
  %v1973 = vpop.f32.mrf.mxu0
  %v1974 = vadd.f32 0.0, %v1973
  %1975 = vmatmul.bf16.gmra.mxu0 %v469
  %v1976 = vpop.f32.mrf.mxu0
  %v1977 = vadd.f32 0.0, %v1976
  %v1978 = vpop.f32.mrf.mxu0
  %v1979 = vadd.f32 0.0, %v1978
  %1980 = vmatmul.bf16.gmra.mxu0 %v471
  %v1981 = vpop.f32.mrf.mxu0
  %v1982 = vadd.f32 0.0, %v1981
  %v1983 = vpop.f32.mrf.mxu0
  %v1984 = vadd.f32 0.0, %v1983
  %1985 = vmatmul.bf16.gmra.mxu0 %v473
  %v1986 = vpop.f32.mrf.mxu0
  %v1987 = vadd.f32 0.0, %v1986
  %v1988 = vpop.f32.mrf.mxu0
  %v1989 = vadd.f32 0.0, %v1988
  %1990 = vmatmul.bf16.gmra.mxu0 %v475
  %v1991 = vpop.f32.mrf.mxu0
  %v1992 = vadd.f32 0.0, %v1991
  %v1993 = vpop.f32.mrf.mxu0
  %v1994 = vadd.f32 0.0, %v1993
  %1995 = vmatmul.bf16.gmra.mxu0 %v477
  %v1996 = vpop.f32.mrf.mxu0
  %v1997 = vadd.f32 0.0, %v1996
  %v1998 = vpop.f32.mrf.mxu0
  %v1999 = vadd.f32 0.0, %v1998
  %2000 = vmatmul.bf16.gmra.mxu0 %v479
  %v2001 = vpop.f32.mrf.mxu0
  %v2002 = vadd.f32 0.0, %v2001
  %v2003 = vpop.f32.mrf.mxu0
  %v2004 = vadd.f32 0.0, %v2003
  %2005 = vmatmul.bf16.gmra.mxu0 %v481
  %v2006 = vpop.f32.mrf.mxu0
  %v2007 = vadd.f32 0.0, %v2006
  %v2008 = vpop.f32.mrf.mxu0
  %v2009 = vadd.f32 0.0, %v2008
  %2010 = vmatmul.bf16.gmra.mxu0 %v483
  %v2011 = vpop.f32.mrf.mxu0
  %v2012 = vadd.f32 0.0, %v2011
  %v2013 = vpop.f32.mrf.mxu0
  %v2014 = vadd.f32 0.0, %v2013
  %2015 = vmatmul.bf16.gmra.mxu0 %v485
  %v2016 = vpop.f32.mrf.mxu0
  %v2017 = vadd.f32 0.0, %v2016
  %v2018 = vpop.f32.mrf.mxu0
  %v2019 = vadd.f32 0.0, %v2018
  %2020 = vmatmul.bf16.gmra.mxu0 %v487
  %v2021 = vpop.f32.mrf.mxu0
  %v2022 = vadd.f32 0.0, %v2021
  %v2023 = vpop.f32.mrf.mxu0
  %v2024 = vadd.f32 0.0, %v2023
  %2025 = vmatmul.bf16.gmra.mxu0 %v489
  %v2026 = vpop.f32.mrf.mxu0
  %v2027 = vadd.f32 0.0, %v2026
  %v2028 = vpop.f32.mrf.mxu0
  %v2029 = vadd.f32 0.0, %v2028
  %2030 = vmatmul.bf16.gmra.mxu0 %v491
  %v2031 = vpop.f32.mrf.mxu0
  %v2032 = vadd.f32 0.0, %v2031
  %v2033 = vpop.f32.mrf.mxu0
  %v2034 = vadd.f32 0.0, %v2033
  %2035 = vmatmul.bf16.gmra.mxu0 %v493
  %v2036 = vpop.f32.mrf.mxu0
  %v2037 = vadd.f32 0.0, %v2036
  %v2038 = vpop.f32.mrf.mxu0
  %v2039 = vadd.f32 0.0, %v2038
  %2040 = vmatmul.bf16.gmra.mxu0 %v495
  %v2041 = vpop.f32.mrf.mxu0
  %v2042 = vadd.f32 0.0, %v2041
  %v2043 = vpop.f32.mrf.mxu0
  %v2044 = vadd.f32 0.0, %v2043
  %2045 = vmatmul.bf16.gmra.mxu0 %v497
  %v2046 = vpop.f32.mrf.mxu0
  %v2047 = vadd.f32 0.0, %v2046
  %v2048 = vpop.f32.mrf.mxu0
  %v2049 = vadd.f32 0.0, %v2048
  %2050 = vmatmul.bf16.gmra.mxu0 %v499
  %v2051 = vpop.f32.mrf.mxu0
  %v2052 = vadd.f32 0.0, %v2051
  %v2053 = vpop.f32.mrf.mxu0
  %v2054 = vadd.f32 0.0, %v2053
  %2055 = vmatmul.bf16.gmra.mxu0 %v501
  %v2056 = vpop.f32.mrf.mxu0
  %v2057 = vadd.f32 0.0, %v2056
  %v2058 = vpop.f32.mrf.mxu0
  %v2059 = vadd.f32 0.0, %v2058
  %2060 = vmatmul.bf16.gmra.mxu0 %v503
  %v2061 = vpop.f32.mrf.mxu0
  %v2062 = vadd.f32 0.0, %v2061
  %v2063 = vpop.f32.mrf.mxu0
  %v2064 = vadd.f32 0.0, %v2063
  %2065 = vmatmul.bf16.gmra.mxu0 %v505
  %v2066 = vpop.f32.mrf.mxu0
  %v2067 = vadd.f32 0.0, %v2066
  %v2068 = vpop.f32.mrf.mxu0
  %v2069 = vadd.f32 0.0, %v2068
  %2070 = vmatmul.bf16.gmra.mxu0 %v507
  %v2071 = vpop.f32.mrf.mxu0
  %v2072 = vadd.f32 0.0, %v2071
  %v2073 = vpop.f32.mrf.mxu0
  %v2074 = vadd.f32 0.0, %v2073
  %2075 = vmatmul.bf16.gmra.mxu0 %v509
  %v2076 = vpop.f32.mrf.mxu0
  %v2077 = vadd.f32 0.0, %v2076
  %v2078 = vpop.f32.mrf.mxu0
  %v2079 = vadd.f32 0.0, %v2078
  %2080 = vmatmul.bf16.gmra.mxu0 %v511
  %v2081 = vpop.f32.mrf.mxu0
  %v2082 = vadd.f32 0.0, %v2081
  %v2083 = vpop.f32.mrf.mxu0
  %v2084 = vadd.f32 0.0, %v2083
  %2085 = vmatmul.bf16.gmra.mxu0 %v513
  %v2086 = vpop.f32.mrf.mxu0
  %v2087 = vadd.f32 0.0, %v2086
  %v2088 = vpop.f32.mrf.mxu0
  %v2089 = vadd.f32 0.0, %v2088
  %2090 = vmatmul.bf16.gmra.mxu0 %v515
  %v2091 = vpop.f32.mrf.mxu0
  %v2092 = vadd.f32 0.0, %v2091
  %v2093 = vpop.f32.mrf.mxu0
  %v2094 = vadd.f32 0.0, %v2093
  %2095 = vmatmul.bf16.gmra.mxu0 %v517
  %v2096 = vpop.f32.mrf.mxu0
  %v2097 = vadd.f32 0.0, %v2096
  %v2098 = vpop.f32.mrf.mxu0
  %v2099 = vadd.f32 0.0, %v2098
  %2100 = vmatmul.bf16.gmra.mxu0 %v519
  %v2101 = vpop.f32.mrf.mxu0
  %v2102 = vadd.f32 0.0, %v2101
  %v2103 = vpop.f32.mrf.mxu0
  %v2104 = vadd.f32 0.0, %v2103
  %2105 = vmatmul.bf16.gmra.mxu0 %v521
  %v2106 = vpop.f32.mrf.mxu0
  %v2107 = vadd.f32 0.0, %v2106
  %v2108 = vpop.f32.mrf.mxu0
  %v2109 = vadd.f32 0.0, %v2108
  %2110 = vmatmul.bf16.gmra.mxu0 %v523
  %v2111 = vpop.f32.mrf.mxu0
  %v2112 = vadd.f32 0.0, %v2111
  %v2113 = vpop.f32.mrf.mxu0
  %v2114 = vadd.f32 0.0, %v2113
  %2115 = vmatmul.bf16.gmra.mxu0 %v525
  %v2116 = vpop.f32.mrf.mxu0
  %v2117 = vadd.f32 0.0, %v2116
  %v2118 = vpop.f32.mrf.mxu0
  %v2119 = vadd.f32 0.0, %v2118
  %2120 = vmatmul.bf16.gmra.mxu0 %v527
  %v2121 = vpop.f32.mrf.mxu0
  %v2122 = vadd.f32 0.0, %v2121
  %v2123 = vpop.f32.mrf.mxu0
  %v2124 = vadd.f32 0.0, %v2123
  %2125 = vmatmul.bf16.gmra.mxu0 %v529
  %v2126 = vpop.f32.mrf.mxu0
  %v2127 = vadd.f32 0.0, %v2126
  %v2128 = vpop.f32.mrf.mxu0
  %v2129 = vadd.f32 0.0, %v2128
  %2130 = vmatmul.bf16.gmra.mxu0 %v531
  %v2131 = vpop.f32.mrf.mxu0
  %v2132 = vadd.f32 0.0, %v2131
  %v2133 = vpop.f32.mrf.mxu0
  %v2134 = vadd.f32 0.0, %v2133
  %2135 = vmatmul.bf16.gmra.mxu0 %v533
  %v2136 = vpop.f32.mrf.mxu0
  %v2137 = vadd.f32 0.0, %v2136
  %v2138 = vpop.f32.mrf.mxu0
  %v2139 = vadd.f32 0.0, %v2138
  %2140 = vmatmul.bf16.gmra.mxu0 %v535
  %v2141 = vpop.f32.mrf.mxu0
  %v2142 = vadd.f32 0.0, %v2141
  %v2143 = vpop.f32.mrf.mxu0
  %v2144 = vadd.f32 0.0, %v2143
  %2145 = vmatmul.bf16.gmra.mxu0 %v537
  %v2146 = vpop.f32.mrf.mxu0
  %v2147 = vadd.f32 0.0, %v2146
  %v2148 = vpop.f32.mrf.mxu0
  %v2149 = vadd.f32 0.0, %v2148
  %2150 = vmatmul.bf16.gmra.mxu0 %v539
  %v2151 = vpop.f32.mrf.mxu0
  %v2152 = vadd.f32 0.0, %v2151
  %v2153 = vpop.f32.mrf.mxu0
  %v2154 = vadd.f32 0.0, %v2153
  %2155 = vmatmul.bf16.gmra.mxu0 %v541
  %v2156 = vpop.f32.mrf.mxu0
  %v2157 = vadd.f32 0.0, %v2156
  %v2158 = vpop.f32.mrf.mxu0
  %v2159 = vadd.f32 0.0, %v2158
  %2160 = vmatmul.bf16.gmra.mxu0 %v543
  %v2161 = vpop.f32.mrf.mxu0
  %v2162 = vadd.f32 0.0, %v2161
  %v2163 = vpop.f32.mrf.mxu0
  %v2164 = vadd.f32 0.0, %v2163
  %2165 = vmatmul.bf16.gmra.mxu0 %v545
  %v2166 = vpop.f32.mrf.mxu0
  %v2167 = vadd.f32 0.0, %v2166
  %v2168 = vpop.f32.mrf.mxu0
  %v2169 = vadd.f32 0.0, %v2168
  %2170 = vmatmul.bf16.gmra.mxu0 %v547
  %v2171 = vpop.f32.mrf.mxu0
  %v2172 = vadd.f32 0.0, %v2171
  %v2173 = vpop.f32.mrf.mxu0
  %v2174 = vadd.f32 0.0, %v2173
  %2175 = vdwg.mxu0
  %2176 = vmatpush.bf16.msra.mxu0 0
  %2177 = vmatpush.bf16.msra.mxu0 0
  %2178 = vmatpush.bf16.msra.mxu0 0
  %2179 = vmatpush.bf16.msra.mxu0 0
  %2180 = vmatpush.bf16.msra.mxu0 0
  %2181 = vmatpush.bf16.msra.mxu0 0
  %2182 = vmatpush.bf16.msra.mxu0 0
  %2183 = vmatpush.bf16.msra.mxu0 %v926
  %2184 = vmatmul.bf16.gmra.mxu0 %v775
  %v2185 = vpop.f32.mrf.mxu0
  %v2186 = vadd.f32 %v1937, %v2185
  %v2187 = vpop.f32.mrf.mxu0
  %v2188 = vadd.f32 %v1939, %v2187
  %2189 = vmatmul.bf16.gmra.mxu0 %v778
  %v2190 = vpop.f32.mrf.mxu0
  %v2191 = vadd.f32 %v1942, %v2190
  %v2192 = vpop.f32.mrf.mxu0
  %v2193 = vadd.f32 %v1944, %v2192
  %2194 = vmatmul.bf16.gmra.mxu0 %v781
  %v2195 = vpop.f32.mrf.mxu0
  %v2196 = vadd.f32 %v1947, %v2195
  %v2197 = vpop.f32.mrf.mxu0
  %v2198 = vadd.f32 %v1949, %v2197
  %2199 = vmatmul.bf16.gmra.mxu0 %v784
  %v2200 = vpop.f32.mrf.mxu0
  %v2201 = vadd.f32 %v1952, %v2200
  %v2202 = vpop.f32.mrf.mxu0
  %v2203 = vadd.f32 %v1954, %v2202
  %2204 = vmatmul.bf16.gmra.mxu0 %v787
  %v2205 = vpop.f32.mrf.mxu0
  %v2206 = vadd.f32 %v1957, %v2205
  %v2207 = vpop.f32.mrf.mxu0
  %v2208 = vadd.f32 %v1959, %v2207
  %2209 = vmatmul.bf16.gmra.mxu0 %v790
  %v2210 = vpop.f32.mrf.mxu0
  %v2211 = vadd.f32 %v1962, %v2210
  %v2212 = vpop.f32.mrf.mxu0
  %v2213 = vadd.f32 %v1964, %v2212
  %2214 = vmatmul.bf16.gmra.mxu0 %v793
  %v2215 = vpop.f32.mrf.mxu0
  %v2216 = vadd.f32 %v1967, %v2215
  %v2217 = vpop.f32.mrf.mxu0
  %v2218 = vadd.f32 %v1969, %v2217
  %2219 = vmatmul.bf16.gmra.mxu0 %v796
  %v2220 = vpop.f32.mrf.mxu0
  %v2221 = vadd.f32 %v1972, %v2220
  %v2222 = vpop.f32.mrf.mxu0
  %v2223 = vadd.f32 %v1974, %v2222
  %2224 = vmatmul.bf16.gmra.mxu0 %v799
  %v2225 = vpop.f32.mrf.mxu0
  %v2226 = vadd.f32 %v1977, %v2225
  %v2227 = vpop.f32.mrf.mxu0
  %v2228 = vadd.f32 %v1979, %v2227
  %2229 = vmatmul.bf16.gmra.mxu0 %v802
  %v2230 = vpop.f32.mrf.mxu0
  %v2231 = vadd.f32 %v1982, %v2230
  %v2232 = vpop.f32.mrf.mxu0
  %v2233 = vadd.f32 %v1984, %v2232
  %2234 = vmatmul.bf16.gmra.mxu0 %v805
  %v2235 = vpop.f32.mrf.mxu0
  %v2236 = vadd.f32 %v1987, %v2235
  %v2237 = vpop.f32.mrf.mxu0
  %v2238 = vadd.f32 %v1989, %v2237
  %2239 = vmatmul.bf16.gmra.mxu0 %v808
  %v2240 = vpop.f32.mrf.mxu0
  %v2241 = vadd.f32 %v1992, %v2240
  %v2242 = vpop.f32.mrf.mxu0
  %v2243 = vadd.f32 %v1994, %v2242
  %2244 = vmatmul.bf16.gmra.mxu0 %v811
  %v2245 = vpop.f32.mrf.mxu0
  %v2246 = vadd.f32 %v1997, %v2245
  %v2247 = vpop.f32.mrf.mxu0
  %v2248 = vadd.f32 %v1999, %v2247
  %2249 = vmatmul.bf16.gmra.mxu0 %v814
  %v2250 = vpop.f32.mrf.mxu0
  %v2251 = vadd.f32 %v2002, %v2250
  %v2252 = vpop.f32.mrf.mxu0
  %v2253 = vadd.f32 %v2004, %v2252
  %2254 = vmatmul.bf16.gmra.mxu0 %v817
  %v2255 = vpop.f32.mrf.mxu0
  %v2256 = vadd.f32 %v2007, %v2255
  %v2257 = vpop.f32.mrf.mxu0
  %v2258 = vadd.f32 %v2009, %v2257
  %2259 = vmatmul.bf16.gmra.mxu0 %v820
  %v2260 = vpop.f32.mrf.mxu0
  %v2261 = vadd.f32 %v2012, %v2260
  %v2262 = vpop.f32.mrf.mxu0
  %v2263 = vadd.f32 %v2014, %v2262
  %2264 = vmatmul.bf16.gmra.mxu0 %v823
  %v2265 = vpop.f32.mrf.mxu0
  %v2266 = vadd.f32 %v2017, %v2265
  %v2267 = vpop.f32.mrf.mxu0
  %v2268 = vadd.f32 %v2019, %v2267
  %2269 = vmatmul.bf16.gmra.mxu0 %v826
  %v2270 = vpop.f32.mrf.mxu0
  %v2271 = vadd.f32 %v2022, %v2270
  %v2272 = vpop.f32.mrf.mxu0
  %v2273 = vadd.f32 %v2024, %v2272
  %2274 = vmatmul.bf16.gmra.mxu0 %v829
  %v2275 = vpop.f32.mrf.mxu0
  %v2276 = vadd.f32 %v2027, %v2275
  %v2277 = vpop.f32.mrf.mxu0
  %v2278 = vadd.f32 %v2029, %v2277
  %2279 = vmatmul.bf16.gmra.mxu0 %v832
  %v2280 = vpop.f32.mrf.mxu0
  %v2281 = vadd.f32 %v2032, %v2280
  %v2282 = vpop.f32.mrf.mxu0
  %v2283 = vadd.f32 %v2034, %v2282
  %2284 = vmatmul.bf16.gmra.mxu0 %v835
  %v2285 = vpop.f32.mrf.mxu0
  %v2286 = vadd.f32 %v2037, %v2285
  %v2287 = vpop.f32.mrf.mxu0
  %v2288 = vadd.f32 %v2039, %v2287
  %2289 = vmatmul.bf16.gmra.mxu0 %v838
  %v2290 = vpop.f32.mrf.mxu0
  %v2291 = vadd.f32 %v2042, %v2290
  %v2292 = vpop.f32.mrf.mxu0
  %v2293 = vadd.f32 %v2044, %v2292
  %2294 = vmatmul.bf16.gmra.mxu0 %v841
  %v2295 = vpop.f32.mrf.mxu0
  %v2296 = vadd.f32 %v2047, %v2295
  %v2297 = vpop.f32.mrf.mxu0
  %v2298 = vadd.f32 %v2049, %v2297
  %2299 = vmatmul.bf16.gmra.mxu0 %v844
  %v2300 = vpop.f32.mrf.mxu0
  %v2301 = vadd.f32 %v2052, %v2300
  %v2302 = vpop.f32.mrf.mxu0
  %v2303 = vadd.f32 %v2054, %v2302
  %2304 = vmatmul.bf16.gmra.mxu0 %v847
  %v2305 = vpop.f32.mrf.mxu0
  %v2306 = vadd.f32 %v2057, %v2305
  %v2307 = vpop.f32.mrf.mxu0
  %v2308 = vadd.f32 %v2059, %v2307
  %2309 = vmatmul.bf16.gmra.mxu0 %v850
  %v2310 = vpop.f32.mrf.mxu0
  %v2311 = vadd.f32 %v2062, %v2310
  %v2312 = vpop.f32.mrf.mxu0
  %v2313 = vadd.f32 %v2064, %v2312
  %2314 = vmatmul.bf16.gmra.mxu0 %v853
  %v2315 = vpop.f32.mrf.mxu0
  %v2316 = vadd.f32 %v2067, %v2315
  %v2317 = vpop.f32.mrf.mxu0
  %v2318 = vadd.f32 %v2069, %v2317
  %2319 = vmatmul.bf16.gmra.mxu0 %v856
  %v2320 = vpop.f32.mrf.mxu0
  %v2321 = vadd.f32 %v2072, %v2320
  %v2322 = vpop.f32.mrf.mxu0
  %v2323 = vadd.f32 %v2074, %v2322
  %2324 = vmatmul.bf16.gmra.mxu0 %v859
  %v2325 = vpop.f32.mrf.mxu0
  %v2326 = vadd.f32 %v2077, %v2325
  %v2327 = vpop.f32.mrf.mxu0
  %v2328 = vadd.f32 %v2079, %v2327
  %2329 = vmatmul.bf16.gmra.mxu0 %v862
  %v2330 = vpop.f32.mrf.mxu0
  %v2331 = vadd.f32 %v2082, %v2330
  %v2332 = vpop.f32.mrf.mxu0
  %v2333 = vadd.f32 %v2084, %v2332
  %2334 = vmatmul.bf16.gmra.mxu0 %v865
  %v2335 = vpop.f32.mrf.mxu0
  %v2336 = vadd.f32 %v2087, %v2335
  %v2337 = vpop.f32.mrf.mxu0
  %v2338 = vadd.f32 %v2089, %v2337
  %2339 = vmatmul.bf16.gmra.mxu0 %v868
  %v2340 = vpop.f32.mrf.mxu0
  %v2341 = vadd.f32 %v2092, %v2340
  %v2342 = vpop.f32.mrf.mxu0
  %v2343 = vadd.f32 %v2094, %v2342
  %2344 = vmatmul.bf16.gmra.mxu0 %v871
  %v2345 = vpop.f32.mrf.mxu0
  %v2346 = vadd.f32 %v2097, %v2345
  %v2347 = vpop.f32.mrf.mxu0
  %v2348 = vadd.f32 %v2099, %v2347
  %2349 = vmatmul.bf16.gmra.mxu0 %v874
  %v2350 = vpop.f32.mrf.mxu0
  %v2351 = vadd.f32 %v2102, %v2350
  %v2352 = vpop.f32.mrf.mxu0
  %v2353 = vadd.f32 %v2104, %v2352
  %2354 = vmatmul.bf16.gmra.mxu0 %v877
  %v2355 = vpop.f32.mrf.mxu0
  %v2356 = vadd.f32 %v2107, %v2355
  %v2357 = vpop.f32.mrf.mxu0
  %v2358 = vadd.f32 %v2109, %v2357
  %2359 = vmatmul.bf16.gmra.mxu0 %v880
  %v2360 = vpop.f32.mrf.mxu0
  %v2361 = vadd.f32 %v2112, %v2360
  %v2362 = vpop.f32.mrf.mxu0
  %v2363 = vadd.f32 %v2114, %v2362
  %2364 = vmatmul.bf16.gmra.mxu0 %v883
  %v2365 = vpop.f32.mrf.mxu0
  %v2366 = vadd.f32 %v2117, %v2365
  %v2367 = vpop.f32.mrf.mxu0
  %v2368 = vadd.f32 %v2119, %v2367
  %2369 = vmatmul.bf16.gmra.mxu0 %v886
  %v2370 = vpop.f32.mrf.mxu0
  %v2371 = vadd.f32 %v2122, %v2370
  %v2372 = vpop.f32.mrf.mxu0
  %v2373 = vadd.f32 %v2124, %v2372
  %2374 = vmatmul.bf16.gmra.mxu0 %v889
  %v2375 = vpop.f32.mrf.mxu0
  %v2376 = vadd.f32 %v2127, %v2375
  %v2377 = vpop.f32.mrf.mxu0
  %v2378 = vadd.f32 %v2129, %v2377
  %2379 = vmatmul.bf16.gmra.mxu0 %v892
  %v2380 = vpop.f32.mrf.mxu0
  %v2381 = vadd.f32 %v2132, %v2380
  %v2382 = vpop.f32.mrf.mxu0
  %v2383 = vadd.f32 %v2134, %v2382
  %2384 = vmatmul.bf16.gmra.mxu0 %v895
  %v2385 = vpop.f32.mrf.mxu0
  %v2386 = vadd.f32 %v2137, %v2385
  %v2387 = vpop.f32.mrf.mxu0
  %v2388 = vadd.f32 %v2139, %v2387
  %2389 = vmatmul.bf16.gmra.mxu0 %v898
  %v2390 = vpop.f32.mrf.mxu0
  %v2391 = vadd.f32 %v2142, %v2390
  %v2392 = vpop.f32.mrf.mxu0
  %v2393 = vadd.f32 %v2144, %v2392
  %2394 = vmatmul.bf16.gmra.mxu0 %v901
  %v2395 = vpop.f32.mrf.mxu0
  %v2396 = vadd.f32 %v2147, %v2395
  %v2397 = vpop.f32.mrf.mxu0
  %v2398 = vadd.f32 %v2149, %v2397
  %2399 = vmatmul.bf16.gmra.mxu0 %v904
  %v2400 = vpop.f32.mrf.mxu0
  %v2401 = vadd.f32 %v2152, %v2400
  %v2402 = vpop.f32.mrf.mxu0
  %v2403 = vadd.f32 %v2154, %v2402
  %2404 = vmatmul.bf16.gmra.mxu0 %v907
  %v2405 = vpop.f32.mrf.mxu0
  %v2406 = vadd.f32 %v2157, %v2405
  %v2407 = vpop.f32.mrf.mxu0
  %v2408 = vadd.f32 %v2159, %v2407
  %2409 = vmatmul.bf16.gmra.mxu0 %v910
  %v2410 = vpop.f32.mrf.mxu0
  %v2411 = vadd.f32 %v2162, %v2410
  %v2412 = vpop.f32.mrf.mxu0
  %v2413 = vadd.f32 %v2164, %v2412
  %2414 = vmatmul.bf16.gmra.mxu0 %v913
  %v2415 = vpop.f32.mrf.mxu0
  %v2416 = vadd.f32 %v2167, %v2415
  %v2417 = vpop.f32.mrf.mxu0
  %v2418 = vadd.f32 %v2169, %v2417
  %2419 = vmatmul.bf16.gmra.mxu0 %v916
  %v2420 = vpop.f32.mrf.mxu0
  %v2421 = vadd.f32 %v2172, %v2420
  %v2422 = vpop.f32.mrf.mxu0
  %v2423 = vadd.f32 %v2174, %v2422
  %2424 = vdwg.mxu0
  %2425 = vmatpush.bf16.msra.mxu0 %v736
  %2426 = vmatpush.bf16.msra.mxu0 %v732
  %2427 = vmatpush.bf16.msra.mxu0 %v728
  %2428 = vmatpush.bf16.msra.mxu0 %v724
  %2429 = vmatpush.bf16.msra.mxu0 %v720
  %2430 = vmatpush.bf16.msra.mxu0 %v716
  %2431 = vmatpush.bf16.msra.mxu0 %v712
  %2432 = vmatpush.bf16.msra.mxu0 %v708
  %2433 = vmatmul.bf16.gmra.mxu0 %v453
  %v2434 = vpop.f32.mrf.mxu0
  %v2435 = vadd.f32 0.0, %v2434
  %v2436 = vpop.f32.mrf.mxu0
  %v2437 = vadd.f32 0.0, %v2436
  %2438 = vmatmul.bf16.gmra.mxu0 %v455
  %v2439 = vpop.f32.mrf.mxu0
  %v2440 = vadd.f32 0.0, %v2439
  %v2441 = vpop.f32.mrf.mxu0
  %v2442 = vadd.f32 0.0, %v2441
  %2443 = vmatmul.bf16.gmra.mxu0 %v457
  %v2444 = vpop.f32.mrf.mxu0
  %v2445 = vadd.f32 0.0, %v2444
  %v2446 = vpop.f32.mrf.mxu0
  %v2447 = vadd.f32 0.0, %v2446
  %2448 = vmatmul.bf16.gmra.mxu0 %v459
  %v2449 = vpop.f32.mrf.mxu0
  %v2450 = vadd.f32 0.0, %v2449
  %v2451 = vpop.f32.mrf.mxu0
  %v2452 = vadd.f32 0.0, %v2451
  %2453 = vmatmul.bf16.gmra.mxu0 %v461
  %v2454 = vpop.f32.mrf.mxu0
  %v2455 = vadd.f32 0.0, %v2454
  %v2456 = vpop.f32.mrf.mxu0
  %v2457 = vadd.f32 0.0, %v2456
  %2458 = vmatmul.bf16.gmra.mxu0 %v463
  %v2459 = vpop.f32.mrf.mxu0
  %v2460 = vadd.f32 0.0, %v2459
  %v2461 = vpop.f32.mrf.mxu0
  %v2462 = vadd.f32 0.0, %v2461
  %2463 = vmatmul.bf16.gmra.mxu0 %v465
  %v2464 = vpop.f32.mrf.mxu0
  %v2465 = vadd.f32 0.0, %v2464
  %v2466 = vpop.f32.mrf.mxu0
  %v2467 = vadd.f32 0.0, %v2466
  %2468 = vmatmul.bf16.gmra.mxu0 %v467
  %v2469 = vpop.f32.mrf.mxu0
  %v2470 = vadd.f32 0.0, %v2469
  %v2471 = vpop.f32.mrf.mxu0
  %v2472 = vadd.f32 0.0, %v2471
  %2473 = vmatmul.bf16.gmra.mxu0 %v469
  %v2474 = vpop.f32.mrf.mxu0
  %v2475 = vadd.f32 0.0, %v2474
  %v2476 = vpop.f32.mrf.mxu0
  %v2477 = vadd.f32 0.0, %v2476
  %2478 = vmatmul.bf16.gmra.mxu0 %v471
  %v2479 = vpop.f32.mrf.mxu0
  %v2480 = vadd.f32 0.0, %v2479
  %v2481 = vpop.f32.mrf.mxu0
  %v2482 = vadd.f32 0.0, %v2481
  %2483 = vmatmul.bf16.gmra.mxu0 %v473
  %v2484 = vpop.f32.mrf.mxu0
  %v2485 = vadd.f32 0.0, %v2484
  %v2486 = vpop.f32.mrf.mxu0
  %v2487 = vadd.f32 0.0, %v2486
  %2488 = vmatmul.bf16.gmra.mxu0 %v475
  %v2489 = vpop.f32.mrf.mxu0
  %v2490 = vadd.f32 0.0, %v2489
  %v2491 = vpop.f32.mrf.mxu0
  %v2492 = vadd.f32 0.0, %v2491
  %2493 = vmatmul.bf16.gmra.mxu0 %v477
  %v2494 = vpop.f32.mrf.mxu0
  %v2495 = vadd.f32 0.0, %v2494
  %v2496 = vpop.f32.mrf.mxu0
  %v2497 = vadd.f32 0.0, %v2496
  %2498 = vmatmul.bf16.gmra.mxu0 %v479
  %v2499 = vpop.f32.mrf.mxu0
  %v2500 = vadd.f32 0.0, %v2499
  %v2501 = vpop.f32.mrf.mxu0
  %v2502 = vadd.f32 0.0, %v2501
  %2503 = vmatmul.bf16.gmra.mxu0 %v481
  %v2504 = vpop.f32.mrf.mxu0
  %v2505 = vadd.f32 0.0, %v2504
  %v2506 = vpop.f32.mrf.mxu0
  %v2507 = vadd.f32 0.0, %v2506
  %2508 = vmatmul.bf16.gmra.mxu0 %v483
  %v2509 = vpop.f32.mrf.mxu0
  %v2510 = vadd.f32 0.0, %v2509
  %v2511 = vpop.f32.mrf.mxu0
  %v2512 = vadd.f32 0.0, %v2511
  %2513 = vmatmul.bf16.gmra.mxu0 %v485
  %v2514 = vpop.f32.mrf.mxu0
  %v2515 = vadd.f32 0.0, %v2514
  %v2516 = vpop.f32.mrf.mxu0
  %v2517 = vadd.f32 0.0, %v2516
  %2518 = vmatmul.bf16.gmra.mxu0 %v487
  %v2519 = vpop.f32.mrf.mxu0
  %v2520 = vadd.f32 0.0, %v2519
  %v2521 = vpop.f32.mrf.mxu0
  %v2522 = vadd.f32 0.0, %v2521
  %2523 = vmatmul.bf16.gmra.mxu0 %v489
  %v2524 = vpop.f32.mrf.mxu0
  %v2525 = vadd.f32 0.0, %v2524
  %v2526 = vpop.f32.mrf.mxu0
  %v2527 = vadd.f32 0.0, %v2526
  %2528 = vmatmul.bf16.gmra.mxu0 %v491
  %v2529 = vpop.f32.mrf.mxu0
  %v2530 = vadd.f32 0.0, %v2529
  %v2531 = vpop.f32.mrf.mxu0
  %v2532 = vadd.f32 0.0, %v2531
  %2533 = vmatmul.bf16.gmra.mxu0 %v493
  %v2534 = vpop.f32.mrf.mxu0
  %v2535 = vadd.f32 0.0, %v2534
  %v2536 = vpop.f32.mrf.mxu0
  %v2537 = vadd.f32 0.0, %v2536
  %2538 = vmatmul.bf16.gmra.mxu0 %v495
  %v2539 = vpop.f32.mrf.mxu0
  %v2540 = vadd.f32 0.0, %v2539
  %v2541 = vpop.f32.mrf.mxu0
  %v2542 = vadd.f32 0.0, %v2541
  %2543 = vmatmul.bf16.gmra.mxu0 %v497
  %v2544 = vpop.f32.mrf.mxu0
  %v2545 = vadd.f32 0.0, %v2544
  %v2546 = vpop.f32.mrf.mxu0
  %v2547 = vadd.f32 0.0, %v2546
  %2548 = vmatmul.bf16.gmra.mxu0 %v499
  %v2549 = vpop.f32.mrf.mxu0
  %v2550 = vadd.f32 0.0, %v2549
  %v2551 = vpop.f32.mrf.mxu0
  %v2552 = vadd.f32 0.0, %v2551
  %2553 = vmatmul.bf16.gmra.mxu0 %v501
  %v2554 = vpop.f32.mrf.mxu0
  %v2555 = vadd.f32 0.0, %v2554
  %v2556 = vpop.f32.mrf.mxu0
  %v2557 = vadd.f32 0.0, %v2556
  %2558 = vmatmul.bf16.gmra.mxu0 %v503
  %v2559 = vpop.f32.mrf.mxu0
  %v2560 = vadd.f32 0.0, %v2559
  %v2561 = vpop.f32.mrf.mxu0
  %v2562 = vadd.f32 0.0, %v2561
  %2563 = vmatmul.bf16.gmra.mxu0 %v505
  %v2564 = vpop.f32.mrf.mxu0
  %v2565 = vadd.f32 0.0, %v2564
  %v2566 = vpop.f32.mrf.mxu0
  %v2567 = vadd.f32 0.0, %v2566
  %2568 = vmatmul.bf16.gmra.mxu0 %v507
  %v2569 = vpop.f32.mrf.mxu0
  %v2570 = vadd.f32 0.0, %v2569
  %v2571 = vpop.f32.mrf.mxu0
  %v2572 = vadd.f32 0.0, %v2571
  %2573 = vmatmul.bf16.gmra.mxu0 %v509
  %v2574 = vpop.f32.mrf.mxu0
  %v2575 = vadd.f32 0.0, %v2574
  %v2576 = vpop.f32.mrf.mxu0
  %v2577 = vadd.f32 0.0, %v2576
  %2578 = vmatmul.bf16.gmra.mxu0 %v511
  %v2579 = vpop.f32.mrf.mxu0
  %v2580 = vadd.f32 0.0, %v2579
  %v2581 = vpop.f32.mrf.mxu0
  %v2582 = vadd.f32 0.0, %v2581
  %2583 = vmatmul.bf16.gmra.mxu0 %v513
  %v2584 = vpop.f32.mrf.mxu0
  %v2585 = vadd.f32 0.0, %v2584
  %v2586 = vpop.f32.mrf.mxu0
  %v2587 = vadd.f32 0.0, %v2586
  %2588 = vmatmul.bf16.gmra.mxu0 %v515
  %v2589 = vpop.f32.mrf.mxu0
  %v2590 = vadd.f32 0.0, %v2589
  %v2591 = vpop.f32.mrf.mxu0
  %v2592 = vadd.f32 0.0, %v2591
  %2593 = vmatmul.bf16.gmra.mxu0 %v517
  %v2594 = vpop.f32.mrf.mxu0
  %v2595 = vadd.f32 0.0, %v2594
  %v2596 = vpop.f32.mrf.mxu0
  %v2597 = vadd.f32 0.0, %v2596
  %2598 = vmatmul.bf16.gmra.mxu0 %v519
  %v2599 = vpop.f32.mrf.mxu0
  %v2600 = vadd.f32 0.0, %v2599
  %v2601 = vpop.f32.mrf.mxu0
  %v2602 = vadd.f32 0.0, %v2601
  %2603 = vmatmul.bf16.gmra.mxu0 %v521
  %v2604 = vpop.f32.mrf.mxu0
  %v2605 = vadd.f32 0.0, %v2604
  %v2606 = vpop.f32.mrf.mxu0
  %v2607 = vadd.f32 0.0, %v2606
  %2608 = vmatmul.bf16.gmra.mxu0 %v523
  %v2609 = vpop.f32.mrf.mxu0
  %v2610 = vadd.f32 0.0, %v2609
  %v2611 = vpop.f32.mrf.mxu0
  %v2612 = vadd.f32 0.0, %v2611
  %2613 = vmatmul.bf16.gmra.mxu0 %v525
  %v2614 = vpop.f32.mrf.mxu0
  %v2615 = vadd.f32 0.0, %v2614
  %v2616 = vpop.f32.mrf.mxu0
  %v2617 = vadd.f32 0.0, %v2616
  %2618 = vmatmul.bf16.gmra.mxu0 %v527
  %v2619 = vpop.f32.mrf.mxu0
  %v2620 = vadd.f32 0.0, %v2619
  %v2621 = vpop.f32.mrf.mxu0
  %v2622 = vadd.f32 0.0, %v2621
  %2623 = vmatmul.bf16.gmra.mxu0 %v529
  %v2624 = vpop.f32.mrf.mxu0
  %v2625 = vadd.f32 0.0, %v2624
  %v2626 = vpop.f32.mrf.mxu0
  %v2627 = vadd.f32 0.0, %v2626
  %2628 = vmatmul.bf16.gmra.mxu0 %v531
  %v2629 = vpop.f32.mrf.mxu0
  %v2630 = vadd.f32 0.0, %v2629
  %v2631 = vpop.f32.mrf.mxu0
  %v2632 = vadd.f32 0.0, %v2631
  %2633 = vmatmul.bf16.gmra.mxu0 %v533
  %v2634 = vpop.f32.mrf.mxu0
  %v2635 = vadd.f32 0.0, %v2634
  %v2636 = vpop.f32.mrf.mxu0
  %v2637 = vadd.f32 0.0, %v2636
  %2638 = vmatmul.bf16.gmra.mxu0 %v535
  %v2639 = vpop.f32.mrf.mxu0
  %v2640 = vadd.f32 0.0, %v2639
  %v2641 = vpop.f32.mrf.mxu0
  %v2642 = vadd.f32 0.0, %v2641
  %2643 = vmatmul.bf16.gmra.mxu0 %v537
  %v2644 = vpop.f32.mrf.mxu0
  %v2645 = vadd.f32 0.0, %v2644
  %v2646 = vpop.f32.mrf.mxu0
  %v2647 = vadd.f32 0.0, %v2646
  %2648 = vmatmul.bf16.gmra.mxu0 %v539
  %v2649 = vpop.f32.mrf.mxu0
  %v2650 = vadd.f32 0.0, %v2649
  %v2651 = vpop.f32.mrf.mxu0
  %v2652 = vadd.f32 0.0, %v2651
  %2653 = vmatmul.bf16.gmra.mxu0 %v541
  %v2654 = vpop.f32.mrf.mxu0
  %v2655 = vadd.f32 0.0, %v2654
  %v2656 = vpop.f32.mrf.mxu0
  %v2657 = vadd.f32 0.0, %v2656
  %2658 = vmatmul.bf16.gmra.mxu0 %v543
  %v2659 = vpop.f32.mrf.mxu0
  %v2660 = vadd.f32 0.0, %v2659
  %v2661 = vpop.f32.mrf.mxu0
  %v2662 = vadd.f32 0.0, %v2661
  %2663 = vmatmul.bf16.gmra.mxu0 %v545
  %v2664 = vpop.f32.mrf.mxu0
  %v2665 = vadd.f32 0.0, %v2664
  %v2666 = vpop.f32.mrf.mxu0
  %v2667 = vadd.f32 0.0, %v2666
  %2668 = vmatmul.bf16.gmra.mxu0 %v547
  %v2669 = vpop.f32.mrf.mxu0
  %v2670 = vadd.f32 0.0, %v2669
  %v2671 = vpop.f32.mrf.mxu0
  %v2672 = vadd.f32 0.0, %v2671
  %2673 = vdwg.mxu0
  %2674 = vmatpush.bf16.msra.mxu0 0
  %2675 = vmatpush.bf16.msra.mxu0 0
  %2676 = vmatpush.bf16.msra.mxu0 0
  %2677 = vmatpush.bf16.msra.mxu0 0
  %2678 = vmatpush.bf16.msra.mxu0 0
  %2679 = vmatpush.bf16.msra.mxu0 0
  %2680 = vmatpush.bf16.msra.mxu0 0
  %2681 = vmatpush.bf16.msra.mxu0 %v929
  %2682 = vmatmul.bf16.gmra.mxu0 %v775
  %v2683 = vpop.f32.mrf.mxu0
  %v2684 = vadd.f32 %v2435, %v2683
  %v2685 = vpop.f32.mrf.mxu0
  %v2686 = vadd.f32 %v2437, %v2685
  %2687 = vmatmul.bf16.gmra.mxu0 %v778
  %v2688 = vpop.f32.mrf.mxu0
  %v2689 = vadd.f32 %v2440, %v2688
  %v2690 = vpop.f32.mrf.mxu0
  %v2691 = vadd.f32 %v2442, %v2690
  %2692 = vmatmul.bf16.gmra.mxu0 %v781
  %v2693 = vpop.f32.mrf.mxu0
  %v2694 = vadd.f32 %v2445, %v2693
  %v2695 = vpop.f32.mrf.mxu0
  %v2696 = vadd.f32 %v2447, %v2695
  %2697 = vmatmul.bf16.gmra.mxu0 %v784
  %v2698 = vpop.f32.mrf.mxu0
  %v2699 = vadd.f32 %v2450, %v2698
  %v2700 = vpop.f32.mrf.mxu0
  %v2701 = vadd.f32 %v2452, %v2700
  %2702 = vmatmul.bf16.gmra.mxu0 %v787
  %v2703 = vpop.f32.mrf.mxu0
  %v2704 = vadd.f32 %v2455, %v2703
  %v2705 = vpop.f32.mrf.mxu0
  %v2706 = vadd.f32 %v2457, %v2705
  %2707 = vmatmul.bf16.gmra.mxu0 %v790
  %v2708 = vpop.f32.mrf.mxu0
  %v2709 = vadd.f32 %v2460, %v2708
  %v2710 = vpop.f32.mrf.mxu0
  %v2711 = vadd.f32 %v2462, %v2710
  %2712 = vmatmul.bf16.gmra.mxu0 %v793
  %v2713 = vpop.f32.mrf.mxu0
  %v2714 = vadd.f32 %v2465, %v2713
  %v2715 = vpop.f32.mrf.mxu0
  %v2716 = vadd.f32 %v2467, %v2715
  %2717 = vmatmul.bf16.gmra.mxu0 %v796
  %v2718 = vpop.f32.mrf.mxu0
  %v2719 = vadd.f32 %v2470, %v2718
  %v2720 = vpop.f32.mrf.mxu0
  %v2721 = vadd.f32 %v2472, %v2720
  %2722 = vmatmul.bf16.gmra.mxu0 %v799
  %v2723 = vpop.f32.mrf.mxu0
  %v2724 = vadd.f32 %v2475, %v2723
  %v2725 = vpop.f32.mrf.mxu0
  %v2726 = vadd.f32 %v2477, %v2725
  %2727 = vmatmul.bf16.gmra.mxu0 %v802
  %v2728 = vpop.f32.mrf.mxu0
  %v2729 = vadd.f32 %v2480, %v2728
  %v2730 = vpop.f32.mrf.mxu0
  %v2731 = vadd.f32 %v2482, %v2730
  %2732 = vmatmul.bf16.gmra.mxu0 %v805
  %v2733 = vpop.f32.mrf.mxu0
  %v2734 = vadd.f32 %v2485, %v2733
  %v2735 = vpop.f32.mrf.mxu0
  %v2736 = vadd.f32 %v2487, %v2735
  %2737 = vmatmul.bf16.gmra.mxu0 %v808
  %v2738 = vpop.f32.mrf.mxu0
  %v2739 = vadd.f32 %v2490, %v2738
  %v2740 = vpop.f32.mrf.mxu0
  %v2741 = vadd.f32 %v2492, %v2740
  %2742 = vmatmul.bf16.gmra.mxu0 %v811
  %v2743 = vpop.f32.mrf.mxu0
  %v2744 = vadd.f32 %v2495, %v2743
  %v2745 = vpop.f32.mrf.mxu0
  %v2746 = vadd.f32 %v2497, %v2745
  %2747 = vmatmul.bf16.gmra.mxu0 %v814
  %v2748 = vpop.f32.mrf.mxu0
  %v2749 = vadd.f32 %v2500, %v2748
  %v2750 = vpop.f32.mrf.mxu0
  %v2751 = vadd.f32 %v2502, %v2750
  %2752 = vmatmul.bf16.gmra.mxu0 %v817
  %v2753 = vpop.f32.mrf.mxu0
  %v2754 = vadd.f32 %v2505, %v2753
  %v2755 = vpop.f32.mrf.mxu0
  %v2756 = vadd.f32 %v2507, %v2755
  %2757 = vmatmul.bf16.gmra.mxu0 %v820
  %v2758 = vpop.f32.mrf.mxu0
  %v2759 = vadd.f32 %v2510, %v2758
  %v2760 = vpop.f32.mrf.mxu0
  %v2761 = vadd.f32 %v2512, %v2760
  %2762 = vmatmul.bf16.gmra.mxu0 %v823
  %v2763 = vpop.f32.mrf.mxu0
  %v2764 = vadd.f32 %v2515, %v2763
  %v2765 = vpop.f32.mrf.mxu0
  %v2766 = vadd.f32 %v2517, %v2765
  %2767 = vmatmul.bf16.gmra.mxu0 %v826
  %v2768 = vpop.f32.mrf.mxu0
  %v2769 = vadd.f32 %v2520, %v2768
  %v2770 = vpop.f32.mrf.mxu0
  %v2771 = vadd.f32 %v2522, %v2770
  %2772 = vmatmul.bf16.gmra.mxu0 %v829
  %v2773 = vpop.f32.mrf.mxu0
  %v2774 = vadd.f32 %v2525, %v2773
  %v2775 = vpop.f32.mrf.mxu0
  %v2776 = vadd.f32 %v2527, %v2775
  %2777 = vmatmul.bf16.gmra.mxu0 %v832
  %v2778 = vpop.f32.mrf.mxu0
  %v2779 = vadd.f32 %v2530, %v2778
  %v2780 = vpop.f32.mrf.mxu0
  %v2781 = vadd.f32 %v2532, %v2780
  %2782 = vmatmul.bf16.gmra.mxu0 %v835
  %v2783 = vpop.f32.mrf.mxu0
  %v2784 = vadd.f32 %v2535, %v2783
  %v2785 = vpop.f32.mrf.mxu0
  %v2786 = vadd.f32 %v2537, %v2785
  %2787 = vmatmul.bf16.gmra.mxu0 %v838
  %v2788 = vpop.f32.mrf.mxu0
  %v2789 = vadd.f32 %v2540, %v2788
  %v2790 = vpop.f32.mrf.mxu0
  %v2791 = vadd.f32 %v2542, %v2790
  %2792 = vmatmul.bf16.gmra.mxu0 %v841
  %v2793 = vpop.f32.mrf.mxu0
  %v2794 = vadd.f32 %v2545, %v2793
  %v2795 = vpop.f32.mrf.mxu0
  %v2796 = vadd.f32 %v2547, %v2795
  %2797 = vmatmul.bf16.gmra.mxu0 %v844
  %v2798 = vpop.f32.mrf.mxu0
  %v2799 = vadd.f32 %v2550, %v2798
  %v2800 = vpop.f32.mrf.mxu0
  %v2801 = vadd.f32 %v2552, %v2800
  %2802 = vmatmul.bf16.gmra.mxu0 %v847
  %v2803 = vpop.f32.mrf.mxu0
  %v2804 = vadd.f32 %v2555, %v2803
  %v2805 = vpop.f32.mrf.mxu0
  %v2806 = vadd.f32 %v2557, %v2805
  %2807 = vmatmul.bf16.gmra.mxu0 %v850
  %v2808 = vpop.f32.mrf.mxu0
  %v2809 = vadd.f32 %v2560, %v2808
  %v2810 = vpop.f32.mrf.mxu0
  %v2811 = vadd.f32 %v2562, %v2810
  %2812 = vmatmul.bf16.gmra.mxu0 %v853
  %v2813 = vpop.f32.mrf.mxu0
  %v2814 = vadd.f32 %v2565, %v2813
  %v2815 = vpop.f32.mrf.mxu0
  %v2816 = vadd.f32 %v2567, %v2815
  %2817 = vmatmul.bf16.gmra.mxu0 %v856
  %v2818 = vpop.f32.mrf.mxu0
  %v2819 = vadd.f32 %v2570, %v2818
  %v2820 = vpop.f32.mrf.mxu0
  %v2821 = vadd.f32 %v2572, %v2820
  %2822 = vmatmul.bf16.gmra.mxu0 %v859
  %v2823 = vpop.f32.mrf.mxu0
  %v2824 = vadd.f32 %v2575, %v2823
  %v2825 = vpop.f32.mrf.mxu0
  %v2826 = vadd.f32 %v2577, %v2825
  %2827 = vmatmul.bf16.gmra.mxu0 %v862
  %v2828 = vpop.f32.mrf.mxu0
  %v2829 = vadd.f32 %v2580, %v2828
  %v2830 = vpop.f32.mrf.mxu0
  %v2831 = vadd.f32 %v2582, %v2830
  %2832 = vmatmul.bf16.gmra.mxu0 %v865
  %v2833 = vpop.f32.mrf.mxu0
  %v2834 = vadd.f32 %v2585, %v2833
  %v2835 = vpop.f32.mrf.mxu0
  %v2836 = vadd.f32 %v2587, %v2835
  %2837 = vmatmul.bf16.gmra.mxu0 %v868
  %v2838 = vpop.f32.mrf.mxu0
  %v2839 = vadd.f32 %v2590, %v2838
  %v2840 = vpop.f32.mrf.mxu0
  %v2841 = vadd.f32 %v2592, %v2840
  %2842 = vmatmul.bf16.gmra.mxu0 %v871
  %v2843 = vpop.f32.mrf.mxu0
  %v2844 = vadd.f32 %v2595, %v2843
  %v2845 = vpop.f32.mrf.mxu0
  %v2846 = vadd.f32 %v2597, %v2845
  %2847 = vmatmul.bf16.gmra.mxu0 %v874
  %v2848 = vpop.f32.mrf.mxu0
  %v2849 = vadd.f32 %v2600, %v2848
  %v2850 = vpop.f32.mrf.mxu0
  %v2851 = vadd.f32 %v2602, %v2850
  %2852 = vmatmul.bf16.gmra.mxu0 %v877
  %v2853 = vpop.f32.mrf.mxu0
  %v2854 = vadd.f32 %v2605, %v2853
  %v2855 = vpop.f32.mrf.mxu0
  %v2856 = vadd.f32 %v2607, %v2855
  %2857 = vmatmul.bf16.gmra.mxu0 %v880
  %v2858 = vpop.f32.mrf.mxu0
  %v2859 = vadd.f32 %v2610, %v2858
  %v2860 = vpop.f32.mrf.mxu0
  %v2861 = vadd.f32 %v2612, %v2860
  %2862 = vmatmul.bf16.gmra.mxu0 %v883
  %v2863 = vpop.f32.mrf.mxu0
  %v2864 = vadd.f32 %v2615, %v2863
  %v2865 = vpop.f32.mrf.mxu0
  %v2866 = vadd.f32 %v2617, %v2865
  %2867 = vmatmul.bf16.gmra.mxu0 %v886
  %v2868 = vpop.f32.mrf.mxu0
  %v2869 = vadd.f32 %v2620, %v2868
  %v2870 = vpop.f32.mrf.mxu0
  %v2871 = vadd.f32 %v2622, %v2870
  %2872 = vmatmul.bf16.gmra.mxu0 %v889
  %v2873 = vpop.f32.mrf.mxu0
  %v2874 = vadd.f32 %v2625, %v2873
  %v2875 = vpop.f32.mrf.mxu0
  %v2876 = vadd.f32 %v2627, %v2875
  %2877 = vmatmul.bf16.gmra.mxu0 %v892
  %v2878 = vpop.f32.mrf.mxu0
  %v2879 = vadd.f32 %v2630, %v2878
  %v2880 = vpop.f32.mrf.mxu0
  %v2881 = vadd.f32 %v2632, %v2880
  %2882 = vmatmul.bf16.gmra.mxu0 %v895
  %v2883 = vpop.f32.mrf.mxu0
  %v2884 = vadd.f32 %v2635, %v2883
  %v2885 = vpop.f32.mrf.mxu0
  %v2886 = vadd.f32 %v2637, %v2885
  %2887 = vmatmul.bf16.gmra.mxu0 %v898
  %v2888 = vpop.f32.mrf.mxu0
  %v2889 = vadd.f32 %v2640, %v2888
  %v2890 = vpop.f32.mrf.mxu0
  %v2891 = vadd.f32 %v2642, %v2890
  %2892 = vmatmul.bf16.gmra.mxu0 %v901
  %v2893 = vpop.f32.mrf.mxu0
  %v2894 = vadd.f32 %v2645, %v2893
  %v2895 = vpop.f32.mrf.mxu0
  %v2896 = vadd.f32 %v2647, %v2895
  %2897 = vmatmul.bf16.gmra.mxu0 %v904
  %v2898 = vpop.f32.mrf.mxu0
  %v2899 = vadd.f32 %v2650, %v2898
  %v2900 = vpop.f32.mrf.mxu0
  %v2901 = vadd.f32 %v2652, %v2900
  %2902 = vmatmul.bf16.gmra.mxu0 %v907
  %v2903 = vpop.f32.mrf.mxu0
  %v2904 = vadd.f32 %v2655, %v2903
  %v2905 = vpop.f32.mrf.mxu0
  %v2906 = vadd.f32 %v2657, %v2905
  %2907 = vmatmul.bf16.gmra.mxu0 %v910
  %v2908 = vpop.f32.mrf.mxu0
  %v2909 = vadd.f32 %v2660, %v2908
  %v2910 = vpop.f32.mrf.mxu0
  %v2911 = vadd.f32 %v2662, %v2910
  %2912 = vmatmul.bf16.gmra.mxu0 %v913
  %v2913 = vpop.f32.mrf.mxu0
  %v2914 = vadd.f32 %v2665, %v2913
  %v2915 = vpop.f32.mrf.mxu0
  %v2916 = vadd.f32 %v2667, %v2915
  %2917 = vmatmul.bf16.gmra.mxu0 %v916
  %v2918 = vpop.f32.mrf.mxu0
  %v2919 = vadd.f32 %v2670, %v2918
  %v2920 = vpop.f32.mrf.mxu0
  %v2921 = vadd.f32 %v2672, %v2920
  %2922 = vdwg.mxu0
  %v2923 = vmax.f32 %v1190, %v1200
  %v2924 = vmax.f32 %v1688, %v1698
  %v2925 = vmax.f32 %v2186, %v2196
  %v2926 = vmax.f32 %v2684, %v2694
  %v2927 = vmax.f32 %v1192, %v1202
  %v2928 = vmax.f32 %v1690, %v1700
  %v2929 = vmax.f32 %v2188, %v2198
  %v2930 = vmax.f32 %v2686, %v2696
  %v2931 = vmax.f32 %v1195, %v1205
  %v2932 = vmax.f32 %v1693, %v1703
  %v2933 = vmax.f32 %v2191, %v2201
  %v2934 = vmax.f32 %v2689, %v2699
  %v2935 = vmax.f32 %v1197, %v1207
  %v2936 = vmax.f32 %v1695, %v1705
  %v2937 = vmax.f32 %v2193, %v2203
  %v2938 = vmax.f32 %v2691, %v2701
  %v2939 = vmax.f32 %v1210, %v1220
  %v2940 = vmax.f32 %v1708, %v1718
  %v2941 = vmax.f32 %v2206, %v2216
  %v2942 = vmax.f32 %v2704, %v2714
  %v2943 = vmax.f32 %v1212, %v1222
  %v2944 = vmax.f32 %v1710, %v1720
  %v2945 = vmax.f32 %v2208, %v2218
  %v2946 = vmax.f32 %v2706, %v2716
  %v2947 = vmax.f32 %v1215, %v1225
  %v2948 = vmax.f32 %v1713, %v1723
  %v2949 = vmax.f32 %v2211, %v2221
  %v2950 = vmax.f32 %v2709, %v2719
  %v2951 = vmax.f32 %v1217, %v1227
  %v2952 = vmax.f32 %v1715, %v1725
  %v2953 = vmax.f32 %v2213, %v2223
  %v2954 = vmax.f32 %v2711, %v2721
  %v2955 = vmax.f32 %v1230, %v1240
  %v2956 = vmax.f32 %v1728, %v1738
  %v2957 = vmax.f32 %v2226, %v2236
  %v2958 = vmax.f32 %v2724, %v2734
  %v2959 = vmax.f32 %v1232, %v1242
  %v2960 = vmax.f32 %v1730, %v1740
  %v2961 = vmax.f32 %v2228, %v2238
  %v2962 = vmax.f32 %v2726, %v2736
  %v2963 = vmax.f32 %v1235, %v1245
  %v2964 = vmax.f32 %v1733, %v1743
  %v2965 = vmax.f32 %v2231, %v2241
  %v2966 = vmax.f32 %v2729, %v2739
  %v2967 = vmax.f32 %v1237, %v1247
  %v2968 = vmax.f32 %v1735, %v1745
  %v2969 = vmax.f32 %v2233, %v2243
  %v2970 = vmax.f32 %v2731, %v2741
  %v2971 = vmax.f32 %v1250, %v1260
  %v2972 = vmax.f32 %v1748, %v1758
  %v2973 = vmax.f32 %v2246, %v2256
  %v2974 = vmax.f32 %v2744, %v2754
  %v2975 = vmax.f32 %v1252, %v1262
  %v2976 = vmax.f32 %v1750, %v1760
  %v2977 = vmax.f32 %v2248, %v2258
  %v2978 = vmax.f32 %v2746, %v2756
  %v2979 = vmax.f32 %v1255, %v1265
  %v2980 = vmax.f32 %v1753, %v1763
  %v2981 = vmax.f32 %v2251, %v2261
  %v2982 = vmax.f32 %v2749, %v2759
  %v2983 = vmax.f32 %v1257, %v1267
  %v2984 = vmax.f32 %v1755, %v1765
  %v2985 = vmax.f32 %v2253, %v2263
  %v2986 = vmax.f32 %v2751, %v2761
  %v2987 = vmax.f32 %v1270, %v1280
  %v2988 = vmax.f32 %v1768, %v1778
  %v2989 = vmax.f32 %v2266, %v2276
  %v2990 = vmax.f32 %v2764, %v2774
  %v2991 = vmax.f32 %v1272, %v1282
  %v2992 = vmax.f32 %v1770, %v1780
  %v2993 = vmax.f32 %v2268, %v2278
  %v2994 = vmax.f32 %v2766, %v2776
  %v2995 = vmax.f32 %v1275, %v1285
  %v2996 = vmax.f32 %v1773, %v1783
  %v2997 = vmax.f32 %v2271, %v2281
  %v2998 = vmax.f32 %v2769, %v2779
  %v2999 = vmax.f32 %v1277, %v1287
  %v3000 = vmax.f32 %v1775, %v1785
  %v3001 = vmax.f32 %v2273, %v2283
  %v3002 = vmax.f32 %v2771, %v2781
  %v3003 = vmax.f32 %v1290, %v1300
  %v3004 = vmax.f32 %v1788, %v1798
  %v3005 = vmax.f32 %v2286, %v2296
  %v3006 = vmax.f32 %v2784, %v2794
  %v3007 = vmax.f32 %v1292, %v1302
  %v3008 = vmax.f32 %v1790, %v1800
  %v3009 = vmax.f32 %v2288, %v2298
  %v3010 = vmax.f32 %v2786, %v2796
  %v3011 = vmax.f32 %v1295, %v1305
  %v3012 = vmax.f32 %v1793, %v1803
  %v3013 = vmax.f32 %v2291, %v2301
  %v3014 = vmax.f32 %v2789, %v2799
  %v3015 = vmax.f32 %v1297, %v1307
  %v3016 = vmax.f32 %v1795, %v1805
  %v3017 = vmax.f32 %v2293, %v2303
  %v3018 = vmax.f32 %v2791, %v2801
  %v3019 = vmax.f32 %v1310, %v1320
  %v3020 = vmax.f32 %v1808, %v1818
  %v3021 = vmax.f32 %v2306, %v2316
  %v3022 = vmax.f32 %v2804, %v2814
  %v3023 = vmax.f32 %v1312, %v1322
  %v3024 = vmax.f32 %v1810, %v1820
  %v3025 = vmax.f32 %v2308, %v2318
  %v3026 = vmax.f32 %v2806, %v2816
  %v3027 = vmax.f32 %v1315, %v1325
  %v3028 = vmax.f32 %v1813, %v1823
  %v3029 = vmax.f32 %v2311, %v2321
  %v3030 = vmax.f32 %v2809, %v2819
  %v3031 = vmax.f32 %v1317, %v1327
  %v3032 = vmax.f32 %v1815, %v1825
  %v3033 = vmax.f32 %v2313, %v2323
  %v3034 = vmax.f32 %v2811, %v2821
  %v3035 = vmax.f32 %v1330, %v1340
  %v3036 = vmax.f32 %v1828, %v1838
  %v3037 = vmax.f32 %v2326, %v2336
  %v3038 = vmax.f32 %v2824, %v2834
  %v3039 = vmax.f32 %v1332, %v1342
  %v3040 = vmax.f32 %v1830, %v1840
  %v3041 = vmax.f32 %v2328, %v2338
  %v3042 = vmax.f32 %v2826, %v2836
  %v3043 = vmax.f32 %v1335, %v1345
  %v3044 = vmax.f32 %v1833, %v1843
  %v3045 = vmax.f32 %v2331, %v2341
  %v3046 = vmax.f32 %v2829, %v2839
  %v3047 = vmax.f32 %v1337, %v1347
  %v3048 = vmax.f32 %v1835, %v1845
  %v3049 = vmax.f32 %v2333, %v2343
  %v3050 = vmax.f32 %v2831, %v2841
  %v3051 = vmax.f32 %v1350, %v1360
  %v3052 = vmax.f32 %v1848, %v1858
  %v3053 = vmax.f32 %v2346, %v2356
  %v3054 = vmax.f32 %v2844, %v2854
  %v3055 = vmax.f32 %v1352, %v1362
  %v3056 = vmax.f32 %v1850, %v1860
  %v3057 = vmax.f32 %v2348, %v2358
  %v3058 = vmax.f32 %v2846, %v2856
  %v3059 = vmax.f32 %v1355, %v1365
  %v3060 = vmax.f32 %v1853, %v1863
  %v3061 = vmax.f32 %v2351, %v2361
  %v3062 = vmax.f32 %v2849, %v2859
  %v3063 = vmax.f32 %v1357, %v1367
  %v3064 = vmax.f32 %v1855, %v1865
  %v3065 = vmax.f32 %v2353, %v2363
  %v3066 = vmax.f32 %v2851, %v2861
  %v3067 = vmax.f32 %v1370, %v1380
  %v3068 = vmax.f32 %v1868, %v1878
  %v3069 = vmax.f32 %v2366, %v2376
  %v3070 = vmax.f32 %v2864, %v2874
  %v3071 = vmax.f32 %v1372, %v1382
  %v3072 = vmax.f32 %v1870, %v1880
  %v3073 = vmax.f32 %v2368, %v2378
  %v3074 = vmax.f32 %v2866, %v2876
  %v3075 = vmax.f32 %v1375, %v1385
  %v3076 = vmax.f32 %v1873, %v1883
  %v3077 = vmax.f32 %v2371, %v2381
  %v3078 = vmax.f32 %v2869, %v2879
  %v3079 = vmax.f32 %v1377, %v1387
  %v3080 = vmax.f32 %v1875, %v1885
  %v3081 = vmax.f32 %v2373, %v2383
  %v3082 = vmax.f32 %v2871, %v2881
  %v3083 = vmax.f32 %v1390, %v1400
  %v3084 = vmax.f32 %v1888, %v1898
  %v3085 = vmax.f32 %v2386, %v2396
  %v3086 = vmax.f32 %v2884, %v2894
  %v3087 = vmax.f32 %v1392, %v1402
  %v3088 = vmax.f32 %v1890, %v1900
  %v3089 = vmax.f32 %v2388, %v2398
  %v3090 = vmax.f32 %v2886, %v2896
  %v3091 = vmax.f32 %v1395, %v1405
  %v3092 = vmax.f32 %v1893, %v1903
  %v3093 = vmax.f32 %v2391, %v2401
  %v3094 = vmax.f32 %v2889, %v2899
  %v3095 = vmax.f32 %v1397, %v1407
  %v3096 = vmax.f32 %v1895, %v1905
  %v3097 = vmax.f32 %v2393, %v2403
  %v3098 = vmax.f32 %v2891, %v2901
  %v3099 = vmax.f32 %v1410, %v1420
  %v3100 = vmax.f32 %v1908, %v1918
  %v3101 = vmax.f32 %v2406, %v2416
  %v3102 = vmax.f32 %v2904, %v2914
  %v3103 = vmax.f32 %v1412, %v1422
  %v3104 = vmax.f32 %v1910, %v1920
  %v3105 = vmax.f32 %v2408, %v2418
  %v3106 = vmax.f32 %v2906, %v2916
  %v3107 = vmax.f32 %v1415, %v1425
  %v3108 = vmax.f32 %v1913, %v1923
  %v3109 = vmax.f32 %v2411, %v2421
  %v3110 = vmax.f32 %v2909, %v2919
  %v3111 = vmax.f32 %v1417, %v1427
  %v3112 = vmax.f32 %v1915, %v1925
  %v3113 = vmax.f32 %v2413, %v2423
  %v3114 = vmax.f32 %v2911, %v2921
  %v3115 = vmax.f32 %v2923, %v2925
  %v3116 = vmax.f32 %v2924, %v2926
  %v3117 = vmax.f32 %v2927, %v2929
  %v3118 = vmax.f32 %v2928, %v2930
  %v3119 = vmax.f32 %v2931, %v2933
  %v3120 = vmax.f32 %v2932, %v2934
  %v3121 = vmax.f32 %v2935, %v2937
  %v3122 = vmax.f32 %v2936, %v2938
  %v3123 = vmax.f32 %v2939, %v2941
  %v3124 = vmax.f32 %v2940, %v2942
  %v3125 = vmax.f32 %v2943, %v2945
  %v3126 = vmax.f32 %v2944, %v2946
  %v3127 = vmax.f32 %v2947, %v2949
  %v3128 = vmax.f32 %v2948, %v2950
  %v3129 = vmax.f32 %v2951, %v2953
  %v3130 = vmax.f32 %v2952, %v2954
  %v3131 = vmax.f32 %v2955, %v2957
  %v3132 = vmax.f32 %v2956, %v2958
  %v3133 = vmax.f32 %v2959, %v2961
  %v3134 = vmax.f32 %v2960, %v2962
  %v3135 = vmax.f32 %v2963, %v2965
  %v3136 = vmax.f32 %v2964, %v2966
  %v3137 = vmax.f32 %v2967, %v2969
  %v3138 = vmax.f32 %v2968, %v2970
  %v3139 = vmax.f32 %v2971, %v2973
  %v3140 = vmax.f32 %v2972, %v2974
  %v3141 = vmax.f32 %v2975, %v2977
  %v3142 = vmax.f32 %v2976, %v2978
  %v3143 = vmax.f32 %v2979, %v2981
  %v3144 = vmax.f32 %v2980, %v2982
  %v3145 = vmax.f32 %v2983, %v2985
  %v3146 = vmax.f32 %v2984, %v2986
  %v3147 = vmax.f32 %v2987, %v2989
  %v3148 = vmax.f32 %v2988, %v2990
  %v3149 = vmax.f32 %v2991, %v2993
  %v3150 = vmax.f32 %v2992, %v2994
  %v3151 = vmax.f32 %v2995, %v2997
  %v3152 = vmax.f32 %v2996, %v2998
  %v3153 = vmax.f32 %v2999, %v3001
  %v3154 = vmax.f32 %v3000, %v3002
  %v3155 = vmax.f32 %v3003, %v3005
  %v3156 = vmax.f32 %v3004, %v3006
  %v3157 = vmax.f32 %v3007, %v3009
  %v3158 = vmax.f32 %v3008, %v3010
  %v3159 = vmax.f32 %v3011, %v3013
  %v3160 = vmax.f32 %v3012, %v3014
  %v3161 = vmax.f32 %v3015, %v3017
  %v3162 = vmax.f32 %v3016, %v3018
  %v3163 = vmax.f32 %v3019, %v3021
  %v3164 = vmax.f32 %v3020, %v3022
  %v3165 = vmax.f32 %v3023, %v3025
  %v3166 = vmax.f32 %v3024, %v3026
  %v3167 = vmax.f32 %v3027, %v3029
  %v3168 = vmax.f32 %v3028, %v3030
  %v3169 = vmax.f32 %v3031, %v3033
  %v3170 = vmax.f32 %v3032, %v3034
  %v3171 = vmax.f32 %v3035, %v3037
  %v3172 = vmax.f32 %v3036, %v3038
  %v3173 = vmax.f32 %v3039, %v3041
  %v3174 = vmax.f32 %v3040, %v3042
  %v3175 = vmax.f32 %v3043, %v3045
  %v3176 = vmax.f32 %v3044, %v3046
  %v3177 = vmax.f32 %v3047, %v3049
  %v3178 = vmax.f32 %v3048, %v3050
  %v3179 = vmax.f32 %v3051, %v3053
  %v3180 = vmax.f32 %v3052, %v3054
  %v3181 = vmax.f32 %v3055, %v3057
  %v3182 = vmax.f32 %v3056, %v3058
  %v3183 = vmax.f32 %v3059, %v3061
  %v3184 = vmax.f32 %v3060, %v3062
  %v3185 = vmax.f32 %v3063, %v3065
  %v3186 = vmax.f32 %v3064, %v3066
  %v3187 = vmax.f32 %v3067, %v3069
  %v3188 = vmax.f32 %v3068, %v3070
  %v3189 = vmax.f32 %v3071, %v3073
  %v3190 = vmax.f32 %v3072, %v3074
  %v3191 = vmax.f32 %v3075, %v3077
  %v3192 = vmax.f32 %v3076, %v3078
  %v3193 = vmax.f32 %v3079, %v3081
  %v3194 = vmax.f32 %v3080, %v3082
  %v3195 = vmax.f32 %v3083, %v3085
  %v3196 = vmax.f32 %v3084, %v3086
  %v3197 = vmax.f32 %v3087, %v3089
  %v3198 = vmax.f32 %v3088, %v3090
  %v3199 = vmax.f32 %v3091, %v3093
  %v3200 = vmax.f32 %v3092, %v3094
  %v3201 = vmax.f32 %v3095, %v3097
  %v3202 = vmax.f32 %v3096, %v3098
  %v3203 = vmax.f32 %v3099, %v3101
  %v3204 = vmax.f32 %v3100, %v3102
  %v3205 = vmax.f32 %v3103, %v3105
  %v3206 = vmax.f32 %v3104, %v3106
  %v3207 = vmax.f32 %v3107, %v3109
  %v3208 = vmax.f32 %v3108, %v3110
  %v3209 = vmax.f32 %v3111, %v3113
  %v3210 = vmax.f32 %v3112, %v3114
  %v3211 = vld [vmem:[%s2] sm:$0x3]
  %v3213 = vperm.slane %v3211, 0
  %v3214 = vperm.slane %v3211, 1
  %v3217 = vadd.f32 %v3115, %v3213
  %v3218 = vadd.f32 %v3116, %v3214
  %v3219 = vadd.f32 %v3117, %v3213
  %v3220 = vadd.f32 %v3118, %v3214
  %v3221 = vadd.f32 %v3119, %v3213
  %v3222 = vadd.f32 %v3120, %v3214
  %v3223 = vadd.f32 %v3121, %v3213
  %v3224 = vadd.f32 %v3122, %v3214
  %v3225 = vadd.f32 %v3123, %v3213
  %v3226 = vadd.f32 %v3124, %v3214
  %v3227 = vadd.f32 %v3125, %v3213
  %v3228 = vadd.f32 %v3126, %v3214
  %v3229 = vadd.f32 %v3127, %v3213
  %v3230 = vadd.f32 %v3128, %v3214
  %v3231 = vadd.f32 %v3129, %v3213
  %v3232 = vadd.f32 %v3130, %v3214
  %v3233 = vadd.f32 %v3131, %v3213
  %v3234 = vadd.f32 %v3132, %v3214
  %v3235 = vadd.f32 %v3133, %v3213
  %v3236 = vadd.f32 %v3134, %v3214
  %v3237 = vadd.f32 %v3135, %v3213
  %v3238 = vadd.f32 %v3136, %v3214
  %v3239 = vadd.f32 %v3137, %v3213
  %v3240 = vadd.f32 %v3138, %v3214
  %v3241 = vadd.f32 %v3139, %v3213
  %v3242 = vadd.f32 %v3140, %v3214
  %v3243 = vadd.f32 %v3141, %v3213
  %v3244 = vadd.f32 %v3142, %v3214
  %v3245 = vadd.f32 %v3143, %v3213
  %v3246 = vadd.f32 %v3144, %v3214
  %v3247 = vadd.f32 %v3145, %v3213
  %v3248 = vadd.f32 %v3146, %v3214
  %v3249 = vadd.f32 %v3147, %v3213
  %v3250 = vadd.f32 %v3148, %v3214
  %v3251 = vadd.f32 %v3149, %v3213
  %v3252 = vadd.f32 %v3150, %v3214
  %v3253 = vadd.f32 %v3151, %v3213
  %v3254 = vadd.f32 %v3152, %v3214
  %v3255 = vadd.f32 %v3153, %v3213
  %v3256 = vadd.f32 %v3154, %v3214
  %v3257 = vadd.f32 %v3155, %v3213
  %v3258 = vadd.f32 %v3156, %v3214
  %v3259 = vadd.f32 %v3157, %v3213
  %v3260 = vadd.f32 %v3158, %v3214
  %v3261 = vadd.f32 %v3159, %v3213
  %v3262 = vadd.f32 %v3160, %v3214
  %v3263 = vadd.f32 %v3161, %v3213
  %v3264 = vadd.f32 %v3162, %v3214
  %v3265 = vadd.f32 %v3163, %v3213
  %v3266 = vadd.f32 %v3164, %v3214
  %v3267 = vadd.f32 %v3165, %v3213
  %v3268 = vadd.f32 %v3166, %v3214
  %v3269 = vadd.f32 %v3167, %v3213
  %v3270 = vadd.f32 %v3168, %v3214
  %v3271 = vadd.f32 %v3169, %v3213
  %v3272 = vadd.f32 %v3170, %v3214
  %v3273 = vadd.f32 %v3171, %v3213
  %v3274 = vadd.f32 %v3172, %v3214
  %v3275 = vadd.f32 %v3173, %v3213
  %v3276 = vadd.f32 %v3174, %v3214
  %v3277 = vadd.f32 %v3175, %v3213
  %v3278 = vadd.f32 %v3176, %v3214
  %v3279 = vadd.f32 %v3177, %v3213
  %v3280 = vadd.f32 %v3178, %v3214
  %v3281 = vadd.f32 %v3179, %v3213
  %v3282 = vadd.f32 %v3180, %v3214
  %v3283 = vadd.f32 %v3181, %v3213
  %v3284 = vadd.f32 %v3182, %v3214
  %v3285 = vadd.f32 %v3183, %v3213
  %v3286 = vadd.f32 %v3184, %v3214
  %v3287 = vadd.f32 %v3185, %v3213
  %v3288 = vadd.f32 %v3186, %v3214
  %v3289 = vadd.f32 %v3187, %v3213
  %v3290 = vadd.f32 %v3188, %v3214
  %v3291 = vadd.f32 %v3189, %v3213
  %v3292 = vadd.f32 %v3190, %v3214
  %v3293 = vadd.f32 %v3191, %v3213
  %v3294 = vadd.f32 %v3192, %v3214
  %v3295 = vadd.f32 %v3193, %v3213
  %v3296 = vadd.f32 %v3194, %v3214
  %v3297 = vadd.f32 %v3195, %v3213
  %v3298 = vadd.f32 %v3196, %v3214
  %v3299 = vadd.f32 %v3197, %v3213
  %v3300 = vadd.f32 %v3198, %v3214
  %v3301 = vadd.f32 %v3199, %v3213
  %v3302 = vadd.f32 %v3200, %v3214
  %v3303 = vadd.f32 %v3201, %v3213
  %v3304 = vadd.f32 %v3202, %v3214
  %v3305 = vadd.f32 %v3203, %v3213
  %v3306 = vadd.f32 %v3204, %v3214
  %v3307 = vadd.f32 %v3205, %v3213
  %v3308 = vadd.f32 %v3206, %v3214
  %v3309 = vadd.f32 %v3207, %v3213
  %v3310 = vadd.f32 %v3208, %v3214
  %v3311 = vadd.f32 %v3209, %v3213
  %v3312 = vadd.f32 %v3210, %v3214
  %v3313 = vmax.f32 %v3217, 0.0
  %v3314 = vmax.f32 %v3218, 0.0
  %v3315 = vmax.f32 %v3219, 0.0
  %v3316 = vmax.f32 %v3220, 0.0
  %v3317 = vmax.f32 %v3221, 0.0
  %v3318 = vmax.f32 %v3222, 0.0
  %v3319 = vmax.f32 %v3223, 0.0
  %v3320 = vmax.f32 %v3224, 0.0
  %v3321 = vmax.f32 %v3225, 0.0
  %v3322 = vmax.f32 %v3226, 0.0
  %v3323 = vmax.f32 %v3227, 0.0
  %v3324 = vmax.f32 %v3228, 0.0
  %v3325 = vmax.f32 %v3229, 0.0
  %v3326 = vmax.f32 %v3230, 0.0
  %v3327 = vmax.f32 %v3231, 0.0
  %v3328 = vmax.f32 %v3232, 0.0
  %v3329 = vmax.f32 %v3233, 0.0
  %v3330 = vmax.f32 %v3234, 0.0
  %v3331 = vmax.f32 %v3235, 0.0
  %v3332 = vmax.f32 %v3236, 0.0
  %v3333 = vmax.f32 %v3237, 0.0
  %v3334 = vmax.f32 %v3238, 0.0
  %v3335 = vmax.f32 %v3239, 0.0
  %v3336 = vmax.f32 %v3240, 0.0
  %v3337 = vmax.f32 %v3241, 0.0
  %v3338 = vmax.f32 %v3242, 0.0
  %v3339 = vmax.f32 %v3243, 0.0
  %v3340 = vmax.f32 %v3244, 0.0
  %v3341 = vmax.f32 %v3245, 0.0
  %v3342 = vmax.f32 %v3246, 0.0
  %v3343 = vmax.f32 %v3247, 0.0
  %v3344 = vmax.f32 %v3248, 0.0
  %v3345 = vmax.f32 %v3249, 0.0
  %v3346 = vmax.f32 %v3250, 0.0
  %v3347 = vmax.f32 %v3251, 0.0
  %v3348 = vmax.f32 %v3252, 0.0
  %v3349 = vmax.f32 %v3253, 0.0
  %v3350 = vmax.f32 %v3254, 0.0
  %v3351 = vmax.f32 %v3255, 0.0
  %v3352 = vmax.f32 %v3256, 0.0
  %v3353 = vmax.f32 %v3257, 0.0
  %v3354 = vmax.f32 %v3258, 0.0
  %v3355 = vmax.f32 %v3259, 0.0
  %v3356 = vmax.f32 %v3260, 0.0
  %v3357 = vmax.f32 %v3261, 0.0
  %v3358 = vmax.f32 %v3262, 0.0
  %v3359 = vmax.f32 %v3263, 0.0
  %v3360 = vmax.f32 %v3264, 0.0
  %v3361 = vmax.f32 %v3265, 0.0
  %v3362 = vmax.f32 %v3266, 0.0
  %v3363 = vmax.f32 %v3267, 0.0
  %v3364 = vmax.f32 %v3268, 0.0
  %v3365 = vmax.f32 %v3269, 0.0
  %v3366 = vmax.f32 %v3270, 0.0
  %v3367 = vmax.f32 %v3271, 0.0
  %v3368 = vmax.f32 %v3272, 0.0
  %v3369 = vmax.f32 %v3273, 0.0
  %v3370 = vmax.f32 %v3274, 0.0
  %v3371 = vmax.f32 %v3275, 0.0
  %v3372 = vmax.f32 %v3276, 0.0
  %v3373 = vmax.f32 %v3277, 0.0
  %v3374 = vmax.f32 %v3278, 0.0
  %v3375 = vmax.f32 %v3279, 0.0
  %v3376 = vmax.f32 %v3280, 0.0
  %v3377 = vmax.f32 %v3281, 0.0
  %v3378 = vmax.f32 %v3282, 0.0
  %v3379 = vmax.f32 %v3283, 0.0
  %v3380 = vmax.f32 %v3284, 0.0
  %v3381 = vmax.f32 %v3285, 0.0
  %v3382 = vmax.f32 %v3286, 0.0
  %v3383 = vmax.f32 %v3287, 0.0
  %v3384 = vmax.f32 %v3288, 0.0
  %v3385 = vmax.f32 %v3289, 0.0
  %v3386 = vmax.f32 %v3290, 0.0
  %v3387 = vmax.f32 %v3291, 0.0
  %v3388 = vmax.f32 %v3292, 0.0
  %v3389 = vmax.f32 %v3293, 0.0
  %v3390 = vmax.f32 %v3294, 0.0
  %v3391 = vmax.f32 %v3295, 0.0
  %v3392 = vmax.f32 %v3296, 0.0
  %v3393 = vmax.f32 %v3297, 0.0
  %v3394 = vmax.f32 %v3298, 0.0
  %v3395 = vmax.f32 %v3299, 0.0
  %v3396 = vmax.f32 %v3300, 0.0
  %v3397 = vmax.f32 %v3301, 0.0
  %v3398 = vmax.f32 %v3302, 0.0
  %v3399 = vmax.f32 %v3303, 0.0
  %v3400 = vmax.f32 %v3304, 0.0
  %v3401 = vmax.f32 %v3305, 0.0
  %v3402 = vmax.f32 %v3306, 0.0
  %v3403 = vmax.f32 %v3307, 0.0
  %v3404 = vmax.f32 %v3308, 0.0
  %v3405 = vmax.f32 %v3309, 0.0
  %v3406 = vmax.f32 %v3310, 0.0
  %v3407 = vmax.f32 %v3311, 0.0
  %v3408 = vmax.f32 %v3312, 0.0
  %v3409 = vpack.c.bf16 %v3314, %v3313
  %v3410 = vpack.c.bf16 %v3316, %v3315
  %v3411 = vpack.c.bf16 %v3318, %v3317
  %v3412 = vpack.c.bf16 %v3320, %v3319
  %v3413 = vpack.c.bf16 %v3322, %v3321
  %v3414 = vpack.c.bf16 %v3324, %v3323
  %v3415 = vpack.c.bf16 %v3326, %v3325
  %v3416 = vpack.c.bf16 %v3328, %v3327
  %v3417 = vpack.c.bf16 %v3330, %v3329
  %v3418 = vpack.c.bf16 %v3332, %v3331
  %v3419 = vpack.c.bf16 %v3334, %v3333
  %v3420 = vpack.c.bf16 %v3336, %v3335
  %v3421 = vpack.c.bf16 %v3338, %v3337
  %v3422 = vpack.c.bf16 %v3340, %v3339
  %v3423 = vpack.c.bf16 %v3342, %v3341
  %v3424 = vpack.c.bf16 %v3344, %v3343
  %v3425 = vpack.c.bf16 %v3346, %v3345
  %v3426 = vpack.c.bf16 %v3348, %v3347
  %v3427 = vpack.c.bf16 %v3350, %v3349
  %v3428 = vpack.c.bf16 %v3352, %v3351
  %v3429 = vpack.c.bf16 %v3354, %v3353
  %v3430 = vpack.c.bf16 %v3356, %v3355
  %v3431 = vpack.c.bf16 %v3358, %v3357
  %v3432 = vpack.c.bf16 %v3360, %v3359
  %v3433 = vpack.c.bf16 %v3362, %v3361
  %v3434 = vpack.c.bf16 %v3364, %v3363
  %v3435 = vpack.c.bf16 %v3366, %v3365
  %v3436 = vpack.c.bf16 %v3368, %v3367
  %v3437 = vpack.c.bf16 %v3370, %v3369
  %v3438 = vpack.c.bf16 %v3372, %v3371
  %v3439 = vpack.c.bf16 %v3374, %v3373
  %v3440 = vpack.c.bf16 %v3376, %v3375
  %v3441 = vpack.c.bf16 %v3378, %v3377
  %v3442 = vpack.c.bf16 %v3380, %v3379
  %v3443 = vpack.c.bf16 %v3382, %v3381
  %v3444 = vpack.c.bf16 %v3384, %v3383
  %v3445 = vpack.c.bf16 %v3386, %v3385
  %v3446 = vpack.c.bf16 %v3388, %v3387
  %v3447 = vpack.c.bf16 %v3390, %v3389
  %v3448 = vpack.c.bf16 %v3392, %v3391
  %v3449 = vpack.c.bf16 %v3394, %v3393
  %v3450 = vpack.c.bf16 %v3396, %v3395
  %v3451 = vpack.c.bf16 %v3398, %v3397
  %v3452 = vpack.c.bf16 %v3400, %v3399
  %v3453 = vpack.c.bf16 %v3402, %v3401
  %v3454 = vpack.c.bf16 %v3404, %v3403
  %v3455 = vpack.c.bf16 %v3406, %v3405
  %v3456 = vpack.c.bf16 %v3408, %v3407
  %v3457 = vld [vmem:[%s3] sm:$0xff]
  %v3458 = vld [vmem:[%s3 + $0x8] sm:$0xff]
  %v3459 = vld [vmem:[%s3 + $0x10] sm:$0xff]
  %v3460 = vld [vmem:[%s3 + $0x18] sm:$0xff]
  %v3461 = vld [vmem:[%s3 + $0x20] sm:$0xff]
  %v3462 = vld [vmem:[%s3 + $0x28] sm:$0xff]
  %v3463 = vld [vmem:[%s3 + $0x30] sm:$0xff]
  %v3464 = vld [vmem:[%s3 + $0x38] sm:$0xff]
  %v3465 = vld [vmem:[%s3 + $0x40] sm:$0xff]
  %v3466 = vld [vmem:[%s3 + $0x48] sm:$0xff]
  %v3467 = vld [vmem:[%s3 + $0x50] sm:$0xff]
  %v3468 = vld [vmem:[%s3 + $0x58] sm:$0xff]
  %v3469 = vld [vmem:[%s3 + $0x60] sm:$0xff]
  %v3470 = vld [vmem:[%s3 + $0x68] sm:$0xff]
  %v3471 = vld [vmem:[%s3 + $0x70] sm:$0xff]
  %v3472 = vld [vmem:[%s3 + $0x78] sm:$0xff]
  %v3473 = vld [vmem:[%s3 + $0x80] sm:$0xff]
  %v3474 = vld [vmem:[%s3 + $0x88] sm:$0xff]
  %v3475 = vld [vmem:[%s3 + $0x90] sm:$0xff]
  %v3476 = vld [vmem:[%s3 + $0x98] sm:$0xff]
  %v3477 = vld [vmem:[%s3 + $0xa0] sm:$0xff]
  %v3478 = vld [vmem:[%s3 + $0xa8] sm:$0xff]
  %v3479 = vld [vmem:[%s3 + $0xb0] sm:$0xff]
  %v3480 = vld [vmem:[%s3 + $0xb8] sm:$0xff]
  %v3481 = vld [vmem:[%s3 + $0xc0] sm:$0xff]
  %v3482 = vld [vmem:[%s3 + $0xc8] sm:$0xff]
  %v3483 = vld [vmem:[%s3 + $0xd0] sm:$0xff]
  %v3484 = vld [vmem:[%s3 + $0xd8] sm:$0xff]
  %v3485 = vld [vmem:[%s3 + $0xe0] sm:$0xff]
  %v3486 = vld [vmem:[%s3 + $0xe8] sm:$0xff]
  %v3487 = vld [vmem:[%s3 + $0xf0] sm:$0xff]
  %v3488 = vld [vmem:[%s3 + $0xf8] sm:$0xff]
  %s3489 = scalar_lea.vmem %s3, 256
  %v3490 = vld [vmem:[%s3489] sm:$0xff]
  %v3491 = vld [vmem:[%s3489 + $0x8] sm:$0xff]
  %v3492 = vld [vmem:[%s3489 + $0x10] sm:$0xff]
  %v3493 = vld [vmem:[%s3489 + $0x18] sm:$0xff]
  %v3494 = vld [vmem:[%s3489 + $0x20] sm:$0xff]
  %v3495 = vld [vmem:[%s3489 + $0x28] sm:$0xff]
  %v3496 = vld [vmem:[%s3489 + $0x30] sm:$0xff]
  %v3497 = vld [vmem:[%s3489 + $0x38] sm:$0xff]
  %v3498 = vld [vmem:[%s3489 + $0x40] sm:$0xff]
  %v3499 = vld [vmem:[%s3489 + $0x48] sm:$0xff]
  %v3500 = vld [vmem:[%s3489 + $0x50] sm:$0xff]
  %v3501 = vld [vmem:[%s3489 + $0x58] sm:$0xff]
  %v3502 = vld [vmem:[%s3489 + $0x60] sm:$0xff]
  %v3503 = vld [vmem:[%s3489 + $0x68] sm:$0xff]
  %v3504 = vld [vmem:[%s3489 + $0x70] sm:$0xff]
  %v3505 = vld [vmem:[%s3489 + $0x78] sm:$0xff]
  %v3506 = vld [vmem:[%s3489 + $0x80] sm:$0xff]
  %v3507 = vld [vmem:[%s3489 + $0x88] sm:$0xff]
  %v3508 = vld [vmem:[%s3489 + $0x90] sm:$0xff]
  %v3509 = vld [vmem:[%s3489 + $0x98] sm:$0xff]
  %v3510 = vld [vmem:[%s3489 + $0xa0] sm:$0xff]
  %v3511 = vld [vmem:[%s3489 + $0xa8] sm:$0xff]
  %v3512 = vld [vmem:[%s3489 + $0xb0] sm:$0xff]
  %v3513 = vld [vmem:[%s3489 + $0xb8] sm:$0xff]
  %v3514 = vld [vmem:[%s3489 + $0xc0] sm:$0xff]
  %v3515 = vld [vmem:[%s3489 + $0xc8] sm:$0xff]
  %v3516 = vld [vmem:[%s3489 + $0xd0] sm:$0xff]
  %v3517 = vld [vmem:[%s3489 + $0xd8] sm:$0xff]
  %v3518 = vld [vmem:[%s3489 + $0xe0] sm:$0xff]
  %v3519 = vld [vmem:[%s3489 + $0xe8] sm:$0xff]
  %v3520 = vld [vmem:[%s3489 + $0xf0] sm:$0xff]
  %v3521 = vld [vmem:[%s3489 + $0xf8] sm:$0xff]
  %v3554 = vunpack.c.l.b16 %v3413
  %v3555 = vunpack.c.h.b16 %v3413
  %v3556 = vunpack.c.l.b16 %v3414
  %v3557 = vunpack.c.h.b16 %v3414
  %v3558 = vunpack.c.l.b16 %v3415
  %v3559 = vunpack.c.h.b16 %v3415
  %v3560 = vunpack.c.l.b16 %v3416
  %v3561 = vunpack.c.h.b16 %v3416
  %v3562 = vunpack.c.l.b16 %v3417
  %v3563 = vunpack.c.h.b16 %v3417
  %v3564 = vunpack.c.l.b16 %v3418
  %v3565 = vunpack.c.h.b16 %v3418
  %v3566 = vunpack.c.l.b16 %v3419
  %v3567 = vunpack.c.h.b16 %v3419
  %v3568 = vunpack.c.l.b16 %v3420
  %v3569 = vunpack.c.h.b16 %v3420
  %v3570 = vunpack.c.l.b16 %v3421
  %v3571 = vunpack.c.h.b16 %v3421
  %v3572 = vunpack.c.l.b16 %v3422
  %v3573 = vunpack.c.h.b16 %v3422
  %v3574 = vunpack.c.l.b16 %v3423
  %v3575 = vunpack.c.h.b16 %v3423
  %v3576 = vunpack.c.l.b16 %v3424
  %v3577 = vunpack.c.h.b16 %v3424
  %v3578 = vunpack.c.l.b16 %v3425
  %v3579 = vunpack.c.h.b16 %v3425
  %v3580 = vunpack.c.l.b16 %v3426
  %v3581 = vunpack.c.h.b16 %v3426
  %v3582 = vunpack.c.l.b16 %v3427
  %v3583 = vunpack.c.h.b16 %v3427
  %v3584 = vunpack.c.l.b16 %v3428
  %v3585 = vunpack.c.h.b16 %v3428
  %v3586 = vunpack.c.l.b16 %v3429
  %v3587 = vunpack.c.h.b16 %v3429
  %v3588 = vunpack.c.l.b16 %v3430
  %v3589 = vunpack.c.h.b16 %v3430
  %v3590 = vunpack.c.l.b16 %v3431
  %v3591 = vunpack.c.h.b16 %v3431
  %v3592 = vunpack.c.l.b16 %v3432
  %v3593 = vunpack.c.h.b16 %v3432
  %v3594 = vunpack.c.l.b16 %v3433
  %v3595 = vunpack.c.h.b16 %v3433
  %v3596 = vunpack.c.l.b16 %v3434
  %v3597 = vunpack.c.h.b16 %v3434
  %v3598 = vunpack.c.l.b16 %v3435
  %v3599 = vunpack.c.h.b16 %v3435
  %v3600 = vunpack.c.l.b16 %v3436
  %v3601 = vunpack.c.h.b16 %v3436
  %v3602 = vunpack.c.l.b16 %v3437
  %v3603 = vunpack.c.h.b16 %v3437
  %v3604 = vunpack.c.l.b16 %v3438
  %v3605 = vunpack.c.h.b16 %v3438
  %v3606 = vunpack.c.l.b16 %v3439
  %v3607 = vunpack.c.h.b16 %v3439
  %v3608 = vunpack.c.l.b16 %v3440
  %v3609 = vunpack.c.h.b16 %v3440
  %v3610 = vunpack.c.l.b16 %v3441
  %v3611 = vunpack.c.h.b16 %v3441
  %v3612 = vunpack.c.l.b16 %v3442
  %v3613 = vunpack.c.h.b16 %v3442
  %v3614 = vunpack.c.l.b16 %v3443
  %v3615 = vunpack.c.h.b16 %v3443
  %v3616 = vunpack.c.l.b16 %v3444
  %v3617 = vunpack.c.h.b16 %v3444
  %v3618 = vpack.c.b16 %v3556, %v3554
  %v3619 = vpack.c.b16 %v3557, %v3555
  %v3620 = vpack.c.b16 %v3560, %v3558
  %v3621 = vpack.c.b16 %v3561, %v3559
  %v3622 = vpack.c.b16 %v3564, %v3562
  %v3623 = vpack.c.b16 %v3565, %v3563
  %v3624 = vpack.c.b16 %v3568, %v3566
  %v3625 = vpack.c.b16 %v3569, %v3567
  %v3626 = vpack.c.b16 %v3572, %v3570
  %v3627 = vpack.c.b16 %v3573, %v3571
  %v3628 = vpack.c.b16 %v3576, %v3574
  %v3629 = vpack.c.b16 %v3577, %v3575
  %v3630 = vpack.c.b16 %v3580, %v3578
  %v3631 = vpack.c.b16 %v3581, %v3579
  %v3632 = vpack.c.b16 %v3584, %v3582
  %v3633 = vpack.c.b16 %v3585, %v3583
  %v3634 = vpack.c.b16 %v3588, %v3586
  %v3635 = vpack.c.b16 %v3589, %v3587
  %v3636 = vpack.c.b16 %v3592, %v3590
  %v3637 = vpack.c.b16 %v3593, %v3591
  %v3638 = vpack.c.b16 %v3596, %v3594
  %v3639 = vpack.c.b16 %v3597, %v3595
  %v3640 = vpack.c.b16 %v3600, %v3598
  %v3641 = vpack.c.b16 %v3601, %v3599
  %v3642 = vpack.c.b16 %v3604, %v3602
  %v3643 = vpack.c.b16 %v3605, %v3603
  %v3644 = vpack.c.b16 %v3608, %v3606
  %v3645 = vpack.c.b16 %v3609, %v3607
  %v3646 = vpack.c.b16 %v3612, %v3610
  %v3647 = vpack.c.b16 %v3613, %v3611
  %v3648 = vpack.c.b16 %v3616, %v3614
  %v3649 = vpack.c.b16 %v3617, %v3615
  %v3714 = vunpack.c.l.b16 %v3490
  %v3715 = vunpack.c.h.b16 %v3490
  %v3716 = vunpack.c.l.b16 %v3491
  %v3717 = vunpack.c.h.b16 %v3491
  %v3718 = vunpack.c.l.b16 %v3492
  %v3719 = vunpack.c.h.b16 %v3492
  %v3720 = vunpack.c.l.b16 %v3493
  %v3721 = vunpack.c.h.b16 %v3493
  %v3722 = vunpack.c.l.b16 %v3494
  %v3723 = vunpack.c.h.b16 %v3494
  %v3724 = vunpack.c.l.b16 %v3495
  %v3725 = vunpack.c.h.b16 %v3495
  %v3726 = vunpack.c.l.b16 %v3496
  %v3727 = vunpack.c.h.b16 %v3496
  %v3728 = vunpack.c.l.b16 %v3497
  %v3729 = vunpack.c.h.b16 %v3497
  %v3730 = vunpack.c.l.b16 %v3498
  %v3731 = vunpack.c.h.b16 %v3498
  %v3732 = vunpack.c.l.b16 %v3499
  %v3733 = vunpack.c.h.b16 %v3499
  %v3734 = vunpack.c.l.b16 %v3500
  %v3735 = vunpack.c.h.b16 %v3500
  %v3736 = vunpack.c.l.b16 %v3501
  %v3737 = vunpack.c.h.b16 %v3501
  %v3738 = vunpack.c.l.b16 %v3502
  %v3739 = vunpack.c.h.b16 %v3502
  %v3740 = vunpack.c.l.b16 %v3503
  %v3741 = vunpack.c.h.b16 %v3503
  %v3742 = vunpack.c.l.b16 %v3504
  %v3743 = vunpack.c.h.b16 %v3504
  %v3744 = vunpack.c.l.b16 %v3505
  %v3745 = vunpack.c.h.b16 %v3505
  %v3746 = vunpack.c.l.b16 %v3506
  %v3747 = vunpack.c.h.b16 %v3506
  %v3748 = vunpack.c.l.b16 %v3507
  %v3749 = vunpack.c.h.b16 %v3507
  %v3750 = vunpack.c.l.b16 %v3508
  %v3751 = vunpack.c.h.b16 %v3508
  %v3752 = vunpack.c.l.b16 %v3509
  %v3753 = vunpack.c.h.b16 %v3509
  %v3754 = vunpack.c.l.b16 %v3510
  %v3755 = vunpack.c.h.b16 %v3510
  %v3756 = vunpack.c.l.b16 %v3511
  %v3757 = vunpack.c.h.b16 %v3511
  %v3758 = vunpack.c.l.b16 %v3512
  %v3759 = vunpack.c.h.b16 %v3512
  %v3760 = vunpack.c.l.b16 %v3513
  %v3761 = vunpack.c.h.b16 %v3513
  %v3762 = vunpack.c.l.b16 %v3514
  %v3763 = vunpack.c.h.b16 %v3514
  %v3764 = vunpack.c.l.b16 %v3515
  %v3765 = vunpack.c.h.b16 %v3515
  %v3766 = vunpack.c.l.b16 %v3516
  %v3767 = vunpack.c.h.b16 %v3516
  %v3768 = vunpack.c.l.b16 %v3517
  %v3769 = vunpack.c.h.b16 %v3517
  %v3770 = vunpack.c.l.b16 %v3518
  %v3771 = vunpack.c.h.b16 %v3518
  %v3772 = vunpack.c.l.b16 %v3519
  %v3773 = vunpack.c.h.b16 %v3519
  %v3774 = vunpack.c.l.b16 %v3520
  %v3775 = vunpack.c.h.b16 %v3520
  %v3776 = vunpack.c.l.b16 %v3521
  %v3777 = vunpack.c.h.b16 %v3521
  %v3778 = vpack.c.b16 %v3716, %v3714
  %v3779 = vpack.c.b16 %v3717, %v3715
  %v3780 = vpack.c.b16 %v3720, %v3718
  %v3781 = vpack.c.b16 %v3721, %v3719
  %v3782 = vpack.c.b16 %v3724, %v3722
  %v3783 = vpack.c.b16 %v3725, %v3723
  %v3784 = vpack.c.b16 %v3728, %v3726
  %v3785 = vpack.c.b16 %v3729, %v3727
  %v3786 = vpack.c.b16 %v3732, %v3730
  %v3787 = vpack.c.b16 %v3733, %v3731
  %v3788 = vpack.c.b16 %v3736, %v3734
  %v3789 = vpack.c.b16 %v3737, %v3735
  %v3790 = vpack.c.b16 %v3740, %v3738
  %v3791 = vpack.c.b16 %v3741, %v3739
  %v3792 = vpack.c.b16 %v3744, %v3742
  %v3793 = vpack.c.b16 %v3745, %v3743
  %v3794 = vpack.c.b16 %v3748, %v3746
  %v3795 = vpack.c.b16 %v3749, %v3747
  %v3796 = vpack.c.b16 %v3752, %v3750
  %v3797 = vpack.c.b16 %v3753, %v3751
  %v3798 = vpack.c.b16 %v3756, %v3754
  %v3799 = vpack.c.b16 %v3757, %v3755
  %v3800 = vpack.c.b16 %v3760, %v3758
  %v3801 = vpack.c.b16 %v3761, %v3759
  %v3802 = vpack.c.b16 %v3764, %v3762
  %v3803 = vpack.c.b16 %v3765, %v3763
  %v3804 = vpack.c.b16 %v3768, %v3766
  %v3805 = vpack.c.b16 %v3769, %v3767
  %v3806 = vpack.c.b16 %v3772, %v3770
  %v3807 = vpack.c.b16 %v3773, %v3771
  %v3808 = vpack.c.b16 %v3776, %v3774
  %v3809 = vpack.c.b16 %v3777, %v3775
  %3842 = vmatpush.bf16.msra.mxu0 %v3792
  %3843 = vmatpush.bf16.msra.mxu0 %v3790
  %3844 = vmatpush.bf16.msra.mxu0 %v3788
  %3845 = vmatpush.bf16.msra.mxu0 %v3786
  %3846 = vmatpush.bf16.msra.mxu0 %v3784
  %3847 = vmatpush.bf16.msra.mxu0 %v3782
  %3848 = vmatpush.bf16.msra.mxu0 %v3780
  %3849 = vmatpush.bf16.msra.mxu0 %v3778
  %3850 = vmatmul.bf16.gmra.mxu0 %v3618
  %v3851 = vpop.f32.mrf.mxu0
  %v3852 = vadd.f32 0.0, %v3851
  %v3853 = vpop.f32.mrf.mxu0
  %v3854 = vadd.f32 0.0, %v3853
  %3855 = vmatmul.bf16.gmra.mxu0 %v3620
  %v3856 = vpop.f32.mrf.mxu0
  %v3857 = vadd.f32 0.0, %v3856
  %v3858 = vpop.f32.mrf.mxu0
  %v3859 = vadd.f32 0.0, %v3858
  %3860 = vmatmul.bf16.gmra.mxu0 %v3622
  %v3861 = vpop.f32.mrf.mxu0
  %v3862 = vadd.f32 0.0, %v3861
  %v3863 = vpop.f32.mrf.mxu0
  %v3864 = vadd.f32 0.0, %v3863
  %3865 = vmatmul.bf16.gmra.mxu0 %v3624
  %v3866 = vpop.f32.mrf.mxu0
  %v3867 = vadd.f32 0.0, %v3866
  %v3868 = vpop.f32.mrf.mxu0
  %v3869 = vadd.f32 0.0, %v3868
  %3870 = vmatmul.bf16.gmra.mxu0 %v3626
  %v3871 = vpop.f32.mrf.mxu0
  %v3872 = vadd.f32 0.0, %v3871
  %v3873 = vpop.f32.mrf.mxu0
  %v3874 = vadd.f32 0.0, %v3873
  %3875 = vmatmul.bf16.gmra.mxu0 %v3628
  %v3876 = vpop.f32.mrf.mxu0
  %v3877 = vadd.f32 0.0, %v3876
  %v3878 = vpop.f32.mrf.mxu0
  %v3879 = vadd.f32 0.0, %v3878
  %3880 = vmatmul.bf16.gmra.mxu0 %v3630
  %v3881 = vpop.f32.mrf.mxu0
  %v3882 = vadd.f32 0.0, %v3881
  %v3883 = vpop.f32.mrf.mxu0
  %v3884 = vadd.f32 0.0, %v3883
  %3885 = vmatmul.bf16.gmra.mxu0 %v3632
  %v3886 = vpop.f32.mrf.mxu0
  %v3887 = vadd.f32 0.0, %v3886
  %v3888 = vpop.f32.mrf.mxu0
  %v3889 = vadd.f32 0.0, %v3888
  %3890 = vmatmul.bf16.gmra.mxu0 %v3634
  %v3891 = vpop.f32.mrf.mxu0
  %v3892 = vadd.f32 0.0, %v3891
  %v3893 = vpop.f32.mrf.mxu0
  %v3894 = vadd.f32 0.0, %v3893
  %3895 = vmatmul.bf16.gmra.mxu0 %v3636
  %v3896 = vpop.f32.mrf.mxu0
  %v3897 = vadd.f32 0.0, %v3896
  %v3898 = vpop.f32.mrf.mxu0
  %v3899 = vadd.f32 0.0, %v3898
  %3900 = vmatmul.bf16.gmra.mxu0 %v3638
  %v3901 = vpop.f32.mrf.mxu0
  %v3902 = vadd.f32 0.0, %v3901
  %v3903 = vpop.f32.mrf.mxu0
  %v3904 = vadd.f32 0.0, %v3903
  %3905 = vmatmul.bf16.gmra.mxu0 %v3640
  %v3906 = vpop.f32.mrf.mxu0
  %v3907 = vadd.f32 0.0, %v3906
  %v3908 = vpop.f32.mrf.mxu0
  %v3909 = vadd.f32 0.0, %v3908
  %3910 = vmatmul.bf16.gmra.mxu0 %v3642
  %v3911 = vpop.f32.mrf.mxu0
  %v3912 = vadd.f32 0.0, %v3911
  %v3913 = vpop.f32.mrf.mxu0
  %v3914 = vadd.f32 0.0, %v3913
  %3915 = vmatmul.bf16.gmra.mxu0 %v3644
  %v3916 = vpop.f32.mrf.mxu0
  %v3917 = vadd.f32 0.0, %v3916
  %v3918 = vpop.f32.mrf.mxu0
  %v3919 = vadd.f32 0.0, %v3918
  %3920 = vmatmul.bf16.gmra.mxu0 %v3646
  %v3921 = vpop.f32.mrf.mxu0
  %v3922 = vadd.f32 0.0, %v3921
  %v3923 = vpop.f32.mrf.mxu0
  %v3924 = vadd.f32 0.0, %v3923
  %3925 = vmatmul.bf16.gmra.mxu0 %v3648
  %v3926 = vpop.f32.mrf.mxu0
  %v3927 = vadd.f32 0.0, %v3926
  %v3928 = vpop.f32.mrf.mxu0
  %v3929 = vadd.f32 0.0, %v3928
  %3930 = vdwg.mxu0
  %3931 = vmatpush.bf16.msra.mxu0 %v3808
  %3932 = vmatpush.bf16.msra.mxu0 %v3806
  %3933 = vmatpush.bf16.msra.mxu0 %v3804
  %3934 = vmatpush.bf16.msra.mxu0 %v3802
  %3935 = vmatpush.bf16.msra.mxu0 %v3800
  %3936 = vmatpush.bf16.msra.mxu0 %v3798
  %3937 = vmatpush.bf16.msra.mxu0 %v3796
  %3938 = vmatpush.bf16.msra.mxu0 %v3794
  %3939 = vmatmul.bf16.gmra.mxu0 %v3619
  %v3940 = vpop.f32.mrf.mxu0
  %v3941 = vadd.f32 %v3852, %v3940
  %v3942 = vpop.f32.mrf.mxu0
  %v3943 = vadd.f32 %v3854, %v3942
  %3944 = vmatmul.bf16.gmra.mxu0 %v3621
  %v3945 = vpop.f32.mrf.mxu0
  %v3946 = vadd.f32 %v3857, %v3945
  %v3947 = vpop.f32.mrf.mxu0
  %v3948 = vadd.f32 %v3859, %v3947
  %3949 = vmatmul.bf16.gmra.mxu0 %v3623
  %v3950 = vpop.f32.mrf.mxu0
  %v3951 = vadd.f32 %v3862, %v3950
  %v3952 = vpop.f32.mrf.mxu0
  %v3953 = vadd.f32 %v3864, %v3952
  %3954 = vmatmul.bf16.gmra.mxu0 %v3625
  %v3955 = vpop.f32.mrf.mxu0
  %v3956 = vadd.f32 %v3867, %v3955
  %v3957 = vpop.f32.mrf.mxu0
  %v3958 = vadd.f32 %v3869, %v3957
  %3959 = vmatmul.bf16.gmra.mxu0 %v3627
  %v3960 = vpop.f32.mrf.mxu0
  %v3961 = vadd.f32 %v3872, %v3960
  %v3962 = vpop.f32.mrf.mxu0
  %v3963 = vadd.f32 %v3874, %v3962
  %3964 = vmatmul.bf16.gmra.mxu0 %v3629
  %v3965 = vpop.f32.mrf.mxu0
  %v3966 = vadd.f32 %v3877, %v3965
  %v3967 = vpop.f32.mrf.mxu0
  %v3968 = vadd.f32 %v3879, %v3967
  %3969 = vmatmul.bf16.gmra.mxu0 %v3631
  %v3970 = vpop.f32.mrf.mxu0
  %v3971 = vadd.f32 %v3882, %v3970
  %v3972 = vpop.f32.mrf.mxu0
  %v3973 = vadd.f32 %v3884, %v3972
  %3974 = vmatmul.bf16.gmra.mxu0 %v3633
  %v3975 = vpop.f32.mrf.mxu0
  %v3976 = vadd.f32 %v3887, %v3975
  %v3977 = vpop.f32.mrf.mxu0
  %v3978 = vadd.f32 %v3889, %v3977
  %3979 = vmatmul.bf16.gmra.mxu0 %v3635
  %v3980 = vpop.f32.mrf.mxu0
  %v3981 = vadd.f32 %v3892, %v3980
  %v3982 = vpop.f32.mrf.mxu0
  %v3983 = vadd.f32 %v3894, %v3982
  %3984 = vmatmul.bf16.gmra.mxu0 %v3637
  %v3985 = vpop.f32.mrf.mxu0
  %v3986 = vadd.f32 %v3897, %v3985
  %v3987 = vpop.f32.mrf.mxu0
  %v3988 = vadd.f32 %v3899, %v3987
  %3989 = vmatmul.bf16.gmra.mxu0 %v3639
  %v3990 = vpop.f32.mrf.mxu0
  %v3991 = vadd.f32 %v3902, %v3990
  %v3992 = vpop.f32.mrf.mxu0
  %v3993 = vadd.f32 %v3904, %v3992
  %3994 = vmatmul.bf16.gmra.mxu0 %v3641
  %v3995 = vpop.f32.mrf.mxu0
  %v3996 = vadd.f32 %v3907, %v3995
  %v3997 = vpop.f32.mrf.mxu0
  %v3998 = vadd.f32 %v3909, %v3997
  %3999 = vmatmul.bf16.gmra.mxu0 %v3643
  %v4000 = vpop.f32.mrf.mxu0
  %v4001 = vadd.f32 %v3912, %v4000
  %v4002 = vpop.f32.mrf.mxu0
  %v4003 = vadd.f32 %v3914, %v4002
  %4004 = vmatmul.bf16.gmra.mxu0 %v3645
  %v4005 = vpop.f32.mrf.mxu0
  %v4006 = vadd.f32 %v3917, %v4005
  %v4007 = vpop.f32.mrf.mxu0
  %v4008 = vadd.f32 %v3919, %v4007
  %4009 = vmatmul.bf16.gmra.mxu0 %v3647
  %v4010 = vpop.f32.mrf.mxu0
  %v4011 = vadd.f32 %v3922, %v4010
  %v4012 = vpop.f32.mrf.mxu0
  %v4013 = vadd.f32 %v3924, %v4012
  %4014 = vmatmul.bf16.gmra.mxu0 %v3649
  %v4015 = vpop.f32.mrf.mxu0
  %v4016 = vadd.f32 %v3927, %v4015
  %v4017 = vpop.f32.mrf.mxu0
  %v4018 = vadd.f32 %v3929, %v4017
  %4019 = vdwg.mxu0
  %4020 = vmatpush.bf16.msra.mxu0 %v3793
  %4021 = vmatpush.bf16.msra.mxu0 %v3791
  %4022 = vmatpush.bf16.msra.mxu0 %v3789
  %4023 = vmatpush.bf16.msra.mxu0 %v3787
  %4024 = vmatpush.bf16.msra.mxu0 %v3785
  %4025 = vmatpush.bf16.msra.mxu0 %v3783
  %4026 = vmatpush.bf16.msra.mxu0 %v3781
  %4027 = vmatpush.bf16.msra.mxu0 %v3779
  %4028 = vmatmul.bf16.gmra.mxu0 %v3618
  %v4029 = vpop.f32.mrf.mxu0
  %v4030 = vadd.f32 0.0, %v4029
  %v4031 = vpop.f32.mrf.mxu0
  %v4032 = vadd.f32 0.0, %v4031
  %4033 = vmatmul.bf16.gmra.mxu0 %v3620
  %v4034 = vpop.f32.mrf.mxu0
  %v4035 = vadd.f32 0.0, %v4034
  %v4036 = vpop.f32.mrf.mxu0
  %v4037 = vadd.f32 0.0, %v4036
  %4038 = vmatmul.bf16.gmra.mxu0 %v3622
  %v4039 = vpop.f32.mrf.mxu0
  %v4040 = vadd.f32 0.0, %v4039
  %v4041 = vpop.f32.mrf.mxu0
  %v4042 = vadd.f32 0.0, %v4041
  %4043 = vmatmul.bf16.gmra.mxu0 %v3624
  %v4044 = vpop.f32.mrf.mxu0
  %v4045 = vadd.f32 0.0, %v4044
  %v4046 = vpop.f32.mrf.mxu0
  %v4047 = vadd.f32 0.0, %v4046
  %4048 = vmatmul.bf16.gmra.mxu0 %v3626
  %v4049 = vpop.f32.mrf.mxu0
  %v4050 = vadd.f32 0.0, %v4049
  %v4051 = vpop.f32.mrf.mxu0
  %v4052 = vadd.f32 0.0, %v4051
  %4053 = vmatmul.bf16.gmra.mxu0 %v3628
  %v4054 = vpop.f32.mrf.mxu0
  %v4055 = vadd.f32 0.0, %v4054
  %v4056 = vpop.f32.mrf.mxu0
  %v4057 = vadd.f32 0.0, %v4056
  %4058 = vmatmul.bf16.gmra.mxu0 %v3630
  %v4059 = vpop.f32.mrf.mxu0
  %v4060 = vadd.f32 0.0, %v4059
  %v4061 = vpop.f32.mrf.mxu0
  %v4062 = vadd.f32 0.0, %v4061
  %4063 = vmatmul.bf16.gmra.mxu0 %v3632
  %v4064 = vpop.f32.mrf.mxu0
  %v4065 = vadd.f32 0.0, %v4064
  %v4066 = vpop.f32.mrf.mxu0
  %v4067 = vadd.f32 0.0, %v4066
  %4068 = vmatmul.bf16.gmra.mxu0 %v3634
  %v4069 = vpop.f32.mrf.mxu0
  %v4070 = vadd.f32 0.0, %v4069
  %v4071 = vpop.f32.mrf.mxu0
  %v4072 = vadd.f32 0.0, %v4071
  %4073 = vmatmul.bf16.gmra.mxu0 %v3636
  %v4074 = vpop.f32.mrf.mxu0
  %v4075 = vadd.f32 0.0, %v4074
  %v4076 = vpop.f32.mrf.mxu0
  %v4077 = vadd.f32 0.0, %v4076
  %4078 = vmatmul.bf16.gmra.mxu0 %v3638
  %v4079 = vpop.f32.mrf.mxu0
  %v4080 = vadd.f32 0.0, %v4079
  %v4081 = vpop.f32.mrf.mxu0
  %v4082 = vadd.f32 0.0, %v4081
  %4083 = vmatmul.bf16.gmra.mxu0 %v3640
  %v4084 = vpop.f32.mrf.mxu0
  %v4085 = vadd.f32 0.0, %v4084
  %v4086 = vpop.f32.mrf.mxu0
  %v4087 = vadd.f32 0.0, %v4086
  %4088 = vmatmul.bf16.gmra.mxu0 %v3642
  %v4089 = vpop.f32.mrf.mxu0
  %v4090 = vadd.f32 0.0, %v4089
  %v4091 = vpop.f32.mrf.mxu0
  %v4092 = vadd.f32 0.0, %v4091
  %4093 = vmatmul.bf16.gmra.mxu0 %v3644
  %v4094 = vpop.f32.mrf.mxu0
  %v4095 = vadd.f32 0.0, %v4094
  %v4096 = vpop.f32.mrf.mxu0
  %v4097 = vadd.f32 0.0, %v4096
  %4098 = vmatmul.bf16.gmra.mxu0 %v3646
  %v4099 = vpop.f32.mrf.mxu0
  %v4100 = vadd.f32 0.0, %v4099
  %v4101 = vpop.f32.mrf.mxu0
  %v4102 = vadd.f32 0.0, %v4101
  %4103 = vmatmul.bf16.gmra.mxu0 %v3648
  %v4104 = vpop.f32.mrf.mxu0
  %v4105 = vadd.f32 0.0, %v4104
  %v4106 = vpop.f32.mrf.mxu0
  %v4107 = vadd.f32 0.0, %v4106
  %4108 = vdwg.mxu0
  %4109 = vmatpush.bf16.msra.mxu0 %v3809
  %4110 = vmatpush.bf16.msra.mxu0 %v3807
  %4111 = vmatpush.bf16.msra.mxu0 %v3805
  %4112 = vmatpush.bf16.msra.mxu0 %v3803
  %4113 = vmatpush.bf16.msra.mxu0 %v3801
  %4114 = vmatpush.bf16.msra.mxu0 %v3799
  %4115 = vmatpush.bf16.msra.mxu0 %v3797
  %4116 = vmatpush.bf16.msra.mxu0 %v3795
  %4117 = vmatmul.bf16.gmra.mxu0 %v3619
  %v4118 = vpop.f32.mrf.mxu0
  %v4119 = vadd.f32 %v4030, %v4118
  %v4120 = vpop.f32.mrf.mxu0
  %v4121 = vadd.f32 %v4032, %v4120
  %4122 = vmatmul.bf16.gmra.mxu0 %v3621
  %v4123 = vpop.f32.mrf.mxu0
  %v4124 = vadd.f32 %v4035, %v4123
  %v4125 = vpop.f32.mrf.mxu0
  %v4126 = vadd.f32 %v4037, %v4125
  %4127 = vmatmul.bf16.gmra.mxu0 %v3623
  %v4128 = vpop.f32.mrf.mxu0
  %v4129 = vadd.f32 %v4040, %v4128
  %v4130 = vpop.f32.mrf.mxu0
  %v4131 = vadd.f32 %v4042, %v4130
  %4132 = vmatmul.bf16.gmra.mxu0 %v3625
  %v4133 = vpop.f32.mrf.mxu0
  %v4134 = vadd.f32 %v4045, %v4133
  %v4135 = vpop.f32.mrf.mxu0
  %v4136 = vadd.f32 %v4047, %v4135
  %4137 = vmatmul.bf16.gmra.mxu0 %v3627
  %v4138 = vpop.f32.mrf.mxu0
  %v4139 = vadd.f32 %v4050, %v4138
  %v4140 = vpop.f32.mrf.mxu0
  %v4141 = vadd.f32 %v4052, %v4140
  %4142 = vmatmul.bf16.gmra.mxu0 %v3629
  %v4143 = vpop.f32.mrf.mxu0
  %v4144 = vadd.f32 %v4055, %v4143
  %v4145 = vpop.f32.mrf.mxu0
  %v4146 = vadd.f32 %v4057, %v4145
  %4147 = vmatmul.bf16.gmra.mxu0 %v3631
  %v4148 = vpop.f32.mrf.mxu0
  %v4149 = vadd.f32 %v4060, %v4148
  %v4150 = vpop.f32.mrf.mxu0
  %v4151 = vadd.f32 %v4062, %v4150
  %4152 = vmatmul.bf16.gmra.mxu0 %v3633
  %v4153 = vpop.f32.mrf.mxu0
  %v4154 = vadd.f32 %v4065, %v4153
  %v4155 = vpop.f32.mrf.mxu0
  %v4156 = vadd.f32 %v4067, %v4155
  %4157 = vmatmul.bf16.gmra.mxu0 %v3635
  %v4158 = vpop.f32.mrf.mxu0
  %v4159 = vadd.f32 %v4070, %v4158
  %v4160 = vpop.f32.mrf.mxu0
  %v4161 = vadd.f32 %v4072, %v4160
  %4162 = vmatmul.bf16.gmra.mxu0 %v3637
  %v4163 = vpop.f32.mrf.mxu0
  %v4164 = vadd.f32 %v4075, %v4163
  %v4165 = vpop.f32.mrf.mxu0
  %v4166 = vadd.f32 %v4077, %v4165
  %4167 = vmatmul.bf16.gmra.mxu0 %v3639
  %v4168 = vpop.f32.mrf.mxu0
  %v4169 = vadd.f32 %v4080, %v4168
  %v4170 = vpop.f32.mrf.mxu0
  %v4171 = vadd.f32 %v4082, %v4170
  %4172 = vmatmul.bf16.gmra.mxu0 %v3641
  %v4173 = vpop.f32.mrf.mxu0
  %v4174 = vadd.f32 %v4085, %v4173
  %v4175 = vpop.f32.mrf.mxu0
  %v4176 = vadd.f32 %v4087, %v4175
  %4177 = vmatmul.bf16.gmra.mxu0 %v3643
  %v4178 = vpop.f32.mrf.mxu0
  %v4179 = vadd.f32 %v4090, %v4178
  %v4180 = vpop.f32.mrf.mxu0
  %v4181 = vadd.f32 %v4092, %v4180
  %4182 = vmatmul.bf16.gmra.mxu0 %v3645
  %v4183 = vpop.f32.mrf.mxu0
  %v4184 = vadd.f32 %v4095, %v4183
  %v4185 = vpop.f32.mrf.mxu0
  %v4186 = vadd.f32 %v4097, %v4185
  %4187 = vmatmul.bf16.gmra.mxu0 %v3647
  %v4188 = vpop.f32.mrf.mxu0
  %v4189 = vadd.f32 %v4100, %v4188
  %v4190 = vpop.f32.mrf.mxu0
  %v4191 = vadd.f32 %v4102, %v4190
  %4192 = vmatmul.bf16.gmra.mxu0 %v3649
  %v4193 = vpop.f32.mrf.mxu0
  %v4194 = vadd.f32 %v4105, %v4193
  %v4195 = vpop.f32.mrf.mxu0
  %v4196 = vadd.f32 %v4107, %v4195
  %4197 = vdwg.mxu0
  %v4202 = vunpack.c.l.b16 %v3409
  %v4203 = vunpack.c.h.b16 %v3409
  %v4204 = vunpack.c.l.b16 %v3410
  %v4205 = vunpack.c.h.b16 %v3410
  %v4206 = vunpack.c.l.b16 %v3411
  %v4207 = vunpack.c.h.b16 %v3411
  %v4208 = vunpack.c.l.b16 %v3412
  %v4209 = vunpack.c.h.b16 %v3412
  %v4210 = vpack.c.b16 %v4204, %v4202
  %v4211 = vpack.c.b16 %v4205, %v4203
  %v4212 = vpack.c.b16 %v4208, %v4206
  %v4213 = vpack.c.b16 %v4209, %v4207
  %v4250 = vunpack.c.l.b16 %v3457
  %v4251 = vunpack.c.h.b16 %v3457
  %v4252 = vunpack.c.l.b16 %v3458
  %v4253 = vunpack.c.h.b16 %v3458
  %v4254 = vunpack.c.l.b16 %v3459
  %v4255 = vunpack.c.h.b16 %v3459
  %v4256 = vunpack.c.l.b16 %v3460
  %v4257 = vunpack.c.h.b16 %v3460
  %v4258 = vunpack.c.l.b16 %v3461
  %v4259 = vunpack.c.h.b16 %v3461
  %v4260 = vunpack.c.l.b16 %v3462
  %v4261 = vunpack.c.h.b16 %v3462
  %v4262 = vunpack.c.l.b16 %v3463
  %v4263 = vunpack.c.h.b16 %v3463
  %v4264 = vunpack.c.l.b16 %v3464
  %v4265 = vunpack.c.h.b16 %v3464
  %v4266 = vunpack.c.l.b16 %v3465
  %v4267 = vunpack.c.h.b16 %v3465
  %v4268 = vunpack.c.l.b16 %v3466
  %v4269 = vunpack.c.h.b16 %v3466
  %v4270 = vunpack.c.l.b16 %v3467
  %v4271 = vunpack.c.h.b16 %v3467
  %v4272 = vunpack.c.l.b16 %v3468
  %v4273 = vunpack.c.h.b16 %v3468
  %v4274 = vunpack.c.l.b16 %v3469
  %v4275 = vunpack.c.h.b16 %v3469
  %v4276 = vunpack.c.l.b16 %v3470
  %v4277 = vunpack.c.h.b16 %v3470
  %v4278 = vunpack.c.l.b16 %v3471
  %v4279 = vunpack.c.h.b16 %v3471
  %v4280 = vunpack.c.l.b16 %v3472
  %v4281 = vunpack.c.h.b16 %v3472
  %v4282 = vunpack.c.l.b16 %v3473
  %v4283 = vunpack.c.h.b16 %v3473
  %v4284 = vunpack.c.l.b16 %v3474
  %v4285 = vunpack.c.h.b16 %v3474
  %v4286 = vunpack.c.l.b16 %v3475
  %v4287 = vunpack.c.h.b16 %v3475
  %v4288 = vunpack.c.l.b16 %v3476
  %v4289 = vunpack.c.h.b16 %v3476
  %v4290 = vunpack.c.l.b16 %v3477
  %v4291 = vunpack.c.h.b16 %v3477
  %v4292 = vunpack.c.l.b16 %v3478
  %v4293 = vunpack.c.h.b16 %v3478
  %v4294 = vunpack.c.l.b16 %v3479
  %v4295 = vunpack.c.h.b16 %v3479
  %v4296 = vunpack.c.l.b16 %v3480
  %v4297 = vunpack.c.h.b16 %v3480
  %v4298 = vunpack.c.l.b16 %v3481
  %v4299 = vunpack.c.h.b16 %v3481
  %v4300 = vunpack.c.l.b16 %v3482
  %v4301 = vunpack.c.h.b16 %v3482
  %v4302 = vunpack.c.l.b16 %v3483
  %v4303 = vunpack.c.h.b16 %v3483
  %v4304 = vunpack.c.l.b16 %v3484
  %v4305 = vunpack.c.h.b16 %v3484
  %v4306 = vunpack.c.l.b16 %v3485
  %v4307 = vunpack.c.h.b16 %v3485
  %v4308 = vunpack.c.l.b16 %v3486
  %v4309 = vunpack.c.h.b16 %v3486
  %v4310 = vunpack.c.l.b16 %v3487
  %v4311 = vunpack.c.h.b16 %v3487
  %v4312 = vunpack.c.l.b16 %v3488
  %v4313 = vunpack.c.h.b16 %v3488
  %v4314 = vpack.c.b16 %v4252, %v4250
  %v4315 = vpack.c.b16 %v4253, %v4251
  %v4316 = vpack.c.b16 %v4256, %v4254
  %v4317 = vpack.c.b16 %v4257, %v4255
  %v4318 = vpack.c.b16 %v4260, %v4258
  %v4319 = vpack.c.b16 %v4261, %v4259
  %v4320 = vpack.c.b16 %v4264, %v4262
  %v4321 = vpack.c.b16 %v4265, %v4263
  %v4322 = vpack.c.b16 %v4268, %v4266
  %v4323 = vpack.c.b16 %v4269, %v4267
  %v4324 = vpack.c.b16 %v4272, %v4270
  %v4325 = vpack.c.b16 %v4273, %v4271
  %v4326 = vpack.c.b16 %v4276, %v4274
  %v4327 = vpack.c.b16 %v4277, %v4275
  %v4328 = vpack.c.b16 %v4280, %v4278
  %v4329 = vpack.c.b16 %v4281, %v4279
  %v4330 = vpack.c.b16 %v4284, %v4282
  %v4331 = vpack.c.b16 %v4285, %v4283
  %v4332 = vpack.c.b16 %v4288, %v4286
  %v4333 = vpack.c.b16 %v4289, %v4287
  %v4334 = vpack.c.b16 %v4292, %v4290
  %v4335 = vpack.c.b16 %v4293, %v4291
  %v4336 = vpack.c.b16 %v4296, %v4294
  %v4337 = vpack.c.b16 %v4297, %v4295
  %v4338 = vpack.c.b16 %v4300, %v4298
  %v4339 = vpack.c.b16 %v4301, %v4299
  %v4340 = vpack.c.b16 %v4304, %v4302
  %v4341 = vpack.c.b16 %v4305, %v4303
  %v4342 = vpack.c.b16 %v4308, %v4306
  %v4343 = vpack.c.b16 %v4309, %v4307
  %v4344 = vpack.c.b16 %v4312, %v4310
  %v4345 = vpack.c.b16 %v4313, %v4311
  %4378 = vmatpush.bf16.msra.mxu0 %v4328
  %4379 = vmatpush.bf16.msra.mxu0 %v4326
  %4380 = vmatpush.bf16.msra.mxu0 %v4324
  %4381 = vmatpush.bf16.msra.mxu0 %v4322
  %4382 = vmatpush.bf16.msra.mxu0 %v4320
  %4383 = vmatpush.bf16.msra.mxu0 %v4318
  %4384 = vmatpush.bf16.msra.mxu0 %v4316
  %4385 = vmatpush.bf16.msra.mxu0 %v4314
  %4386 = vmatmul.bf16.gmra.mxu0 %v4210
  %v4387 = vpop.f32.mrf.mxu0
  %v4388 = vadd.f32 %v3941, %v4387
  %v4389 = vpop.f32.mrf.mxu0
  %v4390 = vadd.f32 %v3943, %v4389
  %4391 = vmatmul.bf16.gmra.mxu0 %v4212
  %v4392 = vpop.f32.mrf.mxu0
  %v4393 = vadd.f32 %v3946, %v4392
  %v4394 = vpop.f32.mrf.mxu0
  %v4395 = vadd.f32 %v3948, %v4394
  %4396 = vmatmul.bf16.gmra.mxu0 %v3618
  %v4397 = vpop.f32.mrf.mxu0
  %v4398 = vadd.f32 %v3951, %v4397
  %v4399 = vpop.f32.mrf.mxu0
  %v4400 = vadd.f32 %v3953, %v4399
  %4401 = vmatmul.bf16.gmra.mxu0 %v3620
  %v4402 = vpop.f32.mrf.mxu0
  %v4403 = vadd.f32 %v3956, %v4402
  %v4404 = vpop.f32.mrf.mxu0
  %v4405 = vadd.f32 %v3958, %v4404
  %4406 = vmatmul.bf16.gmra.mxu0 %v3622
  %v4407 = vpop.f32.mrf.mxu0
  %v4408 = vadd.f32 %v3961, %v4407
  %v4409 = vpop.f32.mrf.mxu0
  %v4410 = vadd.f32 %v3963, %v4409
  %4411 = vmatmul.bf16.gmra.mxu0 %v3624
  %v4412 = vpop.f32.mrf.mxu0
  %v4413 = vadd.f32 %v3966, %v4412
  %v4414 = vpop.f32.mrf.mxu0
  %v4415 = vadd.f32 %v3968, %v4414
  %4416 = vmatmul.bf16.gmra.mxu0 %v3626
  %v4417 = vpop.f32.mrf.mxu0
  %v4418 = vadd.f32 %v3971, %v4417
  %v4419 = vpop.f32.mrf.mxu0
  %v4420 = vadd.f32 %v3973, %v4419
  %4421 = vmatmul.bf16.gmra.mxu0 %v3628
  %v4422 = vpop.f32.mrf.mxu0
  %v4423 = vadd.f32 %v3976, %v4422
  %v4424 = vpop.f32.mrf.mxu0
  %v4425 = vadd.f32 %v3978, %v4424
  %4426 = vmatmul.bf16.gmra.mxu0 %v3630
  %v4427 = vpop.f32.mrf.mxu0
  %v4428 = vadd.f32 %v3981, %v4427
  %v4429 = vpop.f32.mrf.mxu0
  %v4430 = vadd.f32 %v3983, %v4429
  %4431 = vmatmul.bf16.gmra.mxu0 %v3632
  %v4432 = vpop.f32.mrf.mxu0
  %v4433 = vadd.f32 %v3986, %v4432
  %v4434 = vpop.f32.mrf.mxu0
  %v4435 = vadd.f32 %v3988, %v4434
  %4436 = vmatmul.bf16.gmra.mxu0 %v3634
  %v4437 = vpop.f32.mrf.mxu0
  %v4438 = vadd.f32 %v3991, %v4437
  %v4439 = vpop.f32.mrf.mxu0
  %v4440 = vadd.f32 %v3993, %v4439
  %4441 = vmatmul.bf16.gmra.mxu0 %v3636
  %v4442 = vpop.f32.mrf.mxu0
  %v4443 = vadd.f32 %v3996, %v4442
  %v4444 = vpop.f32.mrf.mxu0
  %v4445 = vadd.f32 %v3998, %v4444
  %4446 = vmatmul.bf16.gmra.mxu0 %v3638
  %v4447 = vpop.f32.mrf.mxu0
  %v4448 = vadd.f32 %v4001, %v4447
  %v4449 = vpop.f32.mrf.mxu0
  %v4450 = vadd.f32 %v4003, %v4449
  %4451 = vmatmul.bf16.gmra.mxu0 %v3640
  %v4452 = vpop.f32.mrf.mxu0
  %v4453 = vadd.f32 %v4006, %v4452
  %v4454 = vpop.f32.mrf.mxu0
  %v4455 = vadd.f32 %v4008, %v4454
  %4456 = vmatmul.bf16.gmra.mxu0 %v3642
  %v4457 = vpop.f32.mrf.mxu0
  %v4458 = vadd.f32 %v4011, %v4457
  %v4459 = vpop.f32.mrf.mxu0
  %v4460 = vadd.f32 %v4013, %v4459
  %4461 = vmatmul.bf16.gmra.mxu0 %v3644
  %v4462 = vpop.f32.mrf.mxu0
  %v4463 = vadd.f32 %v4016, %v4462
  %v4464 = vpop.f32.mrf.mxu0
  %v4465 = vadd.f32 %v4018, %v4464
  %4466 = vdwg.mxu0
  %4467 = vmatpush.bf16.msra.mxu0 %v4344
  %4468 = vmatpush.bf16.msra.mxu0 %v4342
  %4469 = vmatpush.bf16.msra.mxu0 %v4340
  %4470 = vmatpush.bf16.msra.mxu0 %v4338
  %4471 = vmatpush.bf16.msra.mxu0 %v4336
  %4472 = vmatpush.bf16.msra.mxu0 %v4334
  %4473 = vmatpush.bf16.msra.mxu0 %v4332
  %4474 = vmatpush.bf16.msra.mxu0 %v4330
  %4475 = vmatmul.bf16.gmra.mxu0 %v4211
  %v4476 = vpop.f32.mrf.mxu0
  %v4477 = vadd.f32 %v4388, %v4476
  %v4478 = vpop.f32.mrf.mxu0
  %v4479 = vadd.f32 %v4390, %v4478
  %4480 = vmatmul.bf16.gmra.mxu0 %v4213
  %v4481 = vpop.f32.mrf.mxu0
  %v4482 = vadd.f32 %v4393, %v4481
  %v4483 = vpop.f32.mrf.mxu0
  %v4484 = vadd.f32 %v4395, %v4483
  %4485 = vmatmul.bf16.gmra.mxu0 %v3619
  %v4486 = vpop.f32.mrf.mxu0
  %v4487 = vadd.f32 %v4398, %v4486
  %v4488 = vpop.f32.mrf.mxu0
  %v4489 = vadd.f32 %v4400, %v4488
  %4490 = vmatmul.bf16.gmra.mxu0 %v3621
  %v4491 = vpop.f32.mrf.mxu0
  %v4492 = vadd.f32 %v4403, %v4491
  %v4493 = vpop.f32.mrf.mxu0
  %v4494 = vadd.f32 %v4405, %v4493
  %4495 = vmatmul.bf16.gmra.mxu0 %v3623
  %v4496 = vpop.f32.mrf.mxu0
  %v4497 = vadd.f32 %v4408, %v4496
  %v4498 = vpop.f32.mrf.mxu0
  %v4499 = vadd.f32 %v4410, %v4498
  %4500 = vmatmul.bf16.gmra.mxu0 %v3625
  %v4501 = vpop.f32.mrf.mxu0
  %v4502 = vadd.f32 %v4413, %v4501
  %v4503 = vpop.f32.mrf.mxu0
  %v4504 = vadd.f32 %v4415, %v4503
  %4505 = vmatmul.bf16.gmra.mxu0 %v3627
  %v4506 = vpop.f32.mrf.mxu0
  %v4507 = vadd.f32 %v4418, %v4506
  %v4508 = vpop.f32.mrf.mxu0
  %v4509 = vadd.f32 %v4420, %v4508
  %4510 = vmatmul.bf16.gmra.mxu0 %v3629
  %v4511 = vpop.f32.mrf.mxu0
  %v4512 = vadd.f32 %v4423, %v4511
  %v4513 = vpop.f32.mrf.mxu0
  %v4514 = vadd.f32 %v4425, %v4513
  %4515 = vmatmul.bf16.gmra.mxu0 %v3631
  %v4516 = vpop.f32.mrf.mxu0
  %v4517 = vadd.f32 %v4428, %v4516
  %v4518 = vpop.f32.mrf.mxu0
  %v4519 = vadd.f32 %v4430, %v4518
  %4520 = vmatmul.bf16.gmra.mxu0 %v3633
  %v4521 = vpop.f32.mrf.mxu0
  %v4522 = vadd.f32 %v4433, %v4521
  %v4523 = vpop.f32.mrf.mxu0
  %v4524 = vadd.f32 %v4435, %v4523
  %4525 = vmatmul.bf16.gmra.mxu0 %v3635
  %v4526 = vpop.f32.mrf.mxu0
  %v4527 = vadd.f32 %v4438, %v4526
  %v4528 = vpop.f32.mrf.mxu0
  %v4529 = vadd.f32 %v4440, %v4528
  %4530 = vmatmul.bf16.gmra.mxu0 %v3637
  %v4531 = vpop.f32.mrf.mxu0
  %v4532 = vadd.f32 %v4443, %v4531
  %v4533 = vpop.f32.mrf.mxu0
  %v4534 = vadd.f32 %v4445, %v4533
  %4535 = vmatmul.bf16.gmra.mxu0 %v3639
  %v4536 = vpop.f32.mrf.mxu0
  %v4537 = vadd.f32 %v4448, %v4536
  %v4538 = vpop.f32.mrf.mxu0
  %v4539 = vadd.f32 %v4450, %v4538
  %4540 = vmatmul.bf16.gmra.mxu0 %v3641
  %v4541 = vpop.f32.mrf.mxu0
  %v4542 = vadd.f32 %v4453, %v4541
  %v4543 = vpop.f32.mrf.mxu0
  %v4544 = vadd.f32 %v4455, %v4543
  %4545 = vmatmul.bf16.gmra.mxu0 %v3643
  %v4546 = vpop.f32.mrf.mxu0
  %v4547 = vadd.f32 %v4458, %v4546
  %v4548 = vpop.f32.mrf.mxu0
  %v4549 = vadd.f32 %v4460, %v4548
  %4550 = vmatmul.bf16.gmra.mxu0 %v3645
  %v4551 = vpop.f32.mrf.mxu0
  %v4552 = vadd.f32 %v4463, %v4551
  %v4553 = vpop.f32.mrf.mxu0
  %v4554 = vadd.f32 %v4465, %v4553
  %4555 = vdwg.mxu0
  %4556 = vmatpush.bf16.msra.mxu0 %v4329
  %4557 = vmatpush.bf16.msra.mxu0 %v4327
  %4558 = vmatpush.bf16.msra.mxu0 %v4325
  %4559 = vmatpush.bf16.msra.mxu0 %v4323
  %4560 = vmatpush.bf16.msra.mxu0 %v4321
  %4561 = vmatpush.bf16.msra.mxu0 %v4319
  %4562 = vmatpush.bf16.msra.mxu0 %v4317
  %4563 = vmatpush.bf16.msra.mxu0 %v4315
  %4564 = vmatmul.bf16.gmra.mxu0 %v4210
  %v4565 = vpop.f32.mrf.mxu0
  %v4566 = vadd.f32 %v4119, %v4565
  %v4567 = vpop.f32.mrf.mxu0
  %v4568 = vadd.f32 %v4121, %v4567
  %4569 = vmatmul.bf16.gmra.mxu0 %v4212
  %v4570 = vpop.f32.mrf.mxu0
  %v4571 = vadd.f32 %v4124, %v4570
  %v4572 = vpop.f32.mrf.mxu0
  %v4573 = vadd.f32 %v4126, %v4572
  %4574 = vmatmul.bf16.gmra.mxu0 %v3618
  %v4575 = vpop.f32.mrf.mxu0
  %v4576 = vadd.f32 %v4129, %v4575
  %v4577 = vpop.f32.mrf.mxu0
  %v4578 = vadd.f32 %v4131, %v4577
  %4579 = vmatmul.bf16.gmra.mxu0 %v3620
  %v4580 = vpop.f32.mrf.mxu0
  %v4581 = vadd.f32 %v4134, %v4580
  %v4582 = vpop.f32.mrf.mxu0
  %v4583 = vadd.f32 %v4136, %v4582
  %4584 = vmatmul.bf16.gmra.mxu0 %v3622
  %v4585 = vpop.f32.mrf.mxu0
  %v4586 = vadd.f32 %v4139, %v4585
  %v4587 = vpop.f32.mrf.mxu0
  %v4588 = vadd.f32 %v4141, %v4587
  %4589 = vmatmul.bf16.gmra.mxu0 %v3624
  %v4590 = vpop.f32.mrf.mxu0
  %v4591 = vadd.f32 %v4144, %v4590
  %v4592 = vpop.f32.mrf.mxu0
  %v4593 = vadd.f32 %v4146, %v4592
  %4594 = vmatmul.bf16.gmra.mxu0 %v3626
  %v4595 = vpop.f32.mrf.mxu0
  %v4596 = vadd.f32 %v4149, %v4595
  %v4597 = vpop.f32.mrf.mxu0
  %v4598 = vadd.f32 %v4151, %v4597
  %4599 = vmatmul.bf16.gmra.mxu0 %v3628
  %v4600 = vpop.f32.mrf.mxu0
  %v4601 = vadd.f32 %v4154, %v4600
  %v4602 = vpop.f32.mrf.mxu0
  %v4603 = vadd.f32 %v4156, %v4602
  %4604 = vmatmul.bf16.gmra.mxu0 %v3630
  %v4605 = vpop.f32.mrf.mxu0
  %v4606 = vadd.f32 %v4159, %v4605
  %v4607 = vpop.f32.mrf.mxu0
  %v4608 = vadd.f32 %v4161, %v4607
  %4609 = vmatmul.bf16.gmra.mxu0 %v3632
  %v4610 = vpop.f32.mrf.mxu0
  %v4611 = vadd.f32 %v4164, %v4610
  %v4612 = vpop.f32.mrf.mxu0
  %v4613 = vadd.f32 %v4166, %v4612
  %4614 = vmatmul.bf16.gmra.mxu0 %v3634
  %v4615 = vpop.f32.mrf.mxu0
  %v4616 = vadd.f32 %v4169, %v4615
  %v4617 = vpop.f32.mrf.mxu0
  %v4618 = vadd.f32 %v4171, %v4617
  %4619 = vmatmul.bf16.gmra.mxu0 %v3636
  %v4620 = vpop.f32.mrf.mxu0
  %v4621 = vadd.f32 %v4174, %v4620
  %v4622 = vpop.f32.mrf.mxu0
  %v4623 = vadd.f32 %v4176, %v4622
  %4624 = vmatmul.bf16.gmra.mxu0 %v3638
  %v4625 = vpop.f32.mrf.mxu0
  %v4626 = vadd.f32 %v4179, %v4625
  %v4627 = vpop.f32.mrf.mxu0
  %v4628 = vadd.f32 %v4181, %v4627
  %4629 = vmatmul.bf16.gmra.mxu0 %v3640
  %v4630 = vpop.f32.mrf.mxu0
  %v4631 = vadd.f32 %v4184, %v4630
  %v4632 = vpop.f32.mrf.mxu0
  %v4633 = vadd.f32 %v4186, %v4632
  %4634 = vmatmul.bf16.gmra.mxu0 %v3642
  %v4635 = vpop.f32.mrf.mxu0
  %v4636 = vadd.f32 %v4189, %v4635
  %v4637 = vpop.f32.mrf.mxu0
  %v4638 = vadd.f32 %v4191, %v4637
  %4639 = vmatmul.bf16.gmra.mxu0 %v3644
  %v4640 = vpop.f32.mrf.mxu0
  %v4641 = vadd.f32 %v4194, %v4640
  %v4642 = vpop.f32.mrf.mxu0
  %v4643 = vadd.f32 %v4196, %v4642
  %4644 = vdwg.mxu0
  %4645 = vmatpush.bf16.msra.mxu0 %v4345
  %4646 = vmatpush.bf16.msra.mxu0 %v4343
  %4647 = vmatpush.bf16.msra.mxu0 %v4341
  %4648 = vmatpush.bf16.msra.mxu0 %v4339
  %4649 = vmatpush.bf16.msra.mxu0 %v4337
  %4650 = vmatpush.bf16.msra.mxu0 %v4335
  %4651 = vmatpush.bf16.msra.mxu0 %v4333
  %4652 = vmatpush.bf16.msra.mxu0 %v4331
  %4653 = vmatmul.bf16.gmra.mxu0 %v4211
  %v4654 = vpop.f32.mrf.mxu0
  %v4655 = vadd.f32 %v4566, %v4654
  %v4656 = vpop.f32.mrf.mxu0
  %v4657 = vadd.f32 %v4568, %v4656
  %4658 = vmatmul.bf16.gmra.mxu0 %v4213
  %v4659 = vpop.f32.mrf.mxu0
  %v4660 = vadd.f32 %v4571, %v4659
  %v4661 = vpop.f32.mrf.mxu0
  %v4662 = vadd.f32 %v4573, %v4661
  %4663 = vmatmul.bf16.gmra.mxu0 %v3619
  %v4664 = vpop.f32.mrf.mxu0
  %v4665 = vadd.f32 %v4576, %v4664
  %v4666 = vpop.f32.mrf.mxu0
  %v4667 = vadd.f32 %v4578, %v4666
  %4668 = vmatmul.bf16.gmra.mxu0 %v3621
  %v4669 = vpop.f32.mrf.mxu0
  %v4670 = vadd.f32 %v4581, %v4669
  %v4671 = vpop.f32.mrf.mxu0
  %v4672 = vadd.f32 %v4583, %v4671
  %4673 = vmatmul.bf16.gmra.mxu0 %v3623
  %v4674 = vpop.f32.mrf.mxu0
  %v4675 = vadd.f32 %v4586, %v4674
  %v4676 = vpop.f32.mrf.mxu0
  %v4677 = vadd.f32 %v4588, %v4676
  %4678 = vmatmul.bf16.gmra.mxu0 %v3625
  %v4679 = vpop.f32.mrf.mxu0
  %v4680 = vadd.f32 %v4591, %v4679
  %v4681 = vpop.f32.mrf.mxu0
  %v4682 = vadd.f32 %v4593, %v4681
  %4683 = vmatmul.bf16.gmra.mxu0 %v3627
  %v4684 = vpop.f32.mrf.mxu0
  %v4685 = vadd.f32 %v4596, %v4684
  %v4686 = vpop.f32.mrf.mxu0
  %v4687 = vadd.f32 %v4598, %v4686
  %4688 = vmatmul.bf16.gmra.mxu0 %v3629
  %v4689 = vpop.f32.mrf.mxu0
  %v4690 = vadd.f32 %v4601, %v4689
  %v4691 = vpop.f32.mrf.mxu0
  %v4692 = vadd.f32 %v4603, %v4691
  %4693 = vmatmul.bf16.gmra.mxu0 %v3631
  %v4694 = vpop.f32.mrf.mxu0
  %v4695 = vadd.f32 %v4606, %v4694
  %v4696 = vpop.f32.mrf.mxu0
  %v4697 = vadd.f32 %v4608, %v4696
  %4698 = vmatmul.bf16.gmra.mxu0 %v3633
  %v4699 = vpop.f32.mrf.mxu0
  %v4700 = vadd.f32 %v4611, %v4699
  %v4701 = vpop.f32.mrf.mxu0
  %v4702 = vadd.f32 %v4613, %v4701
  %4703 = vmatmul.bf16.gmra.mxu0 %v3635
  %v4704 = vpop.f32.mrf.mxu0
  %v4705 = vadd.f32 %v4616, %v4704
  %v4706 = vpop.f32.mrf.mxu0
  %v4707 = vadd.f32 %v4618, %v4706
  %4708 = vmatmul.bf16.gmra.mxu0 %v3637
  %v4709 = vpop.f32.mrf.mxu0
  %v4710 = vadd.f32 %v4621, %v4709
  %v4711 = vpop.f32.mrf.mxu0
  %v4712 = vadd.f32 %v4623, %v4711
  %4713 = vmatmul.bf16.gmra.mxu0 %v3639
  %v4714 = vpop.f32.mrf.mxu0
  %v4715 = vadd.f32 %v4626, %v4714
  %v4716 = vpop.f32.mrf.mxu0
  %v4717 = vadd.f32 %v4628, %v4716
  %4718 = vmatmul.bf16.gmra.mxu0 %v3641
  %v4719 = vpop.f32.mrf.mxu0
  %v4720 = vadd.f32 %v4631, %v4719
  %v4721 = vpop.f32.mrf.mxu0
  %v4722 = vadd.f32 %v4633, %v4721
  %4723 = vmatmul.bf16.gmra.mxu0 %v3643
  %v4724 = vpop.f32.mrf.mxu0
  %v4725 = vadd.f32 %v4636, %v4724
  %v4726 = vpop.f32.mrf.mxu0
  %v4727 = vadd.f32 %v4638, %v4726
  %4728 = vmatmul.bf16.gmra.mxu0 %v3645
  %v4729 = vpop.f32.mrf.mxu0
  %v4730 = vadd.f32 %v4641, %v4729
  %v4731 = vpop.f32.mrf.mxu0
  %v4732 = vadd.f32 %v4643, %v4731
  %4733 = vdwg.mxu0
  %s4734 = scalar_lea.vmem %s3, 512
  %v4735 = vld [vmem:[%s4734] sm:$0xff]
  %v4736 = vld [vmem:[%s4734 + $0x8] sm:$0xff]
  %v4737 = vld [vmem:[%s4734 + $0x10] sm:$0xff]
  %v4738 = vld [vmem:[%s4734 + $0x18] sm:$0xff]
  %v4739 = vld [vmem:[%s4734 + $0x20] sm:$0xff]
  %v4740 = vld [vmem:[%s4734 + $0x28] sm:$0xff]
  %v4741 = vld [vmem:[%s4734 + $0x30] sm:$0xff]
  %v4742 = vld [vmem:[%s4734 + $0x38] sm:$0xff]
  %v4743 = vld [vmem:[%s4734 + $0x40] sm:$0xff]
  %v4744 = vld [vmem:[%s4734 + $0x48] sm:$0xff]
  %v4745 = vld [vmem:[%s4734 + $0x50] sm:$0xff]
  %v4746 = vld [vmem:[%s4734 + $0x58] sm:$0xff]
  %v4747 = vld [vmem:[%s4734 + $0x60] sm:$0xff]
  %v4748 = vld [vmem:[%s4734 + $0x68] sm:$0xff]
  %v4749 = vld [vmem:[%s4734 + $0x70] sm:$0xff]
  %v4750 = vld [vmem:[%s4734 + $0x78] sm:$0xff]
  %v4751 = vld [vmem:[%s4734 + $0x80] sm:$0xff]
  %v4752 = vld [vmem:[%s4734 + $0x88] sm:$0xff]
  %v4753 = vld [vmem:[%s4734 + $0x90] sm:$0xff]
  %v4754 = vld [vmem:[%s4734 + $0x98] sm:$0xff]
  %v4755 = vld [vmem:[%s4734 + $0xa0] sm:$0xff]
  %v4756 = vld [vmem:[%s4734 + $0xa8] sm:$0xff]
  %v4757 = vld [vmem:[%s4734 + $0xb0] sm:$0xff]
  %v4758 = vld [vmem:[%s4734 + $0xb8] sm:$0xff]
  %v4759 = vld [vmem:[%s4734 + $0xc0] sm:$0xff]
  %v4760 = vld [vmem:[%s4734 + $0xc8] sm:$0xff]
  %v4761 = vld [vmem:[%s4734 + $0xd0] sm:$0xff]
  %v4762 = vld [vmem:[%s4734 + $0xd8] sm:$0xff]
  %v4763 = vld [vmem:[%s4734 + $0xe0] sm:$0xff]
  %v4764 = vld [vmem:[%s4734 + $0xe8] sm:$0xff]
  %v4765 = vld [vmem:[%s4734 + $0xf0] sm:$0xff]
  %v4766 = vld [vmem:[%s4734 + $0xf8] sm:$0xff]
  %v4771 = vunpack.c.l.b16 %v3445
  %v4772 = vunpack.c.h.b16 %v3445
  %v4773 = vunpack.c.l.b16 %v3446
  %v4774 = vunpack.c.h.b16 %v3446
  %v4775 = vunpack.c.l.b16 %v3447
  %v4776 = vunpack.c.h.b16 %v3447
  %v4777 = vunpack.c.l.b16 %v3448
  %v4778 = vunpack.c.h.b16 %v3448
  %v4779 = vpack.c.b16 %v4773, %v4771
  %v4780 = vpack.c.b16 %v4774, %v4772
  %v4781 = vpack.c.b16 %v4777, %v4775
  %v4782 = vpack.c.b16 %v4778, %v4776
  %v4819 = vunpack.c.l.b16 %v4735
  %v4820 = vunpack.c.h.b16 %v4735
  %v4821 = vunpack.c.l.b16 %v4736
  %v4822 = vunpack.c.h.b16 %v4736
  %v4823 = vunpack.c.l.b16 %v4737
  %v4824 = vunpack.c.h.b16 %v4737
  %v4825 = vunpack.c.l.b16 %v4738
  %v4826 = vunpack.c.h.b16 %v4738
  %v4827 = vunpack.c.l.b16 %v4739
  %v4828 = vunpack.c.h.b16 %v4739
  %v4829 = vunpack.c.l.b16 %v4740
  %v4830 = vunpack.c.h.b16 %v4740
  %v4831 = vunpack.c.l.b16 %v4741
  %v4832 = vunpack.c.h.b16 %v4741
  %v4833 = vunpack.c.l.b16 %v4742
  %v4834 = vunpack.c.h.b16 %v4742
  %v4835 = vunpack.c.l.b16 %v4743
  %v4836 = vunpack.c.h.b16 %v4743
  %v4837 = vunpack.c.l.b16 %v4744
  %v4838 = vunpack.c.h.b16 %v4744
  %v4839 = vunpack.c.l.b16 %v4745
  %v4840 = vunpack.c.h.b16 %v4745
  %v4841 = vunpack.c.l.b16 %v4746
  %v4842 = vunpack.c.h.b16 %v4746
  %v4843 = vunpack.c.l.b16 %v4747
  %v4844 = vunpack.c.h.b16 %v4747
  %v4845 = vunpack.c.l.b16 %v4748
  %v4846 = vunpack.c.h.b16 %v4748
  %v4847 = vunpack.c.l.b16 %v4749
  %v4848 = vunpack.c.h.b16 %v4749
  %v4849 = vunpack.c.l.b16 %v4750
  %v4850 = vunpack.c.h.b16 %v4750
  %v4851 = vunpack.c.l.b16 %v4751
  %v4852 = vunpack.c.h.b16 %v4751
  %v4853 = vunpack.c.l.b16 %v4752
  %v4854 = vunpack.c.h.b16 %v4752
  %v4855 = vunpack.c.l.b16 %v4753
  %v4856 = vunpack.c.h.b16 %v4753
  %v4857 = vunpack.c.l.b16 %v4754
  %v4858 = vunpack.c.h.b16 %v4754
  %v4859 = vunpack.c.l.b16 %v4755
  %v4860 = vunpack.c.h.b16 %v4755
  %v4861 = vunpack.c.l.b16 %v4756
  %v4862 = vunpack.c.h.b16 %v4756
  %v4863 = vunpack.c.l.b16 %v4757
  %v4864 = vunpack.c.h.b16 %v4757
  %v4865 = vunpack.c.l.b16 %v4758
  %v4866 = vunpack.c.h.b16 %v4758
  %v4867 = vunpack.c.l.b16 %v4759
  %v4868 = vunpack.c.h.b16 %v4759
  %v4869 = vunpack.c.l.b16 %v4760
  %v4870 = vunpack.c.h.b16 %v4760
  %v4871 = vunpack.c.l.b16 %v4761
  %v4872 = vunpack.c.h.b16 %v4761
  %v4873 = vunpack.c.l.b16 %v4762
  %v4874 = vunpack.c.h.b16 %v4762
  %v4875 = vunpack.c.l.b16 %v4763
  %v4876 = vunpack.c.h.b16 %v4763
  %v4877 = vunpack.c.l.b16 %v4764
  %v4878 = vunpack.c.h.b16 %v4764
  %v4879 = vunpack.c.l.b16 %v4765
  %v4880 = vunpack.c.h.b16 %v4765
  %v4881 = vunpack.c.l.b16 %v4766
  %v4882 = vunpack.c.h.b16 %v4766
  %v4883 = vpack.c.b16 %v4821, %v4819
  %v4884 = vpack.c.b16 %v4822, %v4820
  %v4885 = vpack.c.b16 %v4825, %v4823
  %v4886 = vpack.c.b16 %v4826, %v4824
  %v4887 = vpack.c.b16 %v4829, %v4827
  %v4888 = vpack.c.b16 %v4830, %v4828
  %v4889 = vpack.c.b16 %v4833, %v4831
  %v4890 = vpack.c.b16 %v4834, %v4832
  %v4891 = vpack.c.b16 %v4837, %v4835
  %v4892 = vpack.c.b16 %v4838, %v4836
  %v4893 = vpack.c.b16 %v4841, %v4839
  %v4894 = vpack.c.b16 %v4842, %v4840
  %v4895 = vpack.c.b16 %v4845, %v4843
  %v4896 = vpack.c.b16 %v4846, %v4844
  %v4897 = vpack.c.b16 %v4849, %v4847
  %v4898 = vpack.c.b16 %v4850, %v4848
  %v4899 = vpack.c.b16 %v4853, %v4851
  %v4900 = vpack.c.b16 %v4854, %v4852
  %v4901 = vpack.c.b16 %v4857, %v4855
  %v4902 = vpack.c.b16 %v4858, %v4856
  %v4903 = vpack.c.b16 %v4861, %v4859
  %v4904 = vpack.c.b16 %v4862, %v4860
  %v4905 = vpack.c.b16 %v4865, %v4863
  %v4906 = vpack.c.b16 %v4866, %v4864
  %v4907 = vpack.c.b16 %v4869, %v4867
  %v4908 = vpack.c.b16 %v4870, %v4868
  %v4909 = vpack.c.b16 %v4873, %v4871
  %v4910 = vpack.c.b16 %v4874, %v4872
  %v4911 = vpack.c.b16 %v4877, %v4875
  %v4912 = vpack.c.b16 %v4878, %v4876
  %v4913 = vpack.c.b16 %v4881, %v4879
  %v4914 = vpack.c.b16 %v4882, %v4880
  %4947 = vmatpush.bf16.msra.mxu0 %v4897
  %4948 = vmatpush.bf16.msra.mxu0 %v4895
  %4949 = vmatpush.bf16.msra.mxu0 %v4893
  %4950 = vmatpush.bf16.msra.mxu0 %v4891
  %4951 = vmatpush.bf16.msra.mxu0 %v4889
  %4952 = vmatpush.bf16.msra.mxu0 %v4887
  %4953 = vmatpush.bf16.msra.mxu0 %v4885
  %4954 = vmatpush.bf16.msra.mxu0 %v4883
  %4955 = vmatmul.bf16.gmra.mxu0 %v3622
  %v4956 = vpop.f32.mrf.mxu0
  %v4957 = vadd.f32 0.0, %v4956
  %v4958 = vpop.f32.mrf.mxu0
  %v4959 = vadd.f32 0.0, %v4958
  %4960 = vmatmul.bf16.gmra.mxu0 %v3624
  %v4961 = vpop.f32.mrf.mxu0
  %v4962 = vadd.f32 0.0, %v4961
  %v4963 = vpop.f32.mrf.mxu0
  %v4964 = vadd.f32 0.0, %v4963
  %4965 = vmatmul.bf16.gmra.mxu0 %v3626
  %v4966 = vpop.f32.mrf.mxu0
  %v4967 = vadd.f32 0.0, %v4966
  %v4968 = vpop.f32.mrf.mxu0
  %v4969 = vadd.f32 0.0, %v4968
  %4970 = vmatmul.bf16.gmra.mxu0 %v3628
  %v4971 = vpop.f32.mrf.mxu0
  %v4972 = vadd.f32 0.0, %v4971
  %v4973 = vpop.f32.mrf.mxu0
  %v4974 = vadd.f32 0.0, %v4973
  %4975 = vmatmul.bf16.gmra.mxu0 %v3630
  %v4976 = vpop.f32.mrf.mxu0
  %v4977 = vadd.f32 0.0, %v4976
  %v4978 = vpop.f32.mrf.mxu0
  %v4979 = vadd.f32 0.0, %v4978
  %4980 = vmatmul.bf16.gmra.mxu0 %v3632
  %v4981 = vpop.f32.mrf.mxu0
  %v4982 = vadd.f32 0.0, %v4981
  %v4983 = vpop.f32.mrf.mxu0
  %v4984 = vadd.f32 0.0, %v4983
  %4985 = vmatmul.bf16.gmra.mxu0 %v3634
  %v4986 = vpop.f32.mrf.mxu0
  %v4987 = vadd.f32 0.0, %v4986
  %v4988 = vpop.f32.mrf.mxu0
  %v4989 = vadd.f32 0.0, %v4988
  %4990 = vmatmul.bf16.gmra.mxu0 %v3636
  %v4991 = vpop.f32.mrf.mxu0
  %v4992 = vadd.f32 0.0, %v4991
  %v4993 = vpop.f32.mrf.mxu0
  %v4994 = vadd.f32 0.0, %v4993
  %4995 = vmatmul.bf16.gmra.mxu0 %v3638
  %v4996 = vpop.f32.mrf.mxu0
  %v4997 = vadd.f32 0.0, %v4996
  %v4998 = vpop.f32.mrf.mxu0
  %v4999 = vadd.f32 0.0, %v4998
  %5000 = vmatmul.bf16.gmra.mxu0 %v3640
  %v5001 = vpop.f32.mrf.mxu0
  %v5002 = vadd.f32 0.0, %v5001
  %v5003 = vpop.f32.mrf.mxu0
  %v5004 = vadd.f32 0.0, %v5003
  %5005 = vmatmul.bf16.gmra.mxu0 %v3642
  %v5006 = vpop.f32.mrf.mxu0
  %v5007 = vadd.f32 0.0, %v5006
  %v5008 = vpop.f32.mrf.mxu0
  %v5009 = vadd.f32 0.0, %v5008
  %5010 = vmatmul.bf16.gmra.mxu0 %v3644
  %v5011 = vpop.f32.mrf.mxu0
  %v5012 = vadd.f32 0.0, %v5011
  %v5013 = vpop.f32.mrf.mxu0
  %v5014 = vadd.f32 0.0, %v5013
  %5015 = vmatmul.bf16.gmra.mxu0 %v3646
  %v5016 = vpop.f32.mrf.mxu0
  %v5017 = vadd.f32 0.0, %v5016
  %v5018 = vpop.f32.mrf.mxu0
  %v5019 = vadd.f32 0.0, %v5018
  %5020 = vmatmul.bf16.gmra.mxu0 %v3648
  %v5021 = vpop.f32.mrf.mxu0
  %v5022 = vadd.f32 0.0, %v5021
  %v5023 = vpop.f32.mrf.mxu0
  %v5024 = vadd.f32 0.0, %v5023
  %5025 = vmatmul.bf16.gmra.mxu0 %v4779
  %v5026 = vpop.f32.mrf.mxu0
  %v5027 = vadd.f32 0.0, %v5026
  %v5028 = vpop.f32.mrf.mxu0
  %v5029 = vadd.f32 0.0, %v5028
  %5030 = vmatmul.bf16.gmra.mxu0 %v4781
  %v5031 = vpop.f32.mrf.mxu0
  %v5032 = vadd.f32 0.0, %v5031
  %v5033 = vpop.f32.mrf.mxu0
  %v5034 = vadd.f32 0.0, %v5033
  %5035 = vdwg.mxu0
  %5036 = vmatpush.bf16.msra.mxu0 %v4913
  %5037 = vmatpush.bf16.msra.mxu0 %v4911
  %5038 = vmatpush.bf16.msra.mxu0 %v4909
  %5039 = vmatpush.bf16.msra.mxu0 %v4907
  %5040 = vmatpush.bf16.msra.mxu0 %v4905
  %5041 = vmatpush.bf16.msra.mxu0 %v4903
  %5042 = vmatpush.bf16.msra.mxu0 %v4901
  %5043 = vmatpush.bf16.msra.mxu0 %v4899
  %5044 = vmatmul.bf16.gmra.mxu0 %v3623
  %v5045 = vpop.f32.mrf.mxu0
  %v5046 = vadd.f32 %v4957, %v5045
  %v5047 = vpop.f32.mrf.mxu0
  %v5048 = vadd.f32 %v4959, %v5047
  %5049 = vmatmul.bf16.gmra.mxu0 %v3625
  %v5050 = vpop.f32.mrf.mxu0
  %v5051 = vadd.f32 %v4962, %v5050
  %v5052 = vpop.f32.mrf.mxu0
  %v5053 = vadd.f32 %v4964, %v5052
  %5054 = vmatmul.bf16.gmra.mxu0 %v3627
  %v5055 = vpop.f32.mrf.mxu0
  %v5056 = vadd.f32 %v4967, %v5055
  %v5057 = vpop.f32.mrf.mxu0
  %v5058 = vadd.f32 %v4969, %v5057
  %5059 = vmatmul.bf16.gmra.mxu0 %v3629
  %v5060 = vpop.f32.mrf.mxu0
  %v5061 = vadd.f32 %v4972, %v5060
  %v5062 = vpop.f32.mrf.mxu0
  %v5063 = vadd.f32 %v4974, %v5062
  %5064 = vmatmul.bf16.gmra.mxu0 %v3631
  %v5065 = vpop.f32.mrf.mxu0
  %v5066 = vadd.f32 %v4977, %v5065
  %v5067 = vpop.f32.mrf.mxu0
  %v5068 = vadd.f32 %v4979, %v5067
  %5069 = vmatmul.bf16.gmra.mxu0 %v3633
  %v5070 = vpop.f32.mrf.mxu0
  %v5071 = vadd.f32 %v4982, %v5070
  %v5072 = vpop.f32.mrf.mxu0
  %v5073 = vadd.f32 %v4984, %v5072
  %5074 = vmatmul.bf16.gmra.mxu0 %v3635
  %v5075 = vpop.f32.mrf.mxu0
  %v5076 = vadd.f32 %v4987, %v5075
  %v5077 = vpop.f32.mrf.mxu0
  %v5078 = vadd.f32 %v4989, %v5077
  %5079 = vmatmul.bf16.gmra.mxu0 %v3637
  %v5080 = vpop.f32.mrf.mxu0
  %v5081 = vadd.f32 %v4992, %v5080
  %v5082 = vpop.f32.mrf.mxu0
  %v5083 = vadd.f32 %v4994, %v5082
  %5084 = vmatmul.bf16.gmra.mxu0 %v3639
  %v5085 = vpop.f32.mrf.mxu0
  %v5086 = vadd.f32 %v4997, %v5085
  %v5087 = vpop.f32.mrf.mxu0
  %v5088 = vadd.f32 %v4999, %v5087
  %5089 = vmatmul.bf16.gmra.mxu0 %v3641
  %v5090 = vpop.f32.mrf.mxu0
  %v5091 = vadd.f32 %v5002, %v5090
  %v5092 = vpop.f32.mrf.mxu0
  %v5093 = vadd.f32 %v5004, %v5092
  %5094 = vmatmul.bf16.gmra.mxu0 %v3643
  %v5095 = vpop.f32.mrf.mxu0
  %v5096 = vadd.f32 %v5007, %v5095
  %v5097 = vpop.f32.mrf.mxu0
  %v5098 = vadd.f32 %v5009, %v5097
  %5099 = vmatmul.bf16.gmra.mxu0 %v3645
  %v5100 = vpop.f32.mrf.mxu0
  %v5101 = vadd.f32 %v5012, %v5100
  %v5102 = vpop.f32.mrf.mxu0
  %v5103 = vadd.f32 %v5014, %v5102
  %5104 = vmatmul.bf16.gmra.mxu0 %v3647
  %v5105 = vpop.f32.mrf.mxu0
  %v5106 = vadd.f32 %v5017, %v5105
  %v5107 = vpop.f32.mrf.mxu0
  %v5108 = vadd.f32 %v5019, %v5107
  %5109 = vmatmul.bf16.gmra.mxu0 %v3649
  %v5110 = vpop.f32.mrf.mxu0
  %v5111 = vadd.f32 %v5022, %v5110
  %v5112 = vpop.f32.mrf.mxu0
  %v5113 = vadd.f32 %v5024, %v5112
  %5114 = vmatmul.bf16.gmra.mxu0 %v4780
  %v5115 = vpop.f32.mrf.mxu0
  %v5116 = vadd.f32 %v5027, %v5115
  %v5117 = vpop.f32.mrf.mxu0
  %v5118 = vadd.f32 %v5029, %v5117
  %5119 = vmatmul.bf16.gmra.mxu0 %v4782
  %v5120 = vpop.f32.mrf.mxu0
  %v5121 = vadd.f32 %v5032, %v5120
  %v5122 = vpop.f32.mrf.mxu0
  %v5123 = vadd.f32 %v5034, %v5122
  %5124 = vdwg.mxu0
  %5125 = vmatpush.bf16.msra.mxu0 %v4898
  %5126 = vmatpush.bf16.msra.mxu0 %v4896
  %5127 = vmatpush.bf16.msra.mxu0 %v4894
  %5128 = vmatpush.bf16.msra.mxu0 %v4892
  %5129 = vmatpush.bf16.msra.mxu0 %v4890
  %5130 = vmatpush.bf16.msra.mxu0 %v4888
  %5131 = vmatpush.bf16.msra.mxu0 %v4886
  %5132 = vmatpush.bf16.msra.mxu0 %v4884
  %5133 = vmatmul.bf16.gmra.mxu0 %v3622
  %v5134 = vpop.f32.mrf.mxu0
  %v5135 = vadd.f32 0.0, %v5134
  %v5136 = vpop.f32.mrf.mxu0
  %v5137 = vadd.f32 0.0, %v5136
  %5138 = vmatmul.bf16.gmra.mxu0 %v3624
  %v5139 = vpop.f32.mrf.mxu0
  %v5140 = vadd.f32 0.0, %v5139
  %v5141 = vpop.f32.mrf.mxu0
  %v5142 = vadd.f32 0.0, %v5141
  %5143 = vmatmul.bf16.gmra.mxu0 %v3626
  %v5144 = vpop.f32.mrf.mxu0
  %v5145 = vadd.f32 0.0, %v5144
  %v5146 = vpop.f32.mrf.mxu0
  %v5147 = vadd.f32 0.0, %v5146
  %5148 = vmatmul.bf16.gmra.mxu0 %v3628
  %v5149 = vpop.f32.mrf.mxu0
  %v5150 = vadd.f32 0.0, %v5149
  %v5151 = vpop.f32.mrf.mxu0
  %v5152 = vadd.f32 0.0, %v5151
  %5153 = vmatmul.bf16.gmra.mxu0 %v3630
  %v5154 = vpop.f32.mrf.mxu0
  %v5155 = vadd.f32 0.0, %v5154
  %v5156 = vpop.f32.mrf.mxu0
  %v5157 = vadd.f32 0.0, %v5156
  %5158 = vmatmul.bf16.gmra.mxu0 %v3632
  %v5159 = vpop.f32.mrf.mxu0
  %v5160 = vadd.f32 0.0, %v5159
  %v5161 = vpop.f32.mrf.mxu0
  %v5162 = vadd.f32 0.0, %v5161
  %5163 = vmatmul.bf16.gmra.mxu0 %v3634
  %v5164 = vpop.f32.mrf.mxu0
  %v5165 = vadd.f32 0.0, %v5164
  %v5166 = vpop.f32.mrf.mxu0
  %v5167 = vadd.f32 0.0, %v5166
  %5168 = vmatmul.bf16.gmra.mxu0 %v3636
  %v5169 = vpop.f32.mrf.mxu0
  %v5170 = vadd.f32 0.0, %v5169
  %v5171 = vpop.f32.mrf.mxu0
  %v5172 = vadd.f32 0.0, %v5171
  %5173 = vmatmul.bf16.gmra.mxu0 %v3638
  %v5174 = vpop.f32.mrf.mxu0
  %v5175 = vadd.f32 0.0, %v5174
  %v5176 = vpop.f32.mrf.mxu0
  %v5177 = vadd.f32 0.0, %v5176
  %5178 = vmatmul.bf16.gmra.mxu0 %v3640
  %v5179 = vpop.f32.mrf.mxu0
  %v5180 = vadd.f32 0.0, %v5179
  %v5181 = vpop.f32.mrf.mxu0
  %v5182 = vadd.f32 0.0, %v5181
  %5183 = vmatmul.bf16.gmra.mxu0 %v3642
  %v5184 = vpop.f32.mrf.mxu0
  %v5185 = vadd.f32 0.0, %v5184
  %v5186 = vpop.f32.mrf.mxu0
  %v5187 = vadd.f32 0.0, %v5186
  %5188 = vmatmul.bf16.gmra.mxu0 %v3644
  %v5189 = vpop.f32.mrf.mxu0
  %v5190 = vadd.f32 0.0, %v5189
  %v5191 = vpop.f32.mrf.mxu0
  %v5192 = vadd.f32 0.0, %v5191
  %5193 = vmatmul.bf16.gmra.mxu0 %v3646
  %v5194 = vpop.f32.mrf.mxu0
  %v5195 = vadd.f32 0.0, %v5194
  %v5196 = vpop.f32.mrf.mxu0
  %v5197 = vadd.f32 0.0, %v5196
  %5198 = vmatmul.bf16.gmra.mxu0 %v3648
  %v5199 = vpop.f32.mrf.mxu0
  %v5200 = vadd.f32 0.0, %v5199
  %v5201 = vpop.f32.mrf.mxu0
  %v5202 = vadd.f32 0.0, %v5201
  %5203 = vmatmul.bf16.gmra.mxu0 %v4779
  %v5204 = vpop.f32.mrf.mxu0
  %v5205 = vadd.f32 0.0, %v5204
  %v5206 = vpop.f32.mrf.mxu0
  %v5207 = vadd.f32 0.0, %v5206
  %5208 = vmatmul.bf16.gmra.mxu0 %v4781
  %v5209 = vpop.f32.mrf.mxu0
  %v5210 = vadd.f32 0.0, %v5209
  %v5211 = vpop.f32.mrf.mxu0
  %v5212 = vadd.f32 0.0, %v5211
  %5213 = vdwg.mxu0
  %5214 = vmatpush.bf16.msra.mxu0 %v4914
  %5215 = vmatpush.bf16.msra.mxu0 %v4912
  %5216 = vmatpush.bf16.msra.mxu0 %v4910
  %5217 = vmatpush.bf16.msra.mxu0 %v4908
  %5218 = vmatpush.bf16.msra.mxu0 %v4906
  %5219 = vmatpush.bf16.msra.mxu0 %v4904
  %5220 = vmatpush.bf16.msra.mxu0 %v4902
  %5221 = vmatpush.bf16.msra.mxu0 %v4900
  %5222 = vmatmul.bf16.gmra.mxu0 %v3623
  %v5223 = vpop.f32.mrf.mxu0
  %v5224 = vadd.f32 %v5135, %v5223
  %v5225 = vpop.f32.mrf.mxu0
  %v5226 = vadd.f32 %v5137, %v5225
  %5227 = vmatmul.bf16.gmra.mxu0 %v3625
  %v5228 = vpop.f32.mrf.mxu0
  %v5229 = vadd.f32 %v5140, %v5228
  %v5230 = vpop.f32.mrf.mxu0
  %v5231 = vadd.f32 %v5142, %v5230
  %5232 = vmatmul.bf16.gmra.mxu0 %v3627
  %v5233 = vpop.f32.mrf.mxu0
  %v5234 = vadd.f32 %v5145, %v5233
  %v5235 = vpop.f32.mrf.mxu0
  %v5236 = vadd.f32 %v5147, %v5235
  %5237 = vmatmul.bf16.gmra.mxu0 %v3629
  %v5238 = vpop.f32.mrf.mxu0
  %v5239 = vadd.f32 %v5150, %v5238
  %v5240 = vpop.f32.mrf.mxu0
  %v5241 = vadd.f32 %v5152, %v5240
  %5242 = vmatmul.bf16.gmra.mxu0 %v3631
  %v5243 = vpop.f32.mrf.mxu0
  %v5244 = vadd.f32 %v5155, %v5243
  %v5245 = vpop.f32.mrf.mxu0
  %v5246 = vadd.f32 %v5157, %v5245
  %5247 = vmatmul.bf16.gmra.mxu0 %v3633
  %v5248 = vpop.f32.mrf.mxu0
  %v5249 = vadd.f32 %v5160, %v5248
  %v5250 = vpop.f32.mrf.mxu0
  %v5251 = vadd.f32 %v5162, %v5250
  %5252 = vmatmul.bf16.gmra.mxu0 %v3635
  %v5253 = vpop.f32.mrf.mxu0
  %v5254 = vadd.f32 %v5165, %v5253
  %v5255 = vpop.f32.mrf.mxu0
  %v5256 = vadd.f32 %v5167, %v5255
  %5257 = vmatmul.bf16.gmra.mxu0 %v3637
  %v5258 = vpop.f32.mrf.mxu0
  %v5259 = vadd.f32 %v5170, %v5258
  %v5260 = vpop.f32.mrf.mxu0
  %v5261 = vadd.f32 %v5172, %v5260
  %5262 = vmatmul.bf16.gmra.mxu0 %v3639
  %v5263 = vpop.f32.mrf.mxu0
  %v5264 = vadd.f32 %v5175, %v5263
  %v5265 = vpop.f32.mrf.mxu0
  %v5266 = vadd.f32 %v5177, %v5265
  %5267 = vmatmul.bf16.gmra.mxu0 %v3641
  %v5268 = vpop.f32.mrf.mxu0
  %v5269 = vadd.f32 %v5180, %v5268
  %v5270 = vpop.f32.mrf.mxu0
  %v5271 = vadd.f32 %v5182, %v5270
  %5272 = vmatmul.bf16.gmra.mxu0 %v3643
  %v5273 = vpop.f32.mrf.mxu0
  %v5274 = vadd.f32 %v5185, %v5273
  %v5275 = vpop.f32.mrf.mxu0
  %v5276 = vadd.f32 %v5187, %v5275
  %5277 = vmatmul.bf16.gmra.mxu0 %v3645
  %v5278 = vpop.f32.mrf.mxu0
  %v5279 = vadd.f32 %v5190, %v5278
  %v5280 = vpop.f32.mrf.mxu0
  %v5281 = vadd.f32 %v5192, %v5280
  %5282 = vmatmul.bf16.gmra.mxu0 %v3647
  %v5283 = vpop.f32.mrf.mxu0
  %v5284 = vadd.f32 %v5195, %v5283
  %v5285 = vpop.f32.mrf.mxu0
  %v5286 = vadd.f32 %v5197, %v5285
  %5287 = vmatmul.bf16.gmra.mxu0 %v3649
  %v5288 = vpop.f32.mrf.mxu0
  %v5289 = vadd.f32 %v5200, %v5288
  %v5290 = vpop.f32.mrf.mxu0
  %v5291 = vadd.f32 %v5202, %v5290
  %5292 = vmatmul.bf16.gmra.mxu0 %v4780
  %v5293 = vpop.f32.mrf.mxu0
  %v5294 = vadd.f32 %v5205, %v5293
  %v5295 = vpop.f32.mrf.mxu0
  %v5296 = vadd.f32 %v5207, %v5295
  %5297 = vmatmul.bf16.gmra.mxu0 %v4782
  %v5298 = vpop.f32.mrf.mxu0
  %v5299 = vadd.f32 %v5210, %v5298
  %v5300 = vpop.f32.mrf.mxu0
  %v5301 = vadd.f32 %v5212, %v5300
  %5302 = vdwg.mxu0
  %v5303 = vadd.f32 %v4477, %v5046
  %v5304 = vadd.f32 %v4655, %v5224
  %v5305 = vadd.f32 %v4479, %v5048
  %v5306 = vadd.f32 %v4657, %v5226
  %v5307 = vadd.f32 %v4482, %v5051
  %v5308 = vadd.f32 %v4660, %v5229
  %v5309 = vadd.f32 %v4484, %v5053
  %v5310 = vadd.f32 %v4662, %v5231
  %v5311 = vadd.f32 %v4487, %v5056
  %v5312 = vadd.f32 %v4665, %v5234
  %v5313 = vadd.f32 %v4489, %v5058
  %v5314 = vadd.f32 %v4667, %v5236
  %v5315 = vadd.f32 %v4492, %v5061
  %v5316 = vadd.f32 %v4670, %v5239
  %v5317 = vadd.f32 %v4494, %v5063
  %v5318 = vadd.f32 %v4672, %v5241
  %v5319 = vadd.f32 %v4497, %v5066
  %v5320 = vadd.f32 %v4675, %v5244
  %v5321 = vadd.f32 %v4499, %v5068
  %v5322 = vadd.f32 %v4677, %v5246
  %v5323 = vadd.f32 %v4502, %v5071
  %v5324 = vadd.f32 %v4680, %v5249
  %v5325 = vadd.f32 %v4504, %v5073
  %v5326 = vadd.f32 %v4682, %v5251
  %v5327 = vadd.f32 %v4507, %v5076
  %v5328 = vadd.f32 %v4685, %v5254
  %v5329 = vadd.f32 %v4509, %v5078
  %v5330 = vadd.f32 %v4687, %v5256
  %v5331 = vadd.f32 %v4512, %v5081
  %v5332 = vadd.f32 %v4690, %v5259
  %v5333 = vadd.f32 %v4514, %v5083
  %v5334 = vadd.f32 %v4692, %v5261
  %v5335 = vadd.f32 %v4517, %v5086
  %v5336 = vadd.f32 %v4695, %v5264
  %v5337 = vadd.f32 %v4519, %v5088
  %v5338 = vadd.f32 %v4697, %v5266
  %v5339 = vadd.f32 %v4522, %v5091
  %v5340 = vadd.f32 %v4700, %v5269
  %v5341 = vadd.f32 %v4524, %v5093
  %v5342 = vadd.f32 %v4702, %v5271
  %v5343 = vadd.f32 %v4527, %v5096
  %v5344 = vadd.f32 %v4705, %v5274
  %v5345 = vadd.f32 %v4529, %v5098
  %v5346 = vadd.f32 %v4707, %v5276
  %v5347 = vadd.f32 %v4532, %v5101
  %v5348 = vadd.f32 %v4710, %v5279
  %v5349 = vadd.f32 %v4534, %v5103
  %v5350 = vadd.f32 %v4712, %v5281
  %v5351 = vadd.f32 %v4537, %v5106
  %v5352 = vadd.f32 %v4715, %v5284
  %v5353 = vadd.f32 %v4539, %v5108
  %v5354 = vadd.f32 %v4717, %v5286
  %v5355 = vadd.f32 %v4542, %v5111
  %v5356 = vadd.f32 %v4720, %v5289
  %v5357 = vadd.f32 %v4544, %v5113
  %v5358 = vadd.f32 %v4722, %v5291
  %v5359 = vadd.f32 %v4547, %v5116
  %v5360 = vadd.f32 %v4725, %v5294
  %v5361 = vadd.f32 %v4549, %v5118
  %v5362 = vadd.f32 %v4727, %v5296
  %v5363 = vadd.f32 %v4552, %v5121
  %v5364 = vadd.f32 %v4730, %v5299
  %v5365 = vadd.f32 %v4554, %v5123
  %v5366 = vadd.f32 %v4732, %v5301
  %s5367 = scalar_lea.vmem %s3, 768
  %v5368 = vld [vmem:[%s5367] sm:$0xff]
  %v5369 = vld [vmem:[%s5367 + $0x8] sm:$0xff]
  %v5370 = vld [vmem:[%s5367 + $0x10] sm:$0xff]
  %v5371 = vld [vmem:[%s5367 + $0x18] sm:$0xff]
  %v5372 = vld [vmem:[%s5367 + $0x20] sm:$0xff]
  %v5373 = vld [vmem:[%s5367 + $0x28] sm:$0xff]
  %v5374 = vld [vmem:[%s5367 + $0x30] sm:$0xff]
  %v5375 = vld [vmem:[%s5367 + $0x38] sm:$0xff]
  %v5376 = vld [vmem:[%s5367 + $0x40] sm:$0xff]
  %v5377 = vld [vmem:[%s5367 + $0x48] sm:$0xff]
  %v5378 = vld [vmem:[%s5367 + $0x50] sm:$0xff]
  %v5379 = vld [vmem:[%s5367 + $0x58] sm:$0xff]
  %v5380 = vld [vmem:[%s5367 + $0x60] sm:$0xff]
  %v5381 = vld [vmem:[%s5367 + $0x68] sm:$0xff]
  %v5382 = vld [vmem:[%s5367 + $0x70] sm:$0xff]
  %v5383 = vld [vmem:[%s5367 + $0x78] sm:$0xff]
  %v5384 = vld [vmem:[%s5367 + $0x80] sm:$0xff]
  %v5385 = vld [vmem:[%s5367 + $0x88] sm:$0xff]
  %v5386 = vld [vmem:[%s5367 + $0x90] sm:$0xff]
  %v5387 = vld [vmem:[%s5367 + $0x98] sm:$0xff]
  %v5388 = vld [vmem:[%s5367 + $0xa0] sm:$0xff]
  %v5389 = vld [vmem:[%s5367 + $0xa8] sm:$0xff]
  %v5390 = vld [vmem:[%s5367 + $0xb0] sm:$0xff]
  %v5391 = vld [vmem:[%s5367 + $0xb8] sm:$0xff]
  %v5392 = vld [vmem:[%s5367 + $0xc0] sm:$0xff]
  %v5393 = vld [vmem:[%s5367 + $0xc8] sm:$0xff]
  %v5394 = vld [vmem:[%s5367 + $0xd0] sm:$0xff]
  %v5395 = vld [vmem:[%s5367 + $0xd8] sm:$0xff]
  %v5396 = vld [vmem:[%s5367 + $0xe0] sm:$0xff]
  %v5397 = vld [vmem:[%s5367 + $0xe8] sm:$0xff]
  %v5398 = vld [vmem:[%s5367 + $0xf0] sm:$0xff]
  %v5399 = vld [vmem:[%s5367 + $0xf8] sm:$0xff]
  %v5404 = vunpack.c.l.b16 %v3449
  %v5405 = vunpack.c.h.b16 %v3449
  %v5406 = vunpack.c.l.b16 %v3450
  %v5407 = vunpack.c.h.b16 %v3450
  %v5408 = vunpack.c.l.b16 %v3451
  %v5409 = vunpack.c.h.b16 %v3451
  %v5410 = vunpack.c.l.b16 %v3452
  %v5411 = vunpack.c.h.b16 %v3452
  %v5412 = vpack.c.b16 %v5406, %v5404
  %v5413 = vpack.c.b16 %v5407, %v5405
  %v5414 = vpack.c.b16 %v5410, %v5408
  %v5415 = vpack.c.b16 %v5411, %v5409
  %v5452 = vunpack.c.l.b16 %v5368
  %v5453 = vunpack.c.h.b16 %v5368
  %v5454 = vunpack.c.l.b16 %v5369
  %v5455 = vunpack.c.h.b16 %v5369
  %v5456 = vunpack.c.l.b16 %v5370
  %v5457 = vunpack.c.h.b16 %v5370
  %v5458 = vunpack.c.l.b16 %v5371
  %v5459 = vunpack.c.h.b16 %v5371
  %v5460 = vunpack.c.l.b16 %v5372
  %v5461 = vunpack.c.h.b16 %v5372
  %v5462 = vunpack.c.l.b16 %v5373
  %v5463 = vunpack.c.h.b16 %v5373
  %v5464 = vunpack.c.l.b16 %v5374
  %v5465 = vunpack.c.h.b16 %v5374
  %v5466 = vunpack.c.l.b16 %v5375
  %v5467 = vunpack.c.h.b16 %v5375
  %v5468 = vunpack.c.l.b16 %v5376
  %v5469 = vunpack.c.h.b16 %v5376
  %v5470 = vunpack.c.l.b16 %v5377
  %v5471 = vunpack.c.h.b16 %v5377
  %v5472 = vunpack.c.l.b16 %v5378
  %v5473 = vunpack.c.h.b16 %v5378
  %v5474 = vunpack.c.l.b16 %v5379
  %v5475 = vunpack.c.h.b16 %v5379
  %v5476 = vunpack.c.l.b16 %v5380
  %v5477 = vunpack.c.h.b16 %v5380
  %v5478 = vunpack.c.l.b16 %v5381
  %v5479 = vunpack.c.h.b16 %v5381
  %v5480 = vunpack.c.l.b16 %v5382
  %v5481 = vunpack.c.h.b16 %v5382
  %v5482 = vunpack.c.l.b16 %v5383
  %v5483 = vunpack.c.h.b16 %v5383
  %v5484 = vunpack.c.l.b16 %v5384
  %v5485 = vunpack.c.h.b16 %v5384
  %v5486 = vunpack.c.l.b16 %v5385
  %v5487 = vunpack.c.h.b16 %v5385
  %v5488 = vunpack.c.l.b16 %v5386
  %v5489 = vunpack.c.h.b16 %v5386
  %v5490 = vunpack.c.l.b16 %v5387
  %v5491 = vunpack.c.h.b16 %v5387
  %v5492 = vunpack.c.l.b16 %v5388
  %v5493 = vunpack.c.h.b16 %v5388
  %v5494 = vunpack.c.l.b16 %v5389
  %v5495 = vunpack.c.h.b16 %v5389
  %v5496 = vunpack.c.l.b16 %v5390
  %v5497 = vunpack.c.h.b16 %v5390
  %v5498 = vunpack.c.l.b16 %v5391
  %v5499 = vunpack.c.h.b16 %v5391
  %v5500 = vunpack.c.l.b16 %v5392
  %v5501 = vunpack.c.h.b16 %v5392
  %v5502 = vunpack.c.l.b16 %v5393
  %v5503 = vunpack.c.h.b16 %v5393
  %v5504 = vunpack.c.l.b16 %v5394
  %v5505 = vunpack.c.h.b16 %v5394
  %v5506 = vunpack.c.l.b16 %v5395
  %v5507 = vunpack.c.h.b16 %v5395
  %v5508 = vunpack.c.l.b16 %v5396
  %v5509 = vunpack.c.h.b16 %v5396
  %v5510 = vunpack.c.l.b16 %v5397
  %v5511 = vunpack.c.h.b16 %v5397
  %v5512 = vunpack.c.l.b16 %v5398
  %v5513 = vunpack.c.h.b16 %v5398
  %v5514 = vunpack.c.l.b16 %v5399
  %v5515 = vunpack.c.h.b16 %v5399
  %v5516 = vpack.c.b16 %v5454, %v5452
  %v5517 = vpack.c.b16 %v5455, %v5453
  %v5518 = vpack.c.b16 %v5458, %v5456
  %v5519 = vpack.c.b16 %v5459, %v5457
  %v5520 = vpack.c.b16 %v5462, %v5460
  %v5521 = vpack.c.b16 %v5463, %v5461
  %v5522 = vpack.c.b16 %v5466, %v5464
  %v5523 = vpack.c.b16 %v5467, %v5465
  %v5524 = vpack.c.b16 %v5470, %v5468
  %v5525 = vpack.c.b16 %v5471, %v5469
  %v5526 = vpack.c.b16 %v5474, %v5472
  %v5527 = vpack.c.b16 %v5475, %v5473
  %v5528 = vpack.c.b16 %v5478, %v5476
  %v5529 = vpack.c.b16 %v5479, %v5477
  %v5530 = vpack.c.b16 %v5482, %v5480
  %v5531 = vpack.c.b16 %v5483, %v5481
  %v5532 = vpack.c.b16 %v5486, %v5484
  %v5533 = vpack.c.b16 %v5487, %v5485
  %v5534 = vpack.c.b16 %v5490, %v5488
  %v5535 = vpack.c.b16 %v5491, %v5489
  %v5536 = vpack.c.b16 %v5494, %v5492
  %v5537 = vpack.c.b16 %v5495, %v5493
  %v5538 = vpack.c.b16 %v5498, %v5496
  %v5539 = vpack.c.b16 %v5499, %v5497
  %v5540 = vpack.c.b16 %v5502, %v5500
  %v5541 = vpack.c.b16 %v5503, %v5501
  %v5542 = vpack.c.b16 %v5506, %v5504
  %v5543 = vpack.c.b16 %v5507, %v5505
  %v5544 = vpack.c.b16 %v5510, %v5508
  %v5545 = vpack.c.b16 %v5511, %v5509
  %v5546 = vpack.c.b16 %v5514, %v5512
  %v5547 = vpack.c.b16 %v5515, %v5513
  %5580 = vmatpush.bf16.msra.mxu0 %v5530
  %5581 = vmatpush.bf16.msra.mxu0 %v5528
  %5582 = vmatpush.bf16.msra.mxu0 %v5526
  %5583 = vmatpush.bf16.msra.mxu0 %v5524
  %5584 = vmatpush.bf16.msra.mxu0 %v5522
  %5585 = vmatpush.bf16.msra.mxu0 %v5520
  %5586 = vmatpush.bf16.msra.mxu0 %v5518
  %5587 = vmatpush.bf16.msra.mxu0 %v5516
  %5588 = vmatmul.bf16.gmra.mxu0 %v3626
  %v5589 = vpop.f32.mrf.mxu0
  %v5590 = vadd.f32 0.0, %v5589
  %v5591 = vpop.f32.mrf.mxu0
  %v5592 = vadd.f32 0.0, %v5591
  %5593 = vmatmul.bf16.gmra.mxu0 %v3628
  %v5594 = vpop.f32.mrf.mxu0
  %v5595 = vadd.f32 0.0, %v5594
  %v5596 = vpop.f32.mrf.mxu0
  %v5597 = vadd.f32 0.0, %v5596
  %5598 = vmatmul.bf16.gmra.mxu0 %v3630
  %v5599 = vpop.f32.mrf.mxu0
  %v5600 = vadd.f32 0.0, %v5599
  %v5601 = vpop.f32.mrf.mxu0
  %v5602 = vadd.f32 0.0, %v5601
  %5603 = vmatmul.bf16.gmra.mxu0 %v3632
  %v5604 = vpop.f32.mrf.mxu0
  %v5605 = vadd.f32 0.0, %v5604
  %v5606 = vpop.f32.mrf.mxu0
  %v5607 = vadd.f32 0.0, %v5606
  %5608 = vmatmul.bf16.gmra.mxu0 %v3634
  %v5609 = vpop.f32.mrf.mxu0
  %v5610 = vadd.f32 0.0, %v5609
  %v5611 = vpop.f32.mrf.mxu0
  %v5612 = vadd.f32 0.0, %v5611
  %5613 = vmatmul.bf16.gmra.mxu0 %v3636
  %v5614 = vpop.f32.mrf.mxu0
  %v5615 = vadd.f32 0.0, %v5614
  %v5616 = vpop.f32.mrf.mxu0
  %v5617 = vadd.f32 0.0, %v5616
  %5618 = vmatmul.bf16.gmra.mxu0 %v3638
  %v5619 = vpop.f32.mrf.mxu0
  %v5620 = vadd.f32 0.0, %v5619
  %v5621 = vpop.f32.mrf.mxu0
  %v5622 = vadd.f32 0.0, %v5621
  %5623 = vmatmul.bf16.gmra.mxu0 %v3640
  %v5624 = vpop.f32.mrf.mxu0
  %v5625 = vadd.f32 0.0, %v5624
  %v5626 = vpop.f32.mrf.mxu0
  %v5627 = vadd.f32 0.0, %v5626
  %5628 = vmatmul.bf16.gmra.mxu0 %v3642
  %v5629 = vpop.f32.mrf.mxu0
  %v5630 = vadd.f32 0.0, %v5629
  %v5631 = vpop.f32.mrf.mxu0
  %v5632 = vadd.f32 0.0, %v5631
  %5633 = vmatmul.bf16.gmra.mxu0 %v3644
  %v5634 = vpop.f32.mrf.mxu0
  %v5635 = vadd.f32 0.0, %v5634
  %v5636 = vpop.f32.mrf.mxu0
  %v5637 = vadd.f32 0.0, %v5636
  %5638 = vmatmul.bf16.gmra.mxu0 %v3646
  %v5639 = vpop.f32.mrf.mxu0
  %v5640 = vadd.f32 0.0, %v5639
  %v5641 = vpop.f32.mrf.mxu0
  %v5642 = vadd.f32 0.0, %v5641
  %5643 = vmatmul.bf16.gmra.mxu0 %v3648
  %v5644 = vpop.f32.mrf.mxu0
  %v5645 = vadd.f32 0.0, %v5644
  %v5646 = vpop.f32.mrf.mxu0
  %v5647 = vadd.f32 0.0, %v5646
  %5648 = vmatmul.bf16.gmra.mxu0 %v4779
  %v5649 = vpop.f32.mrf.mxu0
  %v5650 = vadd.f32 0.0, %v5649
  %v5651 = vpop.f32.mrf.mxu0
  %v5652 = vadd.f32 0.0, %v5651
  %5653 = vmatmul.bf16.gmra.mxu0 %v4781
  %v5654 = vpop.f32.mrf.mxu0
  %v5655 = vadd.f32 0.0, %v5654
  %v5656 = vpop.f32.mrf.mxu0
  %v5657 = vadd.f32 0.0, %v5656
  %5658 = vmatmul.bf16.gmra.mxu0 %v5412
  %v5659 = vpop.f32.mrf.mxu0
  %v5660 = vadd.f32 0.0, %v5659
  %v5661 = vpop.f32.mrf.mxu0
  %v5662 = vadd.f32 0.0, %v5661
  %5663 = vmatmul.bf16.gmra.mxu0 %v5414
  %v5664 = vpop.f32.mrf.mxu0
  %v5665 = vadd.f32 0.0, %v5664
  %v5666 = vpop.f32.mrf.mxu0
  %v5667 = vadd.f32 0.0, %v5666
  %5668 = vdwg.mxu0
  %5669 = vmatpush.bf16.msra.mxu0 %v5546
  %5670 = vmatpush.bf16.msra.mxu0 %v5544
  %5671 = vmatpush.bf16.msra.mxu0 %v5542
  %5672 = vmatpush.bf16.msra.mxu0 %v5540
  %5673 = vmatpush.bf16.msra.mxu0 %v5538
  %5674 = vmatpush.bf16.msra.mxu0 %v5536
  %5675 = vmatpush.bf16.msra.mxu0 %v5534
  %5676 = vmatpush.bf16.msra.mxu0 %v5532
  %5677 = vmatmul.bf16.gmra.mxu0 %v3627
  %v5678 = vpop.f32.mrf.mxu0
  %v5679 = vadd.f32 %v5590, %v5678
  %v5680 = vpop.f32.mrf.mxu0
  %v5681 = vadd.f32 %v5592, %v5680
  %5682 = vmatmul.bf16.gmra.mxu0 %v3629
  %v5683 = vpop.f32.mrf.mxu0
  %v5684 = vadd.f32 %v5595, %v5683
  %v5685 = vpop.f32.mrf.mxu0
  %v5686 = vadd.f32 %v5597, %v5685
  %5687 = vmatmul.bf16.gmra.mxu0 %v3631
  %v5688 = vpop.f32.mrf.mxu0
  %v5689 = vadd.f32 %v5600, %v5688
  %v5690 = vpop.f32.mrf.mxu0
  %v5691 = vadd.f32 %v5602, %v5690
  %5692 = vmatmul.bf16.gmra.mxu0 %v3633
  %v5693 = vpop.f32.mrf.mxu0
  %v5694 = vadd.f32 %v5605, %v5693
  %v5695 = vpop.f32.mrf.mxu0
  %v5696 = vadd.f32 %v5607, %v5695
  %5697 = vmatmul.bf16.gmra.mxu0 %v3635
  %v5698 = vpop.f32.mrf.mxu0
  %v5699 = vadd.f32 %v5610, %v5698
  %v5700 = vpop.f32.mrf.mxu0
  %v5701 = vadd.f32 %v5612, %v5700
  %5702 = vmatmul.bf16.gmra.mxu0 %v3637
  %v5703 = vpop.f32.mrf.mxu0
  %v5704 = vadd.f32 %v5615, %v5703
  %v5705 = vpop.f32.mrf.mxu0
  %v5706 = vadd.f32 %v5617, %v5705
  %5707 = vmatmul.bf16.gmra.mxu0 %v3639
  %v5708 = vpop.f32.mrf.mxu0
  %v5709 = vadd.f32 %v5620, %v5708
  %v5710 = vpop.f32.mrf.mxu0
  %v5711 = vadd.f32 %v5622, %v5710
  %5712 = vmatmul.bf16.gmra.mxu0 %v3641
  %v5713 = vpop.f32.mrf.mxu0
  %v5714 = vadd.f32 %v5625, %v5713
  %v5715 = vpop.f32.mrf.mxu0
  %v5716 = vadd.f32 %v5627, %v5715
  %5717 = vmatmul.bf16.gmra.mxu0 %v3643
  %v5718 = vpop.f32.mrf.mxu0
  %v5719 = vadd.f32 %v5630, %v5718
  %v5720 = vpop.f32.mrf.mxu0
  %v5721 = vadd.f32 %v5632, %v5720
  %5722 = vmatmul.bf16.gmra.mxu0 %v3645
  %v5723 = vpop.f32.mrf.mxu0
  %v5724 = vadd.f32 %v5635, %v5723
  %v5725 = vpop.f32.mrf.mxu0
  %v5726 = vadd.f32 %v5637, %v5725
  %5727 = vmatmul.bf16.gmra.mxu0 %v3647
  %v5728 = vpop.f32.mrf.mxu0
  %v5729 = vadd.f32 %v5640, %v5728
  %v5730 = vpop.f32.mrf.mxu0
  %v5731 = vadd.f32 %v5642, %v5730
  %5732 = vmatmul.bf16.gmra.mxu0 %v3649
  %v5733 = vpop.f32.mrf.mxu0
  %v5734 = vadd.f32 %v5645, %v5733
  %v5735 = vpop.f32.mrf.mxu0
  %v5736 = vadd.f32 %v5647, %v5735
  %5737 = vmatmul.bf16.gmra.mxu0 %v4780
  %v5738 = vpop.f32.mrf.mxu0
  %v5739 = vadd.f32 %v5650, %v5738
  %v5740 = vpop.f32.mrf.mxu0
  %v5741 = vadd.f32 %v5652, %v5740
  %5742 = vmatmul.bf16.gmra.mxu0 %v4782
  %v5743 = vpop.f32.mrf.mxu0
  %v5744 = vadd.f32 %v5655, %v5743
  %v5745 = vpop.f32.mrf.mxu0
  %v5746 = vadd.f32 %v5657, %v5745
  %5747 = vmatmul.bf16.gmra.mxu0 %v5413
  %v5748 = vpop.f32.mrf.mxu0
  %v5749 = vadd.f32 %v5660, %v5748
  %v5750 = vpop.f32.mrf.mxu0
  %v5751 = vadd.f32 %v5662, %v5750
  %5752 = vmatmul.bf16.gmra.mxu0 %v5415
  %v5753 = vpop.f32.mrf.mxu0
  %v5754 = vadd.f32 %v5665, %v5753
  %v5755 = vpop.f32.mrf.mxu0
  %v5756 = vadd.f32 %v5667, %v5755
  %5757 = vdwg.mxu0
  %5758 = vmatpush.bf16.msra.mxu0 %v5531
  %5759 = vmatpush.bf16.msra.mxu0 %v5529
  %5760 = vmatpush.bf16.msra.mxu0 %v5527
  %5761 = vmatpush.bf16.msra.mxu0 %v5525
  %5762 = vmatpush.bf16.msra.mxu0 %v5523
  %5763 = vmatpush.bf16.msra.mxu0 %v5521
  %5764 = vmatpush.bf16.msra.mxu0 %v5519
  %5765 = vmatpush.bf16.msra.mxu0 %v5517
  %5766 = vmatmul.bf16.gmra.mxu0 %v3626
  %v5767 = vpop.f32.mrf.mxu0
  %v5768 = vadd.f32 0.0, %v5767
  %v5769 = vpop.f32.mrf.mxu0
  %v5770 = vadd.f32 0.0, %v5769
  %5771 = vmatmul.bf16.gmra.mxu0 %v3628
  %v5772 = vpop.f32.mrf.mxu0
  %v5773 = vadd.f32 0.0, %v5772
  %v5774 = vpop.f32.mrf.mxu0
  %v5775 = vadd.f32 0.0, %v5774
  %5776 = vmatmul.bf16.gmra.mxu0 %v3630
  %v5777 = vpop.f32.mrf.mxu0
  %v5778 = vadd.f32 0.0, %v5777
  %v5779 = vpop.f32.mrf.mxu0
  %v5780 = vadd.f32 0.0, %v5779
  %5781 = vmatmul.bf16.gmra.mxu0 %v3632
  %v5782 = vpop.f32.mrf.mxu0
  %v5783 = vadd.f32 0.0, %v5782
  %v5784 = vpop.f32.mrf.mxu0
  %v5785 = vadd.f32 0.0, %v5784
  %5786 = vmatmul.bf16.gmra.mxu0 %v3634
  %v5787 = vpop.f32.mrf.mxu0
  %v5788 = vadd.f32 0.0, %v5787
  %v5789 = vpop.f32.mrf.mxu0
  %v5790 = vadd.f32 0.0, %v5789
  %5791 = vmatmul.bf16.gmra.mxu0 %v3636
  %v5792 = vpop.f32.mrf.mxu0
  %v5793 = vadd.f32 0.0, %v5792
  %v5794 = vpop.f32.mrf.mxu0
  %v5795 = vadd.f32 0.0, %v5794
  %5796 = vmatmul.bf16.gmra.mxu0 %v3638
  %v5797 = vpop.f32.mrf.mxu0
  %v5798 = vadd.f32 0.0, %v5797
  %v5799 = vpop.f32.mrf.mxu0
  %v5800 = vadd.f32 0.0, %v5799
  %5801 = vmatmul.bf16.gmra.mxu0 %v3640
  %v5802 = vpop.f32.mrf.mxu0
  %v5803 = vadd.f32 0.0, %v5802
  %v5804 = vpop.f32.mrf.mxu0
  %v5805 = vadd.f32 0.0, %v5804
  %5806 = vmatmul.bf16.gmra.mxu0 %v3642
  %v5807 = vpop.f32.mrf.mxu0
  %v5808 = vadd.f32 0.0, %v5807
  %v5809 = vpop.f32.mrf.mxu0
  %v5810 = vadd.f32 0.0, %v5809
  %5811 = vmatmul.bf16.gmra.mxu0 %v3644
  %v5812 = vpop.f32.mrf.mxu0
  %v5813 = vadd.f32 0.0, %v5812
  %v5814 = vpop.f32.mrf.mxu0
  %v5815 = vadd.f32 0.0, %v5814
  %5816 = vmatmul.bf16.gmra.mxu0 %v3646
  %v5817 = vpop.f32.mrf.mxu0
  %v5818 = vadd.f32 0.0, %v5817
  %v5819 = vpop.f32.mrf.mxu0
  %v5820 = vadd.f32 0.0, %v5819
  %5821 = vmatmul.bf16.gmra.mxu0 %v3648
  %v5822 = vpop.f32.mrf.mxu0
  %v5823 = vadd.f32 0.0, %v5822
  %v5824 = vpop.f32.mrf.mxu0
  %v5825 = vadd.f32 0.0, %v5824
  %5826 = vmatmul.bf16.gmra.mxu0 %v4779
  %v5827 = vpop.f32.mrf.mxu0
  %v5828 = vadd.f32 0.0, %v5827
  %v5829 = vpop.f32.mrf.mxu0
  %v5830 = vadd.f32 0.0, %v5829
  %5831 = vmatmul.bf16.gmra.mxu0 %v4781
  %v5832 = vpop.f32.mrf.mxu0
  %v5833 = vadd.f32 0.0, %v5832
  %v5834 = vpop.f32.mrf.mxu0
  %v5835 = vadd.f32 0.0, %v5834
  %5836 = vmatmul.bf16.gmra.mxu0 %v5412
  %v5837 = vpop.f32.mrf.mxu0
  %v5838 = vadd.f32 0.0, %v5837
  %v5839 = vpop.f32.mrf.mxu0
  %v5840 = vadd.f32 0.0, %v5839
  %5841 = vmatmul.bf16.gmra.mxu0 %v5414
  %v5842 = vpop.f32.mrf.mxu0
  %v5843 = vadd.f32 0.0, %v5842
  %v5844 = vpop.f32.mrf.mxu0
  %v5845 = vadd.f32 0.0, %v5844
  %5846 = vdwg.mxu0
  %5847 = vmatpush.bf16.msra.mxu0 %v5547
  %5848 = vmatpush.bf16.msra.mxu0 %v5545
  %5849 = vmatpush.bf16.msra.mxu0 %v5543
  %5850 = vmatpush.bf16.msra.mxu0 %v5541
  %5851 = vmatpush.bf16.msra.mxu0 %v5539
  %5852 = vmatpush.bf16.msra.mxu0 %v5537
  %5853 = vmatpush.bf16.msra.mxu0 %v5535
  %5854 = vmatpush.bf16.msra.mxu0 %v5533
  %5855 = vmatmul.bf16.gmra.mxu0 %v3627
  %v5856 = vpop.f32.mrf.mxu0
  %v5857 = vadd.f32 %v5768, %v5856
  %v5858 = vpop.f32.mrf.mxu0
  %v5859 = vadd.f32 %v5770, %v5858
  %5860 = vmatmul.bf16.gmra.mxu0 %v3629
  %v5861 = vpop.f32.mrf.mxu0
  %v5862 = vadd.f32 %v5773, %v5861
  %v5863 = vpop.f32.mrf.mxu0
  %v5864 = vadd.f32 %v5775, %v5863
  %5865 = vmatmul.bf16.gmra.mxu0 %v3631
  %v5866 = vpop.f32.mrf.mxu0
  %v5867 = vadd.f32 %v5778, %v5866
  %v5868 = vpop.f32.mrf.mxu0
  %v5869 = vadd.f32 %v5780, %v5868
  %5870 = vmatmul.bf16.gmra.mxu0 %v3633
  %v5871 = vpop.f32.mrf.mxu0
  %v5872 = vadd.f32 %v5783, %v5871
  %v5873 = vpop.f32.mrf.mxu0
  %v5874 = vadd.f32 %v5785, %v5873
  %5875 = vmatmul.bf16.gmra.mxu0 %v3635
  %v5876 = vpop.f32.mrf.mxu0
  %v5877 = vadd.f32 %v5788, %v5876
  %v5878 = vpop.f32.mrf.mxu0
  %v5879 = vadd.f32 %v5790, %v5878
  %5880 = vmatmul.bf16.gmra.mxu0 %v3637
  %v5881 = vpop.f32.mrf.mxu0
  %v5882 = vadd.f32 %v5793, %v5881
  %v5883 = vpop.f32.mrf.mxu0
  %v5884 = vadd.f32 %v5795, %v5883
  %5885 = vmatmul.bf16.gmra.mxu0 %v3639
  %v5886 = vpop.f32.mrf.mxu0
  %v5887 = vadd.f32 %v5798, %v5886
  %v5888 = vpop.f32.mrf.mxu0
  %v5889 = vadd.f32 %v5800, %v5888
  %5890 = vmatmul.bf16.gmra.mxu0 %v3641
  %v5891 = vpop.f32.mrf.mxu0
  %v5892 = vadd.f32 %v5803, %v5891
  %v5893 = vpop.f32.mrf.mxu0
  %v5894 = vadd.f32 %v5805, %v5893
  %5895 = vmatmul.bf16.gmra.mxu0 %v3643
  %v5896 = vpop.f32.mrf.mxu0
  %v5897 = vadd.f32 %v5808, %v5896
  %v5898 = vpop.f32.mrf.mxu0
  %v5899 = vadd.f32 %v5810, %v5898
  %5900 = vmatmul.bf16.gmra.mxu0 %v3645
  %v5901 = vpop.f32.mrf.mxu0
  %v5902 = vadd.f32 %v5813, %v5901
  %v5903 = vpop.f32.mrf.mxu0
  %v5904 = vadd.f32 %v5815, %v5903
  %5905 = vmatmul.bf16.gmra.mxu0 %v3647
  %v5906 = vpop.f32.mrf.mxu0
  %v5907 = vadd.f32 %v5818, %v5906
  %v5908 = vpop.f32.mrf.mxu0
  %v5909 = vadd.f32 %v5820, %v5908
  %5910 = vmatmul.bf16.gmra.mxu0 %v3649
  %v5911 = vpop.f32.mrf.mxu0
  %v5912 = vadd.f32 %v5823, %v5911
  %v5913 = vpop.f32.mrf.mxu0
  %v5914 = vadd.f32 %v5825, %v5913
  %5915 = vmatmul.bf16.gmra.mxu0 %v4780
  %v5916 = vpop.f32.mrf.mxu0
  %v5917 = vadd.f32 %v5828, %v5916
  %v5918 = vpop.f32.mrf.mxu0
  %v5919 = vadd.f32 %v5830, %v5918
  %5920 = vmatmul.bf16.gmra.mxu0 %v4782
  %v5921 = vpop.f32.mrf.mxu0
  %v5922 = vadd.f32 %v5833, %v5921
  %v5923 = vpop.f32.mrf.mxu0
  %v5924 = vadd.f32 %v5835, %v5923
  %5925 = vmatmul.bf16.gmra.mxu0 %v5413
  %v5926 = vpop.f32.mrf.mxu0
  %v5927 = vadd.f32 %v5838, %v5926
  %v5928 = vpop.f32.mrf.mxu0
  %v5929 = vadd.f32 %v5840, %v5928
  %5930 = vmatmul.bf16.gmra.mxu0 %v5415
  %v5931 = vpop.f32.mrf.mxu0
  %v5932 = vadd.f32 %v5843, %v5931
  %v5933 = vpop.f32.mrf.mxu0
  %v5934 = vadd.f32 %v5845, %v5933
  %5935 = vdwg.mxu0
  %v5936 = vadd.f32 %v5303, %v5679
  %v5937 = vadd.f32 %v5304, %v5857
  %v5938 = vadd.f32 %v5305, %v5681
  %v5939 = vadd.f32 %v5306, %v5859
  %v5940 = vadd.f32 %v5307, %v5684
  %v5941 = vadd.f32 %v5308, %v5862
  %v5942 = vadd.f32 %v5309, %v5686
  %v5943 = vadd.f32 %v5310, %v5864
  %v5944 = vadd.f32 %v5311, %v5689
  %v5945 = vadd.f32 %v5312, %v5867
  %v5946 = vadd.f32 %v5313, %v5691
  %v5947 = vadd.f32 %v5314, %v5869
  %v5948 = vadd.f32 %v5315, %v5694
  %v5949 = vadd.f32 %v5316, %v5872
  %v5950 = vadd.f32 %v5317, %v5696
  %v5951 = vadd.f32 %v5318, %v5874
  %v5952 = vadd.f32 %v5319, %v5699
  %v5953 = vadd.f32 %v5320, %v5877
  %v5954 = vadd.f32 %v5321, %v5701
  %v5955 = vadd.f32 %v5322, %v5879
  %v5956 = vadd.f32 %v5323, %v5704
  %v5957 = vadd.f32 %v5324, %v5882
  %v5958 = vadd.f32 %v5325, %v5706
  %v5959 = vadd.f32 %v5326, %v5884
  %v5960 = vadd.f32 %v5327, %v5709
  %v5961 = vadd.f32 %v5328, %v5887
  %v5962 = vadd.f32 %v5329, %v5711
  %v5963 = vadd.f32 %v5330, %v5889
  %v5964 = vadd.f32 %v5331, %v5714
  %v5965 = vadd.f32 %v5332, %v5892
  %v5966 = vadd.f32 %v5333, %v5716
  %v5967 = vadd.f32 %v5334, %v5894
  %v5968 = vadd.f32 %v5335, %v5719
  %v5969 = vadd.f32 %v5336, %v5897
  %v5970 = vadd.f32 %v5337, %v5721
  %v5971 = vadd.f32 %v5338, %v5899
  %v5972 = vadd.f32 %v5339, %v5724
  %v5973 = vadd.f32 %v5340, %v5902
  %v5974 = vadd.f32 %v5341, %v5726
  %v5975 = vadd.f32 %v5342, %v5904
  %v5976 = vadd.f32 %v5343, %v5729
  %v5977 = vadd.f32 %v5344, %v5907
  %v5978 = vadd.f32 %v5345, %v5731
  %v5979 = vadd.f32 %v5346, %v5909
  %v5980 = vadd.f32 %v5347, %v5734
  %v5981 = vadd.f32 %v5348, %v5912
  %v5982 = vadd.f32 %v5349, %v5736
  %v5983 = vadd.f32 %v5350, %v5914
  %v5984 = vadd.f32 %v5351, %v5739
  %v5985 = vadd.f32 %v5352, %v5917
  %v5986 = vadd.f32 %v5353, %v5741
  %v5987 = vadd.f32 %v5354, %v5919
  %v5988 = vadd.f32 %v5355, %v5744
  %v5989 = vadd.f32 %v5356, %v5922
  %v5990 = vadd.f32 %v5357, %v5746
  %v5991 = vadd.f32 %v5358, %v5924
  %v5992 = vadd.f32 %v5359, %v5749
  %v5993 = vadd.f32 %v5360, %v5927
  %v5994 = vadd.f32 %v5361, %v5751
  %v5995 = vadd.f32 %v5362, %v5929
  %v5996 = vadd.f32 %v5363, %v5754
  %v5997 = vadd.f32 %v5364, %v5932
  %v5998 = vadd.f32 %v5365, %v5756
  %v5999 = vadd.f32 %v5366, %v5934
  %s6000 = scalar_lea.vmem %s3, 1024
  %v6001 = vld [vmem:[%s6000] sm:$0xff]
  %v6002 = vld [vmem:[%s6000 + $0x8] sm:$0xff]
  %v6003 = vld [vmem:[%s6000 + $0x10] sm:$0xff]
  %v6004 = vld [vmem:[%s6000 + $0x18] sm:$0xff]
  %v6005 = vld [vmem:[%s6000 + $0x20] sm:$0xff]
  %v6006 = vld [vmem:[%s6000 + $0x28] sm:$0xff]
  %v6007 = vld [vmem:[%s6000 + $0x30] sm:$0xff]
  %v6008 = vld [vmem:[%s6000 + $0x38] sm:$0xff]
  %v6009 = vld [vmem:[%s6000 + $0x40] sm:$0xff]
  %v6010 = vld [vmem:[%s6000 + $0x48] sm:$0xff]
  %v6011 = vld [vmem:[%s6000 + $0x50] sm:$0xff]
  %v6012 = vld [vmem:[%s6000 + $0x58] sm:$0xff]
  %v6013 = vld [vmem:[%s6000 + $0x60] sm:$0xff]
  %v6014 = vld [vmem:[%s6000 + $0x68] sm:$0xff]
  %v6015 = vld [vmem:[%s6000 + $0x70] sm:$0xff]
  %v6016 = vld [vmem:[%s6000 + $0x78] sm:$0xff]
  %v6017 = vld [vmem:[%s6000 + $0x80] sm:$0xff]
  %v6018 = vld [vmem:[%s6000 + $0x88] sm:$0xff]
  %v6019 = vld [vmem:[%s6000 + $0x90] sm:$0xff]
  %v6020 = vld [vmem:[%s6000 + $0x98] sm:$0xff]
  %v6021 = vld [vmem:[%s6000 + $0xa0] sm:$0xff]
  %v6022 = vld [vmem:[%s6000 + $0xa8] sm:$0xff]
  %v6023 = vld [vmem:[%s6000 + $0xb0] sm:$0xff]
  %v6024 = vld [vmem:[%s6000 + $0xb8] sm:$0xff]
  %v6025 = vld [vmem:[%s6000 + $0xc0] sm:$0xff]
  %v6026 = vld [vmem:[%s6000 + $0xc8] sm:$0xff]
  %v6027 = vld [vmem:[%s6000 + $0xd0] sm:$0xff]
  %v6028 = vld [vmem:[%s6000 + $0xd8] sm:$0xff]
  %v6029 = vld [vmem:[%s6000 + $0xe0] sm:$0xff]
  %v6030 = vld [vmem:[%s6000 + $0xe8] sm:$0xff]
  %v6031 = vld [vmem:[%s6000 + $0xf0] sm:$0xff]
  %v6032 = vld [vmem:[%s6000 + $0xf8] sm:$0xff]
  %v6037 = vunpack.c.l.b16 %v3453
  %v6038 = vunpack.c.h.b16 %v3453
  %v6039 = vunpack.c.l.b16 %v3454
  %v6040 = vunpack.c.h.b16 %v3454
  %v6041 = vunpack.c.l.b16 %v3455
  %v6042 = vunpack.c.h.b16 %v3455
  %v6043 = vunpack.c.l.b16 %v3456
  %v6044 = vunpack.c.h.b16 %v3456
  %v6045 = vpack.c.b16 %v6039, %v6037
  %v6046 = vpack.c.b16 %v6040, %v6038
  %v6047 = vpack.c.b16 %v6043, %v6041
  %v6048 = vpack.c.b16 %v6044, %v6042
  %v6085 = vunpack.c.l.b16 %v6001
  %v6086 = vunpack.c.h.b16 %v6001
  %v6087 = vunpack.c.l.b16 %v6002
  %v6088 = vunpack.c.h.b16 %v6002
  %v6089 = vunpack.c.l.b16 %v6003
  %v6090 = vunpack.c.h.b16 %v6003
  %v6091 = vunpack.c.l.b16 %v6004
  %v6092 = vunpack.c.h.b16 %v6004
  %v6093 = vunpack.c.l.b16 %v6005
  %v6094 = vunpack.c.h.b16 %v6005
  %v6095 = vunpack.c.l.b16 %v6006
  %v6096 = vunpack.c.h.b16 %v6006
  %v6097 = vunpack.c.l.b16 %v6007
  %v6098 = vunpack.c.h.b16 %v6007
  %v6099 = vunpack.c.l.b16 %v6008
  %v6100 = vunpack.c.h.b16 %v6008
  %v6101 = vunpack.c.l.b16 %v6009
  %v6102 = vunpack.c.h.b16 %v6009
  %v6103 = vunpack.c.l.b16 %v6010
  %v6104 = vunpack.c.h.b16 %v6010
  %v6105 = vunpack.c.l.b16 %v6011
  %v6106 = vunpack.c.h.b16 %v6011
  %v6107 = vunpack.c.l.b16 %v6012
  %v6108 = vunpack.c.h.b16 %v6012
  %v6109 = vunpack.c.l.b16 %v6013
  %v6110 = vunpack.c.h.b16 %v6013
  %v6111 = vunpack.c.l.b16 %v6014
  %v6112 = vunpack.c.h.b16 %v6014
  %v6113 = vunpack.c.l.b16 %v6015
  %v6114 = vunpack.c.h.b16 %v6015
  %v6115 = vunpack.c.l.b16 %v6016
  %v6116 = vunpack.c.h.b16 %v6016
  %v6117 = vunpack.c.l.b16 %v6017
  %v6118 = vunpack.c.h.b16 %v6017
  %v6119 = vunpack.c.l.b16 %v6018
  %v6120 = vunpack.c.h.b16 %v6018
  %v6121 = vunpack.c.l.b16 %v6019
  %v6122 = vunpack.c.h.b16 %v6019
  %v6123 = vunpack.c.l.b16 %v6020
  %v6124 = vunpack.c.h.b16 %v6020
  %v6125 = vunpack.c.l.b16 %v6021
  %v6126 = vunpack.c.h.b16 %v6021
  %v6127 = vunpack.c.l.b16 %v6022
  %v6128 = vunpack.c.h.b16 %v6022
  %v6129 = vunpack.c.l.b16 %v6023
  %v6130 = vunpack.c.h.b16 %v6023
  %v6131 = vunpack.c.l.b16 %v6024
  %v6132 = vunpack.c.h.b16 %v6024
  %v6133 = vunpack.c.l.b16 %v6025
  %v6134 = vunpack.c.h.b16 %v6025
  %v6135 = vunpack.c.l.b16 %v6026
  %v6136 = vunpack.c.h.b16 %v6026
  %v6137 = vunpack.c.l.b16 %v6027
  %v6138 = vunpack.c.h.b16 %v6027
  %v6139 = vunpack.c.l.b16 %v6028
  %v6140 = vunpack.c.h.b16 %v6028
  %v6141 = vunpack.c.l.b16 %v6029
  %v6142 = vunpack.c.h.b16 %v6029
  %v6143 = vunpack.c.l.b16 %v6030
  %v6144 = vunpack.c.h.b16 %v6030
  %v6145 = vunpack.c.l.b16 %v6031
  %v6146 = vunpack.c.h.b16 %v6031
  %v6147 = vunpack.c.l.b16 %v6032
  %v6148 = vunpack.c.h.b16 %v6032
  %v6149 = vpack.c.b16 %v6087, %v6085
  %v6150 = vpack.c.b16 %v6088, %v6086
  %v6151 = vpack.c.b16 %v6091, %v6089
  %v6152 = vpack.c.b16 %v6092, %v6090
  %v6153 = vpack.c.b16 %v6095, %v6093
  %v6154 = vpack.c.b16 %v6096, %v6094
  %v6155 = vpack.c.b16 %v6099, %v6097
  %v6156 = vpack.c.b16 %v6100, %v6098
  %v6157 = vpack.c.b16 %v6103, %v6101
  %v6158 = vpack.c.b16 %v6104, %v6102
  %v6159 = vpack.c.b16 %v6107, %v6105
  %v6160 = vpack.c.b16 %v6108, %v6106
  %v6161 = vpack.c.b16 %v6111, %v6109
  %v6162 = vpack.c.b16 %v6112, %v6110
  %v6163 = vpack.c.b16 %v6115, %v6113
  %v6164 = vpack.c.b16 %v6116, %v6114
  %v6165 = vpack.c.b16 %v6119, %v6117
  %v6166 = vpack.c.b16 %v6120, %v6118
  %v6167 = vpack.c.b16 %v6123, %v6121
  %v6168 = vpack.c.b16 %v6124, %v6122
  %v6169 = vpack.c.b16 %v6127, %v6125
  %v6170 = vpack.c.b16 %v6128, %v6126
  %v6171 = vpack.c.b16 %v6131, %v6129
  %v6172 = vpack.c.b16 %v6132, %v6130
  %v6173 = vpack.c.b16 %v6135, %v6133
  %v6174 = vpack.c.b16 %v6136, %v6134
  %v6175 = vpack.c.b16 %v6139, %v6137
  %v6176 = vpack.c.b16 %v6140, %v6138
  %v6177 = vpack.c.b16 %v6143, %v6141
  %v6178 = vpack.c.b16 %v6144, %v6142
  %v6179 = vpack.c.b16 %v6147, %v6145
  %v6180 = vpack.c.b16 %v6148, %v6146
  %6213 = vmatpush.bf16.msra.mxu0 %v6163
  %6214 = vmatpush.bf16.msra.mxu0 %v6161
  %6215 = vmatpush.bf16.msra.mxu0 %v6159
  %6216 = vmatpush.bf16.msra.mxu0 %v6157
  %6217 = vmatpush.bf16.msra.mxu0 %v6155
  %6218 = vmatpush.bf16.msra.mxu0 %v6153
  %6219 = vmatpush.bf16.msra.mxu0 %v6151
  %6220 = vmatpush.bf16.msra.mxu0 %v6149
  %6221 = vmatmul.bf16.gmra.mxu0 %v3630
  %v6222 = vpop.f32.mrf.mxu0
  %v6223 = vadd.f32 0.0, %v6222
  %v6224 = vpop.f32.mrf.mxu0
  %v6225 = vadd.f32 0.0, %v6224
  %6226 = vmatmul.bf16.gmra.mxu0 %v3632
  %v6227 = vpop.f32.mrf.mxu0
  %v6228 = vadd.f32 0.0, %v6227
  %v6229 = vpop.f32.mrf.mxu0
  %v6230 = vadd.f32 0.0, %v6229
  %6231 = vmatmul.bf16.gmra.mxu0 %v3634
  %v6232 = vpop.f32.mrf.mxu0
  %v6233 = vadd.f32 0.0, %v6232
  %v6234 = vpop.f32.mrf.mxu0
  %v6235 = vadd.f32 0.0, %v6234
  %6236 = vmatmul.bf16.gmra.mxu0 %v3636
  %v6237 = vpop.f32.mrf.mxu0
  %v6238 = vadd.f32 0.0, %v6237
  %v6239 = vpop.f32.mrf.mxu0
  %v6240 = vadd.f32 0.0, %v6239
  %6241 = vmatmul.bf16.gmra.mxu0 %v3638
  %v6242 = vpop.f32.mrf.mxu0
  %v6243 = vadd.f32 0.0, %v6242
  %v6244 = vpop.f32.mrf.mxu0
  %v6245 = vadd.f32 0.0, %v6244
  %6246 = vmatmul.bf16.gmra.mxu0 %v3640
  %v6247 = vpop.f32.mrf.mxu0
  %v6248 = vadd.f32 0.0, %v6247
  %v6249 = vpop.f32.mrf.mxu0
  %v6250 = vadd.f32 0.0, %v6249
  %6251 = vmatmul.bf16.gmra.mxu0 %v3642
  %v6252 = vpop.f32.mrf.mxu0
  %v6253 = vadd.f32 0.0, %v6252
  %v6254 = vpop.f32.mrf.mxu0
  %v6255 = vadd.f32 0.0, %v6254
  %6256 = vmatmul.bf16.gmra.mxu0 %v3644
  %v6257 = vpop.f32.mrf.mxu0
  %v6258 = vadd.f32 0.0, %v6257
  %v6259 = vpop.f32.mrf.mxu0
  %v6260 = vadd.f32 0.0, %v6259
  %6261 = vmatmul.bf16.gmra.mxu0 %v3646
  %v6262 = vpop.f32.mrf.mxu0
  %v6263 = vadd.f32 0.0, %v6262
  %v6264 = vpop.f32.mrf.mxu0
  %v6265 = vadd.f32 0.0, %v6264
  %6266 = vmatmul.bf16.gmra.mxu0 %v3648
  %v6267 = vpop.f32.mrf.mxu0
  %v6268 = vadd.f32 0.0, %v6267
  %v6269 = vpop.f32.mrf.mxu0
  %v6270 = vadd.f32 0.0, %v6269
  %6271 = vmatmul.bf16.gmra.mxu0 %v4779
  %v6272 = vpop.f32.mrf.mxu0
  %v6273 = vadd.f32 0.0, %v6272
  %v6274 = vpop.f32.mrf.mxu0
  %v6275 = vadd.f32 0.0, %v6274
  %6276 = vmatmul.bf16.gmra.mxu0 %v4781
  %v6277 = vpop.f32.mrf.mxu0
  %v6278 = vadd.f32 0.0, %v6277
  %v6279 = vpop.f32.mrf.mxu0
  %v6280 = vadd.f32 0.0, %v6279
  %6281 = vmatmul.bf16.gmra.mxu0 %v5412
  %v6282 = vpop.f32.mrf.mxu0
  %v6283 = vadd.f32 0.0, %v6282
  %v6284 = vpop.f32.mrf.mxu0
  %v6285 = vadd.f32 0.0, %v6284
  %6286 = vmatmul.bf16.gmra.mxu0 %v5414
  %v6287 = vpop.f32.mrf.mxu0
  %v6288 = vadd.f32 0.0, %v6287
  %v6289 = vpop.f32.mrf.mxu0
  %v6290 = vadd.f32 0.0, %v6289
  %6291 = vmatmul.bf16.gmra.mxu0 %v6045
  %v6292 = vpop.f32.mrf.mxu0
  %v6293 = vadd.f32 0.0, %v6292
  %v6294 = vpop.f32.mrf.mxu0
  %v6295 = vadd.f32 0.0, %v6294
  %6296 = vmatmul.bf16.gmra.mxu0 %v6047
  %v6297 = vpop.f32.mrf.mxu0
  %v6298 = vadd.f32 0.0, %v6297
  %v6299 = vpop.f32.mrf.mxu0
  %v6300 = vadd.f32 0.0, %v6299
  %6301 = vdwg.mxu0
  %6302 = vmatpush.bf16.msra.mxu0 %v6179
  %6303 = vmatpush.bf16.msra.mxu0 %v6177
  %6304 = vmatpush.bf16.msra.mxu0 %v6175
  %6305 = vmatpush.bf16.msra.mxu0 %v6173
  %6306 = vmatpush.bf16.msra.mxu0 %v6171
  %6307 = vmatpush.bf16.msra.mxu0 %v6169
  %6308 = vmatpush.bf16.msra.mxu0 %v6167
  %6309 = vmatpush.bf16.msra.mxu0 %v6165
  %6310 = vmatmul.bf16.gmra.mxu0 %v3631
  %v6311 = vpop.f32.mrf.mxu0
  %v6312 = vadd.f32 %v6223, %v6311
  %v6313 = vpop.f32.mrf.mxu0
  %v6314 = vadd.f32 %v6225, %v6313
  %6315 = vmatmul.bf16.gmra.mxu0 %v3633
  %v6316 = vpop.f32.mrf.mxu0
  %v6317 = vadd.f32 %v6228, %v6316
  %v6318 = vpop.f32.mrf.mxu0
  %v6319 = vadd.f32 %v6230, %v6318
  %6320 = vmatmul.bf16.gmra.mxu0 %v3635
  %v6321 = vpop.f32.mrf.mxu0
  %v6322 = vadd.f32 %v6233, %v6321
  %v6323 = vpop.f32.mrf.mxu0
  %v6324 = vadd.f32 %v6235, %v6323
  %6325 = vmatmul.bf16.gmra.mxu0 %v3637
  %v6326 = vpop.f32.mrf.mxu0
  %v6327 = vadd.f32 %v6238, %v6326
  %v6328 = vpop.f32.mrf.mxu0
  %v6329 = vadd.f32 %v6240, %v6328
  %6330 = vmatmul.bf16.gmra.mxu0 %v3639
  %v6331 = vpop.f32.mrf.mxu0
  %v6332 = vadd.f32 %v6243, %v6331
  %v6333 = vpop.f32.mrf.mxu0
  %v6334 = vadd.f32 %v6245, %v6333
  %6335 = vmatmul.bf16.gmra.mxu0 %v3641
  %v6336 = vpop.f32.mrf.mxu0
  %v6337 = vadd.f32 %v6248, %v6336
  %v6338 = vpop.f32.mrf.mxu0
  %v6339 = vadd.f32 %v6250, %v6338
  %6340 = vmatmul.bf16.gmra.mxu0 %v3643
  %v6341 = vpop.f32.mrf.mxu0
  %v6342 = vadd.f32 %v6253, %v6341
  %v6343 = vpop.f32.mrf.mxu0
  %v6344 = vadd.f32 %v6255, %v6343
  %6345 = vmatmul.bf16.gmra.mxu0 %v3645
  %v6346 = vpop.f32.mrf.mxu0
  %v6347 = vadd.f32 %v6258, %v6346
  %v6348 = vpop.f32.mrf.mxu0
  %v6349 = vadd.f32 %v6260, %v6348
  %6350 = vmatmul.bf16.gmra.mxu0 %v3647
  %v6351 = vpop.f32.mrf.mxu0
  %v6352 = vadd.f32 %v6263, %v6351
  %v6353 = vpop.f32.mrf.mxu0
  %v6354 = vadd.f32 %v6265, %v6353
  %6355 = vmatmul.bf16.gmra.mxu0 %v3649
  %v6356 = vpop.f32.mrf.mxu0
  %v6357 = vadd.f32 %v6268, %v6356
  %v6358 = vpop.f32.mrf.mxu0
  %v6359 = vadd.f32 %v6270, %v6358
  %6360 = vmatmul.bf16.gmra.mxu0 %v4780
  %v6361 = vpop.f32.mrf.mxu0
  %v6362 = vadd.f32 %v6273, %v6361
  %v6363 = vpop.f32.mrf.mxu0
  %v6364 = vadd.f32 %v6275, %v6363
  %6365 = vmatmul.bf16.gmra.mxu0 %v4782
  %v6366 = vpop.f32.mrf.mxu0
  %v6367 = vadd.f32 %v6278, %v6366
  %v6368 = vpop.f32.mrf.mxu0
  %v6369 = vadd.f32 %v6280, %v6368
  %6370 = vmatmul.bf16.gmra.mxu0 %v5413
  %v6371 = vpop.f32.mrf.mxu0
  %v6372 = vadd.f32 %v6283, %v6371
  %v6373 = vpop.f32.mrf.mxu0
  %v6374 = vadd.f32 %v6285, %v6373
  %6375 = vmatmul.bf16.gmra.mxu0 %v5415
  %v6376 = vpop.f32.mrf.mxu0
  %v6377 = vadd.f32 %v6288, %v6376
  %v6378 = vpop.f32.mrf.mxu0
  %v6379 = vadd.f32 %v6290, %v6378
  %6380 = vmatmul.bf16.gmra.mxu0 %v6046
  %v6381 = vpop.f32.mrf.mxu0
  %v6382 = vadd.f32 %v6293, %v6381
  %v6383 = vpop.f32.mrf.mxu0
  %v6384 = vadd.f32 %v6295, %v6383
  %6385 = vmatmul.bf16.gmra.mxu0 %v6048
  %v6386 = vpop.f32.mrf.mxu0
  %v6387 = vadd.f32 %v6298, %v6386
  %v6388 = vpop.f32.mrf.mxu0
  %v6389 = vadd.f32 %v6300, %v6388
  %6390 = vdwg.mxu0
  %6391 = vmatpush.bf16.msra.mxu0 %v6164
  %6392 = vmatpush.bf16.msra.mxu0 %v6162
  %6393 = vmatpush.bf16.msra.mxu0 %v6160
  %6394 = vmatpush.bf16.msra.mxu0 %v6158
  %6395 = vmatpush.bf16.msra.mxu0 %v6156
  %6396 = vmatpush.bf16.msra.mxu0 %v6154
  %6397 = vmatpush.bf16.msra.mxu0 %v6152
  %6398 = vmatpush.bf16.msra.mxu0 %v6150
  %6399 = vmatmul.bf16.gmra.mxu0 %v3630
  %v6400 = vpop.f32.mrf.mxu0
  %v6401 = vadd.f32 0.0, %v6400
  %v6402 = vpop.f32.mrf.mxu0
  %v6403 = vadd.f32 0.0, %v6402
  %6404 = vmatmul.bf16.gmra.mxu0 %v3632
  %v6405 = vpop.f32.mrf.mxu0
  %v6406 = vadd.f32 0.0, %v6405
  %v6407 = vpop.f32.mrf.mxu0
  %v6408 = vadd.f32 0.0, %v6407
  %6409 = vmatmul.bf16.gmra.mxu0 %v3634
  %v6410 = vpop.f32.mrf.mxu0
  %v6411 = vadd.f32 0.0, %v6410
  %v6412 = vpop.f32.mrf.mxu0
  %v6413 = vadd.f32 0.0, %v6412
  %6414 = vmatmul.bf16.gmra.mxu0 %v3636
  %v6415 = vpop.f32.mrf.mxu0
  %v6416 = vadd.f32 0.0, %v6415
  %v6417 = vpop.f32.mrf.mxu0
  %v6418 = vadd.f32 0.0, %v6417
  %6419 = vmatmul.bf16.gmra.mxu0 %v3638
  %v6420 = vpop.f32.mrf.mxu0
  %v6421 = vadd.f32 0.0, %v6420
  %v6422 = vpop.f32.mrf.mxu0
  %v6423 = vadd.f32 0.0, %v6422
  %6424 = vmatmul.bf16.gmra.mxu0 %v3640
  %v6425 = vpop.f32.mrf.mxu0
  %v6426 = vadd.f32 0.0, %v6425
  %v6427 = vpop.f32.mrf.mxu0
  %v6428 = vadd.f32 0.0, %v6427
  %6429 = vmatmul.bf16.gmra.mxu0 %v3642
  %v6430 = vpop.f32.mrf.mxu0
  %v6431 = vadd.f32 0.0, %v6430
  %v6432 = vpop.f32.mrf.mxu0
  %v6433 = vadd.f32 0.0, %v6432
  %6434 = vmatmul.bf16.gmra.mxu0 %v3644
  %v6435 = vpop.f32.mrf.mxu0
  %v6436 = vadd.f32 0.0, %v6435
  %v6437 = vpop.f32.mrf.mxu0
  %v6438 = vadd.f32 0.0, %v6437
  %6439 = vmatmul.bf16.gmra.mxu0 %v3646
  %v6440 = vpop.f32.mrf.mxu0
  %v6441 = vadd.f32 0.0, %v6440
  %v6442 = vpop.f32.mrf.mxu0
  %v6443 = vadd.f32 0.0, %v6442
  %6444 = vmatmul.bf16.gmra.mxu0 %v3648
  %v6445 = vpop.f32.mrf.mxu0
  %v6446 = vadd.f32 0.0, %v6445
  %v6447 = vpop.f32.mrf.mxu0
  %v6448 = vadd.f32 0.0, %v6447
  %6449 = vmatmul.bf16.gmra.mxu0 %v4779
  %v6450 = vpop.f32.mrf.mxu0
  %v6451 = vadd.f32 0.0, %v6450
  %v6452 = vpop.f32.mrf.mxu0
  %v6453 = vadd.f32 0.0, %v6452
  %6454 = vmatmul.bf16.gmra.mxu0 %v4781
  %v6455 = vpop.f32.mrf.mxu0
  %v6456 = vadd.f32 0.0, %v6455
  %v6457 = vpop.f32.mrf.mxu0
  %v6458 = vadd.f32 0.0, %v6457
  %6459 = vmatmul.bf16.gmra.mxu0 %v5412
  %v6460 = vpop.f32.mrf.mxu0
  %v6461 = vadd.f32 0.0, %v6460
  %v6462 = vpop.f32.mrf.mxu0
  %v6463 = vadd.f32 0.0, %v6462
  %6464 = vmatmul.bf16.gmra.mxu0 %v5414
  %v6465 = vpop.f32.mrf.mxu0
  %v6466 = vadd.f32 0.0, %v6465
  %v6467 = vpop.f32.mrf.mxu0
  %v6468 = vadd.f32 0.0, %v6467
  %6469 = vmatmul.bf16.gmra.mxu0 %v6045
  %v6470 = vpop.f32.mrf.mxu0
  %v6471 = vadd.f32 0.0, %v6470
  %v6472 = vpop.f32.mrf.mxu0
  %v6473 = vadd.f32 0.0, %v6472
  %6474 = vmatmul.bf16.gmra.mxu0 %v6047
  %v6475 = vpop.f32.mrf.mxu0
  %v6476 = vadd.f32 0.0, %v6475
  %v6477 = vpop.f32.mrf.mxu0
  %v6478 = vadd.f32 0.0, %v6477
  %6479 = vdwg.mxu0
  %6480 = vmatpush.bf16.msra.mxu0 %v6180
  %6481 = vmatpush.bf16.msra.mxu0 %v6178
  %6482 = vmatpush.bf16.msra.mxu0 %v6176
  %6483 = vmatpush.bf16.msra.mxu0 %v6174
  %6484 = vmatpush.bf16.msra.mxu0 %v6172
  %6485 = vmatpush.bf16.msra.mxu0 %v6170
  %6486 = vmatpush.bf16.msra.mxu0 %v6168
  %6487 = vmatpush.bf16.msra.mxu0 %v6166
  %6488 = vmatmul.bf16.gmra.mxu0 %v3631
  %v6489 = vpop.f32.mrf.mxu0
  %v6490 = vadd.f32 %v6401, %v6489
  %v6491 = vpop.f32.mrf.mxu0
  %v6492 = vadd.f32 %v6403, %v6491
  %6493 = vmatmul.bf16.gmra.mxu0 %v3633
  %v6494 = vpop.f32.mrf.mxu0
  %v6495 = vadd.f32 %v6406, %v6494
  %v6496 = vpop.f32.mrf.mxu0
  %v6497 = vadd.f32 %v6408, %v6496
  %6498 = vmatmul.bf16.gmra.mxu0 %v3635
  %v6499 = vpop.f32.mrf.mxu0
  %v6500 = vadd.f32 %v6411, %v6499
  %v6501 = vpop.f32.mrf.mxu0
  %v6502 = vadd.f32 %v6413, %v6501
  %6503 = vmatmul.bf16.gmra.mxu0 %v3637
  %v6504 = vpop.f32.mrf.mxu0
  %v6505 = vadd.f32 %v6416, %v6504
  %v6506 = vpop.f32.mrf.mxu0
  %v6507 = vadd.f32 %v6418, %v6506
  %6508 = vmatmul.bf16.gmra.mxu0 %v3639
  %v6509 = vpop.f32.mrf.mxu0
  %v6510 = vadd.f32 %v6421, %v6509
  %v6511 = vpop.f32.mrf.mxu0
  %v6512 = vadd.f32 %v6423, %v6511
  %6513 = vmatmul.bf16.gmra.mxu0 %v3641
  %v6514 = vpop.f32.mrf.mxu0
  %v6515 = vadd.f32 %v6426, %v6514
  %v6516 = vpop.f32.mrf.mxu0
  %v6517 = vadd.f32 %v6428, %v6516
  %6518 = vmatmul.bf16.gmra.mxu0 %v3643
  %v6519 = vpop.f32.mrf.mxu0
  %v6520 = vadd.f32 %v6431, %v6519
  %v6521 = vpop.f32.mrf.mxu0
  %v6522 = vadd.f32 %v6433, %v6521
  %6523 = vmatmul.bf16.gmra.mxu0 %v3645
  %v6524 = vpop.f32.mrf.mxu0
  %v6525 = vadd.f32 %v6436, %v6524
  %v6526 = vpop.f32.mrf.mxu0
  %v6527 = vadd.f32 %v6438, %v6526
  %6528 = vmatmul.bf16.gmra.mxu0 %v3647
  %v6529 = vpop.f32.mrf.mxu0
  %v6530 = vadd.f32 %v6441, %v6529
  %v6531 = vpop.f32.mrf.mxu0
  %v6532 = vadd.f32 %v6443, %v6531
  %6533 = vmatmul.bf16.gmra.mxu0 %v3649
  %v6534 = vpop.f32.mrf.mxu0
  %v6535 = vadd.f32 %v6446, %v6534
  %v6536 = vpop.f32.mrf.mxu0
  %v6537 = vadd.f32 %v6448, %v6536
  %6538 = vmatmul.bf16.gmra.mxu0 %v4780
  %v6539 = vpop.f32.mrf.mxu0
  %v6540 = vadd.f32 %v6451, %v6539
  %v6541 = vpop.f32.mrf.mxu0
  %v6542 = vadd.f32 %v6453, %v6541
  %6543 = vmatmul.bf16.gmra.mxu0 %v4782
  %v6544 = vpop.f32.mrf.mxu0
  %v6545 = vadd.f32 %v6456, %v6544
  %v6546 = vpop.f32.mrf.mxu0
  %v6547 = vadd.f32 %v6458, %v6546
  %6548 = vmatmul.bf16.gmra.mxu0 %v5413
  %v6549 = vpop.f32.mrf.mxu0
  %v6550 = vadd.f32 %v6461, %v6549
  %v6551 = vpop.f32.mrf.mxu0
  %v6552 = vadd.f32 %v6463, %v6551
  %6553 = vmatmul.bf16.gmra.mxu0 %v5415
  %v6554 = vpop.f32.mrf.mxu0
  %v6555 = vadd.f32 %v6466, %v6554
  %v6556 = vpop.f32.mrf.mxu0
  %v6557 = vadd.f32 %v6468, %v6556
  %6558 = vmatmul.bf16.gmra.mxu0 %v6046
  %v6559 = vpop.f32.mrf.mxu0
  %v6560 = vadd.f32 %v6471, %v6559
  %v6561 = vpop.f32.mrf.mxu0
  %v6562 = vadd.f32 %v6473, %v6561
  %6563 = vmatmul.bf16.gmra.mxu0 %v6048
  %v6564 = vpop.f32.mrf.mxu0
  %v6565 = vadd.f32 %v6476, %v6564
  %v6566 = vpop.f32.mrf.mxu0
  %v6567 = vadd.f32 %v6478, %v6566
  %6568 = vdwg.mxu0
  %v6569 = vadd.f32 %v5936, %v6312
  %v6570 = vadd.f32 %v5937, %v6490
  %v6571 = vadd.f32 %v5938, %v6314
  %v6572 = vadd.f32 %v5939, %v6492
  %v6573 = vadd.f32 %v5940, %v6317
  %v6574 = vadd.f32 %v5941, %v6495
  %v6575 = vadd.f32 %v5942, %v6319
  %v6576 = vadd.f32 %v5943, %v6497
  %v6577 = vadd.f32 %v5944, %v6322
  %v6578 = vadd.f32 %v5945, %v6500
  %v6579 = vadd.f32 %v5946, %v6324
  %v6580 = vadd.f32 %v5947, %v6502
  %v6581 = vadd.f32 %v5948, %v6327
  %v6582 = vadd.f32 %v5949, %v6505
  %v6583 = vadd.f32 %v5950, %v6329
  %v6584 = vadd.f32 %v5951, %v6507
  %v6585 = vadd.f32 %v5952, %v6332
  %v6586 = vadd.f32 %v5953, %v6510
  %v6587 = vadd.f32 %v5954, %v6334
  %v6588 = vadd.f32 %v5955, %v6512
  %v6589 = vadd.f32 %v5956, %v6337
  %v6590 = vadd.f32 %v5957, %v6515
  %v6591 = vadd.f32 %v5958, %v6339
  %v6592 = vadd.f32 %v5959, %v6517
  %v6593 = vadd.f32 %v5960, %v6342
  %v6594 = vadd.f32 %v5961, %v6520
  %v6595 = vadd.f32 %v5962, %v6344
  %v6596 = vadd.f32 %v5963, %v6522
  %v6597 = vadd.f32 %v5964, %v6347
  %v6598 = vadd.f32 %v5965, %v6525
  %v6599 = vadd.f32 %v5966, %v6349
  %v6600 = vadd.f32 %v5967, %v6527
  %v6601 = vadd.f32 %v5968, %v6352
  %v6602 = vadd.f32 %v5969, %v6530
  %v6603 = vadd.f32 %v5970, %v6354
  %v6604 = vadd.f32 %v5971, %v6532
  %v6605 = vadd.f32 %v5972, %v6357
  %v6606 = vadd.f32 %v5973, %v6535
  %v6607 = vadd.f32 %v5974, %v6359
  %v6608 = vadd.f32 %v5975, %v6537
  %v6609 = vadd.f32 %v5976, %v6362
  %v6610 = vadd.f32 %v5977, %v6540
  %v6611 = vadd.f32 %v5978, %v6364
  %v6612 = vadd.f32 %v5979, %v6542
  %v6613 = vadd.f32 %v5980, %v6367
  %v6614 = vadd.f32 %v5981, %v6545
  %v6615 = vadd.f32 %v5982, %v6369
  %v6616 = vadd.f32 %v5983, %v6547
  %v6617 = vadd.f32 %v5984, %v6372
  %v6618 = vadd.f32 %v5985, %v6550
  %v6619 = vadd.f32 %v5986, %v6374
  %v6620 = vadd.f32 %v5987, %v6552
  %v6621 = vadd.f32 %v5988, %v6377
  %v6622 = vadd.f32 %v5989, %v6555
  %v6623 = vadd.f32 %v5990, %v6379
  %v6624 = vadd.f32 %v5991, %v6557
  %v6625 = vadd.f32 %v5992, %v6382
  %v6626 = vadd.f32 %v5993, %v6560
  %v6627 = vadd.f32 %v5994, %v6384
  %v6628 = vadd.f32 %v5995, %v6562
  %v6629 = vadd.f32 %v5996, %v6387
  %v6630 = vadd.f32 %v5997, %v6565
  %v6631 = vadd.f32 %v5998, %v6389
  %v6632 = vadd.f32 %v5999, %v6567
  %v6633 = vmax.f32 %v6569, %v6577
  %v6634 = vmax.f32 %v6570, %v6578
  %v6635 = vmax.f32 %v6571, %v6579
  %v6636 = vmax.f32 %v6572, %v6580
  %v6637 = vmax.f32 %v6573, %v6581
  %v6638 = vmax.f32 %v6574, %v6582
  %v6639 = vmax.f32 %v6575, %v6583
  %v6640 = vmax.f32 %v6576, %v6584
  %v6641 = vmax.f32 %v6585, %v6593
  %v6642 = vmax.f32 %v6586, %v6594
  %v6643 = vmax.f32 %v6587, %v6595
  %v6644 = vmax.f32 %v6588, %v6596
  %v6645 = vmax.f32 %v6589, %v6597
  %v6646 = vmax.f32 %v6590, %v6598
  %v6647 = vmax.f32 %v6591, %v6599
  %v6648 = vmax.f32 %v6592, %v6600
  %v6649 = vmax.f32 %v6601, %v6609
  %v6650 = vmax.f32 %v6602, %v6610
  %v6651 = vmax.f32 %v6603, %v6611
  %v6652 = vmax.f32 %v6604, %v6612
  %v6653 = vmax.f32 %v6605, %v6613
  %v6654 = vmax.f32 %v6606, %v6614
  %v6655 = vmax.f32 %v6607, %v6615
  %v6656 = vmax.f32 %v6608, %v6616
  %v6657 = vmax.f32 %v6617, %v6625
  %v6658 = vmax.f32 %v6618, %v6626
  %v6659 = vmax.f32 %v6619, %v6627
  %v6660 = vmax.f32 %v6620, %v6628
  %v6661 = vmax.f32 %v6621, %v6629
  %v6662 = vmax.f32 %v6622, %v6630
  %v6663 = vmax.f32 %v6623, %v6631
  %v6664 = vmax.f32 %v6624, %v6632
  %v6665 = vmax.f32 %v6633, %v6634
  %v6666 = vmax.f32 %v6635, %v6636
  %v6667 = vmax.f32 %v6637, %v6638
  %v6668 = vmax.f32 %v6639, %v6640
  %v6669 = vmax.f32 %v6641, %v6642
  %v6670 = vmax.f32 %v6643, %v6644
  %v6671 = vmax.f32 %v6645, %v6646
  %v6672 = vmax.f32 %v6647, %v6648
  %v6673 = vmax.f32 %v6649, %v6650
  %v6674 = vmax.f32 %v6651, %v6652
  %v6675 = vmax.f32 %v6653, %v6654
  %v6676 = vmax.f32 %v6655, %v6656
  %v6677 = vmax.f32 %v6657, %v6658
  %v6678 = vmax.f32 %v6659, %v6660
  %v6679 = vmax.f32 %v6661, %v6662
  %v6680 = vmax.f32 %v6663, %v6664
  %v6681 = vld [vmem:[%s4] sm:$0x1]
  %v6683 = vperm.slane %v6681, 0
  %v6685 = vadd.f32 %v6665, %v6683
  %v6686 = vadd.f32 %v6666, %v6683
  %v6687 = vadd.f32 %v6667, %v6683
  %v6688 = vadd.f32 %v6668, %v6683
  %v6689 = vadd.f32 %v6669, %v6683
  %v6690 = vadd.f32 %v6670, %v6683
  %v6691 = vadd.f32 %v6671, %v6683
  %v6692 = vadd.f32 %v6672, %v6683
  %v6693 = vadd.f32 %v6673, %v6683
  %v6694 = vadd.f32 %v6674, %v6683
  %v6695 = vadd.f32 %v6675, %v6683
  %v6696 = vadd.f32 %v6676, %v6683
  %v6697 = vadd.f32 %v6677, %v6683
  %v6698 = vadd.f32 %v6678, %v6683
  %v6699 = vadd.f32 %v6679, %v6683
  %v6700 = vadd.f32 %v6680, %v6683
  %v6701 = vmax.f32 %v6685, 0.0
  %v6702 = vmax.f32 %v6686, 0.0
  %v6703 = vmax.f32 %v6687, 0.0
  %v6704 = vmax.f32 %v6688, 0.0
  %v6705 = vmax.f32 %v6689, 0.0
  %v6706 = vmax.f32 %v6690, 0.0
  %v6707 = vmax.f32 %v6691, 0.0
  %v6708 = vmax.f32 %v6692, 0.0
  %v6709 = vmax.f32 %v6693, 0.0
  %v6710 = vmax.f32 %v6694, 0.0
  %v6711 = vmax.f32 %v6695, 0.0
  %v6712 = vmax.f32 %v6696, 0.0
  %v6713 = vmax.f32 %v6697, 0.0
  %v6714 = vmax.f32 %v6698, 0.0
  %v6715 = vmax.f32 %v6699, 0.0
  %v6716 = vmax.f32 %v6700, 0.0
  %v6717 = vpack.c.bf16 %v6701, %v6701
  %v6718 = vpack.c.bf16 %v6702, %v6702
  %v6719 = vpack.c.bf16 %v6703, %v6703
  %v6720 = vpack.c.bf16 %v6704, %v6704
  %v6721 = vpack.c.bf16 %v6705, %v6705
  %v6722 = vpack.c.bf16 %v6706, %v6706
  %v6723 = vpack.c.bf16 %v6707, %v6707
  %v6724 = vpack.c.bf16 %v6708, %v6708
  %v6725 = vpack.c.bf16 %v6709, %v6709
  %v6726 = vpack.c.bf16 %v6710, %v6710
  %v6727 = vpack.c.bf16 %v6711, %v6711
  %v6728 = vpack.c.bf16 %v6712, %v6712
  %v6729 = vpack.c.bf16 %v6713, %v6713
  %v6730 = vpack.c.bf16 %v6714, %v6714
  %v6731 = vpack.c.bf16 %v6715, %v6715
  %v6732 = vpack.c.bf16 %v6716, %v6716
  %v6737 = vunpack.c.l.b16 %v6717
  %v6738 = vunpack.c.l.b16 %v6718
  %v6739 = vunpack.c.l.b16 %v6719
  %v6740 = vunpack.c.l.b16 %v6720
  %v6741 = vpack.c.b16 %v6738, %v6737
  %v6742 = vpack.c.b16 %v6740, %v6739
  %v6749 = vunpack.c.l.b16 %v6721
  %v6750 = vunpack.c.l.b16 %v6722
  %v6751 = vunpack.c.l.b16 %v6723
  %v6752 = vunpack.c.l.b16 %v6724
  %v6753 = vpack.c.b16 %v6750, %v6749
  %v6754 = vpack.c.b16 %v6752, %v6751
  %v6761 = vunpack.c.l.b16 %v6725
  %v6762 = vunpack.c.l.b16 %v6726
  %v6763 = vunpack.c.l.b16 %v6727
  %v6764 = vunpack.c.l.b16 %v6728
  %v6765 = vpack.c.b16 %v6762, %v6761
  %v6766 = vpack.c.b16 %v6764, %v6763
  %v6773 = vunpack.c.l.b16 %v6729
  %v6774 = vunpack.c.l.b16 %v6730
  %v6775 = vunpack.c.l.b16 %v6731
  %v6776 = vunpack.c.l.b16 %v6732
  %v6777 = vpack.c.b16 %v6774, %v6773
  %v6778 = vpack.c.b16 %v6776, %v6775
  %v6781 = vld [vmem:[%s5] sm:$0xf]
  %v6782 = vld [vmem:[%s5 + $0x4] sm:$0xf]
  %v6783 = vld [vmem:[%s5 + $0x8] sm:$0xf]
  %v6784 = vld [vmem:[%s5 + $0xc] sm:$0xf]
  %v6785 = vld [vmem:[%s5 + $0x10] sm:$0xf]
  %v6786 = vld [vmem:[%s5 + $0x14] sm:$0xf]
  %v6787 = vld [vmem:[%s5 + $0x18] sm:$0xf]
  %v6788 = vld [vmem:[%s5 + $0x1c] sm:$0xf]
  %v6789 = vld [vmem:[%s5 + $0x20] sm:$0xf]
  %v6790 = vld [vmem:[%s5 + $0x24] sm:$0xf]
  %v6791 = vld [vmem:[%s5 + $0x28] sm:$0xf]
  %v6792 = vld [vmem:[%s5 + $0x2c] sm:$0xf]
  %v6793 = vld [vmem:[%s5 + $0x30] sm:$0xf]
  %v6794 = vld [vmem:[%s5 + $0x34] sm:$0xf]
  %v6795 = vld [vmem:[%s5 + $0x38] sm:$0xf]
  %v6796 = vld [vmem:[%s5 + $0x3c] sm:$0xf]
  %v6797 = vld [vmem:[%s5 + $0x40] sm:$0xf]
  %v6798 = vld [vmem:[%s5 + $0x44] sm:$0xf]
  %v6799 = vld [vmem:[%s5 + $0x48] sm:$0xf]
  %v6800 = vld [vmem:[%s5 + $0x4c] sm:$0xf]
  %v6801 = vld [vmem:[%s5 + $0x50] sm:$0xf]
  %v6802 = vld [vmem:[%s5 + $0x54] sm:$0xf]
  %v6803 = vld [vmem:[%s5 + $0x58] sm:$0xf]
  %v6804 = vld [vmem:[%s5 + $0x5c] sm:$0xf]
  %v6805 = vld [vmem:[%s5 + $0x60] sm:$0xf]
  %v6806 = vld [vmem:[%s5 + $0x64] sm:$0xf]
  %v6807 = vld [vmem:[%s5 + $0x68] sm:$0xf]
  %v6808 = vld [vmem:[%s5 + $0x6c] sm:$0xf]
  %v6809 = vld [vmem:[%s5 + $0x70] sm:$0xf]
  %v6810 = vld [vmem:[%s5 + $0x74] sm:$0xf]
  %v6811 = vld [vmem:[%s5 + $0x78] sm:$0xf]
  %v6812 = vld [vmem:[%s5 + $0x7c] sm:$0xf]
  %v6813 = vld [vmem:[%s5 + $0x80] sm:$0xf]
  %v6814 = vld [vmem:[%s5 + $0x84] sm:$0xf]
  %v6815 = vld [vmem:[%s5 + $0x88] sm:$0xf]
  %v6816 = vld [vmem:[%s5 + $0x8c] sm:$0xf]
  %v6817 = vld [vmem:[%s5 + $0x90] sm:$0xf]
  %v6818 = vld [vmem:[%s5 + $0x94] sm:$0xf]
  %v6819 = vld [vmem:[%s5 + $0x98] sm:$0xf]
  %v6820 = vld [vmem:[%s5 + $0x9c] sm:$0xf]
  %v6821 = vld [vmem:[%s5 + $0xa0] sm:$0xf]
  %v6822 = vld [vmem:[%s5 + $0xa4] sm:$0xf]
  %v6823 = vld [vmem:[%s5 + $0xa8] sm:$0xf]
  %v6824 = vld [vmem:[%s5 + $0xac] sm:$0xf]
  %v6825 = vld [vmem:[%s5 + $0xb0] sm:$0xf]
  %v6826 = vld [vmem:[%s5 + $0xb4] sm:$0xf]
  %v6827 = vld [vmem:[%s5 + $0xb8] sm:$0xf]
  %v6828 = vld [vmem:[%s5 + $0xbc] sm:$0xf]
  %v6829 = vld [vmem:[%s5 + $0xc0] sm:$0xf]
  %v6830 = vld [vmem:[%s5 + $0xc4] sm:$0xf]
  %v6831 = vld [vmem:[%s5 + $0xc8] sm:$0xf]
  %v6832 = vld [vmem:[%s5 + $0xcc] sm:$0xf]
  %v6833 = vld [vmem:[%s5 + $0xd0] sm:$0xf]
  %v6834 = vld [vmem:[%s5 + $0xd4] sm:$0xf]
  %v6835 = vld [vmem:[%s5 + $0xd8] sm:$0xf]
  %v6836 = vld [vmem:[%s5 + $0xdc] sm:$0xf]
  %v6837 = vld [vmem:[%s5 + $0xe0] sm:$0xf]
  %v6838 = vld [vmem:[%s5 + $0xe4] sm:$0xf]
  %v6839 = vld [vmem:[%s5 + $0xe8] sm:$0xf]
  %v6840 = vld [vmem:[%s5 + $0xec] sm:$0xf]
  %v6841 = vld [vmem:[%s5 + $0xf0] sm:$0xf]
  %v6842 = vld [vmem:[%s5 + $0xf4] sm:$0xf]
  %v6843 = vld [vmem:[%s5 + $0xf8] sm:$0xf]
  %v6844 = vld [vmem:[%s5 + $0xfc] sm:$0xf]
  %v6845 = vld [vmem:[%s6] sm:$0x1]
  %v6847 = vperm.slane %v6845, 0
  %v6913 = vunpack.c.l.b16 %v6781
  %v6914 = vunpack.c.l.b16 %v6782
  %v6915 = vunpack.c.l.b16 %v6783
  %v6916 = vunpack.c.l.b16 %v6784
  %v6917 = vunpack.c.l.b16 %v6785
  %v6918 = vunpack.c.l.b16 %v6786
  %v6919 = vunpack.c.l.b16 %v6787
  %v6920 = vunpack.c.l.b16 %v6788
  %v6921 = vunpack.c.l.b16 %v6789
  %v6922 = vunpack.c.l.b16 %v6790
  %v6923 = vunpack.c.l.b16 %v6791
  %v6924 = vunpack.c.l.b16 %v6792
  %v6925 = vunpack.c.l.b16 %v6793
  %v6926 = vunpack.c.l.b16 %v6794
  %v6927 = vunpack.c.l.b16 %v6795
  %v6928 = vunpack.c.l.b16 %v6796
  %v6929 = vunpack.c.l.b16 %v6797
  %v6930 = vunpack.c.l.b16 %v6798
  %v6931 = vunpack.c.l.b16 %v6799
  %v6932 = vunpack.c.l.b16 %v6800
  %v6933 = vunpack.c.l.b16 %v6801
  %v6934 = vunpack.c.l.b16 %v6802
  %v6935 = vunpack.c.l.b16 %v6803
  %v6936 = vunpack.c.l.b16 %v6804
  %v6937 = vunpack.c.l.b16 %v6805
  %v6938 = vunpack.c.l.b16 %v6806
  %v6939 = vunpack.c.l.b16 %v6807
  %v6940 = vunpack.c.l.b16 %v6808
  %v6941 = vunpack.c.l.b16 %v6809
  %v6942 = vunpack.c.l.b16 %v6810
  %v6943 = vunpack.c.l.b16 %v6811
  %v6944 = vunpack.c.l.b16 %v6812
  %v6945 = vunpack.c.l.b16 %v6813
  %v6946 = vunpack.c.l.b16 %v6814
  %v6947 = vunpack.c.l.b16 %v6815
  %v6948 = vunpack.c.l.b16 %v6816
  %v6949 = vunpack.c.l.b16 %v6817
  %v6950 = vunpack.c.l.b16 %v6818
  %v6951 = vunpack.c.l.b16 %v6819
  %v6952 = vunpack.c.l.b16 %v6820
  %v6953 = vunpack.c.l.b16 %v6821
  %v6954 = vunpack.c.l.b16 %v6822
  %v6955 = vunpack.c.l.b16 %v6823
  %v6956 = vunpack.c.l.b16 %v6824
  %v6957 = vunpack.c.l.b16 %v6825
  %v6958 = vunpack.c.l.b16 %v6826
  %v6959 = vunpack.c.l.b16 %v6827
  %v6960 = vunpack.c.l.b16 %v6828
  %v6961 = vunpack.c.l.b16 %v6829
  %v6962 = vunpack.c.l.b16 %v6830
  %v6963 = vunpack.c.l.b16 %v6831
  %v6964 = vunpack.c.l.b16 %v6832
  %v6965 = vunpack.c.l.b16 %v6833
  %v6966 = vunpack.c.l.b16 %v6834
  %v6967 = vunpack.c.l.b16 %v6835
  %v6968 = vunpack.c.l.b16 %v6836
  %v6969 = vunpack.c.l.b16 %v6837
  %v6970 = vunpack.c.l.b16 %v6838
  %v6971 = vunpack.c.l.b16 %v6839
  %v6972 = vunpack.c.l.b16 %v6840
  %v6973 = vunpack.c.l.b16 %v6841
  %v6974 = vunpack.c.l.b16 %v6842
  %v6975 = vunpack.c.l.b16 %v6843
  %v6976 = vunpack.c.l.b16 %v6844
  %v6977 = vpack.c.b16 %v6914, %v6913
  %v6978 = vpack.c.b16 %v6916, %v6915
  %v6979 = vpack.c.b16 %v6918, %v6917
  %v6980 = vpack.c.b16 %v6920, %v6919
  %v6981 = vpack.c.b16 %v6922, %v6921
  %v6982 = vpack.c.b16 %v6924, %v6923
  %v6983 = vpack.c.b16 %v6926, %v6925
  %v6984 = vpack.c.b16 %v6928, %v6927
  %v6985 = vpack.c.b16 %v6930, %v6929
  %v6986 = vpack.c.b16 %v6932, %v6931
  %v6987 = vpack.c.b16 %v6934, %v6933
  %v6988 = vpack.c.b16 %v6936, %v6935
  %v6989 = vpack.c.b16 %v6938, %v6937
  %v6990 = vpack.c.b16 %v6940, %v6939
  %v6991 = vpack.c.b16 %v6942, %v6941
  %v6992 = vpack.c.b16 %v6944, %v6943
  %v6993 = vpack.c.b16 %v6946, %v6945
  %v6994 = vpack.c.b16 %v6948, %v6947
  %v6995 = vpack.c.b16 %v6950, %v6949
  %v6996 = vpack.c.b16 %v6952, %v6951
  %v6997 = vpack.c.b16 %v6954, %v6953
  %v6998 = vpack.c.b16 %v6956, %v6955
  %v6999 = vpack.c.b16 %v6958, %v6957
  %v7000 = vpack.c.b16 %v6960, %v6959
  %v7001 = vpack.c.b16 %v6962, %v6961
  %v7002 = vpack.c.b16 %v6964, %v6963
  %v7003 = vpack.c.b16 %v6966, %v6965
  %v7004 = vpack.c.b16 %v6968, %v6967
  %v7005 = vpack.c.b16 %v6970, %v6969
  %v7006 = vpack.c.b16 %v6972, %v6971
  %v7007 = vpack.c.b16 %v6974, %v6973
  %v7008 = vpack.c.b16 %v6976, %v6975
  %7041 = vmatpush.bf16.msra.mxu0 %v6984
  %7042 = vmatpush.bf16.msra.mxu0 %v6983
  %7043 = vmatpush.bf16.msra.mxu0 %v6982
  %7044 = vmatpush.bf16.msra.mxu0 %v6981
  %7045 = vmatpush.bf16.msra.mxu0 %v6980
  %7046 = vmatpush.bf16.msra.mxu0 %v6979
  %7047 = vmatpush.bf16.msra.mxu0 %v6978
  %7048 = vmatpush.bf16.msra.mxu0 %v6977
  %7049 = vmatmul.bf16.gmra.mxu0 %v6741
  %v7050 = vpop.f32.mrf.mxu0
  %v7051 = vadd.f32 %v6847, %v7050
  %v7052 = vpop.f32.mrf.mxu0
  %v7053 = vadd.f32 %v6847, %v7052
  %7054 = vmatmul.bf16.gmra.mxu0 %v6742
  %v7055 = vpop.f32.mrf.mxu0
  %v7056 = vadd.f32 %v6847, %v7055
  %v7057 = vpop.f32.mrf.mxu0
  %v7058 = vadd.f32 %v6847, %v7057
  %7059 = vdwg.mxu0
  %7060 = vmatpush.bf16.msra.mxu0 %v6992
  %7061 = vmatpush.bf16.msra.mxu0 %v6991
  %7062 = vmatpush.bf16.msra.mxu0 %v6990
  %7063 = vmatpush.bf16.msra.mxu0 %v6989
  %7064 = vmatpush.bf16.msra.mxu0 %v6988
  %7065 = vmatpush.bf16.msra.mxu0 %v6987
  %7066 = vmatpush.bf16.msra.mxu0 %v6986
  %7067 = vmatpush.bf16.msra.mxu0 %v6985
  %7068 = vmatmul.bf16.gmra.mxu0 %v6753
  %v7069 = vpop.f32.mrf.mxu0
  %v7070 = vadd.f32 %v7051, %v7069
  %v7071 = vpop.f32.mrf.mxu0
  %v7072 = vadd.f32 %v7053, %v7071
  %7073 = vmatmul.bf16.gmra.mxu0 %v6754
  %v7074 = vpop.f32.mrf.mxu0
  %v7075 = vadd.f32 %v7056, %v7074
  %v7076 = vpop.f32.mrf.mxu0
  %v7077 = vadd.f32 %v7058, %v7076
  %7078 = vdwg.mxu0
  %7079 = vmatpush.bf16.msra.mxu0 %v7000
  %7080 = vmatpush.bf16.msra.mxu0 %v6999
  %7081 = vmatpush.bf16.msra.mxu0 %v6998
  %7082 = vmatpush.bf16.msra.mxu0 %v6997
  %7083 = vmatpush.bf16.msra.mxu0 %v6996
  %7084 = vmatpush.bf16.msra.mxu0 %v6995
  %7085 = vmatpush.bf16.msra.mxu0 %v6994
  %7086 = vmatpush.bf16.msra.mxu0 %v6993
  %7087 = vmatmul.bf16.gmra.mxu0 %v6765
  %v7088 = vpop.f32.mrf.mxu0
  %v7089 = vadd.f32 %v7070, %v7088
  %v7090 = vpop.f32.mrf.mxu0
  %v7091 = vadd.f32 %v7072, %v7090
  %7092 = vmatmul.bf16.gmra.mxu0 %v6766
  %v7093 = vpop.f32.mrf.mxu0
  %v7094 = vadd.f32 %v7075, %v7093
  %v7095 = vpop.f32.mrf.mxu0
  %v7096 = vadd.f32 %v7077, %v7095
  %7097 = vdwg.mxu0
  %7098 = vmatpush.bf16.msra.mxu0 %v7008
  %7099 = vmatpush.bf16.msra.mxu0 %v7007
  %7100 = vmatpush.bf16.msra.mxu0 %v7006
  %7101 = vmatpush.bf16.msra.mxu0 %v7005
  %7102 = vmatpush.bf16.msra.mxu0 %v7004
  %7103 = vmatpush.bf16.msra.mxu0 %v7003
  %7104 = vmatpush.bf16.msra.mxu0 %v7002
  %7105 = vmatpush.bf16.msra.mxu0 %v7001
  %7106 = vmatmul.bf16.gmra.mxu0 %v6777
  %v7107 = vpop.f32.mrf.mxu0
  %v7108 = vadd.f32 %v7089, %v7107
  %v7109 = vpop.f32.mrf.mxu0
  %v7110 = vadd.f32 %v7091, %v7109
  %7111 = vmatmul.bf16.gmra.mxu0 %v6778
  %v7112 = vpop.f32.mrf.mxu0
  %v7113 = vadd.f32 %v7094, %v7112
  %v7114 = vpop.f32.mrf.mxu0
  %v7115 = vadd.f32 %v7096, %v7114
  %7116 = vdwg.mxu0
  %v7117 = vmax.f32 %v7108, 0.0
  %v7118 = vmax.f32 %v7110, 0.0
  %v7119 = vmax.f32 %v7113, 0.0
  %v7120 = vmax.f32 %v7115, 0.0
  %v7121 = vpack.c.bf16 %v7118, %v7117
  %v7122 = vpack.c.bf16 %v7120, %v7119
  %v7123 = vld [vmem:[%s7] sm:$0xf]
  %v7124 = vld [vmem:[%s7 + $0x4] sm:$0xf]
  %v7125 = vld [vmem:[%s7 + $0x8] sm:$0xf]
  %v7126 = vld [vmem:[%s7 + $0xc] sm:$0xf]
  %v7127 = vld [vmem:[%s7 + $0x10] sm:$0xf]
  %v7128 = vld [vmem:[%s7 + $0x14] sm:$0xf]
  %v7129 = vld [vmem:[%s7 + $0x18] sm:$0xf]
  %v7130 = vld [vmem:[%s7 + $0x1c] sm:$0xf]
  %v7131 = vld [vmem:[%s7 + $0x20] sm:$0xf]
  %v7132 = vld [vmem:[%s7 + $0x24] sm:$0xf]
  %v7133 = vld [vmem:[%s7 + $0x28] sm:$0xf]
  %v7134 = vld [vmem:[%s7 + $0x2c] sm:$0xf]
  %v7135 = vld [vmem:[%s7 + $0x30] sm:$0xf]
  %v7136 = vld [vmem:[%s7 + $0x34] sm:$0xf]
  %v7137 = vld [vmem:[%s7 + $0x38] sm:$0xf]
  %v7138 = vld [vmem:[%s7 + $0x3c] sm:$0xf]
  %v7139 = vld [vmem:[%s8] sm:$0x1]
  %v7141 = vperm.slane %v7139, 0
  %v7159 = vunpack.c.l.b16 %v7123
  %v7160 = vunpack.c.l.b16 %v7124
  %v7161 = vunpack.c.l.b16 %v7125
  %v7162 = vunpack.c.l.b16 %v7126
  %v7163 = vunpack.c.l.b16 %v7127
  %v7164 = vunpack.c.l.b16 %v7128
  %v7165 = vunpack.c.l.b16 %v7129
  %v7166 = vunpack.c.l.b16 %v7130
  %v7167 = vunpack.c.l.b16 %v7131
  %v7168 = vunpack.c.l.b16 %v7132
  %v7169 = vunpack.c.l.b16 %v7133
  %v7170 = vunpack.c.l.b16 %v7134
  %v7171 = vunpack.c.l.b16 %v7135
  %v7172 = vunpack.c.l.b16 %v7136
  %v7173 = vunpack.c.l.b16 %v7137
  %v7174 = vunpack.c.l.b16 %v7138
  %v7175 = vpack.c.b16 %v7160, %v7159
  %v7176 = vpack.c.b16 %v7162, %v7161
  %v7177 = vpack.c.b16 %v7164, %v7163
  %v7178 = vpack.c.b16 %v7166, %v7165
  %v7179 = vpack.c.b16 %v7168, %v7167
  %v7180 = vpack.c.b16 %v7170, %v7169
  %v7181 = vpack.c.b16 %v7172, %v7171
  %v7182 = vpack.c.b16 %v7174, %v7173
  %7191 = vmatpush.bf16.msra.mxu0 %v7182
  %7192 = vmatpush.bf16.msra.mxu0 %v7181
  %7193 = vmatpush.bf16.msra.mxu0 %v7180
  %7194 = vmatpush.bf16.msra.mxu0 %v7179
  %7195 = vmatpush.bf16.msra.mxu0 %v7178
  %7196 = vmatpush.bf16.msra.mxu0 %v7177
  %7197 = vmatpush.bf16.msra.mxu0 %v7176
  %7198 = vmatpush.bf16.msra.mxu0 %v7175
  %7199 = vmatmul.bf16.gmra.mxu0 %v7121
  %v7200 = vpop.f32.mrf.mxu0
  %v7201 = vadd.f32 %v7141, %v7200
  %v7202 = vpop.f32.mrf.mxu0
  %v7203 = vadd.f32 %v7141, %v7202
  %7204 = vmatmul.bf16.gmra.mxu0 %v7122
  %v7205 = vpop.f32.mrf.mxu0
  %v7206 = vadd.f32 %v7141, %v7205
  %v7207 = vpop.f32.mrf.mxu0
  %v7208 = vadd.f32 %v7141, %v7207
  %7209 = vdwg.mxu0
  %v7210 = vlaneseq
  %v7211 = vand.u32 %v7210, 127
  %vm7212 = vcmp.lt.s32.totalorder %v7211, 10
  %v7213 = vsel %vm7212, %v7201, -1e+30
  %v7214 = vsel %vm7212, %v7203, -1e+30
  %v7215 = vsel %vm7212, %v7206, -1e+30
  %v7216 = vsel %vm7212, %v7208, -1e+30
  %7217 = vmax.xlane.f32.xlu0 %v7213
  %v7218 = vpop.xlane.xlu0 %7217
  %7219 = vmax.xlane.f32.xlu0 %v7214
  %v7220 = vpop.xlane.xlu0 %7219
  %7221 = vmax.xlane.f32.xlu0 %v7215
  %v7222 = vpop.xlane.xlu0 %7221
  %7223 = vmax.xlane.f32.xlu0 %v7216
  %v7224 = vpop.xlane.xlu0 %7223
  %v7225 = vsub.f32 %v7213, %v7218
  %v7226 = vsub.f32 %v7214, %v7220
  %v7227 = vsub.f32 %v7215, %v7222
  %v7228 = vsub.f32 %v7216, %v7224
  %v7229 = vmul.f32 %v7225, 1.442695
  %v7230 = vpow.pop %v7229
  %v7231 = vmul.f32 %v7226, 1.442695
  %v7232 = vpow.pop %v7231
  %v7233 = vmul.f32 %v7227, 1.442695
  %v7234 = vpow.pop %v7233
  %v7235 = vmul.f32 %v7228, 1.442695
  %v7236 = vpow.pop %v7235
  %7237 = vadd.xlane.f32.xlu0 %v7230
  %v7238 = vpop.xlane.xlu0 %7237
  %7239 = vadd.xlane.f32.xlu0 %v7232
  %v7240 = vpop.xlane.xlu0 %7239
  %7241 = vadd.xlane.f32.xlu0 %v7234
  %v7242 = vpop.xlane.xlu0 %7241
  %7243 = vadd.xlane.f32.xlu0 %v7236
  %v7244 = vpop.xlane.xlu0 %7243
  %v7245 = vlog2.pop %v7238
  %v7246 = vmul.f32 %v7245, 0.6931472
  %v7247 = vlog2.pop %v7240
  %v7248 = vmul.f32 %v7247, 0.6931472
  %v7249 = vlog2.pop %v7242
  %v7250 = vmul.f32 %v7249, 0.6931472
  %v7251 = vlog2.pop %v7244
  %v7252 = vmul.f32 %v7251, 0.6931472
  %v7253 = vsub.f32 %v7225, %v7246
  %v7254 = vsub.f32 %v7226, %v7248
  %v7255 = vsub.f32 %v7227, %v7250
  %v7256 = vsub.f32 %v7228, %v7252
  %7257 = vst [vmem:[%s9] sm:$0xff] %v7253
  %7258 = vst [vmem:[%s9 + $0x8] sm:$0xff] %v7254
  %7259 = vst [vmem:[%s9 + $0x10] sm:$0xff] %v7255
  %7260 = vst [vmem:[%s9 + $0x18] sm:$0xff] %v7256
  // Predicated region
  $region38: #{net_forward.1} parent=0 // pred_check
    _
  $region39: #{net_forward.1} parent=0 // pred_check_branch
    %7262 = sbr.rel (0) target = $region41
  $region40: #{net_forward.1} parent=0 // pred_region
    _
  $region41: #{net_forward.1} parent=0 // pred_fallthru
    _
  // Predicated region
  $region42: #{net_forward.1} parent=0 // pred_check
    _
  $region43: #{net_forward.1} parent=0 // pred_check_branch
    %7264 = sbr.rel (0) target = $region45
  $region44: #{net_forward.1} parent=0 // pred_region
    _
  $region45: #{net_forward.1} parent=0 // pred_fallthru
    _

</llo_original>
